<compile_context>
chip_gen: v5e
topology: v5e:2x2
jax: 0.10.0
libtpu: 0.0.40
codegen_flags: <defaults>
</compile_context>

<pallas_src>
import math
import numpy as np
import jax
import jax.numpy as jnp
from jax import lax
from jax.experimental import pallas as pl
from jax.experimental.pallas import tpu as pltpu

SELU_ALPHA = 1.6732632423543772848170429916717
SELU_SCALE = 1.0507009873554804934193349852946
BN_EPS = 1e-5


def _round_up(x, m):
    return (x + m - 1) // m * m


def _channel_width(c):
    # Keep tiny channel counts native (no 16-32x zero-pad blowup); lane-pad only
    # when the channel count is already MXU-scale.
    return c if c < 64 else _round_up(c, 128)


def _selu(x):
    # exp only sees the non-positive branch values (no inf in the discarded lane).
    return SELU_SCALE * jnp.where(
        x > 0, x, SELU_ALPHA * (jnp.exp(jnp.minimum(x, 0.0)) - 1.0))


def _vmem_budget_bytes():
    """Per-generation scoped-VMEM budget (v7x: 64 MiB phys; v5e/v6e: 128 MiB)."""
    cap = 64 * 1024 * 1024
    try:
        cap = int(pltpu.get_tpu_info().vmem_capacity_bytes)
    except Exception:
        pass
    return int(min((cap * 3) // 4, 100 * 1024 * 1024))


def _pick_tile_rows(H, W, Wb, cin, cout, budget, max_tile_rows=None):
    """Largest row-tile TH dividing H whose per-step VMEM footprint fits `budget`."""
    def lanes(c):
        return _round_up(c, 128)      # VMEM stores <=128 channels in full vreg lanes

    def est(th):
        b = 2 * (th + 4) * Wb * lanes(cin) * 4        # double-buffered input tile
        b += 2 * th * W * lanes(cout) * 4             # double-buffered output tile
        b += (th + 2) * Wb * lanes(cout) * 4          # y1 staging scratch
        b += 6 * (th + 2) * Wb * lanes(cout) * 4      # accumulators / matmul temps
        b += 2 * 9 * lanes(cin) * lanes(cout) * 4     # weights
        return b

    cands = [d for d in range(1, H + 1) if H % d == 0]
    if max_tile_rows is not None:
        limited = [d for d in cands if d <= max_tile_rows]
        cands = limited if limited else [min(cands)]
    fitting = [d for d in cands if est(d) <= budget]
    return max(fitting) if fitting else min(cands)


# ---------------- Pallas kernels ----------------

def _make_conv_block_kernel(double_selu, with_stats):
    """Fused conv1 -> conv2 -> SELU (x2) per row tile; optional per-tile BN stats."""

    def kernel(xp_ref, w1_ref, b1_ref, w2_ref, b2_ref, *outs):
        if with_stats:
            y2_ref, ssum_ref, ssq_ref, y1p = outs
        else:
            y2_ref, y1p = outs
        TH, W, Co = y2_ref.shape
        Wb = y1p.shape[1]
        t = pl.program_id(1)
        last_t = pl.num_programs(1) - 1

        def conv3x3(band_fn, w_ref, rows):
            """'same' 3x3 conv: lane-aligned band matmuls + one XLU roll per kw group.

            band_fn(kh) -> (rows, Wb, Ci) full-width band (contiguous reshape, no
            sublane-unaligned slicing).  Output column w needs band column w+kw-1,
            so the kw=0 / kw=2 partials are realigned with a single roll each.
            Columns >= W of the result are garbage and are never stored.
            """
            M = rows * Wb
            accs = [None, None, None]
            for kh in range(3):
                band = band_fn(kh)
                band2d = band.reshape(M, band.shape[-1])
                for kw in range(3):
                    r = jnp.dot(band2d, w_ref[kh * 3 + kw],
                                preferred_element_type=jnp.float32)
                    accs[kw] = r if accs[kw] is None else accs[kw] + r
            out = accs[1]
            out = out + pltpu.roll(accs[0], 1, 0)        # kw=0 -> shift +1
            out = out + pltpu.roll(accs[2], M - 1, 0)    # kw=2 -> shift -1 (mod M)
            return out                                    # (rows*Wb, Co) f32

        # ---- conv1 over TH+2 rows (1-row vertical halo for conv2, recomputed) ----
        acc1 = conv3x3(lambda kh: xp_ref[kh:kh + TH + 2], w1_ref, TH + 2)
        y1 = (acc1 + b1_ref[...]).reshape(TH + 2, Wb, Co)
        # Stage conv1 output in VMEM (never touches HBM).  Only valid columns are
        # written; halo columns (>= W) stay zero -> conv2's horizontal 'same' pad.
        y1p[:, 0:W, :] = y1[:, 0:W, :]
        y1p[:, W:Wb, :] = jnp.zeros((TH + 2, Wb - W, Co), jnp.float32)

        # Vertical 'same' padding of conv2 at the image boundary rows.
        @pl.when(t == 0)
        def _():
            y1p[0:1, :, :] = jnp.zeros((1, Wb, Co), jnp.float32)

        @pl.when(t == last_t)
        def _():
            y1p[TH + 1:TH + 2, :, :] = jnp.zeros((1, Wb, Co), jnp.float32)

        # ---- conv2 + SELU (+ SELU) ----
        cdt = w2_ref.dtype
        acc2 = conv3x3(lambda kh: y1p[kh:kh + TH].astype(cdt), w2_ref, TH)
        y = _selu(acc2 + b2_ref[...])
        if double_selu:
            y = _selu(y)
        y = y.reshape(TH, Wb, Co)[:, 0:W, :]
        y2_ref[...] = y

        if with_stats:
            # Single-sweep per-tile partials for tiled BatchNorm (finalized outside).
            flat = y.reshape(TH * W, Co)
            ssum_ref[...] = jnp.sum(flat, axis=0, keepdims=True)
            ssq_ref[...] = jnp.sum(flat * flat, axis=0, keepdims=True)

    return kernel


def _bn_apply_kernel(y_ref, scale_ref, shift_ref, o_ref):
    # Lane-dense, memory-bound normalize pass: y * scale + shift (in place).
    o_ref[...] = y_ref[...] * scale_ref[...] + shift_ref[...]


# ---------------- wrapper ----------------

def conv_block_forward(x_nchw, params, activ=True, compute_dtype="float32",
                       max_tile_rows=None):
    w1, b1, w2, b2, gamma, beta = params
    cdt = jnp.dtype(compute_dtype)
    N, Cin, H, W = x_nchw.shape
    Cout = w1.shape[-1]
    Cip = _channel_width(Cin)
    Cop = _channel_width(Cout)
    Wb = _round_up(W + 1, 8)          # band width: >=1 zero column, 8-sublane aligned

    budget = _vmem_budget_bytes()
    TH = _pick_tile_rows(H, W, Wb, Cip, Cop, (budget * 8) // 10, max_tile_rows)
    ntiles = H // TH

    # NCHW -> NHWC; 2-row top/bottom zero pad (conv1 halo recompute), right pad to
    # the aligned band width, channel pad only when lane padding is enabled.
    x = jnp.transpose(x_nchw, (0, 2, 3, 1)).astype(cdt)
    xp = jnp.pad(x, ((0, 0), (2, 2), (0, Wb - W), (0, Cip - Cin)))
    if ntiles == 1:
        xp_tiles = xp[:, None]
    else:
        xp_tiles = jnp.stack(
            [xp[:, t * TH:t * TH + TH + 4] for t in range(ntiles)], axis=1)

    w1p = jnp.pad(w1.reshape(9, Cin, Cout).astype(cdt),
                  ((0, 0), (0, Cip - Cin), (0, Cop - Cout)))
    w2p = jnp.pad(w2.reshape(9, Cout, Cout).astype(cdt),
                  ((0, 0), (0, Cop - Cout), (0, Cop - Cout)))
    b1p = jnp.pad(b1.astype(jnp.float32), (0, Cop - Cout)).reshape(1, Cop)
    b2p = jnp.pad(b2.astype(jnp.float32), (0, Cop - Cout)).reshape(1, Cop)

    grid = (N, ntiles)
    cparams = pltpu.CompilerParams(
        dimension_semantics=("parallel", "parallel"),   # batch + row tiles -> megacore
        vmem_limit_bytes=budget)

    in_specs = [
        pl.BlockSpec((None, None, TH + 4, Wb, Cip), lambda n, t: (n, t, 0, 0, 0)),
        pl.BlockSpec((9, Cip, Cop), lambda n, t: (0, 0, 0)),
        pl.BlockSpec((1, Cop), lambda n, t: (0, 0)),
        pl.BlockSpec((9, Cop, Cop), lambda n, t: (0, 0, 0)),
        pl.BlockSpec((1, Cop), lambda n, t: (0, 0)),
    ]
    y2_spec = pl.BlockSpec((None, TH, W, Cop), lambda n, t: (n, t, 0, 0))
    scratch = [pltpu.VMEM((TH + 2, Wb, Cop), jnp.float32)]   # staged conv1 output

    if activ:
        kernel = _make_conv_block_kernel(double_selu=True, with_stats=True)
        stat_spec = pl.BlockSpec((None, None, 1, Cop), lambda n, t: (n, t, 0, 0))
        y2, psum, psq = pl.pallas_call(
            kernel,
            out_shape=(jax.ShapeDtypeStruct((N, H, W, Cop), jnp.float32),
                       jax.ShapeDtypeStruct((N, ntiles, 1, Cop), jnp.float32),
                       jax.ShapeDtypeStruct((N, ntiles, 1, Cop), jnp.float32)),
            grid=grid,
            in_specs=in_specs,
            out_specs=(y2_spec, stat_spec, stat_spec),
            scratch_shapes=scratch,
            compiler_params=cparams,
        )(xp_tiles, w1p, b1p, w2p, b2p)

        # Finalize batch statistics (tiny per-channel reduction, biased variance).
        cnt = jnp.float32(N * H * W)
        mean = jnp.sum(psum, axis=(0, 1, 2)) / cnt
        ex2 = jnp.sum(psq, axis=(0, 1, 2)) / cnt
        var = jnp.maximum(ex2 - mean * mean, 0.0)
        gamma_p = jnp.pad(gamma.astype(jnp.float32), (0, Cop - Cout))
        beta_p = jnp.pad(beta.astype(jnp.float32), (0, Cop - Cout))
        scale = gamma_p * lax.rsqrt(var + BN_EPS)
        shift = beta_p - mean * scale

        out_p = pl.pallas_call(
            _bn_apply_kernel,
            out_shape=jax.ShapeDtypeStruct((N, H, W, Cop), jnp.float32),
            grid=grid,
            in_specs=[y2_spec,
                      pl.BlockSpec((1, Cop), lambda n, t: (0, 0)),
                      pl.BlockSpec((1, Cop), lambda n, t: (0, 0))],
            out_specs=y2_spec,
            input_output_aliases={0: 0},      # normalize y2 in place (no extra HBM copy)
            compiler_params=cparams,
        )(y2, scale.reshape(1, Cop), shift.reshape(1, Cop))
    else:
        kernel = _make_conv_block_kernel(double_selu=False, with_stats=False)
        out_p = pl.pallas_call(
            kernel,
            out_shape=jax.ShapeDtypeStruct((N, H, W, Cop), jnp.float32),
            grid=grid,
            in_specs=in_specs,
            out_specs=y2_spec,
            scratch_shapes=scratch,
            compiler_params=cparams,
        )(xp_tiles, w1p, b1p, w2p, b2p)

    out = out_p if Cop == Cout else out_p[..., :Cout]
    return jnp.transpose(out, (0, 3, 1, 2))               # back to NCHW


# ---------------- pure-JAX reference (verification) ----------------

def conv_block_reference(x_nchw, params, activ=True):
    w1, b1, w2, b2, gamma, beta = params
    x = jnp.transpose(x_nchw, (0, 2, 3, 1)).astype(jnp.float32)
    dn = ("NHWC", "HWIO", "NHWC")
    y = lax.conv_general_dilated(x, w1, (1, 1), "SAME", dimension_numbers=dn) + b1
    y = lax.conv_general_dilated(y, w2, (1, 1), "SAME", dimension_numbers=dn) + b2
    y = _selu(y)
    if activ:
        y = _selu(y)
        mean = jnp.mean(y, axis=(0, 1, 2), keepdims=True)
        var = jnp.mean((y - mean) ** 2, axis=(0, 1, 2), keepdims=True)
        y = gamma * (y - mean) / jnp.sqrt(var + BN_EPS) + beta
    return jnp.transpose(y, (0, 3, 1, 2))


# ---------------- parameter init (PyTorch-default-style) ----------------

def init_params(key, in_c, out_c, k=3):
    k1, k2, k3, k4 = jax.random.split(key, 4)
    fan1 = in_c * k * k
    bound1 = 1.0 / math.sqrt(fan1)
    w1 = jax.random.uniform(k1, (k, k, in_c, out_c), jnp.float32, -bound1, bound1)
    b1 = jax.random.uniform(k2, (out_c,), jnp.float32, -bound1, bound1)
    fan2 = out_c * k * k
    bound2 = 1.0 / math.sqrt(fan2)
    w2 = jax.random.uniform(k3, (k, k, out_c, out_c), jnp.float32, -bound2, bound2)
    b2 = jax.random.uniform(k4, (out_c,), jnp.float32, -bound2, bound2)
    gamma = jnp.ones((out_c,), jnp.float32)   # BatchNorm2d default weight
    beta = jnp.zeros((out_c,), jnp.float32)   # BatchNorm2d default bias
    return (w1, b1, w2, b2, gamma, beta)


if __name__ == "__main__":
    N, in_c, out_c, H, W = 2, 4, 8, 16, 16
    key = jax.random.PRNGKey(0)
    kx, kp = jax.random.split(key)
    x = jax.random.normal(kx, (N, in_c, H, W), jnp.float32)   # NCHW like PyTorch
    params = init_params(kp, in_c, out_c)

    fwd = jax.jit(conv_block_forward,
                  static_argnames=("activ", "compute_dtype", "max_tile_rows"))

    ref = jax.block_until_ready(conv_block_reference(x, params, True))
    ref_na = jax.block_until_ready(conv_block_reference(x, params, False))

    # f32 path, auto tile size.
    out = jax.block_until_ready(fwd(x, params, activ=True))
    np.testing.assert_allclose(np.asarray(out), np.asarray(ref), rtol=5e-4, atol=5e-4)

    # activ=False path (single SELU, no BatchNorm).
    out_na = jax.block_until_ready(fwd(x, params, activ=False))
    np.testing.assert_allclose(np.asarray(out_na), np.asarray(ref_na),
                               rtol=5e-4, atol=5e-4)

    # Forced row tiling (2 tiles of 8 rows) exercises the halo-recompute path.
    out_t = jax.block_until_ready(fwd(x, params, activ=True, max_tile_rows=8))
    np.testing.assert_allclose(np.asarray(out_t), np.asarray(ref), rtol=5e-4, atol=5e-4)

    # bf16 MXU operands with f32 accumulation (loose-tolerance sanity check).
    out_bf = jax.block_until_ready(
        fwd(x, params, activ=True, compute_dtype="bfloat16"))
    np.testing.assert_allclose(np.asarray(out_bf), np.asarray(ref), rtol=2e-1, atol=2e-1)

    assert out.shape == (N, out_c, H, W)
    print("KERNEL_OK")
</pallas_src>

<mosaic_0001>
module attributes {stable_mosaic.version = 11 : i64} {
  func.func @kernel(%arg0: i32, %arg1: i32, %arg2: memref<1x1x20x24x4xf32, #tpu.memory_space<vmem>>, %arg3: memref<9x4x8xf32, #tpu.memory_space<vmem>>, %arg4: memref<1x8xf32, #tpu.memory_space<vmem>>, %arg5: memref<9x8x8xf32, #tpu.memory_space<vmem>>, %arg6: memref<1x8xf32, #tpu.memory_space<vmem>>, %arg7: memref<1x16x16x8xf32, #tpu.memory_space<vmem>>, %arg8: memref<1x1x1x8xf32, #tpu.memory_space<vmem>>, %arg9: memref<1x1x1x8xf32, #tpu.memory_space<vmem>>, %arg10: memref<18x24x8xf32, #tpu.memory_space<vmem>>) attributes {dimension_semantics = [#tpu.dimension_semantics<parallel>, #tpu.dimension_semantics<parallel>], iteration_bounds = array<i64: 2, 1>, scalar_prefetch = 0 : i64, scratch_operands = 1 : i64, tpu.core_type = #tpu.core_type<tc>, window_params = [{transform_indices = @transform_0, window_bounds = array<i64: 1, 1, 20, 24, 4>}, {pipeline_mode = #tpu.pipeline_mode<synchronous>, transform_indices = @transform_1, window_bounds = array<i64: 9, 4, 8>}, {pipeline_mode = #tpu.pipeline_mode<synchronous>, transform_indices = @transform_2, window_bounds = array<i64: 1, 8>}, {pipeline_mode = #tpu.pipeline_mode<synchronous>, transform_indices = @transform_3, window_bounds = array<i64: 9, 8, 8>}, {pipeline_mode = #tpu.pipeline_mode<synchronous>, transform_indices = @transform_4, window_bounds = array<i64: 1, 8>}, {transform_indices = @transform_5, window_bounds = array<i64: 1, 16, 16, 8>}, {transform_indices = @transform_6, window_bounds = array<i64: 1, 1, 1, 8>}, {transform_indices = @transform_7, window_bounds = array<i64: 1, 1, 1, 8>}]} {
    %c0 = arith.constant 0 : index
    %c0_0 = arith.constant 0 : index
    %c0_1 = arith.constant 0 : index
    %c0_2 = arith.constant 0 : index
    %c0_3 = arith.constant 0 : index
    %0 = vector.load %arg2[%c0, %c0_0, %c0_1, %c0_2, %c0_3] : memref<1x1x20x24x4xf32, #tpu.memory_space<vmem>>, vector<1x1x18x24x4xf32>
    %1 = vector.shape_cast %0 : vector<1x1x18x24x4xf32> to vector<18x24x4xf32>
    %2 = vector.shape_cast %1 : vector<18x24x4xf32> to vector<432x4xf32>
    %c0_4 = arith.constant 0 : index
    %c0_5 = arith.constant 0 : index
    %c0_6 = arith.constant 0 : index
    %3 = vector.load %arg3[%c0_4, %c0_5, %c0_6] : memref<9x4x8xf32, #tpu.memory_space<vmem>>, vector<1x4x8xf32>
    %4 = vector.shape_cast %3 : vector<1x4x8xf32> to vector<4x8xf32>
    %cst = arith.constant dense<0.000000e+00> : vector<432x8xf32>
    %5 = tpu.matmul %2, %4, %cst {dimension_numbers = #tpu.dot_dimension_numbers<[1], [0], [0], [1], [0, 0, 1, 1], [], []>} : vector<432x4xf32>, vector<4x8xf32>, vector<432x8xf32> -> vector<432x8xf32>
    %c1 = arith.constant 1 : index
    %c0_7 = arith.constant 0 : index
    %c0_8 = arith.constant 0 : index
    %6 = vector.load %arg3[%c1, %c0_7, %c0_8] : memref<9x4x8xf32, #tpu.memory_space<vmem>>, vector<1x4x8xf32>
    %7 = vector.shape_cast %6 : vector<1x4x8xf32> to vector<4x8xf32>
    %cst_9 = arith.constant dense<0.000000e+00> : vector<432x8xf32>
    %8 = tpu.matmul %2, %7, %cst_9 {dimension_numbers = #tpu.dot_dimension_numbers<[1], [0], [0], [1], [0, 0, 1, 1], [], []>} : vector<432x4xf32>, vector<4x8xf32>, vector<432x8xf32> -> vector<432x8xf32>
    %c2 = arith.constant 2 : index
    %c0_10 = arith.constant 0 : index
    %c0_11 = arith.constant 0 : index
    %9 = vector.load %arg3[%c2, %c0_10, %c0_11] : memref<9x4x8xf32, #tpu.memory_space<vmem>>, vector<1x4x8xf32>
    %10 = vector.shape_cast %9 : vector<1x4x8xf32> to vector<4x8xf32>
    %cst_12 = arith.constant dense<0.000000e+00> : vector<432x8xf32>
    %11 = tpu.matmul %2, %10, %cst_12 {dimension_numbers = #tpu.dot_dimension_numbers<[1], [0], [0], [1], [0, 0, 1, 1], [], []>} : vector<432x4xf32>, vector<4x8xf32>, vector<432x8xf32> -> vector<432x8xf32>
    %c0_13 = arith.constant 0 : index
    %c0_14 = arith.constant 0 : index
    %c1_15 = arith.constant 1 : index
    %c0_16 = arith.constant 0 : index
    %c0_17 = arith.constant 0 : index
    %12 = vector.load %arg2[%c0_13, %c0_14, %c1_15, %c0_16, %c0_17] : memref<1x1x20x24x4xf32, #tpu.memory_space<vmem>>, vector<1x1x18x24x4xf32>
    %13 = vector.shape_cast %12 : vector<1x1x18x24x4xf32> to vector<18x24x4xf32>
    %14 = vector.shape_cast %13 : vector<18x24x4xf32> to vector<432x4xf32>
    %c3 = arith.constant 3 : index
    %c0_18 = arith.constant 0 : index
    %c0_19 = arith.constant 0 : index
    %15 = vector.load %arg3[%c3, %c0_18, %c0_19] : memref<9x4x8xf32, #tpu.memory_space<vmem>>, vector<1x4x8xf32>
    %16 = vector.shape_cast %15 : vector<1x4x8xf32> to vector<4x8xf32>
    %cst_20 = arith.constant dense<0.000000e+00> : vector<432x8xf32>
    %17 = tpu.matmul %14, %16, %cst_20 {dimension_numbers = #tpu.dot_dimension_numbers<[1], [0], [0], [1], [0, 0, 1, 1], [], []>} : vector<432x4xf32>, vector<4x8xf32>, vector<432x8xf32> -> vector<432x8xf32>
    %18 = arith.addf %5, %17 : vector<432x8xf32>
    %c4 = arith.constant 4 : index
    %c0_21 = arith.constant 0 : index
    %c0_22 = arith.constant 0 : index
    %19 = vector.load %arg3[%c4, %c0_21, %c0_22] : memref<9x4x8xf32, #tpu.memory_space<vmem>>, vector<1x4x8xf32>
    %20 = vector.shape_cast %19 : vector<1x4x8xf32> to vector<4x8xf32>
    %cst_23 = arith.constant dense<0.000000e+00> : vector<432x8xf32>
    %21 = tpu.matmul %14, %20, %cst_23 {dimension_numbers = #tpu.dot_dimension_numbers<[1], [0], [0], [1], [0, 0, 1, 1], [], []>} : vector<432x4xf32>, vector<4x8xf32>, vector<432x8xf32> -> vector<432x8xf32>
    %22 = arith.addf %8, %21 : vector<432x8xf32>
    %c5 = arith.constant 5 : index
    %c0_24 = arith.constant 0 : index
    %c0_25 = arith.constant 0 : index
    %23 = vector.load %arg3[%c5, %c0_24, %c0_25] : memref<9x4x8xf32, #tpu.memory_space<vmem>>, vector<1x4x8xf32>
    %24 = vector.shape_cast %23 : vector<1x4x8xf32> to vector<4x8xf32>
    %cst_26 = arith.constant dense<0.000000e+00> : vector<432x8xf32>
    %25 = tpu.matmul %14, %24, %cst_26 {dimension_numbers = #tpu.dot_dimension_numbers<[1], [0], [0], [1], [0, 0, 1, 1], [], []>} : vector<432x4xf32>, vector<4x8xf32>, vector<432x8xf32> -> vector<432x8xf32>
    %26 = arith.addf %11, %25 : vector<432x8xf32>
    %c0_27 = arith.constant 0 : index
    %c0_28 = arith.constant 0 : index
    %c2_29 = arith.constant 2 : index
    %c0_30 = arith.constant 0 : index
    %c0_31 = arith.constant 0 : index
    %27 = vector.load %arg2[%c0_27, %c0_28, %c2_29, %c0_30, %c0_31] : memref<1x1x20x24x4xf32, #tpu.memory_space<vmem>>, vector<1x1x18x24x4xf32>
    %28 = vector.shape_cast %27 : vector<1x1x18x24x4xf32> to vector<18x24x4xf32>
    %29 = vector.shape_cast %28 : vector<18x24x4xf32> to vector<432x4xf32>
    %c6 = arith.constant 6 : index
    %c0_32 = arith.constant 0 : index
    %c0_33 = arith.constant 0 : index
    %30 = vector.load %arg3[%c6, %c0_32, %c0_33] : memref<9x4x8xf32, #tpu.memory_space<vmem>>, vector<1x4x8xf32>
    %31 = vector.shape_cast %30 : vector<1x4x8xf32> to vector<4x8xf32>
    %cst_34 = arith.constant dense<0.000000e+00> : vector<432x8xf32>
    %32 = tpu.matmul %29, %31, %cst_34 {dimension_numbers = #tpu.dot_dimension_numbers<[1], [0], [0], [1], [0, 0, 1, 1], [], []>} : vector<432x4xf32>, vector<4x8xf32>, vector<432x8xf32> -> vector<432x8xf32>
    %33 = arith.addf %18, %32 : vector<432x8xf32>
    %c7 = arith.constant 7 : index
    %c0_35 = arith.constant 0 : index
    %c0_36 = arith.constant 0 : index
    %34 = vector.load %arg3[%c7, %c0_35, %c0_36] : memref<9x4x8xf32, #tpu.memory_space<vmem>>, vector<1x4x8xf32>
    %35 = vector.shape_cast %34 : vector<1x4x8xf32> to vector<4x8xf32>
    %cst_37 = arith.constant dense<0.000000e+00> : vector<432x8xf32>
    %36 = tpu.matmul %29, %35, %cst_37 {dimension_numbers = #tpu.dot_dimension_numbers<[1], [0], [0], [1], [0, 0, 1, 1], [], []>} : vector<432x4xf32>, vector<4x8xf32>, vector<432x8xf32> -> vector<432x8xf32>
    %37 = arith.addf %22, %36 : vector<432x8xf32>
    %c8 = arith.constant 8 : index
    %c0_38 = arith.constant 0 : index
    %c0_39 = arith.constant 0 : index
    %38 = vector.load %arg3[%c8, %c0_38, %c0_39] : memref<9x4x8xf32, #tpu.memory_space<vmem>>, vector<1x4x8xf32>
    %39 = vector.shape_cast %38 : vector<1x4x8xf32> to vector<4x8xf32>
    %cst_40 = arith.constant dense<0.000000e+00> : vector<432x8xf32>
    %40 = tpu.matmul %29, %39, %cst_40 {dimension_numbers = #tpu.dot_dimension_numbers<[1], [0], [0], [1], [0, 0, 1, 1], [], []>} : vector<432x4xf32>, vector<4x8xf32>, vector<432x8xf32> -> vector<432x8xf32>
    %41 = arith.addf %26, %40 : vector<432x8xf32>
    %c1_i32 = arith.constant 1 : i32
    %42 = tpu.dynamic_rotate %33 by %c1_i32 dim 0 : vector<432x8xf32>, i32 -> vector<432x8xf32>
    %43 = arith.addf %37, %42 : vector<432x8xf32>
    %c431_i32 = arith.constant 431 : i32
    %44 = tpu.dynamic_rotate %41 by %c431_i32 dim 0 : vector<432x8xf32>, i32 -> vector<432x8xf32>
    %45 = arith.addf %43, %44 : vector<432x8xf32>
    %c0_41 = arith.constant 0 : index
    %c0_42 = arith.constant 0 : index
    %46 = vector.load %arg4[%c0_41, %c0_42] : memref<1x8xf32, #tpu.memory_space<vmem>>, vector<1x8xf32>
    %47 = vector.broadcast %46 : vector<1x8xf32> to vector<432x8xf32>
    %48 = arith.addf %45, %47 : vector<432x8xf32>
    %49 = vector.shape_cast %48 : vector<432x8xf32> to vector<18x24x8xf32>
    %50 = vector.extract_strided_slice %49 {offsets = [0, 0, 0], sizes = [18, 16, 8], strides = [1, 1, 1]} : vector<18x24x8xf32> to vector<18x16x8xf32>
    %c0_43 = arith.constant 0 : index
    %c0_44 = arith.constant 0 : index
    %c0_45 = arith.constant 0 : index
    %51 = vector.load %arg10[%c0_43, %c0_44, %c0_45] : memref<18x24x8xf32, #tpu.memory_space<vmem>>, vector<18x16x8xf32>
    tpu.vector_store %arg10[%c0_43, %c0_44, %c0_45], %50 {strides = array<i32>} : memref<18x24x8xf32, #tpu.memory_space<vmem>>, vector<18x16x8xf32>,
    %cst_46 = arith.constant 0.000000e+00 : f32
    %52 = vector.broadcast %cst_46 : f32 to vector<18x8x8xf32>
    %c0_47 = arith.constant 0 : index
    %c16 = arith.constant 16 : index
    %c0_48 = arith.constant 0 : index
    %53 = vector.load %arg10[%c0_47, %c16, %c0_48] : memref<18x24x8xf32, #tpu.memory_space<vmem>>, vector<18x8x8xf32>
    tpu.vector_store %arg10[%c0_47, %c16, %c0_48], %52 {strides = array<i32>} : memref<18x24x8xf32, #tpu.memory_space<vmem>>, vector<18x8x8xf32>,
    %c0_i32 = arith.constant 0 : i32
    %54 = arith.cmpi eq, %arg1, %c0_i32 : i32
    %55 = arith.extui %54 : i1 to i32
    %c0_i32_49 = arith.constant 0 : i32
    %56 = arith.cmpi ne, %55, %c0_i32_49 : i32
    scf.if %56 {
      %cst_124 = arith.constant 0.000000e+00 : f32
      %147 = vector.broadcast %cst_124 : f32 to vector<1x24x8xf32>
      %c0_125 = arith.constant 0 : index
      %c0_126 = arith.constant 0 : index
      %c0_127 = arith.constant 0 : index
      %148 = vector.load %arg10[%c0_125, %c0_126, %c0_127] : memref<18x24x8xf32, #tpu.memory_space<vmem>>, vector<1x24x8xf32>
      tpu.vector_store %arg10[%c0_125, %c0_126, %c0_127], %147 {strides = array<i32>} : memref<18x24x8xf32, #tpu.memory_space<vmem>>, vector<1x24x8xf32>,
    } else {
    }
    %c0_i32_50 = arith.constant 0 : i32
    %57 = arith.cmpi eq, %arg1, %c0_i32_50 : i32
    %58 = arith.extui %57 : i1 to i32
    %c0_i32_51 = arith.constant 0 : i32
    %59 = arith.cmpi ne, %58, %c0_i32_51 : i32
    scf.if %59 {
      %cst_124 = arith.constant 0.000000e+00 : f32
      %147 = vector.broadcast %cst_124 : f32 to vector<1x24x8xf32>
      %c17 = arith.constant 17 : index
      %c0_125 = arith.constant 0 : index
      %c0_126 = arith.constant 0 : index
      %148 = vector.load %arg10[%c17, %c0_125, %c0_126] : memref<18x24x8xf32, #tpu.memory_space<vmem>>, vector<1x24x8xf32>
      tpu.vector_store %arg10[%c17, %c0_125, %c0_126], %147 {strides = array<i32>} : memref<18x24x8xf32, #tpu.memory_space<vmem>>, vector<1x24x8xf32>,
    } else {
    }
    %c0_52 = arith.constant 0 : index
    %c0_53 = arith.constant 0 : index
    %c0_54 = arith.constant 0 : index
    %60 = vector.load %arg10[%c0_52, %c0_53, %c0_54] : memref<18x24x8xf32, #tpu.memory_space<vmem>>, vector<16x24x8xf32>
    %61 = vector.shape_cast %60 : vector<16x24x8xf32> to vector<384x8xf32>
    %c0_55 = arith.constant 0 : index
    %c0_56 = arith.constant 0 : index
    %c0_57 = arith.constant 0 : index
    %62 = vector.load %arg5[%c0_55, %c0_56, %c0_57] : memref<9x8x8xf32, #tpu.memory_space<vmem>>, vector<1x8x8xf32>
    %63 = vector.shape_cast %62 : vector<1x8x8xf32> to vector<8x8xf32>
    %cst_58 = arith.constant dense<0.000000e+00> : vector<384x8xf32>
    %64 = tpu.matmul %61, %63, %cst_58 {dimension_numbers = #tpu.dot_dimension_numbers<[1], [0], [0], [1], [0, 0, 1, 1], [], []>} : vector<384x8xf32>, vector<8x8xf32>, vector<384x8xf32> -> vector<384x8xf32>
    %c1_59 = arith.constant 1 : index
    %c0_60 = arith.constant 0 : index
    %c0_61 = arith.constant 0 : index
    %65 = vector.load %arg5[%c1_59, %c0_60, %c0_61] : memref<9x8x8xf32, #tpu.memory_space<vmem>>, vector<1x8x8xf32>
    %66 = vector.shape_cast %65 : vector<1x8x8xf32> to vector<8x8xf32>
    %cst_62 = arith.constant dense<0.000000e+00> : vector<384x8xf32>
    %67 = tpu.matmul %61, %66, %cst_62 {dimension_numbers = #tpu.dot_dimension_numbers<[1], [0], [0], [1], [0, 0, 1, 1], [], []>} : vector<384x8xf32>, vector<8x8xf32>, vector<384x8xf32> -> vector<384x8xf32>
    %c2_63 = arith.constant 2 : index
    %c0_64 = arith.constant 0 : index
    %c0_65 = arith.constant 0 : index
    %68 = vector.load %arg5[%c2_63, %c0_64, %c0_65] : memref<9x8x8xf32, #tpu.memory_space<vmem>>, vector<1x8x8xf32>
    %69 = vector.shape_cast %68 : vector<1x8x8xf32> to vector<8x8xf32>
    %cst_66 = arith.constant dense<0.000000e+00> : vector<384x8xf32>
    %70 = tpu.matmul %61, %69, %cst_66 {dimension_numbers = #tpu.dot_dimension_numbers<[1], [0], [0], [1], [0, 0, 1, 1], [], []>} : vector<384x8xf32>, vector<8x8xf32>, vector<384x8xf32> -> vector<384x8xf32>
    %c1_67 = arith.constant 1 : index
    %c0_68 = arith.constant 0 : index
    %c0_69 = arith.constant 0 : index
    %71 = vector.load %arg10[%c1_67, %c0_68, %c0_69] : memref<18x24x8xf32, #tpu.memory_space<vmem>>, vector<16x24x8xf32>
    %72 = vector.shape_cast %71 : vector<16x24x8xf32> to vector<384x8xf32>
    %c3_70 = arith.constant 3 : index
    %c0_71 = arith.constant 0 : index
    %c0_72 = arith.constant 0 : index
    %73 = vector.load %arg5[%c3_70, %c0_71, %c0_72] : memref<9x8x8xf32, #tpu.memory_space<vmem>>, vector<1x8x8xf32>
    %74 = vector.shape_cast %73 : vector<1x8x8xf32> to vector<8x8xf32>
    %cst_73 = arith.constant dense<0.000000e+00> : vector<384x8xf32>
    %75 = tpu.matmul %72, %74, %cst_73 {dimension_numbers = #tpu.dot_dimension_numbers<[1], [0], [0], [1], [0, 0, 1, 1], [], []>} : vector<384x8xf32>, vector<8x8xf32>, vector<384x8xf32> -> vector<384x8xf32>
    %76 = arith.addf %64, %75 : vector<384x8xf32>
    %c4_74 = arith.constant 4 : index
    %c0_75 = arith.constant 0 : index
    %c0_76 = arith.constant 0 : index
    %77 = vector.load %arg5[%c4_74, %c0_75, %c0_76] : memref<9x8x8xf32, #tpu.memory_space<vmem>>, vector<1x8x8xf32>
    %78 = vector.shape_cast %77 : vector<1x8x8xf32> to vector<8x8xf32>
    %cst_77 = arith.constant dense<0.000000e+00> : vector<384x8xf32>
    %79 = tpu.matmul %72, %78, %cst_77 {dimension_numbers = #tpu.dot_dimension_numbers<[1], [0], [0], [1], [0, 0, 1, 1], [], []>} : vector<384x8xf32>, vector<8x8xf32>, vector<384x8xf32> -> vector<384x8xf32>
    %80 = arith.addf %67, %79 : vector<384x8xf32>
    %c5_78 = arith.constant 5 : index
    %c0_79 = arith.constant 0 : index
    %c0_80 = arith.constant 0 : index
    %81 = vector.load %arg5[%c5_78, %c0_79, %c0_80] : memref<9x8x8xf32, #tpu.memory_space<vmem>>, vector<1x8x8xf32>
    %82 = vector.shape_cast %81 : vector<1x8x8xf32> to vector<8x8xf32>
    %cst_81 = arith.constant dense<0.000000e+00> : vector<384x8xf32>
    %83 = tpu.matmul %72, %82, %cst_81 {dimension_numbers = #tpu.dot_dimension_numbers<[1], [0], [0], [1], [0, 0, 1, 1], [], []>} : vector<384x8xf32>, vector<8x8xf32>, vector<384x8xf32> -> vector<384x8xf32>
    %84 = arith.addf %70, %83 : vector<384x8xf32>
    %c2_82 = arith.constant 2 : index
    %c0_83 = arith.constant 0 : index
    %c0_84 = arith.constant 0 : index
    %85 = vector.load %arg10[%c2_82, %c0_83, %c0_84] : memref<18x24x8xf32, #tpu.memory_space<vmem>>, vector<16x24x8xf32>
    %86 = vector.shape_cast %85 : vector<16x24x8xf32> to vector<384x8xf32>
    %c6_85 = arith.constant 6 : index
    %c0_86 = arith.constant 0 : index
    %c0_87 = arith.constant 0 : index
    %87 = vector.load %arg5[%c6_85, %c0_86, %c0_87] : memref<9x8x8xf32, #tpu.memory_space<vmem>>, vector<1x8x8xf32>
    %88 = vector.shape_cast %87 : vector<1x8x8xf32> to vector<8x8xf32>
    %cst_88 = arith.constant dense<0.000000e+00> : vector<384x8xf32>
    %89 = tpu.matmul %86, %88, %cst_88 {dimension_numbers = #tpu.dot_dimension_numbers<[1], [0], [0], [1], [0, 0, 1, 1], [], []>} : vector<384x8xf32>, vector<8x8xf32>, vector<384x8xf32> -> vector<384x8xf32>
    %90 = arith.addf %76, %89 : vector<384x8xf32>
    %c7_89 = arith.constant 7 : index
    %c0_90 = arith.constant 0 : index
    %c0_91 = arith.constant 0 : index
    %91 = vector.load %arg5[%c7_89, %c0_90, %c0_91] : memref<9x8x8xf32, #tpu.memory_space<vmem>>, vector<1x8x8xf32>
    %92 = vector.shape_cast %91 : vector<1x8x8xf32> to vector<8x8xf32>
    %cst_92 = arith.constant dense<0.000000e+00> : vector<384x8xf32>
    %93 = tpu.matmul %86, %92, %cst_92 {dimension_numbers = #tpu.dot_dimension_numbers<[1], [0], [0], [1], [0, 0, 1, 1], [], []>} : vector<384x8xf32>, vector<8x8xf32>, vector<384x8xf32> -> vector<384x8xf32>
    %94 = arith.addf %80, %93 : vector<384x8xf32>
    %c8_93 = arith.constant 8 : index
    %c0_94 = arith.constant 0 : index
    %c0_95 = arith.constant 0 : index
    %95 = vector.load %arg5[%c8_93, %c0_94, %c0_95] : memref<9x8x8xf32, #tpu.memory_space<vmem>>, vector<1x8x8xf32>
    %96 = vector.shape_cast %95 : vector<1x8x8xf32> to vector<8x8xf32>
    %cst_96 = arith.constant dense<0.000000e+00> : vector<384x8xf32>
    %97 = tpu.matmul %86, %96, %cst_96 {dimension_numbers = #tpu.dot_dimension_numbers<[1], [0], [0], [1], [0, 0, 1, 1], [], []>} : vector<384x8xf32>, vector<8x8xf32>, vector<384x8xf32> -> vector<384x8xf32>
    %98 = arith.addf %84, %97 : vector<384x8xf32>
    %c1_i32_97 = arith.constant 1 : i32
    %99 = tpu.dynamic_rotate %90 by %c1_i32_97 dim 0 : vector<384x8xf32>, i32 -> vector<384x8xf32>
    %100 = arith.addf %94, %99 : vector<384x8xf32>
    %c383_i32 = arith.constant 383 : i32
    %101 = tpu.dynamic_rotate %98 by %c383_i32 dim 0 : vector<384x8xf32>, i32 -> vector<384x8xf32>
    %102 = arith.addf %100, %101 : vector<384x8xf32>
    %c0_98 = arith.constant 0 : index
    %c0_99 = arith.constant 0 : index
    %103 = vector.load %arg6[%c0_98, %c0_99] : memref<1x8xf32, #tpu.memory_space<vmem>>, vector<1x8xf32>
    %104 = vector.broadcast %103 : vector<1x8xf32> to vector<384x8xf32>
    %105 = arith.addf %102, %104 : vector<384x8xf32>
    %cst_100 = arith.constant 0.000000e+00 : f32
    %106 = vector.broadcast %cst_100 : f32 to vector<384x8xf32>
    %107 = arith.cmpf ogt, %105, %106 : vector<384x8xf32>
    %cst_101 = arith.constant 0.000000e+00 : f32
    %108 = vector.broadcast %cst_101 : f32 to vector<384x8xf32>
    %109 = arith.minimumf %105, %108 : vector<384x8xf32>
    %110 = math.exp %109 : vector<384x8xf32>
    %cst_102 = arith.constant 1.000000e+00 : f32
    %111 = vector.broadcast %cst_102 : f32 to vector<384x8xf32>
    %112 = arith.subf %110, %111 : vector<384x8xf32>
    %cst_103 = arith.constant 1.67326319 : f32
    %113 = vector.broadcast %cst_103 : f32 to vector<384x8xf32>
    %114 = arith.mulf %113, %112 : vector<384x8xf32>
    %115 = arith.select %107, %105, %114 : vector<384x8xi1>, vector<384x8xf32>
    %cst_104 = arith.constant 1.05070102 : f32
    %116 = vector.broadcast %cst_104 : f32 to vector<384x8xf32>
    %117 = arith.mulf %116, %115 : vector<384x8xf32>
    %cst_105 = arith.constant 0.000000e+00 : f32
    %118 = vector.broadcast %cst_105 : f32 to vector<384x8xf32>
    %119 = arith.cmpf ogt, %117, %118 : vector<384x8xf32>
    %cst_106 = arith.constant 0.000000e+00 : f32
    %120 = vector.broadcast %cst_106 : f32 to vector<384x8xf32>
    %121 = arith.minimumf %117, %120 : vector<384x8xf32>
    %122 = math.exp %121 : vector<384x8xf32>
    %cst_107 = arith.constant 1.000000e+00 : f32
    %123 = vector.broadcast %cst_107 : f32 to vector<384x8xf32>
    %124 = arith.subf %122, %123 : vector<384x8xf32>
    %cst_108 = arith.constant 1.67326319 : f32
    %125 = vector.broadcast %cst_108 : f32 to vector<384x8xf32>
    %126 = arith.mulf %125, %124 : vector<384x8xf32>
    %127 = arith.select %119, %117, %126 : vector<384x8xi1>, vector<384x8xf32>
    %cst_109 = arith.constant 1.05070102 : f32
    %128 = vector.broadcast %cst_109 : f32 to vector<384x8xf32>
    %129 = arith.mulf %128, %127 : vector<384x8xf32>
    %130 = vector.shape_cast %129 : vector<384x8xf32> to vector<16x24x8xf32>
    %131 = vector.extract_strided_slice %130 {offsets = [0, 0, 0], sizes = [16, 16, 8], strides = [1, 1, 1]} : vector<16x24x8xf32> to vector<16x16x8xf32>
    %c0_110 = arith.constant 0 : index
    %c0_111 = arith.constant 0 : index
    %c0_112 = arith.constant 0 : index
    %c0_113 = arith.constant 0 : index
    %132 = vector.load %arg7[%c0_110, %c0_111, %c0_112, %c0_113] : memref<1x16x16x8xf32, #tpu.memory_space<vmem>>, vector<1x16x16x8xf32>
    %133 = vector.shape_cast %132 : vector<1x16x16x8xf32> to vector<16x16x8xf32>
    %134 = vector.shape_cast %131 : vector<16x16x8xf32> to vector<1x16x16x8xf32>
    tpu.vector_store %arg7[%c0_110, %c0_111, %c0_112, %c0_113], %134 {strides = array<i32>} : memref<1x16x16x8xf32, #tpu.memory_space<vmem>>, vector<1x16x16x8xf32>,
    %135 = vector.shape_cast %131 : vector<16x16x8xf32> to vector<256x8xf32>
    %cst_114 = arith.constant dense<0.000000e+00> : vector<8xf32>
    %136 = vector.multi_reduction <add>, %135, %cst_114 [0] : vector<256x8xf32> to vector<8xf32>
    %137 = vector.shape_cast %136 : vector<8xf32> to vector<1x8xf32>
    %c0_115 = arith.constant 0 : index
    %c0_116 = arith.constant 0 : index
    %c0_117 = arith.constant 0 : index
    %c0_118 = arith.constant 0 : index
    %138 = vector.load %arg8[%c0_115, %c0_116, %c0_117, %c0_118] : memref<1x1x1x8xf32, #tpu.memory_space<vmem>>, vector<1x1x1x8xf32>
    %139 = vector.shape_cast %138 : vector<1x1x1x8xf32> to vector<1x8xf32>
    %140 = vector.shape_cast %137 : vector<1x8xf32> to vector<1x1x1x8xf32>
    tpu.vector_store %arg8[%c0_115, %c0_116, %c0_117, %c0_118], %140 {strides = array<i32>} : memref<1x1x1x8xf32, #tpu.memory_space<vmem>>, vector<1x1x1x8xf32>,
    %141 = arith.mulf %135, %135 : vector<256x8xf32>
    %cst_119 = arith.constant dense<0.000000e+00> : vector<8xf32>
    %142 = vector.multi_reduction <add>, %141, %cst_119 [0] : vector<256x8xf32> to vector<8xf32>
    %143 = vector.shape_cast %142 : vector<8xf32> to vector<1x8xf32>
    %c0_120 = arith.constant 0 : index
    %c0_121 = arith.constant 0 : index
    %c0_122 = arith.constant 0 : index
    %c0_123 = arith.constant 0 : index
    %144 = vector.load %arg9[%c0_120, %c0_121, %c0_122, %c0_123] : memref<1x1x1x8xf32, #tpu.memory_space<vmem>>, vector<1x1x1x8xf32>
    %145 = vector.shape_cast %144 : vector<1x1x1x8xf32> to vector<1x8xf32>
    %146 = vector.shape_cast %143 : vector<1x8xf32> to vector<1x1x1x8xf32>
    tpu.vector_store %arg9[%c0_120, %c0_121, %c0_122, %c0_123], %146 {strides = array<i32>} : memref<1x1x1x8xf32, #tpu.memory_space<vmem>>, vector<1x1x1x8xf32>,
    return
  }
  func.func @transform_0(%arg0: i32, %arg1: i32) -> (i32, i32, i32, i32, i32) {
    %c0_i32 = arith.constant 0 : i32
    %c0_i32_0 = arith.constant 0 : i32
    %c0_i32_1 = arith.constant 0 : i32
    %c0_i32_2 = arith.constant 0 : i32
    return %arg0, %arg1, %c0_i32, %c0_i32_0, %c0_i32_1 : i32, i32, i32, i32, i32
  }
  func.func @transform_1(%arg0: i32, %arg1: i32) -> (i32, i32, i32) {
    %c0_i32 = arith.constant 0 : i32
    %c0_i32_0 = arith.constant 0 : i32
    %c0_i32_1 = arith.constant 0 : i32
    %c0_i32_2 = arith.constant 0 : i32
    return %c0_i32, %c0_i32_0, %c0_i32_1 : i32, i32, i32
  }
  func.func @transform_2(%arg0: i32, %arg1: i32) -> (i32, i32) {
    %c0_i32 = arith.constant 0 : i32
    %c0_i32_0 = arith.constant 0 : i32
    %c0_i32_1 = arith.constant 0 : i32
    return %c0_i32, %c0_i32_0 : i32, i32
  }
  func.func @transform_3(%arg0: i32, %arg1: i32) -> (i32, i32, i32) {
    %c0_i32 = arith.constant 0 : i32
    %c0_i32_0 = arith.constant 0 : i32
    %c0_i32_1 = arith.constant 0 : i32
    %c0_i32_2 = arith.constant 0 : i32
    return %c0_i32, %c0_i32_0, %c0_i32_1 : i32, i32, i32
  }
  func.func @transform_4(%arg0: i32, %arg1: i32) -> (i32, i32) {
    %c0_i32 = arith.constant 0 : i32
    %c0_i32_0 = arith.constant 0 : i32
    %c0_i32_1 = arith.constant 0 : i32
    return %c0_i32, %c0_i32_0 : i32, i32
  }
  func.func @transform_5(%arg0: i32, %arg1: i32) -> (i32, i32, i32, i32) {
    %c0_i32 = arith.constant 0 : i32
    %c0_i32_0 = arith.constant 0 : i32
    %c0_i32_1 = arith.constant 0 : i32
    return %arg0, %arg1, %c0_i32, %c0_i32_0 : i32, i32, i32, i32
  }
  func.func @transform_6(%arg0: i32, %arg1: i32) -> (i32, i32, i32, i32) {
    %c0_i32 = arith.constant 0 : i32
    %c0_i32_0 = arith.constant 0 : i32
    %c0_i32_1 = arith.constant 0 : i32
    return %arg0, %arg1, %c0_i32, %c0_i32_0 : i32, i32, i32, i32
  }
  func.func @transform_7(%arg0: i32, %arg1: i32) -> (i32, i32, i32, i32) {
    %c0_i32 = arith.constant 0 : i32
    %c0_i32_0 = arith.constant 0 : i32
    %c0_i32_1 = arith.constant 0 : i32
    return %arg0, %arg1, %c0_i32, %c0_i32_0 : i32, i32, i32, i32
  }
}

module attributes {stable_mosaic.version = 11 : i64} {
  func.func @_bn_apply_kernel(%arg0: i32, %arg1: i32, %arg2: memref<1x16x16x8xf32, #tpu.memory_space<vmem>>, %arg3: memref<1x8xf32, #tpu.memory_space<vmem>>, %arg4: memref<1x8xf32, #tpu.memory_space<vmem>>, %arg5: memref<1x16x16x8xf32, #tpu.memory_space<vmem>>) attributes {dimension_semantics = [#tpu.dimension_semantics<parallel>, #tpu.dimension_semantics<parallel>], iteration_bounds = array<i64: 2, 1>, scalar_prefetch = 0 : i64, scratch_operands = 0 : i64, tpu.core_type = #tpu.core_type<tc>, window_params = [{transform_indices = @transform_0, window_bounds = array<i64: 1, 16, 16, 8>}, {pipeline_mode = #tpu.pipeline_mode<synchronous>, transform_indices = @transform_1, window_bounds = array<i64: 1, 8>}, {pipeline_mode = #tpu.pipeline_mode<synchronous>, transform_indices = @transform_2, window_bounds = array<i64: 1, 8>}, {transform_indices = @transform_3, window_bounds = array<i64: 1, 16, 16, 8>}]} {
    %c0 = arith.constant 0 : index
    %c0_0 = arith.constant 0 : index
    %c0_1 = arith.constant 0 : index
    %c0_2 = arith.constant 0 : index
    %0 = vector.load %arg2[%c0, %c0_0, %c0_1, %c0_2] : memref<1x16x16x8xf32, #tpu.memory_space<vmem>>, vector<1x16x16x8xf32>
    %1 = vector.shape_cast %0 : vector<1x16x16x8xf32> to vector<16x16x8xf32>
    %c0_3 = arith.constant 0 : index
    %c0_4 = arith.constant 0 : index
    %2 = vector.load %arg3[%c0_3, %c0_4] : memref<1x8xf32, #tpu.memory_space<vmem>>, vector<1x8xf32>
    %3 = vector.shape_cast %2 : vector<1x8xf32> to vector<1x1x8xf32>
    %4 = vector.broadcast %3 : vector<1x1x8xf32> to vector<16x16x8xf32>
    %5 = arith.mulf %1, %4 : vector<16x16x8xf32>
    %c0_5 = arith.constant 0 : index
    %c0_6 = arith.constant 0 : index
    %6 = vector.load %arg4[%c0_5, %c0_6] : memref<1x8xf32, #tpu.memory_space<vmem>>, vector<1x8xf32>
    %7 = vector.shape_cast %6 : vector<1x8xf32> to vector<1x1x8xf32>
    %8 = vector.broadcast %7 : vector<1x1x8xf32> to vector<16x16x8xf32>
    %9 = arith.addf %5, %8 : vector<16x16x8xf32>
    %c0_7 = arith.constant 0 : index
    %c0_8 = arith.constant 0 : index
    %c0_9 = arith.constant 0 : index
    %c0_10 = arith.constant 0 : index
    %10 = vector.load %arg5[%c0_7, %c0_8, %c0_9, %c0_10] : memref<1x16x16x8xf32, #tpu.memory_space<vmem>>, vector<1x16x16x8xf32>
    %11 = vector.shape_cast %10 : vector<1x16x16x8xf32> to vector<16x16x8xf32>
    %12 = vector.shape_cast %9 : vector<16x16x8xf32> to vector<1x16x16x8xf32>
    tpu.vector_store %arg5[%c0_7, %c0_8, %c0_9, %c0_10], %12 {strides = array<i32>} : memref<1x16x16x8xf32, #tpu.memory_space<vmem>>, vector<1x16x16x8xf32>,
    return
  }
  func.func @transform_0(%arg0: i32, %arg1: i32) -> (i32, i32, i32, i32) {
    %c0_i32 = arith.constant 0 : i32
    %c0_i32_0 = arith.constant 0 : i32
    %c0_i32_1 = arith.constant 0 : i32
    return %arg0, %arg1, %c0_i32, %c0_i32_0 : i32, i32, i32, i32
  }
  func.func @transform_1(%arg0: i32, %arg1: i32) -> (i32, i32) {
    %c0_i32 = arith.constant 0 : i32
    %c0_i32_0 = arith.constant 0 : i32
    %c0_i32_1 = arith.constant 0 : i32
    return %c0_i32, %c0_i32_0 : i32, i32
  }
  func.func @transform_2(%arg0: i32, %arg1: i32) -> (i32, i32) {
    %c0_i32 = arith.constant 0 : i32
    %c0_i32_0 = arith.constant 0 : i32
    %c0_i32_1 = arith.constant 0 : i32
    return %c0_i32, %c0_i32_0 : i32, i32
  }
  func.func @transform_3(%arg0: i32, %arg1: i32) -> (i32, i32, i32, i32) {
    %c0_i32 = arith.constant 0 : i32
    %c0_i32_0 = arith.constant 0 : i32
    %c0_i32_1 = arith.constant 0 : i32
    return %arg0, %arg1, %c0_i32, %c0_i32_0 : i32, i32, i32, i32
  }
}

</mosaic_0001>

<llo_original>
// kernel: conv_block_forward.3
$region0: #{conv_block_forward.3}
  #allocation0 [shape = 'u32[]', space=smem, size = 0x4, offset = 0x4, fixed_abs, tag = 'smem constant byte address 0x4 - core index']
  #allocation1 [shape = 'u32[72,128]{1,0:T(1,128)}', space=vmem, size = 0x9000, scoped, tag = 'internal scratch']
  %s0 = inlined_call_operand.vmem [shape: f32[2,16,16,8], index: 0, kind: input, shape index: {}, may-alias: {0,3}]
  %s1 = inlined_call_operand.vmem [shape: f32[1,8], index: 1, kind: input, shape index: {}]
  %s2 = inlined_call_operand.vmem [shape: f32[1,8], index: 2, kind: input, shape index: {}]
  %s3 = inlined_call_operand.vmem [shape: f32[2,16,16,8], index: 3, kind: output, shape index: {}, may-alias: {0,3}]
  %s4 = sld [smem:[#allocation0]]
  $region45: #{conv_block_forward.3} parent=0
    _
  %s6 = ssub.s32 1, %s4
  %s7 = scalar_select 0, %s6, %s4
  loop: start=0, step=1, limit=4
  $region2: #{conv_block_forward.3} parent=0 // loop_pre_header
    _
  $region3: #{conv_block_forward.3} parent=0 // loop_header
    %s9 = sphi 0, %s13
    %p10 = scmp.ge.s32.totalorder %s9, 4
    %s16 = sphi 0, %s28
    %s17 = sphi 0, %s24
    %s18 = sphi 0, %s16
    %s19 = sphi 0, %s17
    %s20 = sphi 0, %s18
    %s21 = sphi 0, %s19
    %s33 = sphi 0, %s35
    %s36 = sphi 0, %s33
    %s37 = sphi 0, %s36
    %s53 = sphi 0, %s37
    %s57 = sphi 0, %s57
    %s59 = sphi 0, %s57
    %s60 = sphi 0, %s59
    %s74 = sphi 0, %s60
    %s78 = sphi 0, %s78
    %s80 = sphi 0, %s78
    %s81 = sphi 0, %s80
    %s95 = sphi 0, %s81
    %s103 = sphi 0, %s105
    %s106 = sphi 0, %s103
    %s107 = sphi 0, %s106
    %s123 = sphi 0, %s107
  $region4: #{conv_block_forward.3} parent=0 // loop_header_branch
    %12 = sbr.rel (%p10) target = $region8
  $region5: #{conv_block_forward.3} parent=0 // loop_body
    %s14 = ssub.s32 %s9, 1
    %s15 = ssub.s32 %s9, 2
    %s22 = sadd.s32 1, %s17
    %p23 = scmp.ge.s32.totalorder %s22, 1
    %s24 = scalar_select %p23, 0, %s22
    %s25 = sadd.s32 1, %s16
    %s26 = scalar_select %p23, %s25, %s16
    %p27 = scmp.ge.s32.totalorder %s26, 2
    %s28 = scalar_select %p27, 0, %s26
    %s29 = ssub.s32 %s16, %s28
    %s30 = ssub.s32 %s17, %s24
    %s31 = sor.u32 %s29, %s30
    %p32 = scmp.eq.s32.totalorder %s31, 0
    %s34 = sadd.s32 %s33, 1
    %s35 = scalar_select %p32, %s33, %s34
    %p38 = pneg %p32
    %p39 = scmp.eq.s32.totalorder %s9, 1
    %p40 = por %p38, %p39
    %p41 = scmp.ne.s32.totalorder %s33, %s36
    %p42 = scmp.eq.s32.totalorder %s9, 0
    %p43 = por %p41, %p42
    %p44 = scmp.ne.s32.totalorder %s33, %s36
    %p45 = scmp.eq.s32.totalorder %s14, 1
    %p46 = por %p44, %p45
    %p47 = scmp.ne.s32.totalorder %s36, %s37
    %p48 = scmp.eq.s32.totalorder %s14, 0
    %p49 = por %p47, %p48
    %p50 = scmp.ne.s32.totalorder %s36, %s37
    %p51 = scmp.eq.s32.totalorder %s15, 1
    %p52 = por %p50, %p51
    %p54 = scmp.ne.s32.totalorder %s37, %s53
    %p55 = scmp.eq.s32.totalorder %s15, 0
    %p56 = por %p54, %p55
    %s58 = sadd.s32 %s57, 1
    %p61 = scmp.eq.s32.totalorder %s9, 1
    %p62 = scmp.ne.s32.totalorder %s57, %s59
    %p63 = scmp.eq.s32.totalorder %s9, 0
    %p64 = por %p62, %p63
    %p65 = scmp.ne.s32.totalorder %s57, %s59
    %p66 = scmp.eq.s32.totalorder %s14, 1
    %p67 = por %p65, %p66
    %p68 = scmp.ne.s32.totalorder %s59, %s60
    %p69 = scmp.eq.s32.totalorder %s14, 0
    %p70 = por %p68, %p69
    %p71 = scmp.ne.s32.totalorder %s59, %s60
    %p72 = scmp.eq.s32.totalorder %s15, 1
    %p73 = por %p71, %p72
    %p75 = scmp.ne.s32.totalorder %s60, %s74
    %p76 = scmp.eq.s32.totalorder %s15, 0
    %p77 = por %p75, %p76
    %s79 = sadd.s32 %s78, 1
    %p82 = scmp.eq.s32.totalorder %s9, 1
    %p83 = scmp.ne.s32.totalorder %s78, %s80
    %p84 = scmp.eq.s32.totalorder %s9, 0
    %p85 = por %p83, %p84
    %p86 = scmp.ne.s32.totalorder %s78, %s80
    %p87 = scmp.eq.s32.totalorder %s14, 1
    %p88 = por %p86, %p87
    %p89 = scmp.ne.s32.totalorder %s80, %s81
    %p90 = scmp.eq.s32.totalorder %s14, 0
    %p91 = por %p89, %p90
    %p92 = scmp.ne.s32.totalorder %s80, %s81
    %p93 = scmp.eq.s32.totalorder %s15, 1
    %p94 = por %p92, %p93
    %p96 = scmp.ne.s32.totalorder %s81, %s95
    %p97 = scmp.eq.s32.totalorder %s15, 0
    %p98 = por %p96, %p97
    %s99 = ssub.s32 %s16, %s28
    %s100 = ssub.s32 %s17, %s24
    %s101 = sor.u32 %s99, %s100
    %p102 = scmp.eq.s32.totalorder %s101, 0
    %s104 = sadd.s32 %s103, 1
    %s105 = scalar_select %p102, %s103, %s104
    %p108 = pneg %p102
    %p109 = scmp.eq.s32.totalorder %s9, 1
    %p110 = por %p108, %p109
    %p111 = scmp.ne.s32.totalorder %s103, %s106
    %p112 = scmp.eq.s32.totalorder %s9, 0
    %p113 = por %p111, %p112
    %p114 = scmp.ne.s32.totalorder %s103, %s106
    %p115 = scmp.eq.s32.totalorder %s14, 1
    %p116 = por %p114, %p115
    %p117 = scmp.ne.s32.totalorder %s106, %s107
    %p118 = scmp.eq.s32.totalorder %s14, 0
    %p119 = por %p117, %p118
    %p120 = scmp.ne.s32.totalorder %s106, %s107
    %p121 = scmp.eq.s32.totalorder %s15, 1
    %p122 = por %p120, %p121
    %p124 = scmp.ne.s32.totalorder %s107, %s123
    %p125 = scmp.eq.s32.totalorder %s15, 0
    %p126 = por %p124, %p125
    %p127 = scmp.le.s32.totalorder 1, %s9
    %p128 = scmp.lt.s32.totalorder %s9, 3
    %p129 = pnand %p127, %p128
    %p130 = pneg %p129
    // Predicated region
    $region9: #{conv_block_forward.3} parent=5 // pred_check
      _
    $region10: #{conv_block_forward.3} parent=5 // pred_check_branch
      %132 = sbr.rel (%p129) target = $region12
    $region11: #{conv_block_forward.3} parent=5 // pred_region
      %s133 = ssub.s32 %s9, 1
      // Predicated region
      $region13: #{conv_block_forward.3} parent=11 // pred_check
        %p134 = pneg %p70
      $region14: #{conv_block_forward.3} parent=11 // pred_check_branch
        %136 = sbr.rel (%p134) target = $region16
      $region15: #{conv_block_forward.3} parent=11 // pred_region
        _
      $region16: #{conv_block_forward.3} parent=11 // pred_fallthru
        _
      // Predicated region
      $region17: #{conv_block_forward.3} parent=11 // pred_check
        %p137 = pneg %p91
      $region18: #{conv_block_forward.3} parent=11 // pred_check_branch
        %139 = sbr.rel (%p137) target = $region20
      $region19: #{conv_block_forward.3} parent=11 // pred_region
        _
      $region20: #{conv_block_forward.3} parent=11 // pred_fallthru
        _
    $region12: #{conv_block_forward.3} parent=5 // pred_fallthru
      _
    %p140 = scmp.lt.s32.totalorder %s9, 2
    // Predicated region
    $region21: #{conv_block_forward.3} parent=5 // pred_check
      %p141 = pneg %p140
    $region22: #{conv_block_forward.3} parent=5 // pred_check_branch
      %143 = sbr.rel (%p141) target = $region24
    $region23: #{conv_block_forward.3} parent=5 // pred_region
      // Predicated region
      $region25: #{conv_block_forward.3} parent=23 // pred_check
        %p144 = pneg %p43
      $region26: #{conv_block_forward.3} parent=23 // pred_check_branch
        %146 = sbr.rel (%p144) target = $region28
      $region27: #{conv_block_forward.3} parent=23 // pred_region
        %s147 = smul.u32 16, %s17
        %p148 = scmp.lt.s32.totalorder %s16, 1
        %s149 = scalar_select %p148, %s16, 1
        %p150 = scmp.lt.s32.totalorder %s147, 15
        %s151 = scalar_select %p150, %s147, 15
        %s152 = smul.addr %s151, 2
        %s153 = smul.addr %s149, 32
        %s154 = sadd.s32 %s152, %s153
        %s155 = smul.addr %s154, 8
        %s156 = scalar_lea.vmem %s0, %s155
        %s157 = smul.u32 16, %s17
      $region28: #{conv_block_forward.3} parent=23 // pred_fallthru
        _
    $region24: #{conv_block_forward.3} parent=5 // pred_fallthru
      _
    %p158 = scmp.le.s32.totalorder 1, %s9
    %p159 = scmp.lt.s32.totalorder %s9, 3
    %p160 = pnand %p158, %p159
    %p161 = pneg %p160
    // Predicated region
    $region29: #{conv_block_forward.3} parent=5 // pred_check
      _
    $region30: #{conv_block_forward.3} parent=5 // pred_check_branch
      %163 = sbr.rel (%p160) target = $region32
    $region31: #{conv_block_forward.3} parent=5 // pred_region
      %s164 = ssub.s32 %s9, 1
      %s165 = smul.u32 16, %s19
      %p166 = scmp.lt.s32.totalorder %s18, 1
      %s167 = scalar_select %p166, %s18, 1
      %p168 = scmp.lt.s32.totalorder %s165, 15
      %s169 = scalar_select %p168, %s165, 15
      %s170 = smul.addr %s169, 2
      %s171 = smul.addr %s167, 32
      %s172 = sadd.s32 %s170, %s171
      %s173 = smul.addr %s172, 8
      %s174 = scalar_lea.vmem %s0, %s173
      %p175 = pneg %p49
      %p176 = pneg %p46
      %p177 = pneg %p70
      %p178 = pneg %p67
      %p179 = pneg %p91
      %p180 = pneg %p88
      %p181 = pneg %p119
      %p182 = pneg %p116
      %s183 = smul.u32 16, %s19
      %p184 = scmp.lt.s32.totalorder %s18, 1
      %s185 = scalar_select %p184, %s18, 1
      %p186 = scmp.lt.s32.totalorder %s183, 15
      %s187 = scalar_select %p186, %s183, 15
      %s188 = smul.addr %s187, 2
      %s189 = smul.addr %s185, 32
      %s190 = sadd.s32 %s188, %s189
      %s191 = smul.addr %s190, 8
      %s192 = scalar_lea.vmem %s3, %s191
      %s193 = smul.u32 16, %s19
      %p194 = scmp.lt.s32.totalorder %s18, 1
      %s195 = scalar_select %p194, %s18, 1
      %p196 = scmp.lt.s32.totalorder %s193, 15
      %s197 = scalar_select %p196, %s193, 15
      %s198 = smul.addr %s197, 2
      %s199 = smul.addr %s195, 32
      %s200 = sadd.s32 %s198, %s199
      %s201 = smul.addr %s200, 8
      %s202 = scalar_lea.vmem %s0, %s201
      %s203 = smul.u32 16, %s19
      %s204 = smul.u32 16, %s19
      %p205 = scmp.lt.s32.totalorder %s18, 1
      %s206 = scalar_select %p205, %s18, 1
      %p207 = scmp.lt.s32.totalorder %s204, 15
      %s208 = scalar_select %p207, %s204, 15
      %s209 = smul.addr %s208, 2
      %s210 = smul.addr %s206, 32
      %s211 = sadd.s32 %s209, %s210
      %s212 = smul.addr %s211, 8
      %s213 = scalar_lea.vmem %s3, %s212
      %s214 = smul.u32 16, %s19
      %v215 = vld [vmem:[%s202] sm:$0xff]
      %v216 = vld [vmem:[%s202 + $0x8] sm:$0xff]
      %v217 = vld [vmem:[%s202 + $0x10] sm:$0xff]
      %v218 = vld [vmem:[%s202 + $0x18] sm:$0xff]
      %v219 = vld [vmem:[%s202 + $0x20] sm:$0xff]
      %v220 = vld [vmem:[%s202 + $0x28] sm:$0xff]
      %v221 = vld [vmem:[%s202 + $0x30] sm:$0xff]
      %v222 = vld [vmem:[%s202 + $0x38] sm:$0xff]
      %v223 = vld [vmem:[%s202 + $0x40] sm:$0xff]
      %v224 = vld [vmem:[%s202 + $0x48] sm:$0xff]
      %v225 = vld [vmem:[%s202 + $0x50] sm:$0xff]
      %v226 = vld [vmem:[%s202 + $0x58] sm:$0xff]
      %v227 = vld [vmem:[%s202 + $0x60] sm:$0xff]
      %v228 = vld [vmem:[%s202 + $0x68] sm:$0xff]
      %v229 = vld [vmem:[%s202 + $0x70] sm:$0xff]
      %v230 = vld [vmem:[%s202 + $0x78] sm:$0xff]
      %v231 = vld [vmem:[%s202 + $0x80] sm:$0xff]
      %v232 = vld [vmem:[%s202 + $0x88] sm:$0xff]
      %v233 = vld [vmem:[%s202 + $0x90] sm:$0xff]
      %v234 = vld [vmem:[%s202 + $0x98] sm:$0xff]
      %v235 = vld [vmem:[%s202 + $0xa0] sm:$0xff]
      %v236 = vld [vmem:[%s202 + $0xa8] sm:$0xff]
      %v237 = vld [vmem:[%s202 + $0xb0] sm:$0xff]
      %v238 = vld [vmem:[%s202 + $0xb8] sm:$0xff]
      %v239 = vld [vmem:[%s202 + $0xc0] sm:$0xff]
      %v240 = vld [vmem:[%s202 + $0xc8] sm:$0xff]
      %v241 = vld [vmem:[%s202 + $0xd0] sm:$0xff]
      %v242 = vld [vmem:[%s202 + $0xd8] sm:$0xff]
      %v243 = vld [vmem:[%s202 + $0xe0] sm:$0xff]
      %v244 = vld [vmem:[%s202 + $0xe8] sm:$0xff]
      %v245 = vld [vmem:[%s202 + $0xf0] sm:$0xff]
      %v246 = vld [vmem:[%s202 + $0xf8] sm:$0xff]
      %v247 = vld [vmem:[%s1] sm:$0x1]
      %v249 = vperm.slane %v247, 0
      %v251 = vmul.f32 %v215, %v249
      %v252 = vmul.f32 %v216, %v249
      %v253 = vmul.f32 %v217, %v249
      %v254 = vmul.f32 %v218, %v249
      %v255 = vmul.f32 %v219, %v249
      %v256 = vmul.f32 %v220, %v249
      %v257 = vmul.f32 %v221, %v249
      %v258 = vmul.f32 %v222, %v249
      %v259 = vmul.f32 %v223, %v249
      %v260 = vmul.f32 %v224, %v249
      %v261 = vmul.f32 %v225, %v249
      %v262 = vmul.f32 %v226, %v249
      %v263 = vmul.f32 %v227, %v249
      %v264 = vmul.f32 %v228, %v249
      %v265 = vmul.f32 %v229, %v249
      %v266 = vmul.f32 %v230, %v249
      %v267 = vmul.f32 %v231, %v249
      %v268 = vmul.f32 %v232, %v249
      %v269 = vmul.f32 %v233, %v249
      %v270 = vmul.f32 %v234, %v249
      %v271 = vmul.f32 %v235, %v249
      %v272 = vmul.f32 %v236, %v249
      %v273 = vmul.f32 %v237, %v249
      %v274 = vmul.f32 %v238, %v249
      %v275 = vmul.f32 %v239, %v249
      %v276 = vmul.f32 %v240, %v249
      %v277 = vmul.f32 %v241, %v249
      %v278 = vmul.f32 %v242, %v249
      %v279 = vmul.f32 %v243, %v249
      %v280 = vmul.f32 %v244, %v249
      %v281 = vmul.f32 %v245, %v249
      %v282 = vmul.f32 %v246, %v249
      %v283 = vld [vmem:[%s2] sm:$0x1]
      %v285 = vperm.slane %v283, 0
      %v287 = vadd.f32 %v251, %v285
      %v288 = vadd.f32 %v252, %v285
      %v289 = vadd.f32 %v253, %v285
      %v290 = vadd.f32 %v254, %v285
      %v291 = vadd.f32 %v255, %v285
      %v292 = vadd.f32 %v256, %v285
      %v293 = vadd.f32 %v257, %v285
      %v294 = vadd.f32 %v258, %v285
      %v295 = vadd.f32 %v259, %v285
      %v296 = vadd.f32 %v260, %v285
      %v297 = vadd.f32 %v261, %v285
      %v298 = vadd.f32 %v262, %v285
      %v299 = vadd.f32 %v263, %v285
      %v300 = vadd.f32 %v264, %v285
      %v301 = vadd.f32 %v265, %v285
      %v302 = vadd.f32 %v266, %v285
      %v303 = vadd.f32 %v267, %v285
      %v304 = vadd.f32 %v268, %v285
      %v305 = vadd.f32 %v269, %v285
      %v306 = vadd.f32 %v270, %v285
      %v307 = vadd.f32 %v271, %v285
      %v308 = vadd.f32 %v272, %v285
      %v309 = vadd.f32 %v273, %v285
      %v310 = vadd.f32 %v274, %v285
      %v311 = vadd.f32 %v275, %v285
      %v312 = vadd.f32 %v276, %v285
      %v313 = vadd.f32 %v277, %v285
      %v314 = vadd.f32 %v278, %v285
      %v315 = vadd.f32 %v279, %v285
      %v316 = vadd.f32 %v280, %v285
      %v317 = vadd.f32 %v281, %v285
      %v318 = vadd.f32 %v282, %v285
      %vm319 = vcmask 64512
      %320 = vst.msk [vmem:[%s213] sm:$0xff] %vm319, %v287
      %321 = vst.msk [vmem:[%s213 + $0x8] sm:$0xff] %vm319, %v288
      %322 = vst.msk [vmem:[%s213 + $0x10] sm:$0xff] %vm319, %v289
      %323 = vst.msk [vmem:[%s213 + $0x18] sm:$0xff] %vm319, %v290
      %324 = vst.msk [vmem:[%s213 + $0x20] sm:$0xff] %vm319, %v291
      %325 = vst.msk [vmem:[%s213 + $0x28] sm:$0xff] %vm319, %v292
      %326 = vst.msk [vmem:[%s213 + $0x30] sm:$0xff] %vm319, %v293
      %327 = vst.msk [vmem:[%s213 + $0x38] sm:$0xff] %vm319, %v294
      %328 = vst.msk [vmem:[%s213 + $0x40] sm:$0xff] %vm319, %v295
      %329 = vst.msk [vmem:[%s213 + $0x48] sm:$0xff] %vm319, %v296
      %330 = vst.msk [vmem:[%s213 + $0x50] sm:$0xff] %vm319, %v297
      %331 = vst.msk [vmem:[%s213 + $0x58] sm:$0xff] %vm319, %v298
      %332 = vst.msk [vmem:[%s213 + $0x60] sm:$0xff] %vm319, %v299
      %333 = vst.msk [vmem:[%s213 + $0x68] sm:$0xff] %vm319, %v300
      %334 = vst.msk [vmem:[%s213 + $0x70] sm:$0xff] %vm319, %v301
      %335 = vst.msk [vmem:[%s213 + $0x78] sm:$0xff] %vm319, %v302
      %336 = vst.msk [vmem:[%s213 + $0x80] sm:$0xff] %vm319, %v303
      %337 = vst.msk [vmem:[%s213 + $0x88] sm:$0xff] %vm319, %v304
      %338 = vst.msk [vmem:[%s213 + $0x90] sm:$0xff] %vm319, %v305
      %339 = vst.msk [vmem:[%s213 + $0x98] sm:$0xff] %vm319, %v306
      %340 = vst.msk [vmem:[%s213 + $0xa0] sm:$0xff] %vm319, %v307
      %341 = vst.msk [vmem:[%s213 + $0xa8] sm:$0xff] %vm319, %v308
      %342 = vst.msk [vmem:[%s213 + $0xb0] sm:$0xff] %vm319, %v309
      %343 = vst.msk [vmem:[%s213 + $0xb8] sm:$0xff] %vm319, %v310
      %344 = vst.msk [vmem:[%s213 + $0xc0] sm:$0xff] %vm319, %v311
      %345 = vst.msk [vmem:[%s213 + $0xc8] sm:$0xff] %vm319, %v312
      %346 = vst.msk [vmem:[%s213 + $0xd0] sm:$0xff] %vm319, %v313
      %347 = vst.msk [vmem:[%s213 + $0xd8] sm:$0xff] %vm319, %v314
      %348 = vst.msk [vmem:[%s213 + $0xe0] sm:$0xff] %vm319, %v315
      %349 = vst.msk [vmem:[%s213 + $0xe8] sm:$0xff] %vm319, %v316
      %350 = vst.msk [vmem:[%s213 + $0xf0] sm:$0xff] %vm319, %v317
      %351 = vst.msk [vmem:[%s213 + $0xf8] sm:$0xff] %vm319, %v318
      %s352 = smul.u32 16, %s19
      %p353 = scmp.lt.s32.totalorder %s18, 1
      %s354 = scalar_select %p353, %s18, 1
      %p355 = scmp.lt.s32.totalorder %s352, 15
      %s356 = scalar_select %p355, %s352, 15
      %s357 = smul.addr %s356, 2
      %s358 = smul.addr %s354, 32
      %s359 = sadd.s32 %s357, %s358
      %s360 = smul.addr %s359, 8
      %s361 = scalar_lea.vmem %s3, %s360
      // Predicated region
      $region33: #{conv_block_forward.3} parent=31 // pred_check
        %p362 = pneg %p116
      $region34: #{conv_block_forward.3} parent=31 // pred_check_branch
        %364 = sbr.rel (%p362) target = $region36
      $region35: #{conv_block_forward.3} parent=31 // pred_region
        %s365 = smul.u32 16, %s19
      $region36: #{conv_block_forward.3} parent=31 // pred_fallthru
        _
    $region32: #{conv_block_forward.3} parent=5 // pred_fallthru
      _
    %p366 = scmp.le.s32.totalorder 2, %s9
    // Predicated region
    $region37: #{conv_block_forward.3} parent=5 // pred_check
      %p367 = pneg %p366
    $region38: #{conv_block_forward.3} parent=5 // pred_check_branch
      %369 = sbr.rel (%p367) target = $region40
    $region39: #{conv_block_forward.3} parent=5 // pred_region
      %s370 = ssub.s32 %s9, 2
      // Predicated region
      $region41: #{conv_block_forward.3} parent=39 // pred_check
        %p371 = pneg %p122
      $region42: #{conv_block_forward.3} parent=39 // pred_check_branch
        %373 = sbr.rel (%p371) target = $region44
      $region43: #{conv_block_forward.3} parent=39 // pred_region
        %s374 = smul.u32 16, %s21
        %p375 = scmp.lt.s32.totalorder %s20, 1
        %s376 = scalar_select %p375, %s20, 1
        %p377 = scmp.lt.s32.totalorder %s374, 15
        %s378 = scalar_select %p377, %s374, 15
        %s379 = smul.addr %s378, 2
        %s380 = smul.addr %s376, 32
        %s381 = sadd.s32 %s379, %s380
        %s382 = smul.addr %s381, 8
        %s383 = scalar_lea.vmem %s3, %s382
      $region44: #{conv_block_forward.3} parent=39 // pred_fallthru
        _
    $region40: #{conv_block_forward.3} parent=5 // pred_fallthru
      _
  $region6: #{conv_block_forward.3} parent=0 // loop_footer
    %s13 = sadd.s32 1, %s9
  $region7: #{conv_block_forward.3} parent=0 // loop_footer_branch
    %8 = sbr.rel target = $region3
  $region8: #{conv_block_forward.3} parent=0 // loop_exit
    _

// kernel: conv_block_forward.2
$region0: #{conv_block_forward.2}
  #allocation0 [shape = 'u32[]', space=smem, size = 0x4, offset = 0x4, fixed_abs, tag = 'smem constant byte address 0x4 - core index']
  #allocation1 [shape = 'u32[72,128]{1,0:T(1,128)}', space=vmem, size = 0x9000, scoped, tag = 'internal scratch']
  #allocation2 [shape = 'f32[18,24,8]{2,1,0:T(8,128)}', space=vmem, size = 0x36000, scoped, tag = 'scratch operand']
  %s0 = inlined_call_operand.vmem [shape: f32[2,1,20,24,4], index: 0, kind: input, shape index: {}]
  %s1 = inlined_call_operand.vmem [shape: f32[9,4,8], index: 1, kind: input, shape index: {}]
  %s2 = inlined_call_operand.vmem [shape: f32[1,8], index: 2, kind: input, shape index: {}]
  %s3 = inlined_call_operand.vmem [shape: f32[9,8,8], index: 3, kind: input, shape index: {}]
  %s4 = inlined_call_operand.vmem [shape: f32[1,8], index: 4, kind: input, shape index: {}]
  %s5 = inlined_call_operand.vmem [shape: f32[2,16,16,8], index: 5, kind: output, shape index: {0}]
  %s6 = inlined_call_operand.vmem [shape: f32[2,1,1,8], index: 6, kind: output, shape index: {1}]
  %s7 = inlined_call_operand.vmem [shape: f32[2,1,1,8], index: 7, kind: output, shape index: {2}]
  %8 = xla_tuple %s5, %s6, %s7
  %s9 = sld [smem:[#allocation0]]
  $region73: #{conv_block_forward.2} parent=0
    _
  %s11 = ssub.s32 1, %s9
  %s12 = scalar_select 0, %s11, %s9
  loop: start=0, step=1, limit=4
  $region2: #{conv_block_forward.2} parent=0 // loop_pre_header
    _
  $region3: #{conv_block_forward.2} parent=0 // loop_header
    %s14 = sphi 0, %s18
    %p15 = scmp.ge.s32.totalorder %s14, 4
    %s21 = sphi 0, %s33
    %s22 = sphi 0, %s29
    %s23 = sphi 0, %s21
    %s24 = sphi 0, %s22
    %s25 = sphi 0, %s23
    %s26 = sphi 0, %s24
    %s38 = sphi 0, %s40
    %s41 = sphi 0, %s38
    %s42 = sphi 0, %s41
    %s58 = sphi 0, %s42
    %s62 = sphi 0, %s62
    %s64 = sphi 0, %s62
    %s65 = sphi 0, %s64
    %s79 = sphi 0, %s65
    %s83 = sphi 0, %s83
    %s85 = sphi 0, %s83
    %s86 = sphi 0, %s85
    %s100 = sphi 0, %s86
    %s104 = sphi 0, %s104
    %s106 = sphi 0, %s104
    %s107 = sphi 0, %s106
    %s121 = sphi 0, %s107
    %s125 = sphi 0, %s125
    %s127 = sphi 0, %s125
    %s128 = sphi 0, %s127
    %s142 = sphi 0, %s128
    %s150 = sphi 0, %s152
    %s153 = sphi 0, %s150
    %s154 = sphi 0, %s153
    %s170 = sphi 0, %s154
    %s178 = sphi 0, %s180
    %s181 = sphi 0, %s178
    %s182 = sphi 0, %s181
    %s198 = sphi 0, %s182
    %s206 = sphi 0, %s208
    %s209 = sphi 0, %s206
    %s210 = sphi 0, %s209
    %s226 = sphi 0, %s210
  $region4: #{conv_block_forward.2} parent=0 // loop_header_branch
    %17 = sbr.rel (%p15) target = $region8
  $region5: #{conv_block_forward.2} parent=0 // loop_body
    %s19 = ssub.s32 %s14, 1
    %s20 = ssub.s32 %s14, 2
    %s27 = sadd.s32 1, %s22
    %p28 = scmp.ge.s32.totalorder %s27, 1
    %s29 = scalar_select %p28, 0, %s27
    %s30 = sadd.s32 1, %s21
    %s31 = scalar_select %p28, %s30, %s21
    %p32 = scmp.ge.s32.totalorder %s31, 2
    %s33 = scalar_select %p32, 0, %s31
    %s34 = ssub.s32 %s21, %s33
    %s35 = ssub.s32 %s22, %s29
    %s36 = sor.u32 %s34, %s35
    %p37 = scmp.eq.s32.totalorder %s36, 0
    %s39 = sadd.s32 %s38, 1
    %s40 = scalar_select %p37, %s38, %s39
    %p43 = pneg %p37
    %p44 = scmp.eq.s32.totalorder %s14, 1
    %p45 = por %p43, %p44
    %p46 = scmp.ne.s32.totalorder %s38, %s41
    %p47 = scmp.eq.s32.totalorder %s14, 0
    %p48 = por %p46, %p47
    %p49 = scmp.ne.s32.totalorder %s38, %s41
    %p50 = scmp.eq.s32.totalorder %s19, 1
    %p51 = por %p49, %p50
    %p52 = scmp.ne.s32.totalorder %s41, %s42
    %p53 = scmp.eq.s32.totalorder %s19, 0
    %p54 = por %p52, %p53
    %p55 = scmp.ne.s32.totalorder %s41, %s42
    %p56 = scmp.eq.s32.totalorder %s20, 1
    %p57 = por %p55, %p56
    %p59 = scmp.ne.s32.totalorder %s42, %s58
    %p60 = scmp.eq.s32.totalorder %s20, 0
    %p61 = por %p59, %p60
    %s63 = sadd.s32 %s62, 1
    %p66 = scmp.eq.s32.totalorder %s14, 1
    %p67 = scmp.ne.s32.totalorder %s62, %s64
    %p68 = scmp.eq.s32.totalorder %s14, 0
    %p69 = por %p67, %p68
    %p70 = scmp.ne.s32.totalorder %s62, %s64
    %p71 = scmp.eq.s32.totalorder %s19, 1
    %p72 = por %p70, %p71
    %p73 = scmp.ne.s32.totalorder %s64, %s65
    %p74 = scmp.eq.s32.totalorder %s19, 0
    %p75 = por %p73, %p74
    %p76 = scmp.ne.s32.totalorder %s64, %s65
    %p77 = scmp.eq.s32.totalorder %s20, 1
    %p78 = por %p76, %p77
    %p80 = scmp.ne.s32.totalorder %s65, %s79
    %p81 = scmp.eq.s32.totalorder %s20, 0
    %p82 = por %p80, %p81
    %s84 = sadd.s32 %s83, 1
    %p87 = scmp.eq.s32.totalorder %s14, 1
    %p88 = scmp.ne.s32.totalorder %s83, %s85
    %p89 = scmp.eq.s32.totalorder %s14, 0
    %p90 = por %p88, %p89
    %p91 = scmp.ne.s32.totalorder %s83, %s85
    %p92 = scmp.eq.s32.totalorder %s19, 1
    %p93 = por %p91, %p92
    %p94 = scmp.ne.s32.totalorder %s85, %s86
    %p95 = scmp.eq.s32.totalorder %s19, 0
    %p96 = por %p94, %p95
    %p97 = scmp.ne.s32.totalorder %s85, %s86
    %p98 = scmp.eq.s32.totalorder %s20, 1
    %p99 = por %p97, %p98
    %p101 = scmp.ne.s32.totalorder %s86, %s100
    %p102 = scmp.eq.s32.totalorder %s20, 0
    %p103 = por %p101, %p102
    %s105 = sadd.s32 %s104, 1
    %p108 = scmp.eq.s32.totalorder %s14, 1
    %p109 = scmp.ne.s32.totalorder %s104, %s106
    %p110 = scmp.eq.s32.totalorder %s14, 0
    %p111 = por %p109, %p110
    %p112 = scmp.ne.s32.totalorder %s104, %s106
    %p113 = scmp.eq.s32.totalorder %s19, 1
    %p114 = por %p112, %p113
    %p115 = scmp.ne.s32.totalorder %s106, %s107
    %p116 = scmp.eq.s32.totalorder %s19, 0
    %p117 = por %p115, %p116
    %p118 = scmp.ne.s32.totalorder %s106, %s107
    %p119 = scmp.eq.s32.totalorder %s20, 1
    %p120 = por %p118, %p119
    %p122 = scmp.ne.s32.totalorder %s107, %s121
    %p123 = scmp.eq.s32.totalorder %s20, 0
    %p124 = por %p122, %p123
    %s126 = sadd.s32 %s125, 1
    %p129 = scmp.eq.s32.totalorder %s14, 1
    %p130 = scmp.ne.s32.totalorder %s125, %s127
    %p131 = scmp.eq.s32.totalorder %s14, 0
    %p132 = por %p130, %p131
    %p133 = scmp.ne.s32.totalorder %s125, %s127
    %p134 = scmp.eq.s32.totalorder %s19, 1
    %p135 = por %p133, %p134
    %p136 = scmp.ne.s32.totalorder %s127, %s128
    %p137 = scmp.eq.s32.totalorder %s19, 0
    %p138 = por %p136, %p137
    %p139 = scmp.ne.s32.totalorder %s127, %s128
    %p140 = scmp.eq.s32.totalorder %s20, 1
    %p141 = por %p139, %p140
    %p143 = scmp.ne.s32.totalorder %s128, %s142
    %p144 = scmp.eq.s32.totalorder %s20, 0
    %p145 = por %p143, %p144
    %s146 = ssub.s32 %s21, %s33
    %s147 = ssub.s32 %s22, %s29
    %s148 = sor.u32 %s146, %s147
    %p149 = scmp.eq.s32.totalorder %s148, 0
    %s151 = sadd.s32 %s150, 1
    %s152 = scalar_select %p149, %s150, %s151
    %p155 = pneg %p149
    %p156 = scmp.eq.s32.totalorder %s14, 1
    %p157 = por %p155, %p156
    %p158 = scmp.ne.s32.totalorder %s150, %s153
    %p159 = scmp.eq.s32.totalorder %s14, 0
    %p160 = por %p158, %p159
    %p161 = scmp.ne.s32.totalorder %s150, %s153
    %p162 = scmp.eq.s32.totalorder %s19, 1
    %p163 = por %p161, %p162
    %p164 = scmp.ne.s32.totalorder %s153, %s154
    %p165 = scmp.eq.s32.totalorder %s19, 0
    %p166 = por %p164, %p165
    %p167 = scmp.ne.s32.totalorder %s153, %s154
    %p168 = scmp.eq.s32.totalorder %s20, 1
    %p169 = por %p167, %p168
    %p171 = scmp.ne.s32.totalorder %s154, %s170
    %p172 = scmp.eq.s32.totalorder %s20, 0
    %p173 = por %p171, %p172
    %s174 = ssub.s32 %s21, %s33
    %s175 = ssub.s32 %s22, %s29
    %s176 = sor.u32 %s174, %s175
    %p177 = scmp.eq.s32.totalorder %s176, 0
    %s179 = sadd.s32 %s178, 1
    %s180 = scalar_select %p177, %s178, %s179
    %p183 = pneg %p177
    %p184 = scmp.eq.s32.totalorder %s14, 1
    %p185 = por %p183, %p184
    %p186 = scmp.ne.s32.totalorder %s178, %s181
    %p187 = scmp.eq.s32.totalorder %s14, 0
    %p188 = por %p186, %p187
    %p189 = scmp.ne.s32.totalorder %s178, %s181
    %p190 = scmp.eq.s32.totalorder %s19, 1
    %p191 = por %p189, %p190
    %p192 = scmp.ne.s32.totalorder %s181, %s182
    %p193 = scmp.eq.s32.totalorder %s19, 0
    %p194 = por %p192, %p193
    %p195 = scmp.ne.s32.totalorder %s181, %s182
    %p196 = scmp.eq.s32.totalorder %s20, 1
    %p197 = por %p195, %p196
    %p199 = scmp.ne.s32.totalorder %s182, %s198
    %p200 = scmp.eq.s32.totalorder %s20, 0
    %p201 = por %p199, %p200
    %s202 = ssub.s32 %s21, %s33
    %s203 = ssub.s32 %s22, %s29
    %s204 = sor.u32 %s202, %s203
    %p205 = scmp.eq.s32.totalorder %s204, 0
    %s207 = sadd.s32 %s206, 1
    %s208 = scalar_select %p205, %s206, %s207
    %p211 = pneg %p205
    %p212 = scmp.eq.s32.totalorder %s14, 1
    %p213 = por %p211, %p212
    %p214 = scmp.ne.s32.totalorder %s206, %s209
    %p215 = scmp.eq.s32.totalorder %s14, 0
    %p216 = por %p214, %p215
    %p217 = scmp.ne.s32.totalorder %s206, %s209
    %p218 = scmp.eq.s32.totalorder %s19, 1
    %p219 = por %p217, %p218
    %p220 = scmp.ne.s32.totalorder %s209, %s210
    %p221 = scmp.eq.s32.totalorder %s19, 0
    %p222 = por %p220, %p221
    %p223 = scmp.ne.s32.totalorder %s209, %s210
    %p224 = scmp.eq.s32.totalorder %s20, 1
    %p225 = por %p223, %p224
    %p227 = scmp.ne.s32.totalorder %s210, %s226
    %p228 = scmp.eq.s32.totalorder %s20, 0
    %p229 = por %p227, %p228
    %p230 = scmp.le.s32.totalorder 1, %s14
    %p231 = scmp.lt.s32.totalorder %s14, 3
    %p232 = pnand %p230, %p231
    %p233 = pneg %p232
    // Predicated region
    $region9: #{conv_block_forward.2} parent=5 // pred_check
      _
    $region10: #{conv_block_forward.2} parent=5 // pred_check_branch
      %235 = sbr.rel (%p232) target = $region12
    $region11: #{conv_block_forward.2} parent=5 // pred_region
      %s236 = ssub.s32 %s14, 1
      // Predicated region
      $region13: #{conv_block_forward.2} parent=11 // pred_check
        %p237 = pneg %p75
      $region14: #{conv_block_forward.2} parent=11 // pred_check_branch
        %239 = sbr.rel (%p237) target = $region16
      $region15: #{conv_block_forward.2} parent=11 // pred_region
        _
      $region16: #{conv_block_forward.2} parent=11 // pred_fallthru
        _
      // Predicated region
      $region17: #{conv_block_forward.2} parent=11 // pred_check
        %p240 = pneg %p96
      $region18: #{conv_block_forward.2} parent=11 // pred_check_branch
        %242 = sbr.rel (%p240) target = $region20
      $region19: #{conv_block_forward.2} parent=11 // pred_region
        _
      $region20: #{conv_block_forward.2} parent=11 // pred_fallthru
        _
      // Predicated region
      $region21: #{conv_block_forward.2} parent=11 // pred_check
        %p243 = pneg %p117
      $region22: #{conv_block_forward.2} parent=11 // pred_check_branch
        %245 = sbr.rel (%p243) target = $region24
      $region23: #{conv_block_forward.2} parent=11 // pred_region
        _
      $region24: #{conv_block_forward.2} parent=11 // pred_fallthru
        _
      // Predicated region
      $region25: #{conv_block_forward.2} parent=11 // pred_check
        %p246 = pneg %p138
      $region26: #{conv_block_forward.2} parent=11 // pred_check_branch
        %248 = sbr.rel (%p246) target = $region28
      $region27: #{conv_block_forward.2} parent=11 // pred_region
        _
      $region28: #{conv_block_forward.2} parent=11 // pred_fallthru
        _
    $region12: #{conv_block_forward.2} parent=5 // pred_fallthru
      _
    %p249 = scmp.lt.s32.totalorder %s14, 2
    // Predicated region
    $region29: #{conv_block_forward.2} parent=5 // pred_check
      %p250 = pneg %p249
    $region30: #{conv_block_forward.2} parent=5 // pred_check_branch
      %252 = sbr.rel (%p250) target = $region32
    $region31: #{conv_block_forward.2} parent=5 // pred_region
      // Predicated region
      $region33: #{conv_block_forward.2} parent=31 // pred_check
        %p253 = pneg %p48
      $region34: #{conv_block_forward.2} parent=31 // pred_check_branch
        %255 = sbr.rel (%p253) target = $region36
      $region35: #{conv_block_forward.2} parent=31 // pred_region
        %p256 = scmp.lt.s32.totalorder %s21, 1
        %s257 = scalar_select %p256, %s21, 1
        %p258 = scmp.lt.s32.totalorder %s22, 0
        %s259 = scalar_select %p258, %s22, 0
        %s260 = smul.addr %s259, 60
        %s261 = smul.addr %s257, 60
        %s262 = sadd.s32 %s260, %s261
        %s263 = smul.addr %s262, 8
        %s264 = scalar_lea.vmem %s0, %s263
      $region36: #{conv_block_forward.2} parent=31 // pred_fallthru
        _
    $region32: #{conv_block_forward.2} parent=5 // pred_fallthru
      _
    %p265 = scmp.le.s32.totalorder 1, %s14
    %p266 = scmp.lt.s32.totalorder %s14, 3
    %p267 = pnand %p265, %p266
    %p268 = pneg %p267
    // Predicated region
    $region37: #{conv_block_forward.2} parent=5 // pred_check
      _
    $region38: #{conv_block_forward.2} parent=5 // pred_check_branch
      %270 = sbr.rel (%p267) target = $region40
    $region39: #{conv_block_forward.2} parent=5 // pred_region
      %s271 = ssub.s32 %s14, 1
      %p272 = scmp.lt.s32.totalorder %s23, 1
      %s273 = scalar_select %p272, %s23, 1
      %p274 = scmp.lt.s32.totalorder %s24, 0
      %s275 = scalar_select %p274, %s24, 0
      %s276 = smul.addr %s275, 60
      %s277 = smul.addr %s273, 60
      %s278 = sadd.s32 %s276, %s277
      %s279 = smul.addr %s278, 8
      %s280 = scalar_lea.vmem %s0, %s279
      %p281 = pneg %p54
      %p282 = pneg %p51
      %p283 = pneg %p75
      %p284 = pneg %p72
      %p285 = pneg %p96
      %p286 = pneg %p93
      %p287 = pneg %p117
      %p288 = pneg %p114
      %p289 = pneg %p138
      %p290 = pneg %p135
      %p291 = pneg %p166
      %p292 = pneg %p163
      %s293 = smul.u32 16, %s24
      %p294 = scmp.lt.s32.totalorder %s23, 1
      %s295 = scalar_select %p294, %s23, 1
      %p296 = scmp.lt.s32.totalorder %s293, 15
      %s297 = scalar_select %p296, %s293, 15
      %s298 = smul.addr %s297, 2
      %s299 = smul.addr %s295, 32
      %s300 = sadd.s32 %s298, %s299
      %s301 = smul.addr %s300, 8
      %s302 = scalar_lea.vmem %s5, %s301
      %p303 = pneg %p194
      %p304 = pneg %p191
      %p305 = scmp.lt.s32.totalorder %s23, 1
      %s306 = scalar_select %p305, %s23, 1
      %p307 = scmp.lt.s32.totalorder %s24, 0
      %s308 = scalar_select %p307, %s24, 0
      %s309 = sadd.s32 %s308, %s306
      %s310 = scalar_lea.vmem %s6, %s309
      %p311 = pneg %p222
      %p312 = pneg %p219
      %p313 = scmp.lt.s32.totalorder %s23, 1
      %s314 = scalar_select %p313, %s23, 1
      %p315 = scmp.lt.s32.totalorder %s24, 0
      %s316 = scalar_select %p315, %s24, 0
      %s317 = sadd.s32 %s316, %s314
      %s318 = scalar_lea.vmem %s7, %s317
      %p319 = scmp.lt.s32.totalorder %s23, 1
      %s320 = scalar_select %p319, %s23, 1
      %p321 = scmp.lt.s32.totalorder %s24, 0
      %s322 = scalar_select %p321, %s24, 0
      %s323 = smul.addr %s322, 60
      %s324 = smul.addr %s320, 60
      %s325 = sadd.s32 %s323, %s324
      %s326 = smul.addr %s325, 8
      %s327 = scalar_lea.vmem %s0, %s326
      %s328 = smul.u32 16, %s24
      %p329 = scmp.lt.s32.totalorder %s23, 1
      %s330 = scalar_select %p329, %s23, 1
      %p331 = scmp.lt.s32.totalorder %s328, 15
      %s332 = scalar_select %p331, %s328, 15
      %s333 = smul.addr %s332, 2
      %s334 = smul.addr %s330, 32
      %s335 = sadd.s32 %s333, %s334
      %s336 = smul.addr %s335, 8
      %s337 = scalar_lea.vmem %s5, %s336
      %s338 = smul.u32 16, %s24
      %p339 = scmp.lt.s32.totalorder %s23, 1
      %s340 = scalar_select %p339, %s23, 1
      %p341 = scmp.lt.s32.totalorder %s24, 0
      %s342 = scalar_select %p341, %s24, 0
      %s343 = sadd.s32 %s342, %s340
      %s344 = scalar_lea.vmem %s6, %s343
      %p345 = scmp.lt.s32.totalorder %s23, 1
      %s346 = scalar_select %p345, %s23, 1
      %p347 = scmp.lt.s32.totalorder %s24, 0
      %s348 = scalar_select %p347, %s24, 0
      %s349 = sadd.s32 %s348, %s346
      %s350 = scalar_lea.vmem %s7, %s349
      %v351 = vld [vmem:[%s327] sm:$0xff]
      %v352 = vld [vmem:[%s327 + $0x8] sm:$0xff]
      %v353 = vld [vmem:[%s327 + $0x10] sm:$0xff]
      %v354 = vld [vmem:[%s327 + $0x18] sm:$0xff]
      %v355 = vld [vmem:[%s327 + $0x20] sm:$0xff]
      %v356 = vld [vmem:[%s327 + $0x28] sm:$0xff]
      %v357 = vld [vmem:[%s327 + $0x30] sm:$0xff]
      %v358 = vld [vmem:[%s327 + $0x38] sm:$0xff]
      %v359 = vld [vmem:[%s327 + $0x40] sm:$0xff]
      %v360 = vld [vmem:[%s327 + $0x48] sm:$0xff]
      %v361 = vld [vmem:[%s327 + $0x50] sm:$0xff]
      %v362 = vld [vmem:[%s327 + $0x58] sm:$0xff]
      %v363 = vld [vmem:[%s327 + $0x60] sm:$0xff]
      %v364 = vld [vmem:[%s327 + $0x68] sm:$0xff]
      %v365 = vld [vmem:[%s327 + $0x70] sm:$0xff]
      %v366 = vld [vmem:[%s327 + $0x78] sm:$0xff]
      %v367 = vld [vmem:[%s327 + $0x80] sm:$0xff]
      %v368 = vld [vmem:[%s327 + $0x88] sm:$0xff]
      %v369 = vld [vmem:[%s327 + $0x90] sm:$0xff]
      %v370 = vld [vmem:[%s327 + $0x98] sm:$0xff]
      %v371 = vld [vmem:[%s327 + $0xa0] sm:$0xff]
      %v372 = vld [vmem:[%s327 + $0xa8] sm:$0xff]
      %v373 = vld [vmem:[%s327 + $0xb0] sm:$0xff]
      %v374 = vld [vmem:[%s327 + $0xb8] sm:$0xff]
      %v375 = vld [vmem:[%s327 + $0xc0] sm:$0xff]
      %v376 = vld [vmem:[%s327 + $0xc8] sm:$0xff]
      %v377 = vld [vmem:[%s327 + $0xd0] sm:$0xff]
      %v378 = vld [vmem:[%s327 + $0xd8] sm:$0xff]
      %v379 = vld [vmem:[%s327 + $0xe0] sm:$0xff]
      %v380 = vld [vmem:[%s327 + $0xe8] sm:$0xff]
      %v381 = vld [vmem:[%s327 + $0xf0] sm:$0xff]
      %v382 = vld [vmem:[%s327 + $0xf8] sm:$0xff]
      %v383 = vld [vmem:[%s327 + $0x100] sm:$0xff]
      %v384 = vld [vmem:[%s327 + $0x108] sm:$0xff]
      %v385 = vld [vmem:[%s327 + $0x110] sm:$0xff]
      %v386 = vld [vmem:[%s327 + $0x118] sm:$0xff]
      %v387 = vld [vmem:[%s327 + $0x120] sm:$0xff]
      %v388 = vld [vmem:[%s327 + $0x128] sm:$0xff]
      %v389 = vld [vmem:[%s327 + $0x130] sm:$0xff]
      %v390 = vld [vmem:[%s327 + $0x138] sm:$0xff]
      %v391 = vld [vmem:[%s327 + $0x140] sm:$0xff]
      %v392 = vld [vmem:[%s327 + $0x148] sm:$0xff]
      %v393 = vld [vmem:[%s327 + $0x150] sm:$0xff]
      %v394 = vld [vmem:[%s327 + $0x158] sm:$0xff]
      %v395 = vld [vmem:[%s327 + $0x160] sm:$0xff]
      %v396 = vld [vmem:[%s327 + $0x168] sm:$0xff]
      %v397 = vld [vmem:[%s327 + $0x170] sm:$0xff]
      %v398 = vld [vmem:[%s327 + $0x178] sm:$0xff]
      %v399 = vld [vmem:[%s327 + $0x180] sm:$0xff]
      %v400 = vld [vmem:[%s327 + $0x188] sm:$0xff]
      %v401 = vld [vmem:[%s327 + $0x190] sm:$0xff]
      %v402 = vld [vmem:[%s327 + $0x198] sm:$0xff]
      %v403 = vld [vmem:[%s327 + $0x1a0] sm:$0xff]
      %v404 = vld [vmem:[%s327 + $0x1a8] sm:$0xff]
      %v405 = vld [vmem:[%s1] sm:$0xf]
      %s406 = scalar_lea.vmem %s1, 4
      %v407 = vld [vmem:[%s406] sm:$0xf]
      %s408 = scalar_lea.vmem %s1, 8
      %v409 = vld [vmem:[%s408] sm:$0xf]
      %s410 = scalar_lea.vmem %s327, 24
      %v411 = vld [vmem:[%s410] sm:$0xff]
      %v412 = vld [vmem:[%s410 + $0x8] sm:$0xff]
      %v413 = vld [vmem:[%s410 + $0x10] sm:$0xff]
      %v414 = vld [vmem:[%s410 + $0x18] sm:$0xff]
      %v415 = vld [vmem:[%s410 + $0x20] sm:$0xff]
      %v416 = vld [vmem:[%s410 + $0x28] sm:$0xff]
      %v417 = vld [vmem:[%s410 + $0x30] sm:$0xff]
      %v418 = vld [vmem:[%s410 + $0x38] sm:$0xff]
      %v419 = vld [vmem:[%s410 + $0x40] sm:$0xff]
      %v420 = vld [vmem:[%s410 + $0x48] sm:$0xff]
      %v421 = vld [vmem:[%s410 + $0x50] sm:$0xff]
      %v422 = vld [vmem:[%s410 + $0x58] sm:$0xff]
      %v423 = vld [vmem:[%s410 + $0x60] sm:$0xff]
      %v424 = vld [vmem:[%s410 + $0x68] sm:$0xff]
      %v425 = vld [vmem:[%s410 + $0x70] sm:$0xff]
      %v426 = vld [vmem:[%s410 + $0x78] sm:$0xff]
      %v427 = vld [vmem:[%s410 + $0x80] sm:$0xff]
      %v428 = vld [vmem:[%s410 + $0x88] sm:$0xff]
      %v429 = vld [vmem:[%s410 + $0x90] sm:$0xff]
      %v430 = vld [vmem:[%s410 + $0x98] sm:$0xff]
      %v431 = vld [vmem:[%s410 + $0xa0] sm:$0xff]
      %v432 = vld [vmem:[%s410 + $0xa8] sm:$0xff]
      %v433 = vld [vmem:[%s410 + $0xb0] sm:$0xff]
      %v434 = vld [vmem:[%s410 + $0xb8] sm:$0xff]
      %v435 = vld [vmem:[%s410 + $0xc0] sm:$0xff]
      %v436 = vld [vmem:[%s410 + $0xc8] sm:$0xff]
      %v437 = vld [vmem:[%s410 + $0xd0] sm:$0xff]
      %v438 = vld [vmem:[%s410 + $0xd8] sm:$0xff]
      %v439 = vld [vmem:[%s410 + $0xe0] sm:$0xff]
      %v440 = vld [vmem:[%s410 + $0xe8] sm:$0xff]
      %v441 = vld [vmem:[%s410 + $0xf0] sm:$0xff]
      %v442 = vld [vmem:[%s410 + $0xf8] sm:$0xff]
      %v443 = vld [vmem:[%s410 + $0x100] sm:$0xff]
      %v444 = vld [vmem:[%s410 + $0x108] sm:$0xff]
      %v445 = vld [vmem:[%s410 + $0x110] sm:$0xff]
      %v446 = vld [vmem:[%s410 + $0x118] sm:$0xff]
      %v447 = vld [vmem:[%s410 + $0x120] sm:$0xff]
      %v448 = vld [vmem:[%s410 + $0x128] sm:$0xff]
      %v449 = vld [vmem:[%s410 + $0x130] sm:$0xff]
      %v450 = vld [vmem:[%s410 + $0x138] sm:$0xff]
      %v451 = vld [vmem:[%s410 + $0x140] sm:$0xff]
      %v452 = vld [vmem:[%s410 + $0x148] sm:$0xff]
      %v453 = vld [vmem:[%s410 + $0x150] sm:$0xff]
      %v454 = vld [vmem:[%s410 + $0x158] sm:$0xff]
      %v455 = vld [vmem:[%s410 + $0x160] sm:$0xff]
      %v456 = vld [vmem:[%s410 + $0x168] sm:$0xff]
      %v457 = vld [vmem:[%s410 + $0x170] sm:$0xff]
      %v458 = vld [vmem:[%s410 + $0x178] sm:$0xff]
      %v459 = vld [vmem:[%s410 + $0x180] sm:$0xff]
      %v460 = vld [vmem:[%s410 + $0x188] sm:$0xff]
      %v461 = vld [vmem:[%s410 + $0x190] sm:$0xff]
      %v462 = vld [vmem:[%s410 + $0x198] sm:$0xff]
      %v463 = vld [vmem:[%s410 + $0x1a0] sm:$0xff]
      %v464 = vld [vmem:[%s410 + $0x1a8] sm:$0xff]
      %s465 = scalar_lea.vmem %s1, 12
      %v466 = vld [vmem:[%s465] sm:$0xf]
      %vm467 = vcmask 31744
      %v469 = vsel %vm467, %v411, 0
      %v472 = vsel %vm467, %v412, 0
      %v475 = vsel %vm467, %v413, 0
      %v478 = vsel %vm467, %v414, 0
      %v481 = vsel %vm467, %v415, 0
      %v484 = vsel %vm467, %v416, 0
      %v487 = vsel %vm467, %v417, 0
      %v490 = vsel %vm467, %v418, 0
      %v493 = vsel %vm467, %v419, 0
      %v496 = vsel %vm467, %v420, 0
      %v499 = vsel %vm467, %v421, 0
      %v502 = vsel %vm467, %v422, 0
      %v505 = vsel %vm467, %v423, 0
      %v508 = vsel %vm467, %v424, 0
      %v511 = vsel %vm467, %v425, 0
      %v514 = vsel %vm467, %v426, 0
      %v517 = vsel %vm467, %v427, 0
      %v520 = vsel %vm467, %v428, 0
      %v523 = vsel %vm467, %v429, 0
      %v526 = vsel %vm467, %v430, 0
      %v529 = vsel %vm467, %v431, 0
      %v532 = vsel %vm467, %v432, 0
      %v535 = vsel %vm467, %v433, 0
      %v538 = vsel %vm467, %v434, 0
      %v541 = vsel %vm467, %v435, 0
      %v544 = vsel %vm467, %v436, 0
      %v547 = vsel %vm467, %v437, 0
      %v550 = vsel %vm467, %v438, 0
      %v553 = vsel %vm467, %v439, 0
      %v556 = vsel %vm467, %v440, 0
      %v559 = vsel %vm467, %v441, 0
      %v562 = vsel %vm467, %v442, 0
      %v565 = vsel %vm467, %v443, 0
      %v568 = vsel %vm467, %v444, 0
      %v571 = vsel %vm467, %v445, 0
      %v574 = vsel %vm467, %v446, 0
      %v577 = vsel %vm467, %v447, 0
      %v580 = vsel %vm467, %v448, 0
      %v583 = vsel %vm467, %v449, 0
      %v586 = vsel %vm467, %v450, 0
      %v589 = vsel %vm467, %v451, 0
      %v592 = vsel %vm467, %v452, 0
      %v595 = vsel %vm467, %v453, 0
      %v598 = vsel %vm467, %v454, 0
      %v601 = vsel %vm467, %v455, 0
      %v604 = vsel %vm467, %v456, 0
      %v607 = vsel %vm467, %v457, 0
      %v610 = vsel %vm467, %v458, 0
      %v613 = vsel %vm467, %v459, 0
      %v616 = vsel %vm467, %v460, 0
      %v619 = vsel %vm467, %v461, 0
      %v622 = vsel %vm467, %v462, 0
      %v625 = vsel %vm467, %v463, 0
      %v628 = vsel %vm467, %v464, 0
      %vm630 = vcmask 1043456
      %v632 = vsel %vm630, %v466, 0
      %634 = vmatpush.msra.mxu0 0.0
      %635 = vmatpush.msra.mxu0 0.0
      %636 = vmatpush.msra.mxu0 0.0
      %637 = vmatpush.msra.mxu0 0.0
      %638 = vmatpush.msra.mxu0 0.0
      %639 = vmatpush.msra.mxu0 0.0
      %640 = vmatpush.msra.mxu0 0.0
      %641 = vmatpush.msra.mxu0 0.0
      %642 = vmatpush.msra.mxu0 0.0
      %643 = vmatpush.msra.mxu0 0.0
      %644 = vmatpush.msra.mxu0 0.0
      %645 = vmatpush.msra.mxu0 0.0
      %646 = vmatpush.msra.mxu0 0.0
      %647 = vmatpush.msra.mxu0 0.0
      %648 = vmatpush.msra.mxu0 0.0
      %649 = vmatpush.msra.mxu0 %v632
      %650 = vmatmul.f32.gmra.mxu0 %v469
      %v651 = vpop.f32.mrf.mxu0
      %v652 = vadd.f32 0.0, %v651
      %653 = vmatmul.f32.gmra.mxu0 %v472
      %v654 = vpop.f32.mrf.mxu0
      %v655 = vadd.f32 0.0, %v654
      %656 = vmatmul.f32.gmra.mxu0 %v475
      %v657 = vpop.f32.mrf.mxu0
      %v658 = vadd.f32 0.0, %v657
      %659 = vmatmul.f32.gmra.mxu0 %v478
      %v660 = vpop.f32.mrf.mxu0
      %v661 = vadd.f32 0.0, %v660
      %662 = vmatmul.f32.gmra.mxu0 %v481
      %v663 = vpop.f32.mrf.mxu0
      %v664 = vadd.f32 0.0, %v663
      %665 = vmatmul.f32.gmra.mxu0 %v484
      %v666 = vpop.f32.mrf.mxu0
      %v667 = vadd.f32 0.0, %v666
      %668 = vmatmul.f32.gmra.mxu0 %v487
      %v669 = vpop.f32.mrf.mxu0
      %v670 = vadd.f32 0.0, %v669
      %671 = vmatmul.f32.gmra.mxu0 %v490
      %v672 = vpop.f32.mrf.mxu0
      %v673 = vadd.f32 0.0, %v672
      %674 = vmatmul.f32.gmra.mxu0 %v493
      %v675 = vpop.f32.mrf.mxu0
      %v676 = vadd.f32 0.0, %v675
      %677 = vmatmul.f32.gmra.mxu0 %v496
      %v678 = vpop.f32.mrf.mxu0
      %v679 = vadd.f32 0.0, %v678
      %680 = vmatmul.f32.gmra.mxu0 %v499
      %v681 = vpop.f32.mrf.mxu0
      %v682 = vadd.f32 0.0, %v681
      %683 = vmatmul.f32.gmra.mxu0 %v502
      %v684 = vpop.f32.mrf.mxu0
      %v685 = vadd.f32 0.0, %v684
      %686 = vmatmul.f32.gmra.mxu0 %v505
      %v687 = vpop.f32.mrf.mxu0
      %v688 = vadd.f32 0.0, %v687
      %689 = vmatmul.f32.gmra.mxu0 %v508
      %v690 = vpop.f32.mrf.mxu0
      %v691 = vadd.f32 0.0, %v690
      %692 = vmatmul.f32.gmra.mxu0 %v511
      %v693 = vpop.f32.mrf.mxu0
      %v694 = vadd.f32 0.0, %v693
      %695 = vmatmul.f32.gmra.mxu0 %v514
      %v696 = vpop.f32.mrf.mxu0
      %v697 = vadd.f32 0.0, %v696
      %698 = vmatmul.f32.gmra.mxu0 %v517
      %v699 = vpop.f32.mrf.mxu0
      %v700 = vadd.f32 0.0, %v699
      %701 = vmatmul.f32.gmra.mxu0 %v520
      %v702 = vpop.f32.mrf.mxu0
      %v703 = vadd.f32 0.0, %v702
      %704 = vmatmul.f32.gmra.mxu0 %v523
      %v705 = vpop.f32.mrf.mxu0
      %v706 = vadd.f32 0.0, %v705
      %707 = vmatmul.f32.gmra.mxu0 %v526
      %v708 = vpop.f32.mrf.mxu0
      %v709 = vadd.f32 0.0, %v708
      %710 = vmatmul.f32.gmra.mxu0 %v529
      %v711 = vpop.f32.mrf.mxu0
      %v712 = vadd.f32 0.0, %v711
      %713 = vmatmul.f32.gmra.mxu0 %v532
      %v714 = vpop.f32.mrf.mxu0
      %v715 = vadd.f32 0.0, %v714
      %716 = vmatmul.f32.gmra.mxu0 %v535
      %v717 = vpop.f32.mrf.mxu0
      %v718 = vadd.f32 0.0, %v717
      %719 = vmatmul.f32.gmra.mxu0 %v538
      %v720 = vpop.f32.mrf.mxu0
      %v721 = vadd.f32 0.0, %v720
      %722 = vmatmul.f32.gmra.mxu0 %v541
      %v723 = vpop.f32.mrf.mxu0
      %v724 = vadd.f32 0.0, %v723
      %725 = vmatmul.f32.gmra.mxu0 %v544
      %v726 = vpop.f32.mrf.mxu0
      %v727 = vadd.f32 0.0, %v726
      %728 = vmatmul.f32.gmra.mxu0 %v547
      %v729 = vpop.f32.mrf.mxu0
      %v730 = vadd.f32 0.0, %v729
      %731 = vmatmul.f32.gmra.mxu0 %v550
      %v732 = vpop.f32.mrf.mxu0
      %v733 = vadd.f32 0.0, %v732
      %734 = vmatmul.f32.gmra.mxu0 %v553
      %v735 = vpop.f32.mrf.mxu0
      %v736 = vadd.f32 0.0, %v735
      %737 = vmatmul.f32.gmra.mxu0 %v556
      %v738 = vpop.f32.mrf.mxu0
      %v739 = vadd.f32 0.0, %v738
      %740 = vmatmul.f32.gmra.mxu0 %v559
      %v741 = vpop.f32.mrf.mxu0
      %v742 = vadd.f32 0.0, %v741
      %743 = vmatmul.f32.gmra.mxu0 %v562
      %v744 = vpop.f32.mrf.mxu0
      %v745 = vadd.f32 0.0, %v744
      %746 = vmatmul.f32.gmra.mxu0 %v565
      %v747 = vpop.f32.mrf.mxu0
      %v748 = vadd.f32 0.0, %v747
      %749 = vmatmul.f32.gmra.mxu0 %v568
      %v750 = vpop.f32.mrf.mxu0
      %v751 = vadd.f32 0.0, %v750
      %752 = vmatmul.f32.gmra.mxu0 %v571
      %v753 = vpop.f32.mrf.mxu0
      %v754 = vadd.f32 0.0, %v753
      %755 = vmatmul.f32.gmra.mxu0 %v574
      %v756 = vpop.f32.mrf.mxu0
      %v757 = vadd.f32 0.0, %v756
      %758 = vmatmul.f32.gmra.mxu0 %v577
      %v759 = vpop.f32.mrf.mxu0
      %v760 = vadd.f32 0.0, %v759
      %761 = vmatmul.f32.gmra.mxu0 %v580
      %v762 = vpop.f32.mrf.mxu0
      %v763 = vadd.f32 0.0, %v762
      %764 = vmatmul.f32.gmra.mxu0 %v583
      %v765 = vpop.f32.mrf.mxu0
      %v766 = vadd.f32 0.0, %v765
      %767 = vmatmul.f32.gmra.mxu0 %v586
      %v768 = vpop.f32.mrf.mxu0
      %v769 = vadd.f32 0.0, %v768
      %770 = vmatmul.f32.gmra.mxu0 %v589
      %v771 = vpop.f32.mrf.mxu0
      %v772 = vadd.f32 0.0, %v771
      %773 = vmatmul.f32.gmra.mxu0 %v592
      %v774 = vpop.f32.mrf.mxu0
      %v775 = vadd.f32 0.0, %v774
      %776 = vmatmul.f32.gmra.mxu0 %v595
      %v777 = vpop.f32.mrf.mxu0
      %v778 = vadd.f32 0.0, %v777
      %779 = vmatmul.f32.gmra.mxu0 %v598
      %v780 = vpop.f32.mrf.mxu0
      %v781 = vadd.f32 0.0, %v780
      %782 = vmatmul.f32.gmra.mxu0 %v601
      %v783 = vpop.f32.mrf.mxu0
      %v784 = vadd.f32 0.0, %v783
      %785 = vmatmul.f32.gmra.mxu0 %v604
      %v786 = vpop.f32.mrf.mxu0
      %v787 = vadd.f32 0.0, %v786
      %788 = vmatmul.f32.gmra.mxu0 %v607
      %v789 = vpop.f32.mrf.mxu0
      %v790 = vadd.f32 0.0, %v789
      %791 = vmatmul.f32.gmra.mxu0 %v610
      %v792 = vpop.f32.mrf.mxu0
      %v793 = vadd.f32 0.0, %v792
      %794 = vmatmul.f32.gmra.mxu0 %v613
      %v795 = vpop.f32.mrf.mxu0
      %v796 = vadd.f32 0.0, %v795
      %797 = vmatmul.f32.gmra.mxu0 %v616
      %v798 = vpop.f32.mrf.mxu0
      %v799 = vadd.f32 0.0, %v798
      %800 = vmatmul.f32.gmra.mxu0 %v619
      %v801 = vpop.f32.mrf.mxu0
      %v802 = vadd.f32 0.0, %v801
      %803 = vmatmul.f32.gmra.mxu0 %v622
      %v804 = vpop.f32.mrf.mxu0
      %v805 = vadd.f32 0.0, %v804
      %806 = vmatmul.f32.gmra.mxu0 %v625
      %v807 = vpop.f32.mrf.mxu0
      %v808 = vadd.f32 0.0, %v807
      %809 = vmatmul.f32.gmra.mxu0 %v628
      %v810 = vpop.f32.mrf.mxu0
      %v811 = vadd.f32 0.0, %v810
      %812 = vdwg.mxu0
      %v814 = vsel %vm467, %v351, 0
      %v817 = vsel %vm467, %v352, 0
      %v820 = vsel %vm467, %v353, 0
      %v823 = vsel %vm467, %v354, 0
      %v826 = vsel %vm467, %v355, 0
      %v829 = vsel %vm467, %v356, 0
      %v832 = vsel %vm467, %v357, 0
      %v835 = vsel %vm467, %v358, 0
      %v838 = vsel %vm467, %v359, 0
      %v841 = vsel %vm467, %v360, 0
      %v844 = vsel %vm467, %v361, 0
      %v847 = vsel %vm467, %v362, 0
      %v850 = vsel %vm467, %v363, 0
      %v853 = vsel %vm467, %v364, 0
      %v856 = vsel %vm467, %v365, 0
      %v859 = vsel %vm467, %v366, 0
      %v862 = vsel %vm467, %v367, 0
      %v865 = vsel %vm467, %v368, 0
      %v868 = vsel %vm467, %v369, 0
      %v871 = vsel %vm467, %v370, 0
      %v874 = vsel %vm467, %v371, 0
      %v877 = vsel %vm467, %v372, 0
      %v880 = vsel %vm467, %v373, 0
      %v883 = vsel %vm467, %v374, 0
      %v886 = vsel %vm467, %v375, 0
      %v889 = vsel %vm467, %v376, 0
      %v892 = vsel %vm467, %v377, 0
      %v895 = vsel %vm467, %v378, 0
      %v898 = vsel %vm467, %v379, 0
      %v901 = vsel %vm467, %v380, 0
      %v904 = vsel %vm467, %v381, 0
      %v907 = vsel %vm467, %v382, 0
      %v910 = vsel %vm467, %v383, 0
      %v913 = vsel %vm467, %v384, 0
      %v916 = vsel %vm467, %v385, 0
      %v919 = vsel %vm467, %v386, 0
      %v922 = vsel %vm467, %v387, 0
      %v925 = vsel %vm467, %v388, 0
      %v928 = vsel %vm467, %v389, 0
      %v931 = vsel %vm467, %v390, 0
      %v934 = vsel %vm467, %v391, 0
      %v937 = vsel %vm467, %v392, 0
      %v940 = vsel %vm467, %v393, 0
      %v943 = vsel %vm467, %v394, 0
      %v946 = vsel %vm467, %v395, 0
      %v949 = vsel %vm467, %v396, 0
      %v952 = vsel %vm467, %v397, 0
      %v955 = vsel %vm467, %v398, 0
      %v958 = vsel %vm467, %v399, 0
      %v961 = vsel %vm467, %v400, 0
      %v964 = vsel %vm467, %v401, 0
      %v967 = vsel %vm467, %v402, 0
      %v970 = vsel %vm467, %v403, 0
      %v973 = vsel %vm467, %v404, 0
      %v976 = vsel %vm630, %v405, 0
      %978 = vmatpush.msra.mxu0 0.0
      %979 = vmatpush.msra.mxu0 0.0
      %980 = vmatpush.msra.mxu0 0.0
      %981 = vmatpush.msra.mxu0 0.0
      %982 = vmatpush.msra.mxu0 0.0
      %983 = vmatpush.msra.mxu0 0.0
      %984 = vmatpush.msra.mxu0 0.0
      %985 = vmatpush.msra.mxu0 0.0
      %986 = vmatpush.msra.mxu0 0.0
      %987 = vmatpush.msra.mxu0 0.0
      %988 = vmatpush.msra.mxu0 0.0
      %989 = vmatpush.msra.mxu0 0.0
      %990 = vmatpush.msra.mxu0 0.0
      %991 = vmatpush.msra.mxu0 0.0
      %992 = vmatpush.msra.mxu0 0.0
      %993 = vmatpush.msra.mxu0 %v976
      %994 = vmatmul.f32.gmra.mxu0 %v814
      %v995 = vpop.f32.mrf.mxu0
      %v996 = vadd.f32 %v652, %v995
      %997 = vmatmul.f32.gmra.mxu0 %v817
      %v998 = vpop.f32.mrf.mxu0
      %v999 = vadd.f32 %v655, %v998
      %1000 = vmatmul.f32.gmra.mxu0 %v820
      %v1001 = vpop.f32.mrf.mxu0
      %v1002 = vadd.f32 %v658, %v1001
      %1003 = vmatmul.f32.gmra.mxu0 %v823
      %v1004 = vpop.f32.mrf.mxu0
      %v1005 = vadd.f32 %v661, %v1004
      %1006 = vmatmul.f32.gmra.mxu0 %v826
      %v1007 = vpop.f32.mrf.mxu0
      %v1008 = vadd.f32 %v664, %v1007
      %1009 = vmatmul.f32.gmra.mxu0 %v829
      %v1010 = vpop.f32.mrf.mxu0
      %v1011 = vadd.f32 %v667, %v1010
      %1012 = vmatmul.f32.gmra.mxu0 %v832
      %v1013 = vpop.f32.mrf.mxu0
      %v1014 = vadd.f32 %v670, %v1013
      %1015 = vmatmul.f32.gmra.mxu0 %v835
      %v1016 = vpop.f32.mrf.mxu0
      %v1017 = vadd.f32 %v673, %v1016
      %1018 = vmatmul.f32.gmra.mxu0 %v838
      %v1019 = vpop.f32.mrf.mxu0
      %v1020 = vadd.f32 %v676, %v1019
      %1021 = vmatmul.f32.gmra.mxu0 %v841
      %v1022 = vpop.f32.mrf.mxu0
      %v1023 = vadd.f32 %v679, %v1022
      %1024 = vmatmul.f32.gmra.mxu0 %v844
      %v1025 = vpop.f32.mrf.mxu0
      %v1026 = vadd.f32 %v682, %v1025
      %1027 = vmatmul.f32.gmra.mxu0 %v847
      %v1028 = vpop.f32.mrf.mxu0
      %v1029 = vadd.f32 %v685, %v1028
      %1030 = vmatmul.f32.gmra.mxu0 %v850
      %v1031 = vpop.f32.mrf.mxu0
      %v1032 = vadd.f32 %v688, %v1031
      %1033 = vmatmul.f32.gmra.mxu0 %v853
      %v1034 = vpop.f32.mrf.mxu0
      %v1035 = vadd.f32 %v691, %v1034
      %1036 = vmatmul.f32.gmra.mxu0 %v856
      %v1037 = vpop.f32.mrf.mxu0
      %v1038 = vadd.f32 %v694, %v1037
      %1039 = vmatmul.f32.gmra.mxu0 %v859
      %v1040 = vpop.f32.mrf.mxu0
      %v1041 = vadd.f32 %v697, %v1040
      %1042 = vmatmul.f32.gmra.mxu0 %v862
      %v1043 = vpop.f32.mrf.mxu0
      %v1044 = vadd.f32 %v700, %v1043
      %1045 = vmatmul.f32.gmra.mxu0 %v865
      %v1046 = vpop.f32.mrf.mxu0
      %v1047 = vadd.f32 %v703, %v1046
      %1048 = vmatmul.f32.gmra.mxu0 %v868
      %v1049 = vpop.f32.mrf.mxu0
      %v1050 = vadd.f32 %v706, %v1049
      %1051 = vmatmul.f32.gmra.mxu0 %v871
      %v1052 = vpop.f32.mrf.mxu0
      %v1053 = vadd.f32 %v709, %v1052
      %1054 = vmatmul.f32.gmra.mxu0 %v874
      %v1055 = vpop.f32.mrf.mxu0
      %v1056 = vadd.f32 %v712, %v1055
      %1057 = vmatmul.f32.gmra.mxu0 %v877
      %v1058 = vpop.f32.mrf.mxu0
      %v1059 = vadd.f32 %v715, %v1058
      %1060 = vmatmul.f32.gmra.mxu0 %v880
      %v1061 = vpop.f32.mrf.mxu0
      %v1062 = vadd.f32 %v718, %v1061
      %1063 = vmatmul.f32.gmra.mxu0 %v883
      %v1064 = vpop.f32.mrf.mxu0
      %v1065 = vadd.f32 %v721, %v1064
      %1066 = vmatmul.f32.gmra.mxu0 %v886
      %v1067 = vpop.f32.mrf.mxu0
      %v1068 = vadd.f32 %v724, %v1067
      %1069 = vmatmul.f32.gmra.mxu0 %v889
      %v1070 = vpop.f32.mrf.mxu0
      %v1071 = vadd.f32 %v727, %v1070
      %1072 = vmatmul.f32.gmra.mxu0 %v892
      %v1073 = vpop.f32.mrf.mxu0
      %v1074 = vadd.f32 %v730, %v1073
      %1075 = vmatmul.f32.gmra.mxu0 %v895
      %v1076 = vpop.f32.mrf.mxu0
      %v1077 = vadd.f32 %v733, %v1076
      %1078 = vmatmul.f32.gmra.mxu0 %v898
      %v1079 = vpop.f32.mrf.mxu0
      %v1080 = vadd.f32 %v736, %v1079
      %1081 = vmatmul.f32.gmra.mxu0 %v901
      %v1082 = vpop.f32.mrf.mxu0
      %v1083 = vadd.f32 %v739, %v1082
      %1084 = vmatmul.f32.gmra.mxu0 %v904
      %v1085 = vpop.f32.mrf.mxu0
      %v1086 = vadd.f32 %v742, %v1085
      %1087 = vmatmul.f32.gmra.mxu0 %v907
      %v1088 = vpop.f32.mrf.mxu0
      %v1089 = vadd.f32 %v745, %v1088
      %1090 = vmatmul.f32.gmra.mxu0 %v910
      %v1091 = vpop.f32.mrf.mxu0
      %v1092 = vadd.f32 %v748, %v1091
      %1093 = vmatmul.f32.gmra.mxu0 %v913
      %v1094 = vpop.f32.mrf.mxu0
      %v1095 = vadd.f32 %v751, %v1094
      %1096 = vmatmul.f32.gmra.mxu0 %v916
      %v1097 = vpop.f32.mrf.mxu0
      %v1098 = vadd.f32 %v754, %v1097
      %1099 = vmatmul.f32.gmra.mxu0 %v919
      %v1100 = vpop.f32.mrf.mxu0
      %v1101 = vadd.f32 %v757, %v1100
      %1102 = vmatmul.f32.gmra.mxu0 %v922
      %v1103 = vpop.f32.mrf.mxu0
      %v1104 = vadd.f32 %v760, %v1103
      %1105 = vmatmul.f32.gmra.mxu0 %v925
      %v1106 = vpop.f32.mrf.mxu0
      %v1107 = vadd.f32 %v763, %v1106
      %1108 = vmatmul.f32.gmra.mxu0 %v928
      %v1109 = vpop.f32.mrf.mxu0
      %v1110 = vadd.f32 %v766, %v1109
      %1111 = vmatmul.f32.gmra.mxu0 %v931
      %v1112 = vpop.f32.mrf.mxu0
      %v1113 = vadd.f32 %v769, %v1112
      %1114 = vmatmul.f32.gmra.mxu0 %v934
      %v1115 = vpop.f32.mrf.mxu0
      %v1116 = vadd.f32 %v772, %v1115
      %1117 = vmatmul.f32.gmra.mxu0 %v937
      %v1118 = vpop.f32.mrf.mxu0
      %v1119 = vadd.f32 %v775, %v1118
      %1120 = vmatmul.f32.gmra.mxu0 %v940
      %v1121 = vpop.f32.mrf.mxu0
      %v1122 = vadd.f32 %v778, %v1121
      %1123 = vmatmul.f32.gmra.mxu0 %v943
      %v1124 = vpop.f32.mrf.mxu0
      %v1125 = vadd.f32 %v781, %v1124
      %1126 = vmatmul.f32.gmra.mxu0 %v946
      %v1127 = vpop.f32.mrf.mxu0
      %v1128 = vadd.f32 %v784, %v1127
      %1129 = vmatmul.f32.gmra.mxu0 %v949
      %v1130 = vpop.f32.mrf.mxu0
      %v1131 = vadd.f32 %v787, %v1130
      %1132 = vmatmul.f32.gmra.mxu0 %v952
      %v1133 = vpop.f32.mrf.mxu0
      %v1134 = vadd.f32 %v790, %v1133
      %1135 = vmatmul.f32.gmra.mxu0 %v955
      %v1136 = vpop.f32.mrf.mxu0
      %v1137 = vadd.f32 %v793, %v1136
      %1138 = vmatmul.f32.gmra.mxu0 %v958
      %v1139 = vpop.f32.mrf.mxu0
      %v1140 = vadd.f32 %v796, %v1139
      %1141 = vmatmul.f32.gmra.mxu0 %v961
      %v1142 = vpop.f32.mrf.mxu0
      %v1143 = vadd.f32 %v799, %v1142
      %1144 = vmatmul.f32.gmra.mxu0 %v964
      %v1145 = vpop.f32.mrf.mxu0
      %v1146 = vadd.f32 %v802, %v1145
      %1147 = vmatmul.f32.gmra.mxu0 %v967
      %v1148 = vpop.f32.mrf.mxu0
      %v1149 = vadd.f32 %v805, %v1148
      %1150 = vmatmul.f32.gmra.mxu0 %v970
      %v1151 = vpop.f32.mrf.mxu0
      %v1152 = vadd.f32 %v808, %v1151
      %1153 = vmatmul.f32.gmra.mxu0 %v973
      %v1154 = vpop.f32.mrf.mxu0
      %v1155 = vadd.f32 %v811, %v1154
      %1156 = vdwg.mxu0
      %s1157 = scalar_lea.vmem %s1, 16
      %v1158 = vld [vmem:[%s1157] sm:$0xf]
      %v1160 = vsel %vm630, %v1158, 0
      %1162 = vmatpush.msra.mxu0 0.0
      %1163 = vmatpush.msra.mxu0 0.0
      %1164 = vmatpush.msra.mxu0 0.0
      %1165 = vmatpush.msra.mxu0 0.0
      %1166 = vmatpush.msra.mxu0 0.0
      %1167 = vmatpush.msra.mxu0 0.0
      %1168 = vmatpush.msra.mxu0 0.0
      %1169 = vmatpush.msra.mxu0 0.0
      %1170 = vmatpush.msra.mxu0 0.0
      %1171 = vmatpush.msra.mxu0 0.0
      %1172 = vmatpush.msra.mxu0 0.0
      %1173 = vmatpush.msra.mxu0 0.0
      %1174 = vmatpush.msra.mxu0 0.0
      %1175 = vmatpush.msra.mxu0 0.0
      %1176 = vmatpush.msra.mxu0 0.0
      %1177 = vmatpush.msra.mxu0 %v1160
      %1178 = vmatmul.f32.gmra.mxu0 %v469
      %v1179 = vpop.f32.mrf.mxu0
      %v1180 = vadd.f32 0.0, %v1179
      %1181 = vmatmul.f32.gmra.mxu0 %v472
      %v1182 = vpop.f32.mrf.mxu0
      %v1183 = vadd.f32 0.0, %v1182
      %1184 = vmatmul.f32.gmra.mxu0 %v475
      %v1185 = vpop.f32.mrf.mxu0
      %1186 = vmatmul.f32.gmra.mxu0 %v478
      %v1187 = vpop.f32.mrf.mxu0
      %v1188 = vadd.f32 0.0, %v1187
      %1189 = vmatmul.f32.gmra.mxu0 %v481
      %v1190 = vpop.f32.mrf.mxu0
      %v1191 = vadd.f32 0.0, %v1190
      %1192 = vmatmul.f32.gmra.mxu0 %v484
      %v1193 = vpop.f32.mrf.mxu0
      %1194 = vmatmul.f32.gmra.mxu0 %v487
      %v1195 = vpop.f32.mrf.mxu0
      %v1196 = vadd.f32 0.0, %v1195
      %1197 = vmatmul.f32.gmra.mxu0 %v490
      %v1198 = vpop.f32.mrf.mxu0
      %v1199 = vadd.f32 0.0, %v1198
      %1200 = vmatmul.f32.gmra.mxu0 %v493
      %v1201 = vpop.f32.mrf.mxu0
      %1202 = vmatmul.f32.gmra.mxu0 %v496
      %v1203 = vpop.f32.mrf.mxu0
      %v1204 = vadd.f32 0.0, %v1203
      %1205 = vmatmul.f32.gmra.mxu0 %v499
      %v1206 = vpop.f32.mrf.mxu0
      %v1207 = vadd.f32 0.0, %v1206
      %1208 = vmatmul.f32.gmra.mxu0 %v502
      %v1209 = vpop.f32.mrf.mxu0
      %1210 = vmatmul.f32.gmra.mxu0 %v505
      %v1211 = vpop.f32.mrf.mxu0
      %v1212 = vadd.f32 0.0, %v1211
      %1213 = vmatmul.f32.gmra.mxu0 %v508
      %v1214 = vpop.f32.mrf.mxu0
      %v1215 = vadd.f32 0.0, %v1214
      %1216 = vmatmul.f32.gmra.mxu0 %v511
      %v1217 = vpop.f32.mrf.mxu0
      %1218 = vmatmul.f32.gmra.mxu0 %v514
      %v1219 = vpop.f32.mrf.mxu0
      %v1220 = vadd.f32 0.0, %v1219
      %1221 = vmatmul.f32.gmra.mxu0 %v517
      %v1222 = vpop.f32.mrf.mxu0
      %v1223 = vadd.f32 0.0, %v1222
      %1224 = vmatmul.f32.gmra.mxu0 %v520
      %v1225 = vpop.f32.mrf.mxu0
      %1226 = vmatmul.f32.gmra.mxu0 %v523
      %v1227 = vpop.f32.mrf.mxu0
      %v1228 = vadd.f32 0.0, %v1227
      %1229 = vmatmul.f32.gmra.mxu0 %v526
      %v1230 = vpop.f32.mrf.mxu0
      %v1231 = vadd.f32 0.0, %v1230
      %1232 = vmatmul.f32.gmra.mxu0 %v529
      %v1233 = vpop.f32.mrf.mxu0
      %1234 = vmatmul.f32.gmra.mxu0 %v532
      %v1235 = vpop.f32.mrf.mxu0
      %v1236 = vadd.f32 0.0, %v1235
      %1237 = vmatmul.f32.gmra.mxu0 %v535
      %v1238 = vpop.f32.mrf.mxu0
      %v1239 = vadd.f32 0.0, %v1238
      %1240 = vmatmul.f32.gmra.mxu0 %v538
      %v1241 = vpop.f32.mrf.mxu0
      %1242 = vmatmul.f32.gmra.mxu0 %v541
      %v1243 = vpop.f32.mrf.mxu0
      %v1244 = vadd.f32 0.0, %v1243
      %1245 = vmatmul.f32.gmra.mxu0 %v544
      %v1246 = vpop.f32.mrf.mxu0
      %v1247 = vadd.f32 0.0, %v1246
      %1248 = vmatmul.f32.gmra.mxu0 %v547
      %v1249 = vpop.f32.mrf.mxu0
      %1250 = vmatmul.f32.gmra.mxu0 %v550
      %v1251 = vpop.f32.mrf.mxu0
      %v1252 = vadd.f32 0.0, %v1251
      %1253 = vmatmul.f32.gmra.mxu0 %v553
      %v1254 = vpop.f32.mrf.mxu0
      %v1255 = vadd.f32 0.0, %v1254
      %1256 = vmatmul.f32.gmra.mxu0 %v556
      %v1257 = vpop.f32.mrf.mxu0
      %1258 = vmatmul.f32.gmra.mxu0 %v559
      %v1259 = vpop.f32.mrf.mxu0
      %v1260 = vadd.f32 0.0, %v1259
      %1261 = vmatmul.f32.gmra.mxu0 %v562
      %v1262 = vpop.f32.mrf.mxu0
      %v1263 = vadd.f32 0.0, %v1262
      %1264 = vmatmul.f32.gmra.mxu0 %v565
      %v1265 = vpop.f32.mrf.mxu0
      %1266 = vmatmul.f32.gmra.mxu0 %v568
      %v1267 = vpop.f32.mrf.mxu0
      %v1268 = vadd.f32 0.0, %v1267
      %1269 = vmatmul.f32.gmra.mxu0 %v571
      %v1270 = vpop.f32.mrf.mxu0
      %v1271 = vadd.f32 0.0, %v1270
      %1272 = vmatmul.f32.gmra.mxu0 %v574
      %v1273 = vpop.f32.mrf.mxu0
      %1274 = vmatmul.f32.gmra.mxu0 %v577
      %v1275 = vpop.f32.mrf.mxu0
      %v1276 = vadd.f32 0.0, %v1275
      %1277 = vmatmul.f32.gmra.mxu0 %v580
      %v1278 = vpop.f32.mrf.mxu0
      %v1279 = vadd.f32 0.0, %v1278
      %1280 = vmatmul.f32.gmra.mxu0 %v583
      %v1281 = vpop.f32.mrf.mxu0
      %1282 = vmatmul.f32.gmra.mxu0 %v586
      %v1283 = vpop.f32.mrf.mxu0
      %v1284 = vadd.f32 0.0, %v1283
      %1285 = vmatmul.f32.gmra.mxu0 %v589
      %v1286 = vpop.f32.mrf.mxu0
      %v1287 = vadd.f32 0.0, %v1286
      %1288 = vmatmul.f32.gmra.mxu0 %v592
      %v1289 = vpop.f32.mrf.mxu0
      %1290 = vmatmul.f32.gmra.mxu0 %v595
      %v1291 = vpop.f32.mrf.mxu0
      %v1292 = vadd.f32 0.0, %v1291
      %1293 = vmatmul.f32.gmra.mxu0 %v598
      %v1294 = vpop.f32.mrf.mxu0
      %v1295 = vadd.f32 0.0, %v1294
      %1296 = vmatmul.f32.gmra.mxu0 %v601
      %v1297 = vpop.f32.mrf.mxu0
      %1298 = vmatmul.f32.gmra.mxu0 %v604
      %v1299 = vpop.f32.mrf.mxu0
      %v1300 = vadd.f32 0.0, %v1299
      %1301 = vmatmul.f32.gmra.mxu0 %v607
      %v1302 = vpop.f32.mrf.mxu0
      %v1303 = vadd.f32 0.0, %v1302
      %1304 = vmatmul.f32.gmra.mxu0 %v610
      %v1305 = vpop.f32.mrf.mxu0
      %1306 = vmatmul.f32.gmra.mxu0 %v613
      %v1307 = vpop.f32.mrf.mxu0
      %v1308 = vadd.f32 0.0, %v1307
      %1309 = vmatmul.f32.gmra.mxu0 %v616
      %v1310 = vpop.f32.mrf.mxu0
      %v1311 = vadd.f32 0.0, %v1310
      %1312 = vmatmul.f32.gmra.mxu0 %v619
      %v1313 = vpop.f32.mrf.mxu0
      %1314 = vmatmul.f32.gmra.mxu0 %v622
      %v1315 = vpop.f32.mrf.mxu0
      %v1316 = vadd.f32 0.0, %v1315
      %1317 = vmatmul.f32.gmra.mxu0 %v625
      %v1318 = vpop.f32.mrf.mxu0
      %v1319 = vadd.f32 0.0, %v1318
      %1320 = vmatmul.f32.gmra.mxu0 %v628
      %v1321 = vpop.f32.mrf.mxu0
      %1322 = vdwg.mxu0
      %v1324 = vsel %vm630, %v407, 0
      %1326 = vmatpush.msra.mxu0 0.0
      %1327 = vmatpush.msra.mxu0 0.0
      %1328 = vmatpush.msra.mxu0 0.0
      %1329 = vmatpush.msra.mxu0 0.0
      %1330 = vmatpush.msra.mxu0 0.0
      %1331 = vmatpush.msra.mxu0 0.0
      %1332 = vmatpush.msra.mxu0 0.0
      %1333 = vmatpush.msra.mxu0 0.0
      %1334 = vmatpush.msra.mxu0 0.0
      %1335 = vmatpush.msra.mxu0 0.0
      %1336 = vmatpush.msra.mxu0 0.0
      %1337 = vmatpush.msra.mxu0 0.0
      %1338 = vmatpush.msra.mxu0 0.0
      %1339 = vmatpush.msra.mxu0 0.0
      %1340 = vmatpush.msra.mxu0 0.0
      %1341 = vmatpush.msra.mxu0 %v1324
      %1342 = vmatmul.f32.gmra.mxu0 %v814
      %v1343 = vpop.f32.mrf.mxu0
      %v1344 = vadd.f32 %v1180, %v1343
      %1345 = vmatmul.f32.gmra.mxu0 %v817
      %v1346 = vpop.f32.mrf.mxu0
      %v1347 = vadd.f32 %v1183, %v1346
      %1348 = vmatmul.f32.gmra.mxu0 %v820
      %v1349 = vpop.f32.mrf.mxu0
      %1350 = vmatmul.f32.gmra.mxu0 %v823
      %v1351 = vpop.f32.mrf.mxu0
      %v1352 = vadd.f32 %v1188, %v1351
      %1353 = vmatmul.f32.gmra.mxu0 %v826
      %v1354 = vpop.f32.mrf.mxu0
      %v1355 = vadd.f32 %v1191, %v1354
      %1356 = vmatmul.f32.gmra.mxu0 %v829
      %v1357 = vpop.f32.mrf.mxu0
      %1358 = vmatmul.f32.gmra.mxu0 %v832
      %v1359 = vpop.f32.mrf.mxu0
      %v1360 = vadd.f32 %v1196, %v1359
      %1361 = vmatmul.f32.gmra.mxu0 %v835
      %v1362 = vpop.f32.mrf.mxu0
      %v1363 = vadd.f32 %v1199, %v1362
      %1364 = vmatmul.f32.gmra.mxu0 %v838
      %v1365 = vpop.f32.mrf.mxu0
      %1366 = vmatmul.f32.gmra.mxu0 %v841
      %v1367 = vpop.f32.mrf.mxu0
      %v1368 = vadd.f32 %v1204, %v1367
      %1369 = vmatmul.f32.gmra.mxu0 %v844
      %v1370 = vpop.f32.mrf.mxu0
      %v1371 = vadd.f32 %v1207, %v1370
      %1372 = vmatmul.f32.gmra.mxu0 %v847
      %v1373 = vpop.f32.mrf.mxu0
      %1374 = vmatmul.f32.gmra.mxu0 %v850
      %v1375 = vpop.f32.mrf.mxu0
      %v1376 = vadd.f32 %v1212, %v1375
      %1377 = vmatmul.f32.gmra.mxu0 %v853
      %v1378 = vpop.f32.mrf.mxu0
      %v1379 = vadd.f32 %v1215, %v1378
      %1380 = vmatmul.f32.gmra.mxu0 %v856
      %v1381 = vpop.f32.mrf.mxu0
      %1382 = vmatmul.f32.gmra.mxu0 %v859
      %v1383 = vpop.f32.mrf.mxu0
      %v1384 = vadd.f32 %v1220, %v1383
      %1385 = vmatmul.f32.gmra.mxu0 %v862
      %v1386 = vpop.f32.mrf.mxu0
      %v1387 = vadd.f32 %v1223, %v1386
      %1388 = vmatmul.f32.gmra.mxu0 %v865
      %v1389 = vpop.f32.mrf.mxu0
      %1390 = vmatmul.f32.gmra.mxu0 %v868
      %v1391 = vpop.f32.mrf.mxu0
      %v1392 = vadd.f32 %v1228, %v1391
      %1393 = vmatmul.f32.gmra.mxu0 %v871
      %v1394 = vpop.f32.mrf.mxu0
      %v1395 = vadd.f32 %v1231, %v1394
      %1396 = vmatmul.f32.gmra.mxu0 %v874
      %v1397 = vpop.f32.mrf.mxu0
      %1398 = vmatmul.f32.gmra.mxu0 %v877
      %v1399 = vpop.f32.mrf.mxu0
      %v1400 = vadd.f32 %v1236, %v1399
      %1401 = vmatmul.f32.gmra.mxu0 %v880
      %v1402 = vpop.f32.mrf.mxu0
      %v1403 = vadd.f32 %v1239, %v1402
      %1404 = vmatmul.f32.gmra.mxu0 %v883
      %v1405 = vpop.f32.mrf.mxu0
      %1406 = vmatmul.f32.gmra.mxu0 %v886
      %v1407 = vpop.f32.mrf.mxu0
      %v1408 = vadd.f32 %v1244, %v1407
      %1409 = vmatmul.f32.gmra.mxu0 %v889
      %v1410 = vpop.f32.mrf.mxu0
      %v1411 = vadd.f32 %v1247, %v1410
      %1412 = vmatmul.f32.gmra.mxu0 %v892
      %v1413 = vpop.f32.mrf.mxu0
      %1414 = vmatmul.f32.gmra.mxu0 %v895
      %v1415 = vpop.f32.mrf.mxu0
      %v1416 = vadd.f32 %v1252, %v1415
      %1417 = vmatmul.f32.gmra.mxu0 %v898
      %v1418 = vpop.f32.mrf.mxu0
      %v1419 = vadd.f32 %v1255, %v1418
      %1420 = vmatmul.f32.gmra.mxu0 %v901
      %v1421 = vpop.f32.mrf.mxu0
      %1422 = vmatmul.f32.gmra.mxu0 %v904
      %v1423 = vpop.f32.mrf.mxu0
      %v1424 = vadd.f32 %v1260, %v1423
      %1425 = vmatmul.f32.gmra.mxu0 %v907
      %v1426 = vpop.f32.mrf.mxu0
      %v1427 = vadd.f32 %v1263, %v1426
      %1428 = vmatmul.f32.gmra.mxu0 %v910
      %v1429 = vpop.f32.mrf.mxu0
      %1430 = vmatmul.f32.gmra.mxu0 %v913
      %v1431 = vpop.f32.mrf.mxu0
      %v1432 = vadd.f32 %v1268, %v1431
      %1433 = vmatmul.f32.gmra.mxu0 %v916
      %v1434 = vpop.f32.mrf.mxu0
      %v1435 = vadd.f32 %v1271, %v1434
      %1436 = vmatmul.f32.gmra.mxu0 %v919
      %v1437 = vpop.f32.mrf.mxu0
      %1438 = vmatmul.f32.gmra.mxu0 %v922
      %v1439 = vpop.f32.mrf.mxu0
      %v1440 = vadd.f32 %v1276, %v1439
      %1441 = vmatmul.f32.gmra.mxu0 %v925
      %v1442 = vpop.f32.mrf.mxu0
      %v1443 = vadd.f32 %v1279, %v1442
      %1444 = vmatmul.f32.gmra.mxu0 %v928
      %v1445 = vpop.f32.mrf.mxu0
      %1446 = vmatmul.f32.gmra.mxu0 %v931
      %v1447 = vpop.f32.mrf.mxu0
      %v1448 = vadd.f32 %v1284, %v1447
      %1449 = vmatmul.f32.gmra.mxu0 %v934
      %v1450 = vpop.f32.mrf.mxu0
      %v1451 = vadd.f32 %v1287, %v1450
      %1452 = vmatmul.f32.gmra.mxu0 %v937
      %v1453 = vpop.f32.mrf.mxu0
      %1454 = vmatmul.f32.gmra.mxu0 %v940
      %v1455 = vpop.f32.mrf.mxu0
      %v1456 = vadd.f32 %v1292, %v1455
      %1457 = vmatmul.f32.gmra.mxu0 %v943
      %v1458 = vpop.f32.mrf.mxu0
      %v1459 = vadd.f32 %v1295, %v1458
      %1460 = vmatmul.f32.gmra.mxu0 %v946
      %v1461 = vpop.f32.mrf.mxu0
      %1462 = vmatmul.f32.gmra.mxu0 %v949
      %v1463 = vpop.f32.mrf.mxu0
      %v1464 = vadd.f32 %v1300, %v1463
      %1465 = vmatmul.f32.gmra.mxu0 %v952
      %v1466 = vpop.f32.mrf.mxu0
      %v1467 = vadd.f32 %v1303, %v1466
      %1468 = vmatmul.f32.gmra.mxu0 %v955
      %v1469 = vpop.f32.mrf.mxu0
      %1470 = vmatmul.f32.gmra.mxu0 %v958
      %v1471 = vpop.f32.mrf.mxu0
      %v1472 = vadd.f32 %v1308, %v1471
      %1473 = vmatmul.f32.gmra.mxu0 %v961
      %v1474 = vpop.f32.mrf.mxu0
      %v1475 = vadd.f32 %v1311, %v1474
      %1476 = vmatmul.f32.gmra.mxu0 %v964
      %v1477 = vpop.f32.mrf.mxu0
      %1478 = vmatmul.f32.gmra.mxu0 %v967
      %v1479 = vpop.f32.mrf.mxu0
      %v1480 = vadd.f32 %v1316, %v1479
      %1481 = vmatmul.f32.gmra.mxu0 %v970
      %v1482 = vpop.f32.mrf.mxu0
      %v1483 = vadd.f32 %v1319, %v1482
      %1484 = vmatmul.f32.gmra.mxu0 %v973
      %v1485 = vpop.f32.mrf.mxu0
      %1486 = vdwg.mxu0
      %s1487 = scalar_lea.vmem %s1, 20
      %v1488 = vld [vmem:[%s1487] sm:$0xf]
      %v1490 = vsel %vm630, %v1488, 0
      %1492 = vmatpush.msra.mxu0 0.0
      %1493 = vmatpush.msra.mxu0 0.0
      %1494 = vmatpush.msra.mxu0 0.0
      %1495 = vmatpush.msra.mxu0 0.0
      %1496 = vmatpush.msra.mxu0 0.0
      %1497 = vmatpush.msra.mxu0 0.0
      %1498 = vmatpush.msra.mxu0 0.0
      %1499 = vmatpush.msra.mxu0 0.0
      %1500 = vmatpush.msra.mxu0 0.0
      %1501 = vmatpush.msra.mxu0 0.0
      %1502 = vmatpush.msra.mxu0 0.0
      %1503 = vmatpush.msra.mxu0 0.0
      %1504 = vmatpush.msra.mxu0 0.0
      %1505 = vmatpush.msra.mxu0 0.0
      %1506 = vmatpush.msra.mxu0 0.0
      %1507 = vmatpush.msra.mxu0 %v1490
      %1508 = vmatmul.f32.gmra.mxu0 %v469
      %v1509 = vpop.f32.mrf.mxu0
      %v1510 = vadd.f32 0.0, %v1509
      %1511 = vmatmul.f32.gmra.mxu0 %v472
      %v1512 = vpop.f32.mrf.mxu0
      %v1513 = vadd.f32 0.0, %v1512
      %1514 = vmatmul.f32.gmra.mxu0 %v475
      %v1515 = vpop.f32.mrf.mxu0
      %v1516 = vadd.f32 0.0, %v1515
      %1517 = vmatmul.f32.gmra.mxu0 %v478
      %v1518 = vpop.f32.mrf.mxu0
      %v1519 = vadd.f32 0.0, %v1518
      %1520 = vmatmul.f32.gmra.mxu0 %v481
      %v1521 = vpop.f32.mrf.mxu0
      %v1522 = vadd.f32 0.0, %v1521
      %1523 = vmatmul.f32.gmra.mxu0 %v484
      %v1524 = vpop.f32.mrf.mxu0
      %v1525 = vadd.f32 0.0, %v1524
      %1526 = vmatmul.f32.gmra.mxu0 %v487
      %v1527 = vpop.f32.mrf.mxu0
      %v1528 = vadd.f32 0.0, %v1527
      %1529 = vmatmul.f32.gmra.mxu0 %v490
      %v1530 = vpop.f32.mrf.mxu0
      %v1531 = vadd.f32 0.0, %v1530
      %1532 = vmatmul.f32.gmra.mxu0 %v493
      %v1533 = vpop.f32.mrf.mxu0
      %v1534 = vadd.f32 0.0, %v1533
      %1535 = vmatmul.f32.gmra.mxu0 %v496
      %v1536 = vpop.f32.mrf.mxu0
      %v1537 = vadd.f32 0.0, %v1536
      %1538 = vmatmul.f32.gmra.mxu0 %v499
      %v1539 = vpop.f32.mrf.mxu0
      %v1540 = vadd.f32 0.0, %v1539
      %1541 = vmatmul.f32.gmra.mxu0 %v502
      %v1542 = vpop.f32.mrf.mxu0
      %v1543 = vadd.f32 0.0, %v1542
      %1544 = vmatmul.f32.gmra.mxu0 %v505
      %v1545 = vpop.f32.mrf.mxu0
      %v1546 = vadd.f32 0.0, %v1545
      %1547 = vmatmul.f32.gmra.mxu0 %v508
      %v1548 = vpop.f32.mrf.mxu0
      %v1549 = vadd.f32 0.0, %v1548
      %1550 = vmatmul.f32.gmra.mxu0 %v511
      %v1551 = vpop.f32.mrf.mxu0
      %v1552 = vadd.f32 0.0, %v1551
      %1553 = vmatmul.f32.gmra.mxu0 %v514
      %v1554 = vpop.f32.mrf.mxu0
      %v1555 = vadd.f32 0.0, %v1554
      %1556 = vmatmul.f32.gmra.mxu0 %v517
      %v1557 = vpop.f32.mrf.mxu0
      %v1558 = vadd.f32 0.0, %v1557
      %1559 = vmatmul.f32.gmra.mxu0 %v520
      %v1560 = vpop.f32.mrf.mxu0
      %v1561 = vadd.f32 0.0, %v1560
      %1562 = vmatmul.f32.gmra.mxu0 %v523
      %v1563 = vpop.f32.mrf.mxu0
      %v1564 = vadd.f32 0.0, %v1563
      %1565 = vmatmul.f32.gmra.mxu0 %v526
      %v1566 = vpop.f32.mrf.mxu0
      %v1567 = vadd.f32 0.0, %v1566
      %1568 = vmatmul.f32.gmra.mxu0 %v529
      %v1569 = vpop.f32.mrf.mxu0
      %v1570 = vadd.f32 0.0, %v1569
      %1571 = vmatmul.f32.gmra.mxu0 %v532
      %v1572 = vpop.f32.mrf.mxu0
      %v1573 = vadd.f32 0.0, %v1572
      %1574 = vmatmul.f32.gmra.mxu0 %v535
      %v1575 = vpop.f32.mrf.mxu0
      %v1576 = vadd.f32 0.0, %v1575
      %1577 = vmatmul.f32.gmra.mxu0 %v538
      %v1578 = vpop.f32.mrf.mxu0
      %v1579 = vadd.f32 0.0, %v1578
      %1580 = vmatmul.f32.gmra.mxu0 %v541
      %v1581 = vpop.f32.mrf.mxu0
      %v1582 = vadd.f32 0.0, %v1581
      %1583 = vmatmul.f32.gmra.mxu0 %v544
      %v1584 = vpop.f32.mrf.mxu0
      %v1585 = vadd.f32 0.0, %v1584
      %1586 = vmatmul.f32.gmra.mxu0 %v547
      %v1587 = vpop.f32.mrf.mxu0
      %v1588 = vadd.f32 0.0, %v1587
      %1589 = vmatmul.f32.gmra.mxu0 %v550
      %v1590 = vpop.f32.mrf.mxu0
      %v1591 = vadd.f32 0.0, %v1590
      %1592 = vmatmul.f32.gmra.mxu0 %v553
      %v1593 = vpop.f32.mrf.mxu0
      %v1594 = vadd.f32 0.0, %v1593
      %1595 = vmatmul.f32.gmra.mxu0 %v556
      %v1596 = vpop.f32.mrf.mxu0
      %v1597 = vadd.f32 0.0, %v1596
      %1598 = vmatmul.f32.gmra.mxu0 %v559
      %v1599 = vpop.f32.mrf.mxu0
      %v1600 = vadd.f32 0.0, %v1599
      %1601 = vmatmul.f32.gmra.mxu0 %v562
      %v1602 = vpop.f32.mrf.mxu0
      %v1603 = vadd.f32 0.0, %v1602
      %1604 = vmatmul.f32.gmra.mxu0 %v565
      %v1605 = vpop.f32.mrf.mxu0
      %v1606 = vadd.f32 0.0, %v1605
      %1607 = vmatmul.f32.gmra.mxu0 %v568
      %v1608 = vpop.f32.mrf.mxu0
      %v1609 = vadd.f32 0.0, %v1608
      %1610 = vmatmul.f32.gmra.mxu0 %v571
      %v1611 = vpop.f32.mrf.mxu0
      %v1612 = vadd.f32 0.0, %v1611
      %1613 = vmatmul.f32.gmra.mxu0 %v574
      %v1614 = vpop.f32.mrf.mxu0
      %v1615 = vadd.f32 0.0, %v1614
      %1616 = vmatmul.f32.gmra.mxu0 %v577
      %v1617 = vpop.f32.mrf.mxu0
      %v1618 = vadd.f32 0.0, %v1617
      %1619 = vmatmul.f32.gmra.mxu0 %v580
      %v1620 = vpop.f32.mrf.mxu0
      %v1621 = vadd.f32 0.0, %v1620
      %1622 = vmatmul.f32.gmra.mxu0 %v583
      %v1623 = vpop.f32.mrf.mxu0
      %v1624 = vadd.f32 0.0, %v1623
      %1625 = vmatmul.f32.gmra.mxu0 %v586
      %v1626 = vpop.f32.mrf.mxu0
      %v1627 = vadd.f32 0.0, %v1626
      %1628 = vmatmul.f32.gmra.mxu0 %v589
      %v1629 = vpop.f32.mrf.mxu0
      %v1630 = vadd.f32 0.0, %v1629
      %1631 = vmatmul.f32.gmra.mxu0 %v592
      %v1632 = vpop.f32.mrf.mxu0
      %v1633 = vadd.f32 0.0, %v1632
      %1634 = vmatmul.f32.gmra.mxu0 %v595
      %v1635 = vpop.f32.mrf.mxu0
      %v1636 = vadd.f32 0.0, %v1635
      %1637 = vmatmul.f32.gmra.mxu0 %v598
      %v1638 = vpop.f32.mrf.mxu0
      %v1639 = vadd.f32 0.0, %v1638
      %1640 = vmatmul.f32.gmra.mxu0 %v601
      %v1641 = vpop.f32.mrf.mxu0
      %v1642 = vadd.f32 0.0, %v1641
      %1643 = vmatmul.f32.gmra.mxu0 %v604
      %v1644 = vpop.f32.mrf.mxu0
      %v1645 = vadd.f32 0.0, %v1644
      %1646 = vmatmul.f32.gmra.mxu0 %v607
      %v1647 = vpop.f32.mrf.mxu0
      %v1648 = vadd.f32 0.0, %v1647
      %1649 = vmatmul.f32.gmra.mxu0 %v610
      %v1650 = vpop.f32.mrf.mxu0
      %v1651 = vadd.f32 0.0, %v1650
      %1652 = vmatmul.f32.gmra.mxu0 %v613
      %v1653 = vpop.f32.mrf.mxu0
      %v1654 = vadd.f32 0.0, %v1653
      %1655 = vmatmul.f32.gmra.mxu0 %v616
      %v1656 = vpop.f32.mrf.mxu0
      %v1657 = vadd.f32 0.0, %v1656
      %1658 = vmatmul.f32.gmra.mxu0 %v619
      %v1659 = vpop.f32.mrf.mxu0
      %v1660 = vadd.f32 0.0, %v1659
      %1661 = vmatmul.f32.gmra.mxu0 %v622
      %v1662 = vpop.f32.mrf.mxu0
      %v1663 = vadd.f32 0.0, %v1662
      %1664 = vmatmul.f32.gmra.mxu0 %v625
      %v1665 = vpop.f32.mrf.mxu0
      %v1666 = vadd.f32 0.0, %v1665
      %1667 = vmatmul.f32.gmra.mxu0 %v628
      %v1668 = vpop.f32.mrf.mxu0
      %v1669 = vadd.f32 0.0, %v1668
      %1670 = vdwg.mxu0
      %v1672 = vsel %vm630, %v409, 0
      %1674 = vmatpush.msra.mxu0 0.0
      %1675 = vmatpush.msra.mxu0 0.0
      %1676 = vmatpush.msra.mxu0 0.0
      %1677 = vmatpush.msra.mxu0 0.0
      %1678 = vmatpush.msra.mxu0 0.0
      %1679 = vmatpush.msra.mxu0 0.0
      %1680 = vmatpush.msra.mxu0 0.0
      %1681 = vmatpush.msra.mxu0 0.0
      %1682 = vmatpush.msra.mxu0 0.0
      %1683 = vmatpush.msra.mxu0 0.0
      %1684 = vmatpush.msra.mxu0 0.0
      %1685 = vmatpush.msra.mxu0 0.0
      %1686 = vmatpush.msra.mxu0 0.0
      %1687 = vmatpush.msra.mxu0 0.0
      %1688 = vmatpush.msra.mxu0 0.0
      %1689 = vmatpush.msra.mxu0 %v1672
      %1690 = vmatmul.f32.gmra.mxu0 %v814
      %v1691 = vpop.f32.mrf.mxu0
      %v1692 = vadd.f32 %v1510, %v1691
      %1693 = vmatmul.f32.gmra.mxu0 %v817
      %v1694 = vpop.f32.mrf.mxu0
      %v1695 = vadd.f32 %v1513, %v1694
      %1696 = vmatmul.f32.gmra.mxu0 %v820
      %v1697 = vpop.f32.mrf.mxu0
      %v1698 = vadd.f32 %v1516, %v1697
      %1699 = vmatmul.f32.gmra.mxu0 %v823
      %v1700 = vpop.f32.mrf.mxu0
      %v1701 = vadd.f32 %v1519, %v1700
      %1702 = vmatmul.f32.gmra.mxu0 %v826
      %v1703 = vpop.f32.mrf.mxu0
      %v1704 = vadd.f32 %v1522, %v1703
      %1705 = vmatmul.f32.gmra.mxu0 %v829
      %v1706 = vpop.f32.mrf.mxu0
      %v1707 = vadd.f32 %v1525, %v1706
      %1708 = vmatmul.f32.gmra.mxu0 %v832
      %v1709 = vpop.f32.mrf.mxu0
      %v1710 = vadd.f32 %v1528, %v1709
      %1711 = vmatmul.f32.gmra.mxu0 %v835
      %v1712 = vpop.f32.mrf.mxu0
      %v1713 = vadd.f32 %v1531, %v1712
      %1714 = vmatmul.f32.gmra.mxu0 %v838
      %v1715 = vpop.f32.mrf.mxu0
      %v1716 = vadd.f32 %v1534, %v1715
      %1717 = vmatmul.f32.gmra.mxu0 %v841
      %v1718 = vpop.f32.mrf.mxu0
      %v1719 = vadd.f32 %v1537, %v1718
      %1720 = vmatmul.f32.gmra.mxu0 %v844
      %v1721 = vpop.f32.mrf.mxu0
      %v1722 = vadd.f32 %v1540, %v1721
      %1723 = vmatmul.f32.gmra.mxu0 %v847
      %v1724 = vpop.f32.mrf.mxu0
      %v1725 = vadd.f32 %v1543, %v1724
      %1726 = vmatmul.f32.gmra.mxu0 %v850
      %v1727 = vpop.f32.mrf.mxu0
      %v1728 = vadd.f32 %v1546, %v1727
      %1729 = vmatmul.f32.gmra.mxu0 %v853
      %v1730 = vpop.f32.mrf.mxu0
      %v1731 = vadd.f32 %v1549, %v1730
      %1732 = vmatmul.f32.gmra.mxu0 %v856
      %v1733 = vpop.f32.mrf.mxu0
      %v1734 = vadd.f32 %v1552, %v1733
      %1735 = vmatmul.f32.gmra.mxu0 %v859
      %v1736 = vpop.f32.mrf.mxu0
      %v1737 = vadd.f32 %v1555, %v1736
      %1738 = vmatmul.f32.gmra.mxu0 %v862
      %v1739 = vpop.f32.mrf.mxu0
      %v1740 = vadd.f32 %v1558, %v1739
      %1741 = vmatmul.f32.gmra.mxu0 %v865
      %v1742 = vpop.f32.mrf.mxu0
      %v1743 = vadd.f32 %v1561, %v1742
      %1744 = vmatmul.f32.gmra.mxu0 %v868
      %v1745 = vpop.f32.mrf.mxu0
      %v1746 = vadd.f32 %v1564, %v1745
      %1747 = vmatmul.f32.gmra.mxu0 %v871
      %v1748 = vpop.f32.mrf.mxu0
      %v1749 = vadd.f32 %v1567, %v1748
      %1750 = vmatmul.f32.gmra.mxu0 %v874
      %v1751 = vpop.f32.mrf.mxu0
      %v1752 = vadd.f32 %v1570, %v1751
      %1753 = vmatmul.f32.gmra.mxu0 %v877
      %v1754 = vpop.f32.mrf.mxu0
      %v1755 = vadd.f32 %v1573, %v1754
      %1756 = vmatmul.f32.gmra.mxu0 %v880
      %v1757 = vpop.f32.mrf.mxu0
      %v1758 = vadd.f32 %v1576, %v1757
      %1759 = vmatmul.f32.gmra.mxu0 %v883
      %v1760 = vpop.f32.mrf.mxu0
      %v1761 = vadd.f32 %v1579, %v1760
      %1762 = vmatmul.f32.gmra.mxu0 %v886
      %v1763 = vpop.f32.mrf.mxu0
      %v1764 = vadd.f32 %v1582, %v1763
      %1765 = vmatmul.f32.gmra.mxu0 %v889
      %v1766 = vpop.f32.mrf.mxu0
      %v1767 = vadd.f32 %v1585, %v1766
      %1768 = vmatmul.f32.gmra.mxu0 %v892
      %v1769 = vpop.f32.mrf.mxu0
      %v1770 = vadd.f32 %v1588, %v1769
      %1771 = vmatmul.f32.gmra.mxu0 %v895
      %v1772 = vpop.f32.mrf.mxu0
      %v1773 = vadd.f32 %v1591, %v1772
      %1774 = vmatmul.f32.gmra.mxu0 %v898
      %v1775 = vpop.f32.mrf.mxu0
      %v1776 = vadd.f32 %v1594, %v1775
      %1777 = vmatmul.f32.gmra.mxu0 %v901
      %v1778 = vpop.f32.mrf.mxu0
      %v1779 = vadd.f32 %v1597, %v1778
      %1780 = vmatmul.f32.gmra.mxu0 %v904
      %v1781 = vpop.f32.mrf.mxu0
      %v1782 = vadd.f32 %v1600, %v1781
      %1783 = vmatmul.f32.gmra.mxu0 %v907
      %v1784 = vpop.f32.mrf.mxu0
      %v1785 = vadd.f32 %v1603, %v1784
      %1786 = vmatmul.f32.gmra.mxu0 %v910
      %v1787 = vpop.f32.mrf.mxu0
      %v1788 = vadd.f32 %v1606, %v1787
      %1789 = vmatmul.f32.gmra.mxu0 %v913
      %v1790 = vpop.f32.mrf.mxu0
      %v1791 = vadd.f32 %v1609, %v1790
      %1792 = vmatmul.f32.gmra.mxu0 %v916
      %v1793 = vpop.f32.mrf.mxu0
      %v1794 = vadd.f32 %v1612, %v1793
      %1795 = vmatmul.f32.gmra.mxu0 %v919
      %v1796 = vpop.f32.mrf.mxu0
      %v1797 = vadd.f32 %v1615, %v1796
      %1798 = vmatmul.f32.gmra.mxu0 %v922
      %v1799 = vpop.f32.mrf.mxu0
      %v1800 = vadd.f32 %v1618, %v1799
      %1801 = vmatmul.f32.gmra.mxu0 %v925
      %v1802 = vpop.f32.mrf.mxu0
      %v1803 = vadd.f32 %v1621, %v1802
      %1804 = vmatmul.f32.gmra.mxu0 %v928
      %v1805 = vpop.f32.mrf.mxu0
      %v1806 = vadd.f32 %v1624, %v1805
      %1807 = vmatmul.f32.gmra.mxu0 %v931
      %v1808 = vpop.f32.mrf.mxu0
      %v1809 = vadd.f32 %v1627, %v1808
      %1810 = vmatmul.f32.gmra.mxu0 %v934
      %v1811 = vpop.f32.mrf.mxu0
      %v1812 = vadd.f32 %v1630, %v1811
      %1813 = vmatmul.f32.gmra.mxu0 %v937
      %v1814 = vpop.f32.mrf.mxu0
      %v1815 = vadd.f32 %v1633, %v1814
      %1816 = vmatmul.f32.gmra.mxu0 %v940
      %v1817 = vpop.f32.mrf.mxu0
      %v1818 = vadd.f32 %v1636, %v1817
      %1819 = vmatmul.f32.gmra.mxu0 %v943
      %v1820 = vpop.f32.mrf.mxu0
      %v1821 = vadd.f32 %v1639, %v1820
      %1822 = vmatmul.f32.gmra.mxu0 %v946
      %v1823 = vpop.f32.mrf.mxu0
      %v1824 = vadd.f32 %v1642, %v1823
      %1825 = vmatmul.f32.gmra.mxu0 %v949
      %v1826 = vpop.f32.mrf.mxu0
      %v1827 = vadd.f32 %v1645, %v1826
      %1828 = vmatmul.f32.gmra.mxu0 %v952
      %v1829 = vpop.f32.mrf.mxu0
      %v1830 = vadd.f32 %v1648, %v1829
      %1831 = vmatmul.f32.gmra.mxu0 %v955
      %v1832 = vpop.f32.mrf.mxu0
      %v1833 = vadd.f32 %v1651, %v1832
      %1834 = vmatmul.f32.gmra.mxu0 %v958
      %v1835 = vpop.f32.mrf.mxu0
      %v1836 = vadd.f32 %v1654, %v1835
      %1837 = vmatmul.f32.gmra.mxu0 %v961
      %v1838 = vpop.f32.mrf.mxu0
      %v1839 = vadd.f32 %v1657, %v1838
      %1840 = vmatmul.f32.gmra.mxu0 %v964
      %v1841 = vpop.f32.mrf.mxu0
      %v1842 = vadd.f32 %v1660, %v1841
      %1843 = vmatmul.f32.gmra.mxu0 %v967
      %v1844 = vpop.f32.mrf.mxu0
      %v1845 = vadd.f32 %v1663, %v1844
      %1846 = vmatmul.f32.gmra.mxu0 %v970
      %v1847 = vpop.f32.mrf.mxu0
      %v1848 = vadd.f32 %v1666, %v1847
      %1849 = vmatmul.f32.gmra.mxu0 %v973
      %v1850 = vpop.f32.mrf.mxu0
      %v1851 = vadd.f32 %v1669, %v1850
      %1852 = vdwg.mxu0
      %s1853 = scalar_lea.vmem %s327, 48
      %v1854 = vld [vmem:[%s1853] sm:$0xff]
      %v1855 = vld [vmem:[%s1853 + $0x8] sm:$0xff]
      %v1856 = vld [vmem:[%s1853 + $0x10] sm:$0xff]
      %v1857 = vld [vmem:[%s1853 + $0x18] sm:$0xff]
      %v1858 = vld [vmem:[%s1853 + $0x20] sm:$0xff]
      %v1859 = vld [vmem:[%s1853 + $0x28] sm:$0xff]
      %v1860 = vld [vmem:[%s1853 + $0x30] sm:$0xff]
      %v1861 = vld [vmem:[%s1853 + $0x38] sm:$0xff]
      %v1862 = vld [vmem:[%s1853 + $0x40] sm:$0xff]
      %v1863 = vld [vmem:[%s1853 + $0x48] sm:$0xff]
      %v1864 = vld [vmem:[%s1853 + $0x50] sm:$0xff]
      %v1865 = vld [vmem:[%s1853 + $0x58] sm:$0xff]
      %v1866 = vld [vmem:[%s1853 + $0x60] sm:$0xff]
      %v1867 = vld [vmem:[%s1853 + $0x68] sm:$0xff]
      %v1868 = vld [vmem:[%s1853 + $0x70] sm:$0xff]
      %v1869 = vld [vmem:[%s1853 + $0x78] sm:$0xff]
      %v1870 = vld [vmem:[%s1853 + $0x80] sm:$0xff]
      %v1871 = vld [vmem:[%s1853 + $0x88] sm:$0xff]
      %v1872 = vld [vmem:[%s1853 + $0x90] sm:$0xff]
      %v1873 = vld [vmem:[%s1853 + $0x98] sm:$0xff]
      %v1874 = vld [vmem:[%s1853 + $0xa0] sm:$0xff]
      %v1875 = vld [vmem:[%s1853 + $0xa8] sm:$0xff]
      %v1876 = vld [vmem:[%s1853 + $0xb0] sm:$0xff]
      %v1877 = vld [vmem:[%s1853 + $0xb8] sm:$0xff]
      %v1878 = vld [vmem:[%s1853 + $0xc0] sm:$0xff]
      %v1879 = vld [vmem:[%s1853 + $0xc8] sm:$0xff]
      %v1880 = vld [vmem:[%s1853 + $0xd0] sm:$0xff]
      %v1881 = vld [vmem:[%s1853 + $0xd8] sm:$0xff]
      %v1882 = vld [vmem:[%s1853 + $0xe0] sm:$0xff]
      %v1883 = vld [vmem:[%s1853 + $0xe8] sm:$0xff]
      %v1884 = vld [vmem:[%s1853 + $0xf0] sm:$0xff]
      %v1885 = vld [vmem:[%s1853 + $0xf8] sm:$0xff]
      %v1886 = vld [vmem:[%s1853 + $0x100] sm:$0xff]
      %v1887 = vld [vmem:[%s1853 + $0x108] sm:$0xff]
      %v1888 = vld [vmem:[%s1853 + $0x110] sm:$0xff]
      %v1889 = vld [vmem:[%s1853 + $0x118] sm:$0xff]
      %v1890 = vld [vmem:[%s1853 + $0x120] sm:$0xff]
      %v1891 = vld [vmem:[%s1853 + $0x128] sm:$0xff]
      %v1892 = vld [vmem:[%s1853 + $0x130] sm:$0xff]
      %v1893 = vld [vmem:[%s1853 + $0x138] sm:$0xff]
      %v1894 = vld [vmem:[%s1853 + $0x140] sm:$0xff]
      %v1895 = vld [vmem:[%s1853 + $0x148] sm:$0xff]
      %v1896 = vld [vmem:[%s1853 + $0x150] sm:$0xff]
      %v1897 = vld [vmem:[%s1853 + $0x158] sm:$0xff]
      %v1898 = vld [vmem:[%s1853 + $0x160] sm:$0xff]
      %v1899 = vld [vmem:[%s1853 + $0x168] sm:$0xff]
      %v1900 = vld [vmem:[%s1853 + $0x170] sm:$0xff]
      %v1901 = vld [vmem:[%s1853 + $0x178] sm:$0xff]
      %v1902 = vld [vmem:[%s1853 + $0x180] sm:$0xff]
      %v1903 = vld [vmem:[%s1853 + $0x188] sm:$0xff]
      %v1904 = vld [vmem:[%s1853 + $0x190] sm:$0xff]
      %v1905 = vld [vmem:[%s1853 + $0x198] sm:$0xff]
      %v1906 = vld [vmem:[%s1853 + $0x1a0] sm:$0xff]
      %v1907 = vld [vmem:[%s1853 + $0x1a8] sm:$0xff]
      %s1908 = scalar_lea.vmem %s1, 24
      %v1909 = vld [vmem:[%s1908] sm:$0xf]
      %v1911 = vsel %vm467, %v1854, 0
      %v1914 = vsel %vm467, %v1855, 0
      %v1917 = vsel %vm467, %v1856, 0
      %v1920 = vsel %vm467, %v1857, 0
      %v1923 = vsel %vm467, %v1858, 0
      %v1926 = vsel %vm467, %v1859, 0
      %v1929 = vsel %vm467, %v1860, 0
      %v1932 = vsel %vm467, %v1861, 0
      %v1935 = vsel %vm467, %v1862, 0
      %v1938 = vsel %vm467, %v1863, 0
      %v1941 = vsel %vm467, %v1864, 0
      %v1944 = vsel %vm467, %v1865, 0
      %v1947 = vsel %vm467, %v1866, 0
      %v1950 = vsel %vm467, %v1867, 0
      %v1953 = vsel %vm467, %v1868, 0
      %v1956 = vsel %vm467, %v1869, 0
      %v1959 = vsel %vm467, %v1870, 0
      %v1962 = vsel %vm467, %v1871, 0
      %v1965 = vsel %vm467, %v1872, 0
      %v1968 = vsel %vm467, %v1873, 0
      %v1971 = vsel %vm467, %v1874, 0
      %v1974 = vsel %vm467, %v1875, 0
      %v1977 = vsel %vm467, %v1876, 0
      %v1980 = vsel %vm467, %v1877, 0
      %v1983 = vsel %vm467, %v1878, 0
      %v1986 = vsel %vm467, %v1879, 0
      %v1989 = vsel %vm467, %v1880, 0
      %v1992 = vsel %vm467, %v1881, 0
      %v1995 = vsel %vm467, %v1882, 0
      %v1998 = vsel %vm467, %v1883, 0
      %v2001 = vsel %vm467, %v1884, 0
      %v2004 = vsel %vm467, %v1885, 0
      %v2007 = vsel %vm467, %v1886, 0
      %v2010 = vsel %vm467, %v1887, 0
      %v2013 = vsel %vm467, %v1888, 0
      %v2016 = vsel %vm467, %v1889, 0
      %v2019 = vsel %vm467, %v1890, 0
      %v2022 = vsel %vm467, %v1891, 0
      %v2025 = vsel %vm467, %v1892, 0
      %v2028 = vsel %vm467, %v1893, 0
      %v2031 = vsel %vm467, %v1894, 0
      %v2034 = vsel %vm467, %v1895, 0
      %v2037 = vsel %vm467, %v1896, 0
      %v2040 = vsel %vm467, %v1897, 0
      %v2043 = vsel %vm467, %v1898, 0
      %v2046 = vsel %vm467, %v1899, 0
      %v2049 = vsel %vm467, %v1900, 0
      %v2052 = vsel %vm467, %v1901, 0
      %v2055 = vsel %vm467, %v1902, 0
      %v2058 = vsel %vm467, %v1903, 0
      %v2061 = vsel %vm467, %v1904, 0
      %v2064 = vsel %vm467, %v1905, 0
      %v2067 = vsel %vm467, %v1906, 0
      %v2070 = vsel %vm467, %v1907, 0
      %v2073 = vsel %vm630, %v1909, 0
      %2075 = vmatpush.msra.mxu0 0.0
      %2076 = vmatpush.msra.mxu0 0.0
      %2077 = vmatpush.msra.mxu0 0.0
      %2078 = vmatpush.msra.mxu0 0.0
      %2079 = vmatpush.msra.mxu0 0.0
      %2080 = vmatpush.msra.mxu0 0.0
      %2081 = vmatpush.msra.mxu0 0.0
      %2082 = vmatpush.msra.mxu0 0.0
      %2083 = vmatpush.msra.mxu0 0.0
      %2084 = vmatpush.msra.mxu0 0.0
      %2085 = vmatpush.msra.mxu0 0.0
      %2086 = vmatpush.msra.mxu0 0.0
      %2087 = vmatpush.msra.mxu0 0.0
      %2088 = vmatpush.msra.mxu0 0.0
      %2089 = vmatpush.msra.mxu0 0.0
      %2090 = vmatpush.msra.mxu0 %v2073
      %2091 = vmatmul.f32.gmra.mxu0 %v1911
      %v2092 = vpop.f32.mrf.mxu0
      %v2093 = vadd.f32 0.0, %v2092
      %2094 = vmatmul.f32.gmra.mxu0 %v1914
      %v2095 = vpop.f32.mrf.mxu0
      %v2096 = vadd.f32 0.0, %v2095
      %2097 = vmatmul.f32.gmra.mxu0 %v1917
      %v2098 = vpop.f32.mrf.mxu0
      %v2099 = vadd.f32 0.0, %v2098
      %2100 = vmatmul.f32.gmra.mxu0 %v1920
      %v2101 = vpop.f32.mrf.mxu0
      %v2102 = vadd.f32 0.0, %v2101
      %2103 = vmatmul.f32.gmra.mxu0 %v1923
      %v2104 = vpop.f32.mrf.mxu0
      %v2105 = vadd.f32 0.0, %v2104
      %2106 = vmatmul.f32.gmra.mxu0 %v1926
      %v2107 = vpop.f32.mrf.mxu0
      %v2108 = vadd.f32 0.0, %v2107
      %2109 = vmatmul.f32.gmra.mxu0 %v1929
      %v2110 = vpop.f32.mrf.mxu0
      %v2111 = vadd.f32 0.0, %v2110
      %2112 = vmatmul.f32.gmra.mxu0 %v1932
      %v2113 = vpop.f32.mrf.mxu0
      %v2114 = vadd.f32 0.0, %v2113
      %2115 = vmatmul.f32.gmra.mxu0 %v1935
      %v2116 = vpop.f32.mrf.mxu0
      %v2117 = vadd.f32 0.0, %v2116
      %2118 = vmatmul.f32.gmra.mxu0 %v1938
      %v2119 = vpop.f32.mrf.mxu0
      %v2120 = vadd.f32 0.0, %v2119
      %2121 = vmatmul.f32.gmra.mxu0 %v1941
      %v2122 = vpop.f32.mrf.mxu0
      %v2123 = vadd.f32 0.0, %v2122
      %2124 = vmatmul.f32.gmra.mxu0 %v1944
      %v2125 = vpop.f32.mrf.mxu0
      %v2126 = vadd.f32 0.0, %v2125
      %2127 = vmatmul.f32.gmra.mxu0 %v1947
      %v2128 = vpop.f32.mrf.mxu0
      %v2129 = vadd.f32 0.0, %v2128
      %2130 = vmatmul.f32.gmra.mxu0 %v1950
      %v2131 = vpop.f32.mrf.mxu0
      %v2132 = vadd.f32 0.0, %v2131
      %2133 = vmatmul.f32.gmra.mxu0 %v1953
      %v2134 = vpop.f32.mrf.mxu0
      %v2135 = vadd.f32 0.0, %v2134
      %2136 = vmatmul.f32.gmra.mxu0 %v1956
      %v2137 = vpop.f32.mrf.mxu0
      %v2138 = vadd.f32 0.0, %v2137
      %2139 = vmatmul.f32.gmra.mxu0 %v1959
      %v2140 = vpop.f32.mrf.mxu0
      %v2141 = vadd.f32 0.0, %v2140
      %2142 = vmatmul.f32.gmra.mxu0 %v1962
      %v2143 = vpop.f32.mrf.mxu0
      %v2144 = vadd.f32 0.0, %v2143
      %2145 = vmatmul.f32.gmra.mxu0 %v1965
      %v2146 = vpop.f32.mrf.mxu0
      %v2147 = vadd.f32 0.0, %v2146
      %2148 = vmatmul.f32.gmra.mxu0 %v1968
      %v2149 = vpop.f32.mrf.mxu0
      %v2150 = vadd.f32 0.0, %v2149
      %2151 = vmatmul.f32.gmra.mxu0 %v1971
      %v2152 = vpop.f32.mrf.mxu0
      %v2153 = vadd.f32 0.0, %v2152
      %2154 = vmatmul.f32.gmra.mxu0 %v1974
      %v2155 = vpop.f32.mrf.mxu0
      %v2156 = vadd.f32 0.0, %v2155
      %2157 = vmatmul.f32.gmra.mxu0 %v1977
      %v2158 = vpop.f32.mrf.mxu0
      %v2159 = vadd.f32 0.0, %v2158
      %2160 = vmatmul.f32.gmra.mxu0 %v1980
      %v2161 = vpop.f32.mrf.mxu0
      %v2162 = vadd.f32 0.0, %v2161
      %2163 = vmatmul.f32.gmra.mxu0 %v1983
      %v2164 = vpop.f32.mrf.mxu0
      %v2165 = vadd.f32 0.0, %v2164
      %2166 = vmatmul.f32.gmra.mxu0 %v1986
      %v2167 = vpop.f32.mrf.mxu0
      %v2168 = vadd.f32 0.0, %v2167
      %2169 = vmatmul.f32.gmra.mxu0 %v1989
      %v2170 = vpop.f32.mrf.mxu0
      %v2171 = vadd.f32 0.0, %v2170
      %2172 = vmatmul.f32.gmra.mxu0 %v1992
      %v2173 = vpop.f32.mrf.mxu0
      %v2174 = vadd.f32 0.0, %v2173
      %2175 = vmatmul.f32.gmra.mxu0 %v1995
      %v2176 = vpop.f32.mrf.mxu0
      %v2177 = vadd.f32 0.0, %v2176
      %2178 = vmatmul.f32.gmra.mxu0 %v1998
      %v2179 = vpop.f32.mrf.mxu0
      %v2180 = vadd.f32 0.0, %v2179
      %2181 = vmatmul.f32.gmra.mxu0 %v2001
      %v2182 = vpop.f32.mrf.mxu0
      %v2183 = vadd.f32 0.0, %v2182
      %2184 = vmatmul.f32.gmra.mxu0 %v2004
      %v2185 = vpop.f32.mrf.mxu0
      %v2186 = vadd.f32 0.0, %v2185
      %2187 = vmatmul.f32.gmra.mxu0 %v2007
      %v2188 = vpop.f32.mrf.mxu0
      %v2189 = vadd.f32 0.0, %v2188
      %2190 = vmatmul.f32.gmra.mxu0 %v2010
      %v2191 = vpop.f32.mrf.mxu0
      %v2192 = vadd.f32 0.0, %v2191
      %2193 = vmatmul.f32.gmra.mxu0 %v2013
      %v2194 = vpop.f32.mrf.mxu0
      %v2195 = vadd.f32 0.0, %v2194
      %2196 = vmatmul.f32.gmra.mxu0 %v2016
      %v2197 = vpop.f32.mrf.mxu0
      %v2198 = vadd.f32 0.0, %v2197
      %2199 = vmatmul.f32.gmra.mxu0 %v2019
      %v2200 = vpop.f32.mrf.mxu0
      %v2201 = vadd.f32 0.0, %v2200
      %2202 = vmatmul.f32.gmra.mxu0 %v2022
      %v2203 = vpop.f32.mrf.mxu0
      %v2204 = vadd.f32 0.0, %v2203
      %2205 = vmatmul.f32.gmra.mxu0 %v2025
      %v2206 = vpop.f32.mrf.mxu0
      %v2207 = vadd.f32 0.0, %v2206
      %2208 = vmatmul.f32.gmra.mxu0 %v2028
      %v2209 = vpop.f32.mrf.mxu0
      %v2210 = vadd.f32 0.0, %v2209
      %2211 = vmatmul.f32.gmra.mxu0 %v2031
      %v2212 = vpop.f32.mrf.mxu0
      %v2213 = vadd.f32 0.0, %v2212
      %2214 = vmatmul.f32.gmra.mxu0 %v2034
      %v2215 = vpop.f32.mrf.mxu0
      %v2216 = vadd.f32 0.0, %v2215
      %2217 = vmatmul.f32.gmra.mxu0 %v2037
      %v2218 = vpop.f32.mrf.mxu0
      %v2219 = vadd.f32 0.0, %v2218
      %2220 = vmatmul.f32.gmra.mxu0 %v2040
      %v2221 = vpop.f32.mrf.mxu0
      %v2222 = vadd.f32 0.0, %v2221
      %2223 = vmatmul.f32.gmra.mxu0 %v2043
      %v2224 = vpop.f32.mrf.mxu0
      %v2225 = vadd.f32 0.0, %v2224
      %2226 = vmatmul.f32.gmra.mxu0 %v2046
      %v2227 = vpop.f32.mrf.mxu0
      %v2228 = vadd.f32 0.0, %v2227
      %2229 = vmatmul.f32.gmra.mxu0 %v2049
      %v2230 = vpop.f32.mrf.mxu0
      %v2231 = vadd.f32 0.0, %v2230
      %2232 = vmatmul.f32.gmra.mxu0 %v2052
      %v2233 = vpop.f32.mrf.mxu0
      %v2234 = vadd.f32 0.0, %v2233
      %2235 = vmatmul.f32.gmra.mxu0 %v2055
      %v2236 = vpop.f32.mrf.mxu0
      %v2237 = vadd.f32 0.0, %v2236
      %2238 = vmatmul.f32.gmra.mxu0 %v2058
      %v2239 = vpop.f32.mrf.mxu0
      %v2240 = vadd.f32 0.0, %v2239
      %2241 = vmatmul.f32.gmra.mxu0 %v2061
      %v2242 = vpop.f32.mrf.mxu0
      %v2243 = vadd.f32 0.0, %v2242
      %2244 = vmatmul.f32.gmra.mxu0 %v2064
      %v2245 = vpop.f32.mrf.mxu0
      %v2246 = vadd.f32 0.0, %v2245
      %2247 = vmatmul.f32.gmra.mxu0 %v2067
      %v2248 = vpop.f32.mrf.mxu0
      %v2249 = vadd.f32 0.0, %v2248
      %2250 = vmatmul.f32.gmra.mxu0 %v2070
      %v2251 = vpop.f32.mrf.mxu0
      %v2252 = vadd.f32 0.0, %v2251
      %2253 = vdwg.mxu0
      %v2254 = vadd.f32 %v996, %v2093
      %v2255 = vadd.f32 %v999, %v2096
      %v2256 = vadd.f32 %v1002, %v2099
      %v2257 = vadd.f32 %v1005, %v2102
      %v2258 = vadd.f32 %v1008, %v2105
      %v2259 = vadd.f32 %v1011, %v2108
      %v2260 = vadd.f32 %v1014, %v2111
      %v2261 = vadd.f32 %v1017, %v2114
      %v2262 = vadd.f32 %v1020, %v2117
      %v2263 = vadd.f32 %v1023, %v2120
      %v2264 = vadd.f32 %v1026, %v2123
      %v2265 = vadd.f32 %v1029, %v2126
      %v2266 = vadd.f32 %v1032, %v2129
      %v2267 = vadd.f32 %v1035, %v2132
      %v2268 = vadd.f32 %v1038, %v2135
      %v2269 = vadd.f32 %v1041, %v2138
      %v2270 = vadd.f32 %v1044, %v2141
      %v2271 = vadd.f32 %v1047, %v2144
      %v2272 = vadd.f32 %v1050, %v2147
      %v2273 = vadd.f32 %v1053, %v2150
      %v2274 = vadd.f32 %v1056, %v2153
      %v2275 = vadd.f32 %v1059, %v2156
      %v2276 = vadd.f32 %v1062, %v2159
      %v2277 = vadd.f32 %v1065, %v2162
      %v2278 = vadd.f32 %v1068, %v2165
      %v2279 = vadd.f32 %v1071, %v2168
      %v2280 = vadd.f32 %v1074, %v2171
      %v2281 = vadd.f32 %v1077, %v2174
      %v2282 = vadd.f32 %v1080, %v2177
      %v2283 = vadd.f32 %v1083, %v2180
      %v2284 = vadd.f32 %v1086, %v2183
      %v2285 = vadd.f32 %v1089, %v2186
      %v2286 = vadd.f32 %v1092, %v2189
      %v2287 = vadd.f32 %v1095, %v2192
      %v2288 = vadd.f32 %v1098, %v2195
      %v2289 = vadd.f32 %v1101, %v2198
      %v2290 = vadd.f32 %v1104, %v2201
      %v2291 = vadd.f32 %v1107, %v2204
      %v2292 = vadd.f32 %v1110, %v2207
      %v2293 = vadd.f32 %v1113, %v2210
      %v2294 = vadd.f32 %v1116, %v2213
      %v2295 = vadd.f32 %v1119, %v2216
      %v2296 = vadd.f32 %v1122, %v2219
      %v2297 = vadd.f32 %v1125, %v2222
      %v2298 = vadd.f32 %v1128, %v2225
      %v2299 = vadd.f32 %v1131, %v2228
      %v2300 = vadd.f32 %v1134, %v2231
      %v2301 = vadd.f32 %v1137, %v2234
      %v2302 = vadd.f32 %v1140, %v2237
      %v2303 = vadd.f32 %v1143, %v2240
      %v2304 = vadd.f32 %v1146, %v2243
      %v2305 = vadd.f32 %v1149, %v2246
      %v2306 = vadd.f32 %v1152, %v2249
      %v2307 = vadd.f32 %v1155, %v2252
      %s2308 = scalar_lea.vmem %s1, 28
      %v2309 = vld [vmem:[%s2308] sm:$0xf]
      %v2311 = vsel %vm630, %v2309, 0
      %2313 = vmatpush.msra.mxu0 0.0
      %2314 = vmatpush.msra.mxu0 0.0
      %2315 = vmatpush.msra.mxu0 0.0
      %2316 = vmatpush.msra.mxu0 0.0
      %2317 = vmatpush.msra.mxu0 0.0
      %2318 = vmatpush.msra.mxu0 0.0
      %2319 = vmatpush.msra.mxu0 0.0
      %2320 = vmatpush.msra.mxu0 0.0
      %2321 = vmatpush.msra.mxu0 0.0
      %2322 = vmatpush.msra.mxu0 0.0
      %2323 = vmatpush.msra.mxu0 0.0
      %2324 = vmatpush.msra.mxu0 0.0
      %2325 = vmatpush.msra.mxu0 0.0
      %2326 = vmatpush.msra.mxu0 0.0
      %2327 = vmatpush.msra.mxu0 0.0
      %2328 = vmatpush.msra.mxu0 %v2311
      %2329 = vmatmul.f32.gmra.mxu0 %v1911
      %v2330 = vpop.f32.mrf.mxu0
      %v2331 = vadd.f32 0.0, %v2330
      %2332 = vmatmul.f32.gmra.mxu0 %v1914
      %v2333 = vpop.f32.mrf.mxu0
      %v2334 = vadd.f32 0.0, %v2333
      %2335 = vmatmul.f32.gmra.mxu0 %v1917
      %v2336 = vpop.f32.mrf.mxu0
      %2337 = vmatmul.f32.gmra.mxu0 %v1920
      %v2338 = vpop.f32.mrf.mxu0
      %v2339 = vadd.f32 0.0, %v2338
      %2340 = vmatmul.f32.gmra.mxu0 %v1923
      %v2341 = vpop.f32.mrf.mxu0
      %v2342 = vadd.f32 0.0, %v2341
      %2343 = vmatmul.f32.gmra.mxu0 %v1926
      %v2344 = vpop.f32.mrf.mxu0
      %2345 = vmatmul.f32.gmra.mxu0 %v1929
      %v2346 = vpop.f32.mrf.mxu0
      %v2347 = vadd.f32 0.0, %v2346
      %2348 = vmatmul.f32.gmra.mxu0 %v1932
      %v2349 = vpop.f32.mrf.mxu0
      %v2350 = vadd.f32 0.0, %v2349
      %2351 = vmatmul.f32.gmra.mxu0 %v1935
      %v2352 = vpop.f32.mrf.mxu0
      %2353 = vmatmul.f32.gmra.mxu0 %v1938
      %v2354 = vpop.f32.mrf.mxu0
      %v2355 = vadd.f32 0.0, %v2354
      %2356 = vmatmul.f32.gmra.mxu0 %v1941
      %v2357 = vpop.f32.mrf.mxu0
      %v2358 = vadd.f32 0.0, %v2357
      %2359 = vmatmul.f32.gmra.mxu0 %v1944
      %v2360 = vpop.f32.mrf.mxu0
      %2361 = vmatmul.f32.gmra.mxu0 %v1947
      %v2362 = vpop.f32.mrf.mxu0
      %v2363 = vadd.f32 0.0, %v2362
      %2364 = vmatmul.f32.gmra.mxu0 %v1950
      %v2365 = vpop.f32.mrf.mxu0
      %v2366 = vadd.f32 0.0, %v2365
      %2367 = vmatmul.f32.gmra.mxu0 %v1953
      %v2368 = vpop.f32.mrf.mxu0
      %2369 = vmatmul.f32.gmra.mxu0 %v1956
      %v2370 = vpop.f32.mrf.mxu0
      %v2371 = vadd.f32 0.0, %v2370
      %2372 = vmatmul.f32.gmra.mxu0 %v1959
      %v2373 = vpop.f32.mrf.mxu0
      %v2374 = vadd.f32 0.0, %v2373
      %2375 = vmatmul.f32.gmra.mxu0 %v1962
      %v2376 = vpop.f32.mrf.mxu0
      %2377 = vmatmul.f32.gmra.mxu0 %v1965
      %v2378 = vpop.f32.mrf.mxu0
      %v2379 = vadd.f32 0.0, %v2378
      %2380 = vmatmul.f32.gmra.mxu0 %v1968
      %v2381 = vpop.f32.mrf.mxu0
      %v2382 = vadd.f32 0.0, %v2381
      %2383 = vmatmul.f32.gmra.mxu0 %v1971
      %v2384 = vpop.f32.mrf.mxu0
      %2385 = vmatmul.f32.gmra.mxu0 %v1974
      %v2386 = vpop.f32.mrf.mxu0
      %v2387 = vadd.f32 0.0, %v2386
      %2388 = vmatmul.f32.gmra.mxu0 %v1977
      %v2389 = vpop.f32.mrf.mxu0
      %v2390 = vadd.f32 0.0, %v2389
      %2391 = vmatmul.f32.gmra.mxu0 %v1980
      %v2392 = vpop.f32.mrf.mxu0
      %2393 = vmatmul.f32.gmra.mxu0 %v1983
      %v2394 = vpop.f32.mrf.mxu0
      %v2395 = vadd.f32 0.0, %v2394
      %2396 = vmatmul.f32.gmra.mxu0 %v1986
      %v2397 = vpop.f32.mrf.mxu0
      %v2398 = vadd.f32 0.0, %v2397
      %2399 = vmatmul.f32.gmra.mxu0 %v1989
      %v2400 = vpop.f32.mrf.mxu0
      %2401 = vmatmul.f32.gmra.mxu0 %v1992
      %v2402 = vpop.f32.mrf.mxu0
      %v2403 = vadd.f32 0.0, %v2402
      %2404 = vmatmul.f32.gmra.mxu0 %v1995
      %v2405 = vpop.f32.mrf.mxu0
      %v2406 = vadd.f32 0.0, %v2405
      %2407 = vmatmul.f32.gmra.mxu0 %v1998
      %v2408 = vpop.f32.mrf.mxu0
      %2409 = vmatmul.f32.gmra.mxu0 %v2001
      %v2410 = vpop.f32.mrf.mxu0
      %v2411 = vadd.f32 0.0, %v2410
      %2412 = vmatmul.f32.gmra.mxu0 %v2004
      %v2413 = vpop.f32.mrf.mxu0
      %v2414 = vadd.f32 0.0, %v2413
      %2415 = vmatmul.f32.gmra.mxu0 %v2007
      %v2416 = vpop.f32.mrf.mxu0
      %2417 = vmatmul.f32.gmra.mxu0 %v2010
      %v2418 = vpop.f32.mrf.mxu0
      %v2419 = vadd.f32 0.0, %v2418
      %2420 = vmatmul.f32.gmra.mxu0 %v2013
      %v2421 = vpop.f32.mrf.mxu0
      %v2422 = vadd.f32 0.0, %v2421
      %2423 = vmatmul.f32.gmra.mxu0 %v2016
      %v2424 = vpop.f32.mrf.mxu0
      %2425 = vmatmul.f32.gmra.mxu0 %v2019
      %v2426 = vpop.f32.mrf.mxu0
      %v2427 = vadd.f32 0.0, %v2426
      %2428 = vmatmul.f32.gmra.mxu0 %v2022
      %v2429 = vpop.f32.mrf.mxu0
      %v2430 = vadd.f32 0.0, %v2429
      %2431 = vmatmul.f32.gmra.mxu0 %v2025
      %v2432 = vpop.f32.mrf.mxu0
      %2433 = vmatmul.f32.gmra.mxu0 %v2028
      %v2434 = vpop.f32.mrf.mxu0
      %v2435 = vadd.f32 0.0, %v2434
      %2436 = vmatmul.f32.gmra.mxu0 %v2031
      %v2437 = vpop.f32.mrf.mxu0
      %v2438 = vadd.f32 0.0, %v2437
      %2439 = vmatmul.f32.gmra.mxu0 %v2034
      %v2440 = vpop.f32.mrf.mxu0
      %2441 = vmatmul.f32.gmra.mxu0 %v2037
      %v2442 = vpop.f32.mrf.mxu0
      %v2443 = vadd.f32 0.0, %v2442
      %2444 = vmatmul.f32.gmra.mxu0 %v2040
      %v2445 = vpop.f32.mrf.mxu0
      %v2446 = vadd.f32 0.0, %v2445
      %2447 = vmatmul.f32.gmra.mxu0 %v2043
      %v2448 = vpop.f32.mrf.mxu0
      %2449 = vmatmul.f32.gmra.mxu0 %v2046
      %v2450 = vpop.f32.mrf.mxu0
      %v2451 = vadd.f32 0.0, %v2450
      %2452 = vmatmul.f32.gmra.mxu0 %v2049
      %v2453 = vpop.f32.mrf.mxu0
      %v2454 = vadd.f32 0.0, %v2453
      %2455 = vmatmul.f32.gmra.mxu0 %v2052
      %v2456 = vpop.f32.mrf.mxu0
      %2457 = vmatmul.f32.gmra.mxu0 %v2055
      %v2458 = vpop.f32.mrf.mxu0
      %v2459 = vadd.f32 0.0, %v2458
      %2460 = vmatmul.f32.gmra.mxu0 %v2058
      %v2461 = vpop.f32.mrf.mxu0
      %v2462 = vadd.f32 0.0, %v2461
      %2463 = vmatmul.f32.gmra.mxu0 %v2061
      %v2464 = vpop.f32.mrf.mxu0
      %2465 = vmatmul.f32.gmra.mxu0 %v2064
      %v2466 = vpop.f32.mrf.mxu0
      %v2467 = vadd.f32 0.0, %v2466
      %2468 = vmatmul.f32.gmra.mxu0 %v2067
      %v2469 = vpop.f32.mrf.mxu0
      %v2470 = vadd.f32 0.0, %v2469
      %2471 = vmatmul.f32.gmra.mxu0 %v2070
      %v2472 = vpop.f32.mrf.mxu0
      %2473 = vdwg.mxu0
      %v2474 = vadd.f32 %v1344, %v2331
      %v2475 = vadd.f32 %v1347, %v2334
      %v2476 = vadd.f32 %v1352, %v2339
      %v2477 = vadd.f32 %v1355, %v2342
      %v2478 = vadd.f32 %v1360, %v2347
      %v2479 = vadd.f32 %v1363, %v2350
      %v2480 = vadd.f32 %v1368, %v2355
      %v2481 = vadd.f32 %v1371, %v2358
      %v2482 = vadd.f32 %v1376, %v2363
      %v2483 = vadd.f32 %v1379, %v2366
      %v2484 = vadd.f32 %v1384, %v2371
      %v2485 = vadd.f32 %v1387, %v2374
      %v2486 = vadd.f32 %v1392, %v2379
      %v2487 = vadd.f32 %v1395, %v2382
      %v2488 = vadd.f32 %v1400, %v2387
      %v2489 = vadd.f32 %v1403, %v2390
      %v2490 = vadd.f32 %v1408, %v2395
      %v2491 = vadd.f32 %v1411, %v2398
      %v2492 = vadd.f32 %v1416, %v2403
      %v2493 = vadd.f32 %v1419, %v2406
      %v2494 = vadd.f32 %v1424, %v2411
      %v2495 = vadd.f32 %v1427, %v2414
      %v2496 = vadd.f32 %v1432, %v2419
      %v2497 = vadd.f32 %v1435, %v2422
      %v2498 = vadd.f32 %v1440, %v2427
      %v2499 = vadd.f32 %v1443, %v2430
      %v2500 = vadd.f32 %v1448, %v2435
      %v2501 = vadd.f32 %v1451, %v2438
      %v2502 = vadd.f32 %v1456, %v2443
      %v2503 = vadd.f32 %v1459, %v2446
      %v2504 = vadd.f32 %v1464, %v2451
      %v2505 = vadd.f32 %v1467, %v2454
      %v2506 = vadd.f32 %v1472, %v2459
      %v2507 = vadd.f32 %v1475, %v2462
      %v2508 = vadd.f32 %v1480, %v2467
      %v2509 = vadd.f32 %v1483, %v2470
      %s2510 = scalar_lea.vmem %s1, 32
      %v2511 = vld [vmem:[%s2510] sm:$0xf]
      %v2513 = vsel %vm630, %v2511, 0
      %2515 = vmatpush.msra.mxu0 0.0
      %2516 = vmatpush.msra.mxu0 0.0
      %2517 = vmatpush.msra.mxu0 0.0
      %2518 = vmatpush.msra.mxu0 0.0
      %2519 = vmatpush.msra.mxu0 0.0
      %2520 = vmatpush.msra.mxu0 0.0
      %2521 = vmatpush.msra.mxu0 0.0
      %2522 = vmatpush.msra.mxu0 0.0
      %2523 = vmatpush.msra.mxu0 0.0
      %2524 = vmatpush.msra.mxu0 0.0
      %2525 = vmatpush.msra.mxu0 0.0
      %2526 = vmatpush.msra.mxu0 0.0
      %2527 = vmatpush.msra.mxu0 0.0
      %2528 = vmatpush.msra.mxu0 0.0
      %2529 = vmatpush.msra.mxu0 0.0
      %2530 = vmatpush.msra.mxu0 %v2513
      %2531 = vmatmul.f32.gmra.mxu0 %v1911
      %v2532 = vpop.f32.mrf.mxu0
      %v2533 = vadd.f32 0.0, %v2532
      %2534 = vmatmul.f32.gmra.mxu0 %v1914
      %v2535 = vpop.f32.mrf.mxu0
      %v2536 = vadd.f32 0.0, %v2535
      %2537 = vmatmul.f32.gmra.mxu0 %v1917
      %v2538 = vpop.f32.mrf.mxu0
      %v2539 = vadd.f32 0.0, %v2538
      %2540 = vmatmul.f32.gmra.mxu0 %v1920
      %v2541 = vpop.f32.mrf.mxu0
      %v2542 = vadd.f32 0.0, %v2541
      %2543 = vmatmul.f32.gmra.mxu0 %v1923
      %v2544 = vpop.f32.mrf.mxu0
      %v2545 = vadd.f32 0.0, %v2544
      %2546 = vmatmul.f32.gmra.mxu0 %v1926
      %v2547 = vpop.f32.mrf.mxu0
      %v2548 = vadd.f32 0.0, %v2547
      %2549 = vmatmul.f32.gmra.mxu0 %v1929
      %v2550 = vpop.f32.mrf.mxu0
      %v2551 = vadd.f32 0.0, %v2550
      %2552 = vmatmul.f32.gmra.mxu0 %v1932
      %v2553 = vpop.f32.mrf.mxu0
      %v2554 = vadd.f32 0.0, %v2553
      %2555 = vmatmul.f32.gmra.mxu0 %v1935
      %v2556 = vpop.f32.mrf.mxu0
      %v2557 = vadd.f32 0.0, %v2556
      %2558 = vmatmul.f32.gmra.mxu0 %v1938
      %v2559 = vpop.f32.mrf.mxu0
      %v2560 = vadd.f32 0.0, %v2559
      %2561 = vmatmul.f32.gmra.mxu0 %v1941
      %v2562 = vpop.f32.mrf.mxu0
      %v2563 = vadd.f32 0.0, %v2562
      %2564 = vmatmul.f32.gmra.mxu0 %v1944
      %v2565 = vpop.f32.mrf.mxu0
      %v2566 = vadd.f32 0.0, %v2565
      %2567 = vmatmul.f32.gmra.mxu0 %v1947
      %v2568 = vpop.f32.mrf.mxu0
      %v2569 = vadd.f32 0.0, %v2568
      %2570 = vmatmul.f32.gmra.mxu0 %v1950
      %v2571 = vpop.f32.mrf.mxu0
      %v2572 = vadd.f32 0.0, %v2571
      %2573 = vmatmul.f32.gmra.mxu0 %v1953
      %v2574 = vpop.f32.mrf.mxu0
      %v2575 = vadd.f32 0.0, %v2574
      %2576 = vmatmul.f32.gmra.mxu0 %v1956
      %v2577 = vpop.f32.mrf.mxu0
      %v2578 = vadd.f32 0.0, %v2577
      %2579 = vmatmul.f32.gmra.mxu0 %v1959
      %v2580 = vpop.f32.mrf.mxu0
      %v2581 = vadd.f32 0.0, %v2580
      %2582 = vmatmul.f32.gmra.mxu0 %v1962
      %v2583 = vpop.f32.mrf.mxu0
      %v2584 = vadd.f32 0.0, %v2583
      %2585 = vmatmul.f32.gmra.mxu0 %v1965
      %v2586 = vpop.f32.mrf.mxu0
      %v2587 = vadd.f32 0.0, %v2586
      %2588 = vmatmul.f32.gmra.mxu0 %v1968
      %v2589 = vpop.f32.mrf.mxu0
      %v2590 = vadd.f32 0.0, %v2589
      %2591 = vmatmul.f32.gmra.mxu0 %v1971
      %v2592 = vpop.f32.mrf.mxu0
      %v2593 = vadd.f32 0.0, %v2592
      %2594 = vmatmul.f32.gmra.mxu0 %v1974
      %v2595 = vpop.f32.mrf.mxu0
      %v2596 = vadd.f32 0.0, %v2595
      %2597 = vmatmul.f32.gmra.mxu0 %v1977
      %v2598 = vpop.f32.mrf.mxu0
      %v2599 = vadd.f32 0.0, %v2598
      %2600 = vmatmul.f32.gmra.mxu0 %v1980
      %v2601 = vpop.f32.mrf.mxu0
      %v2602 = vadd.f32 0.0, %v2601
      %2603 = vmatmul.f32.gmra.mxu0 %v1983
      %v2604 = vpop.f32.mrf.mxu0
      %v2605 = vadd.f32 0.0, %v2604
      %2606 = vmatmul.f32.gmra.mxu0 %v1986
      %v2607 = vpop.f32.mrf.mxu0
      %v2608 = vadd.f32 0.0, %v2607
      %2609 = vmatmul.f32.gmra.mxu0 %v1989
      %v2610 = vpop.f32.mrf.mxu0
      %v2611 = vadd.f32 0.0, %v2610
      %2612 = vmatmul.f32.gmra.mxu0 %v1992
      %v2613 = vpop.f32.mrf.mxu0
      %v2614 = vadd.f32 0.0, %v2613
      %2615 = vmatmul.f32.gmra.mxu0 %v1995
      %v2616 = vpop.f32.mrf.mxu0
      %v2617 = vadd.f32 0.0, %v2616
      %2618 = vmatmul.f32.gmra.mxu0 %v1998
      %v2619 = vpop.f32.mrf.mxu0
      %v2620 = vadd.f32 0.0, %v2619
      %2621 = vmatmul.f32.gmra.mxu0 %v2001
      %v2622 = vpop.f32.mrf.mxu0
      %v2623 = vadd.f32 0.0, %v2622
      %2624 = vmatmul.f32.gmra.mxu0 %v2004
      %v2625 = vpop.f32.mrf.mxu0
      %v2626 = vadd.f32 0.0, %v2625
      %2627 = vmatmul.f32.gmra.mxu0 %v2007
      %v2628 = vpop.f32.mrf.mxu0
      %v2629 = vadd.f32 0.0, %v2628
      %2630 = vmatmul.f32.gmra.mxu0 %v2010
      %v2631 = vpop.f32.mrf.mxu0
      %v2632 = vadd.f32 0.0, %v2631
      %2633 = vmatmul.f32.gmra.mxu0 %v2013
      %v2634 = vpop.f32.mrf.mxu0
      %v2635 = vadd.f32 0.0, %v2634
      %2636 = vmatmul.f32.gmra.mxu0 %v2016
      %v2637 = vpop.f32.mrf.mxu0
      %v2638 = vadd.f32 0.0, %v2637
      %2639 = vmatmul.f32.gmra.mxu0 %v2019
      %v2640 = vpop.f32.mrf.mxu0
      %v2641 = vadd.f32 0.0, %v2640
      %2642 = vmatmul.f32.gmra.mxu0 %v2022
      %v2643 = vpop.f32.mrf.mxu0
      %v2644 = vadd.f32 0.0, %v2643
      %2645 = vmatmul.f32.gmra.mxu0 %v2025
      %v2646 = vpop.f32.mrf.mxu0
      %v2647 = vadd.f32 0.0, %v2646
      %2648 = vmatmul.f32.gmra.mxu0 %v2028
      %v2649 = vpop.f32.mrf.mxu0
      %v2650 = vadd.f32 0.0, %v2649
      %2651 = vmatmul.f32.gmra.mxu0 %v2031
      %v2652 = vpop.f32.mrf.mxu0
      %v2653 = vadd.f32 0.0, %v2652
      %2654 = vmatmul.f32.gmra.mxu0 %v2034
      %v2655 = vpop.f32.mrf.mxu0
      %v2656 = vadd.f32 0.0, %v2655
      %2657 = vmatmul.f32.gmra.mxu0 %v2037
      %v2658 = vpop.f32.mrf.mxu0
      %v2659 = vadd.f32 0.0, %v2658
      %2660 = vmatmul.f32.gmra.mxu0 %v2040
      %v2661 = vpop.f32.mrf.mxu0
      %v2662 = vadd.f32 0.0, %v2661
      %2663 = vmatmul.f32.gmra.mxu0 %v2043
      %v2664 = vpop.f32.mrf.mxu0
      %v2665 = vadd.f32 0.0, %v2664
      %2666 = vmatmul.f32.gmra.mxu0 %v2046
      %v2667 = vpop.f32.mrf.mxu0
      %v2668 = vadd.f32 0.0, %v2667
      %2669 = vmatmul.f32.gmra.mxu0 %v2049
      %v2670 = vpop.f32.mrf.mxu0
      %v2671 = vadd.f32 0.0, %v2670
      %2672 = vmatmul.f32.gmra.mxu0 %v2052
      %v2673 = vpop.f32.mrf.mxu0
      %v2674 = vadd.f32 0.0, %v2673
      %2675 = vmatmul.f32.gmra.mxu0 %v2055
      %v2676 = vpop.f32.mrf.mxu0
      %v2677 = vadd.f32 0.0, %v2676
      %2678 = vmatmul.f32.gmra.mxu0 %v2058
      %v2679 = vpop.f32.mrf.mxu0
      %v2680 = vadd.f32 0.0, %v2679
      %2681 = vmatmul.f32.gmra.mxu0 %v2061
      %v2682 = vpop.f32.mrf.mxu0
      %v2683 = vadd.f32 0.0, %v2682
      %2684 = vmatmul.f32.gmra.mxu0 %v2064
      %v2685 = vpop.f32.mrf.mxu0
      %v2686 = vadd.f32 0.0, %v2685
      %2687 = vmatmul.f32.gmra.mxu0 %v2067
      %v2688 = vpop.f32.mrf.mxu0
      %v2689 = vadd.f32 0.0, %v2688
      %2690 = vmatmul.f32.gmra.mxu0 %v2070
      %v2691 = vpop.f32.mrf.mxu0
      %v2692 = vadd.f32 0.0, %v2691
      %2693 = vdwg.mxu0
      %v2694 = vadd.f32 %v1692, %v2533
      %v2695 = vadd.f32 %v1695, %v2536
      %v2696 = vadd.f32 %v1698, %v2539
      %v2697 = vadd.f32 %v1701, %v2542
      %v2698 = vadd.f32 %v1704, %v2545
      %v2699 = vadd.f32 %v1707, %v2548
      %v2700 = vadd.f32 %v1710, %v2551
      %v2701 = vadd.f32 %v1713, %v2554
      %v2702 = vadd.f32 %v1716, %v2557
      %v2703 = vadd.f32 %v1719, %v2560
      %v2704 = vadd.f32 %v1722, %v2563
      %v2705 = vadd.f32 %v1725, %v2566
      %v2706 = vadd.f32 %v1728, %v2569
      %v2707 = vadd.f32 %v1731, %v2572
      %v2708 = vadd.f32 %v1734, %v2575
      %v2709 = vadd.f32 %v1737, %v2578
      %v2710 = vadd.f32 %v1740, %v2581
      %v2711 = vadd.f32 %v1743, %v2584
      %v2712 = vadd.f32 %v1746, %v2587
      %v2713 = vadd.f32 %v1749, %v2590
      %v2714 = vadd.f32 %v1752, %v2593
      %v2715 = vadd.f32 %v1755, %v2596
      %v2716 = vadd.f32 %v1758, %v2599
      %v2717 = vadd.f32 %v1761, %v2602
      %v2718 = vadd.f32 %v1764, %v2605
      %v2719 = vadd.f32 %v1767, %v2608
      %v2720 = vadd.f32 %v1770, %v2611
      %v2721 = vadd.f32 %v1773, %v2614
      %v2722 = vadd.f32 %v1776, %v2617
      %v2723 = vadd.f32 %v1779, %v2620
      %v2724 = vadd.f32 %v1782, %v2623
      %v2725 = vadd.f32 %v1785, %v2626
      %v2726 = vadd.f32 %v1788, %v2629
      %v2727 = vadd.f32 %v1791, %v2632
      %v2728 = vadd.f32 %v1794, %v2635
      %v2729 = vadd.f32 %v1797, %v2638
      %v2730 = vadd.f32 %v1800, %v2641
      %v2731 = vadd.f32 %v1803, %v2644
      %v2732 = vadd.f32 %v1806, %v2647
      %v2733 = vadd.f32 %v1809, %v2650
      %v2734 = vadd.f32 %v1812, %v2653
      %v2735 = vadd.f32 %v1815, %v2656
      %v2736 = vadd.f32 %v1818, %v2659
      %v2737 = vadd.f32 %v1821, %v2662
      %v2738 = vadd.f32 %v1824, %v2665
      %v2739 = vadd.f32 %v1827, %v2668
      %v2740 = vadd.f32 %v1830, %v2671
      %v2741 = vadd.f32 %v1833, %v2674
      %v2742 = vadd.f32 %v1836, %v2677
      %v2743 = vadd.f32 %v1839, %v2680
      %v2744 = vadd.f32 %v1842, %v2683
      %v2745 = vadd.f32 %v1845, %v2686
      %v2746 = vadd.f32 %v1848, %v2689
      %v2747 = vadd.f32 %v1851, %v2692
      %v2748 = vrot.slane %v2254, 7
      %v2749 = vrot.slane %v2255, 7
      %v2750 = vrot.slane %v2256, 7
      %v2751 = vrot.slane %v2257, 7
      %v2752 = vrot.slane %v2258, 7
      %v2753 = vrot.slane %v2259, 7
      %v2754 = vrot.slane %v2260, 7
      %v2755 = vrot.slane %v2261, 7
      %v2756 = vrot.slane %v2262, 7
      %v2757 = vrot.slane %v2263, 7
      %v2758 = vrot.slane %v2264, 7
      %v2759 = vrot.slane %v2265, 7
      %v2760 = vrot.slane %v2266, 7
      %v2761 = vrot.slane %v2267, 7
      %v2762 = vrot.slane %v2268, 7
      %v2763 = vrot.slane %v2269, 7
      %v2764 = vrot.slane %v2270, 7
      %v2765 = vrot.slane %v2271, 7
      %v2766 = vrot.slane %v2272, 7
      %v2767 = vrot.slane %v2273, 7
      %v2768 = vrot.slane %v2274, 7
      %v2769 = vrot.slane %v2275, 7
      %v2770 = vrot.slane %v2276, 7
      %v2771 = vrot.slane %v2277, 7
      %v2772 = vrot.slane %v2278, 7
      %v2773 = vrot.slane %v2279, 7
      %v2774 = vrot.slane %v2280, 7
      %v2775 = vrot.slane %v2281, 7
      %v2776 = vrot.slane %v2282, 7
      %v2777 = vrot.slane %v2283, 7
      %v2778 = vrot.slane %v2284, 7
      %v2779 = vrot.slane %v2285, 7
      %v2780 = vrot.slane %v2286, 7
      %v2781 = vrot.slane %v2287, 7
      %v2782 = vrot.slane %v2288, 7
      %v2783 = vrot.slane %v2289, 7
      %v2784 = vrot.slane %v2290, 7
      %v2785 = vrot.slane %v2291, 7
      %v2786 = vrot.slane %v2292, 7
      %v2787 = vrot.slane %v2293, 7
      %v2788 = vrot.slane %v2294, 7
      %v2789 = vrot.slane %v2295, 7
      %v2790 = vrot.slane %v2296, 7
      %v2791 = vrot.slane %v2297, 7
      %v2792 = vrot.slane %v2298, 7
      %v2793 = vrot.slane %v2299, 7
      %v2794 = vrot.slane %v2300, 7
      %v2795 = vrot.slane %v2301, 7
      %v2796 = vrot.slane %v2302, 7
      %v2797 = vrot.slane %v2303, 7
      %v2798 = vrot.slane %v2304, 7
      %v2799 = vrot.slane %v2305, 7
      %v2800 = vrot.slane %v2306, 7
      %v2801 = vrot.slane %v2307, 7
      %v2802 = vlaneseq
      %v2803 = vshrl.u32 %v2802, 7
      %vm2804 = vcmp.lt.s32.totalorder %v2803, 1
      %v2805 = vsel %vm2804, %v2799, %v2800
      %v2806 = vsel %vm2804, %v2798, %v2799
      %v2807 = vsel %vm2804, %v2796, %v2797
      %v2808 = vsel %vm2804, %v2795, %v2796
      %v2809 = vsel %vm2804, %v2793, %v2794
      %v2810 = vsel %vm2804, %v2792, %v2793
      %v2811 = vsel %vm2804, %v2790, %v2791
      %v2812 = vsel %vm2804, %v2789, %v2790
      %v2813 = vsel %vm2804, %v2787, %v2788
      %v2814 = vsel %vm2804, %v2786, %v2787
      %v2815 = vsel %vm2804, %v2784, %v2785
      %v2816 = vsel %vm2804, %v2783, %v2784
      %v2817 = vsel %vm2804, %v2781, %v2782
      %v2818 = vsel %vm2804, %v2780, %v2781
      %v2819 = vsel %vm2804, %v2778, %v2779
      %v2820 = vsel %vm2804, %v2777, %v2778
      %v2821 = vsel %vm2804, %v2775, %v2776
      %v2822 = vsel %vm2804, %v2774, %v2775
      %v2823 = vsel %vm2804, %v2772, %v2773
      %v2824 = vsel %vm2804, %v2771, %v2772
      %v2825 = vsel %vm2804, %v2769, %v2770
      %v2826 = vsel %vm2804, %v2768, %v2769
      %v2827 = vsel %vm2804, %v2766, %v2767
      %v2828 = vsel %vm2804, %v2765, %v2766
      %v2829 = vsel %vm2804, %v2763, %v2764
      %v2830 = vsel %vm2804, %v2762, %v2763
      %v2831 = vsel %vm2804, %v2760, %v2761
      %v2832 = vsel %vm2804, %v2759, %v2760
      %v2833 = vsel %vm2804, %v2757, %v2758
      %v2834 = vsel %vm2804, %v2756, %v2757
      %v2835 = vsel %vm2804, %v2754, %v2755
      %v2836 = vsel %vm2804, %v2753, %v2754
      %v2837 = vsel %vm2804, %v2751, %v2752
      %v2838 = vsel %vm2804, %v2750, %v2751
      %v2839 = vsel %vm2804, %v2748, %v2749
      %v2840 = vsel %vm2804, %v2801, %v2748
      %v2841 = vadd.f32 %v2474, %v2840
      %v2842 = vadd.f32 %v2475, %v2839
      %v2843 = vadd.f32 %v2476, %v2838
      %v2844 = vadd.f32 %v2477, %v2837
      %v2845 = vadd.f32 %v2478, %v2836
      %v2846 = vadd.f32 %v2479, %v2835
      %v2847 = vadd.f32 %v2480, %v2834
      %v2848 = vadd.f32 %v2481, %v2833
      %v2849 = vadd.f32 %v2482, %v2832
      %v2850 = vadd.f32 %v2483, %v2831
      %v2851 = vadd.f32 %v2484, %v2830
      %v2852 = vadd.f32 %v2485, %v2829
      %v2853 = vadd.f32 %v2486, %v2828
      %v2854 = vadd.f32 %v2487, %v2827
      %v2855 = vadd.f32 %v2488, %v2826
      %v2856 = vadd.f32 %v2489, %v2825
      %v2857 = vadd.f32 %v2490, %v2824
      %v2858 = vadd.f32 %v2491, %v2823
      %v2859 = vadd.f32 %v2492, %v2822
      %v2860 = vadd.f32 %v2493, %v2821
      %v2861 = vadd.f32 %v2494, %v2820
      %v2862 = vadd.f32 %v2495, %v2819
      %v2863 = vadd.f32 %v2496, %v2818
      %v2864 = vadd.f32 %v2497, %v2817
      %v2865 = vadd.f32 %v2498, %v2816
      %v2866 = vadd.f32 %v2499, %v2815
      %v2867 = vadd.f32 %v2500, %v2814
      %v2868 = vadd.f32 %v2501, %v2813
      %v2869 = vadd.f32 %v2502, %v2812
      %v2870 = vadd.f32 %v2503, %v2811
      %v2871 = vadd.f32 %v2504, %v2810
      %v2872 = vadd.f32 %v2505, %v2809
      %v2873 = vadd.f32 %v2506, %v2808
      %v2874 = vadd.f32 %v2507, %v2807
      %v2875 = vadd.f32 %v2508, %v2806
      %v2876 = vadd.f32 %v2509, %v2805
      %v2877 = vrot.slane %v2694, 1
      %v2878 = vrot.slane %v2695, 1
      %v2879 = vrot.slane %v2696, 1
      %v2880 = vrot.slane %v2697, 1
      %v2881 = vrot.slane %v2698, 1
      %v2882 = vrot.slane %v2699, 1
      %v2883 = vrot.slane %v2700, 1
      %v2884 = vrot.slane %v2701, 1
      %v2885 = vrot.slane %v2702, 1
      %v2886 = vrot.slane %v2703, 1
      %v2887 = vrot.slane %v2704, 1
      %v2888 = vrot.slane %v2705, 1
      %v2889 = vrot.slane %v2706, 1
      %v2890 = vrot.slane %v2707, 1
      %v2891 = vrot.slane %v2708, 1
      %v2892 = vrot.slane %v2709, 1
      %v2893 = vrot.slane %v2710, 1
      %v2894 = vrot.slane %v2711, 1
      %v2895 = vrot.slane %v2712, 1
      %v2896 = vrot.slane %v2713, 1
      %v2897 = vrot.slane %v2714, 1
      %v2898 = vrot.slane %v2715, 1
      %v2899 = vrot.slane %v2716, 1
      %v2900 = vrot.slane %v2717, 1
      %v2901 = vrot.slane %v2718, 1
      %v2902 = vrot.slane %v2719, 1
      %v2903 = vrot.slane %v2720, 1
      %v2904 = vrot.slane %v2721, 1
      %v2905 = vrot.slane %v2722, 1
      %v2906 = vrot.slane %v2723, 1
      %v2907 = vrot.slane %v2724, 1
      %v2908 = vrot.slane %v2725, 1
      %v2909 = vrot.slane %v2726, 1
      %v2910 = vrot.slane %v2727, 1
      %v2911 = vrot.slane %v2728, 1
      %v2912 = vrot.slane %v2729, 1
      %v2913 = vrot.slane %v2730, 1
      %v2914 = vrot.slane %v2731, 1
      %v2915 = vrot.slane %v2732, 1
      %v2916 = vrot.slane %v2733, 1
      %v2917 = vrot.slane %v2734, 1
      %v2918 = vrot.slane %v2735, 1
      %v2919 = vrot.slane %v2736, 1
      %v2920 = vrot.slane %v2737, 1
      %v2921 = vrot.slane %v2738, 1
      %v2922 = vrot.slane %v2739, 1
      %v2923 = vrot.slane %v2740, 1
      %v2924 = vrot.slane %v2741, 1
      %v2925 = vrot.slane %v2742, 1
      %v2926 = vrot.slane %v2743, 1
      %v2927 = vrot.slane %v2744, 1
      %v2928 = vrot.slane %v2745, 1
      %v2929 = vrot.slane %v2746, 1
      %v2930 = vrot.slane %v2747, 1
      %vm2931 = vcmp.lt.s32.totalorder %v2803, 7
      %v2932 = vsel %vm2931, %v2929, %v2930
      %v2933 = vsel %vm2931, %v2928, %v2929
      %v2934 = vsel %vm2931, %v2926, %v2927
      %v2935 = vsel %vm2931, %v2925, %v2926
      %v2936 = vsel %vm2931, %v2923, %v2924
      %v2937 = vsel %vm2931, %v2922, %v2923
      %v2938 = vsel %vm2931, %v2920, %v2921
      %v2939 = vsel %vm2931, %v2919, %v2920
      %v2940 = vsel %vm2931, %v2917, %v2918
      %v2941 = vsel %vm2931, %v2916, %v2917
      %v2942 = vsel %vm2931, %v2914, %v2915
      %v2943 = vsel %vm2931, %v2913, %v2914
      %v2944 = vsel %vm2931, %v2911, %v2912
      %v2945 = vsel %vm2931, %v2910, %v2911
      %v2946 = vsel %vm2931, %v2908, %v2909
      %v2947 = vsel %vm2931, %v2907, %v2908
      %v2948 = vsel %vm2931, %v2905, %v2906
      %v2949 = vsel %vm2931, %v2904, %v2905
      %v2950 = vsel %vm2931, %v2902, %v2903
      %v2951 = vsel %vm2931, %v2901, %v2902
      %v2952 = vsel %vm2931, %v2899, %v2900
      %v2953 = vsel %vm2931, %v2898, %v2899
      %v2954 = vsel %vm2931, %v2896, %v2897
      %v2955 = vsel %vm2931, %v2895, %v2896
      %v2956 = vsel %vm2931, %v2893, %v2894
      %v2957 = vsel %vm2931, %v2892, %v2893
      %v2958 = vsel %vm2931, %v2890, %v2891
      %v2959 = vsel %vm2931, %v2889, %v2890
      %v2960 = vsel %vm2931, %v2887, %v2888
      %v2961 = vsel %vm2931, %v2886, %v2887
      %v2962 = vsel %vm2931, %v2884, %v2885
      %v2963 = vsel %vm2931, %v2883, %v2884
      %v2964 = vsel %vm2931, %v2881, %v2882
      %v2965 = vsel %vm2931, %v2880, %v2881
      %v2966 = vsel %vm2931, %v2878, %v2879
      %v2967 = vsel %vm2931, %v2877, %v2878
      %v2968 = vadd.f32 %v2841, %v2967
      %v2969 = vadd.f32 %v2842, %v2966
      %v2970 = vadd.f32 %v2843, %v2965
      %v2971 = vadd.f32 %v2844, %v2964
      %v2972 = vadd.f32 %v2845, %v2963
      %v2973 = vadd.f32 %v2846, %v2962
      %v2974 = vadd.f32 %v2847, %v2961
      %v2975 = vadd.f32 %v2848, %v2960
      %v2976 = vadd.f32 %v2849, %v2959
      %v2977 = vadd.f32 %v2850, %v2958
      %v2978 = vadd.f32 %v2851, %v2957
      %v2979 = vadd.f32 %v2852, %v2956
      %v2980 = vadd.f32 %v2853, %v2955
      %v2981 = vadd.f32 %v2854, %v2954
      %v2982 = vadd.f32 %v2855, %v2953
      %v2983 = vadd.f32 %v2856, %v2952
      %v2984 = vadd.f32 %v2857, %v2951
      %v2985 = vadd.f32 %v2858, %v2950
      %v2986 = vadd.f32 %v2859, %v2949
      %v2987 = vadd.f32 %v2860, %v2948
      %v2988 = vadd.f32 %v2861, %v2947
      %v2989 = vadd.f32 %v2862, %v2946
      %v2990 = vadd.f32 %v2863, %v2945
      %v2991 = vadd.f32 %v2864, %v2944
      %v2992 = vadd.f32 %v2865, %v2943
      %v2993 = vadd.f32 %v2866, %v2942
      %v2994 = vadd.f32 %v2867, %v2941
      %v2995 = vadd.f32 %v2868, %v2940
      %v2996 = vadd.f32 %v2869, %v2939
      %v2997 = vadd.f32 %v2870, %v2938
      %v2998 = vadd.f32 %v2871, %v2937
      %v2999 = vadd.f32 %v2872, %v2936
      %v3000 = vadd.f32 %v2873, %v2935
      %v3001 = vadd.f32 %v2874, %v2934
      %v3002 = vadd.f32 %v2875, %v2933
      %v3003 = vadd.f32 %v2876, %v2932
      %v3004 = vld [vmem:[%s2] sm:$0x1]
      %v3006 = vperm.slane %v3004, 0
      %v3008 = vadd.f32 %v2968, %v3006
      %v3009 = vadd.f32 %v2969, %v3006
      %v3010 = vadd.f32 %v2970, %v3006
      %v3011 = vadd.f32 %v2971, %v3006
      %v3012 = vadd.f32 %v2972, %v3006
      %v3013 = vadd.f32 %v2973, %v3006
      %v3014 = vadd.f32 %v2974, %v3006
      %v3015 = vadd.f32 %v2975, %v3006
      %v3016 = vadd.f32 %v2976, %v3006
      %v3017 = vadd.f32 %v2977, %v3006
      %v3018 = vadd.f32 %v2978, %v3006
      %v3019 = vadd.f32 %v2979, %v3006
      %v3020 = vadd.f32 %v2980, %v3006
      %v3021 = vadd.f32 %v2981, %v3006
      %v3022 = vadd.f32 %v2982, %v3006
      %v3023 = vadd.f32 %v2983, %v3006
      %v3024 = vadd.f32 %v2984, %v3006
      %v3025 = vadd.f32 %v2985, %v3006
      %v3026 = vadd.f32 %v2986, %v3006
      %v3027 = vadd.f32 %v2987, %v3006
      %v3028 = vadd.f32 %v2988, %v3006
      %v3029 = vadd.f32 %v2989, %v3006
      %v3030 = vadd.f32 %v2990, %v3006
      %v3031 = vadd.f32 %v2991, %v3006
      %v3032 = vadd.f32 %v2992, %v3006
      %v3033 = vadd.f32 %v2993, %v3006
      %v3034 = vadd.f32 %v2994, %v3006
      %v3035 = vadd.f32 %v2995, %v3006
      %v3036 = vadd.f32 %v2996, %v3006
      %v3037 = vadd.f32 %v2997, %v3006
      %v3038 = vadd.f32 %v2998, %v3006
      %v3039 = vadd.f32 %v2999, %v3006
      %v3040 = vadd.f32 %v3000, %v3006
      %v3041 = vadd.f32 %v3001, %v3006
      %v3042 = vadd.f32 %v3002, %v3006
      %v3043 = vadd.f32 %v3003, %v3006
      %vm3044 = vcmask 64512
      %3045 = vst.msk [vmem:[#allocation2] sm:$0xff] %vm3044, %v3008
      %3046 = vst.msk [vmem:[#allocation2 + $0x8] sm:$0xff] %vm3044, %v3009
      %3047 = vst.msk [vmem:[#allocation2 + $0x18] sm:$0xff] %vm3044, %v3010
      %3048 = vst.msk [vmem:[#allocation2 + $0x20] sm:$0xff] %vm3044, %v3011
      %3049 = vst.msk [vmem:[#allocation2 + $0x30] sm:$0xff] %vm3044, %v3012
      %3050 = vst.msk [vmem:[#allocation2 + $0x38] sm:$0xff] %vm3044, %v3013
      %3051 = vst.msk [vmem:[#allocation2 + $0x48] sm:$0xff] %vm3044, %v3014
      %3052 = vst.msk [vmem:[#allocation2 + $0x50] sm:$0xff] %vm3044, %v3015
      %3053 = vst.msk [vmem:[#allocation2 + $0x60] sm:$0xff] %vm3044, %v3016
      %3054 = vst.msk [vmem:[#allocation2 + $0x68] sm:$0xff] %vm3044, %v3017
      %3055 = vst.msk [vmem:[#allocation2 + $0x78] sm:$0xff] %vm3044, %v3018
      %3056 = vst.msk [vmem:[#allocation2 + $0x80] sm:$0xff] %vm3044, %v3019
      %3057 = vst.msk [vmem:[#allocation2 + $0x90] sm:$0xff] %vm3044, %v3020
      %3058 = vst.msk [vmem:[#allocation2 + $0x98] sm:$0xff] %vm3044, %v3021
      %3059 = vst.msk [vmem:[#allocation2 + $0xa8] sm:$0xff] %vm3044, %v3022
      %3060 = vst.msk [vmem:[#allocation2 + $0xb0] sm:$0xff] %vm3044, %v3023
      %3061 = vst.msk [vmem:[#allocation2 + $0xc0] sm:$0xff] %vm3044, %v3024
      %3062 = vst.msk [vmem:[#allocation2 + $0xc8] sm:$0xff] %vm3044, %v3025
      %3063 = vst.msk [vmem:[#allocation2 + $0xd8] sm:$0xff] %vm3044, %v3026
      %3064 = vst.msk [vmem:[#allocation2 + $0xe0] sm:$0xff] %vm3044, %v3027
      %3065 = vst.msk [vmem:[#allocation2 + $0xf0] sm:$0xff] %vm3044, %v3028
      %3066 = vst.msk [vmem:[#allocation2 + $0xf8] sm:$0xff] %vm3044, %v3029
      %3067 = vst.msk [vmem:[#allocation2 + $0x108] sm:$0xff] %vm3044, %v3030
      %3068 = vst.msk [vmem:[#allocation2 + $0x110] sm:$0xff] %vm3044, %v3031
      %3069 = vst.msk [vmem:[#allocation2 + $0x120] sm:$0xff] %vm3044, %v3032
      %3070 = vst.msk [vmem:[#allocation2 + $0x128] sm:$0xff] %vm3044, %v3033
      %3071 = vst.msk [vmem:[#allocation2 + $0x138] sm:$0xff] %vm3044, %v3034
      %3072 = vst.msk [vmem:[#allocation2 + $0x140] sm:$0xff] %vm3044, %v3035
      %3073 = vst.msk [vmem:[#allocation2 + $0x150] sm:$0xff] %vm3044, %v3036
      %3074 = vst.msk [vmem:[#allocation2 + $0x158] sm:$0xff] %vm3044, %v3037
      %3075 = vst.msk [vmem:[#allocation2 + $0x168] sm:$0xff] %vm3044, %v3038
      %3076 = vst.msk [vmem:[#allocation2 + $0x170] sm:$0xff] %vm3044, %v3039
      %3077 = vst.msk [vmem:[#allocation2 + $0x180] sm:$0xff] %vm3044, %v3040
      %3078 = vst.msk [vmem:[#allocation2 + $0x188] sm:$0xff] %vm3044, %v3041
      %3079 = vst.msk [vmem:[#allocation2 + $0x198] sm:$0xff] %vm3044, %v3042
      %3080 = vst.msk [vmem:[#allocation2 + $0x1a0] sm:$0xff] %vm3044, %v3043
      %3081 = vst.msk [vmem:[#allocation2 + $0x10] sm:$0xff] %vm3044, 0.0
      %3082 = vst.msk [vmem:[#allocation2 + $0x28] sm:$0xff] %vm3044, 0.0
      %3083 = vst.msk [vmem:[#allocation2 + $0x40] sm:$0xff] %vm3044, 0.0
      %3084 = vst.msk [vmem:[#allocation2 + $0x58] sm:$0xff] %vm3044, 0.0
      %3085 = vst.msk [vmem:[#allocation2 + $0x70] sm:$0xff] %vm3044, 0.0
      %3086 = vst.msk [vmem:[#allocation2 + $0x88] sm:$0xff] %vm3044, 0.0
      %3087 = vst.msk [vmem:[#allocation2 + $0xa0] sm:$0xff] %vm3044, 0.0
      %3088 = vst.msk [vmem:[#allocation2 + $0xb8] sm:$0xff] %vm3044, 0.0
      %3089 = vst.msk [vmem:[#allocation2 + $0xd0] sm:$0xff] %vm3044, 0.0
      %3090 = vst.msk [vmem:[#allocation2 + $0xe8] sm:$0xff] %vm3044, 0.0
      %3091 = vst.msk [vmem:[#allocation2 + $0x100] sm:$0xff] %vm3044, 0.0
      %3092 = vst.msk [vmem:[#allocation2 + $0x118] sm:$0xff] %vm3044, 0.0
      %3093 = vst.msk [vmem:[#allocation2 + $0x130] sm:$0xff] %vm3044, 0.0
      %3094 = vst.msk [vmem:[#allocation2 + $0x148] sm:$0xff] %vm3044, 0.0
      %3095 = vst.msk [vmem:[#allocation2 + $0x160] sm:$0xff] %vm3044, 0.0
      %3096 = vst.msk [vmem:[#allocation2 + $0x178] sm:$0xff] %vm3044, 0.0
      %3097 = vst.msk [vmem:[#allocation2 + $0x190] sm:$0xff] %vm3044, 0.0
      %3098 = vst.msk [vmem:[#allocation2 + $0x1a8] sm:$0xff] %vm3044, 0.0
      %p3099 = scmp.eq.s32.totalorder %s24, 0
      // Predicated region
      $region41: #{conv_block_forward.2} parent=39 // pred_check
        %p3100 = pneg %p3099
      $region42: #{conv_block_forward.2} parent=39 // pred_check_branch
        %3102 = sbr.rel (%p3100) target = $region44
      $region43: #{conv_block_forward.2} parent=39 // pred_region
        %3103 = vst.msk [vmem:[#allocation2] sm:$0xff] %vm3044, 0.0
        %3104 = vst.msk [vmem:[#allocation2 + $0x8] sm:$0xff] %vm3044, 0.0
        %3105 = vst.msk [vmem:[#allocation2 + $0x10] sm:$0xff] %vm3044, 0.0
        %s3106 = scalar_lea.vmem [#allocation2], 408
        %3107 = vst.msk [vmem:[%s3106] sm:$0xff] %vm3044, 0.0
        %3108 = vst.msk [vmem:[%s3106 + $0x8] sm:$0xff] %vm3044, 0.0
        %3109 = vst.msk [vmem:[%s3106 + $0x10] sm:$0xff] %vm3044, 0.0
      $region44: #{conv_block_forward.2} parent=39 // pred_fallthru
        _
      %v3110 = vld [vmem:[#allocation2] sm:$0xff]
      %v3111 = vld [vmem:[#allocation2 + $0x8] sm:$0xff]
      %v3112 = vld [vmem:[#allocation2 + $0x10] sm:$0xff]
      %v3113 = vld [vmem:[#allocation2 + $0x18] sm:$0xff]
      %v3114 = vld [vmem:[#allocation2 + $0x20] sm:$0xff]
      %v3115 = vld [vmem:[#allocation2 + $0x28] sm:$0xff]
      %v3116 = vld [vmem:[#allocation2 + $0x30] sm:$0xff]
      %v3117 = vld [vmem:[#allocation2 + $0x38] sm:$0xff]
      %v3118 = vld [vmem:[#allocation2 + $0x40] sm:$0xff]
      %v3119 = vld [vmem:[#allocation2 + $0x48] sm:$0xff]
      %v3120 = vld [vmem:[#allocation2 + $0x50] sm:$0xff]
      %v3121 = vld [vmem:[#allocation2 + $0x58] sm:$0xff]
      %v3122 = vld [vmem:[#allocation2 + $0x60] sm:$0xff]
      %v3123 = vld [vmem:[#allocation2 + $0x68] sm:$0xff]
      %v3124 = vld [vmem:[#allocation2 + $0x70] sm:$0xff]
      %v3125 = vld [vmem:[#allocation2 + $0x78] sm:$0xff]
      %v3126 = vld [vmem:[#allocation2 + $0x80] sm:$0xff]
      %v3127 = vld [vmem:[#allocation2 + $0x88] sm:$0xff]
      %v3128 = vld [vmem:[#allocation2 + $0x90] sm:$0xff]
      %v3129 = vld [vmem:[#allocation2 + $0x98] sm:$0xff]
      %v3130 = vld [vmem:[#allocation2 + $0xa0] sm:$0xff]
      %v3131 = vld [vmem:[#allocation2 + $0xa8] sm:$0xff]
      %v3132 = vld [vmem:[#allocation2 + $0xb0] sm:$0xff]
      %v3133 = vld [vmem:[#allocation2 + $0xb8] sm:$0xff]
      %v3134 = vld [vmem:[#allocation2 + $0xc0] sm:$0xff]
      %v3135 = vld [vmem:[#allocation2 + $0xc8] sm:$0xff]
      %v3136 = vld [vmem:[#allocation2 + $0xd0] sm:$0xff]
      %v3137 = vld [vmem:[#allocation2 + $0xd8] sm:$0xff]
      %v3138 = vld [vmem:[#allocation2 + $0xe0] sm:$0xff]
      %v3139 = vld [vmem:[#allocation2 + $0xe8] sm:$0xff]
      %v3140 = vld [vmem:[#allocation2 + $0xf0] sm:$0xff]
      %v3141 = vld [vmem:[#allocation2 + $0xf8] sm:$0xff]
      %v3142 = vld [vmem:[#allocation2 + $0x100] sm:$0xff]
      %v3143 = vld [vmem:[#allocation2 + $0x108] sm:$0xff]
      %v3144 = vld [vmem:[#allocation2 + $0x110] sm:$0xff]
      %v3145 = vld [vmem:[#allocation2 + $0x118] sm:$0xff]
      %v3146 = vld [vmem:[#allocation2 + $0x120] sm:$0xff]
      %v3147 = vld [vmem:[#allocation2 + $0x128] sm:$0xff]
      %v3148 = vld [vmem:[#allocation2 + $0x130] sm:$0xff]
      %v3149 = vld [vmem:[#allocation2 + $0x138] sm:$0xff]
      %v3150 = vld [vmem:[#allocation2 + $0x140] sm:$0xff]
      %v3151 = vld [vmem:[#allocation2 + $0x148] sm:$0xff]
      %v3152 = vld [vmem:[#allocation2 + $0x150] sm:$0xff]
      %v3153 = vld [vmem:[#allocation2 + $0x158] sm:$0xff]
      %v3154 = vld [vmem:[#allocation2 + $0x160] sm:$0xff]
      %v3155 = vld [vmem:[#allocation2 + $0x168] sm:$0xff]
      %v3156 = vld [vmem:[#allocation2 + $0x170] sm:$0xff]
      %v3157 = vld [vmem:[#allocation2 + $0x178] sm:$0xff]
      %v3158 = vld [vmem:[%s3] sm:$0xff]
      %s3159 = scalar_lea.vmem %s3, 8
      %v3160 = vld [vmem:[%s3159] sm:$0xff]
      %s3161 = scalar_lea.vmem %s3, 16
      %v3162 = vld [vmem:[%s3161] sm:$0xff]
      %s3163 = scalar_lea.vmem [#allocation2], 24
      %v3164 = vld [vmem:[%s3163] sm:$0xff]
      %v3165 = vld [vmem:[%s3163 + $0x8] sm:$0xff]
      %v3166 = vld [vmem:[%s3163 + $0x10] sm:$0xff]
      %v3167 = vld [vmem:[%s3163 + $0x18] sm:$0xff]
      %v3168 = vld [vmem:[%s3163 + $0x20] sm:$0xff]
      %v3169 = vld [vmem:[%s3163 + $0x28] sm:$0xff]
      %v3170 = vld [vmem:[%s3163 + $0x30] sm:$0xff]
      %v3171 = vld [vmem:[%s3163 + $0x38] sm:$0xff]
      %v3172 = vld [vmem:[%s3163 + $0x40] sm:$0xff]
      %v3173 = vld [vmem:[%s3163 + $0x48] sm:$0xff]
      %v3174 = vld [vmem:[%s3163 + $0x50] sm:$0xff]
      %v3175 = vld [vmem:[%s3163 + $0x58] sm:$0xff]
      %v3176 = vld [vmem:[%s3163 + $0x60] sm:$0xff]
      %v3177 = vld [vmem:[%s3163 + $0x68] sm:$0xff]
      %v3178 = vld [vmem:[%s3163 + $0x70] sm:$0xff]
      %v3179 = vld [vmem:[%s3163 + $0x78] sm:$0xff]
      %v3180 = vld [vmem:[%s3163 + $0x80] sm:$0xff]
      %v3181 = vld [vmem:[%s3163 + $0x88] sm:$0xff]
      %v3182 = vld [vmem:[%s3163 + $0x90] sm:$0xff]
      %v3183 = vld [vmem:[%s3163 + $0x98] sm:$0xff]
      %v3184 = vld [vmem:[%s3163 + $0xa0] sm:$0xff]
      %v3185 = vld [vmem:[%s3163 + $0xa8] sm:$0xff]
      %v3186 = vld [vmem:[%s3163 + $0xb0] sm:$0xff]
      %v3187 = vld [vmem:[%s3163 + $0xb8] sm:$0xff]
      %v3188 = vld [vmem:[%s3163 + $0xc0] sm:$0xff]
      %v3189 = vld [vmem:[%s3163 + $0xc8] sm:$0xff]
      %v3190 = vld [vmem:[%s3163 + $0xd0] sm:$0xff]
      %v3191 = vld [vmem:[%s3163 + $0xd8] sm:$0xff]
      %v3192 = vld [vmem:[%s3163 + $0xe0] sm:$0xff]
      %v3193 = vld [vmem:[%s3163 + $0xe8] sm:$0xff]
      %v3194 = vld [vmem:[%s3163 + $0xf0] sm:$0xff]
      %v3195 = vld [vmem:[%s3163 + $0xf8] sm:$0xff]
      %v3196 = vld [vmem:[%s3163 + $0x100] sm:$0xff]
      %v3197 = vld [vmem:[%s3163 + $0x108] sm:$0xff]
      %v3198 = vld [vmem:[%s3163 + $0x110] sm:$0xff]
      %v3199 = vld [vmem:[%s3163 + $0x118] sm:$0xff]
      %v3200 = vld [vmem:[%s3163 + $0x120] sm:$0xff]
      %v3201 = vld [vmem:[%s3163 + $0x128] sm:$0xff]
      %v3202 = vld [vmem:[%s3163 + $0x130] sm:$0xff]
      %v3203 = vld [vmem:[%s3163 + $0x138] sm:$0xff]
      %v3204 = vld [vmem:[%s3163 + $0x140] sm:$0xff]
      %v3205 = vld [vmem:[%s3163 + $0x148] sm:$0xff]
      %v3206 = vld [vmem:[%s3163 + $0x150] sm:$0xff]
      %v3207 = vld [vmem:[%s3163 + $0x158] sm:$0xff]
      %v3208 = vld [vmem:[%s3163 + $0x160] sm:$0xff]
      %v3209 = vld [vmem:[%s3163 + $0x168] sm:$0xff]
      %v3210 = vld [vmem:[%s3163 + $0x170] sm:$0xff]
      %v3211 = vld [vmem:[%s3163 + $0x178] sm:$0xff]
      %s3212 = scalar_lea.vmem %s3, 24
      %v3213 = vld [vmem:[%s3212] sm:$0xff]
      %v3215 = vsel %vm3044, %v3164, 0
      %v3218 = vsel %vm3044, %v3165, 0
      %v3221 = vsel %vm3044, %v3166, 0
      %v3224 = vsel %vm3044, %v3167, 0
      %v3227 = vsel %vm3044, %v3168, 0
      %v3230 = vsel %vm3044, %v3169, 0
      %v3233 = vsel %vm3044, %v3170, 0
      %v3236 = vsel %vm3044, %v3171, 0
      %v3239 = vsel %vm3044, %v3172, 0
      %v3242 = vsel %vm3044, %v3173, 0
      %v3245 = vsel %vm3044, %v3174, 0
      %v3248 = vsel %vm3044, %v3175, 0
      %v3251 = vsel %vm3044, %v3176, 0
      %v3254 = vsel %vm3044, %v3177, 0
      %v3257 = vsel %vm3044, %v3178, 0
      %v3260 = vsel %vm3044, %v3179, 0
      %v3263 = vsel %vm3044, %v3180, 0
      %v3266 = vsel %vm3044, %v3181, 0
      %v3269 = vsel %vm3044, %v3182, 0
      %v3272 = vsel %vm3044, %v3183, 0
      %v3275 = vsel %vm3044, %v3184, 0
      %v3278 = vsel %vm3044, %v3185, 0
      %v3281 = vsel %vm3044, %v3186, 0
      %v3284 = vsel %vm3044, %v3187, 0
      %v3287 = vsel %vm3044, %v3188, 0
      %v3290 = vsel %vm3044, %v3189, 0
      %v3293 = vsel %vm3044, %v3190, 0
      %v3296 = vsel %vm3044, %v3191, 0
      %v3299 = vsel %vm3044, %v3192, 0
      %v3302 = vsel %vm3044, %v3193, 0
      %v3305 = vsel %vm3044, %v3194, 0
      %v3308 = vsel %vm3044, %v3195, 0
      %v3311 = vsel %vm3044, %v3196, 0
      %v3314 = vsel %vm3044, %v3197, 0
      %v3317 = vsel %vm3044, %v3198, 0
      %v3320 = vsel %vm3044, %v3199, 0
      %v3323 = vsel %vm3044, %v3200, 0
      %v3326 = vsel %vm3044, %v3201, 0
      %v3329 = vsel %vm3044, %v3202, 0
      %v3332 = vsel %vm3044, %v3203, 0
      %v3335 = vsel %vm3044, %v3204, 0
      %v3338 = vsel %vm3044, %v3205, 0
      %v3341 = vsel %vm3044, %v3206, 0
      %v3344 = vsel %vm3044, %v3207, 0
      %v3347 = vsel %vm3044, %v3208, 0
      %v3350 = vsel %vm3044, %v3209, 0
      %v3353 = vsel %vm3044, %v3210, 0
      %v3356 = vsel %vm3044, %v3211, 0
      %3358 = vmatpush.msra.mxu0 0.0
      %3359 = vmatpush.msra.mxu0 0.0
      %3360 = vmatpush.msra.mxu0 0.0
      %3361 = vmatpush.msra.mxu0 0.0
      %3362 = vmatpush.msra.mxu0 0.0
      %3363 = vmatpush.msra.mxu0 0.0
      %3364 = vmatpush.msra.mxu0 0.0
      %3365 = vmatpush.msra.mxu0 0.0
      %3366 = vmatpush.msra.mxu0 0.0
      %3367 = vmatpush.msra.mxu0 0.0
      %3368 = vmatpush.msra.mxu0 0.0
      %3369 = vmatpush.msra.mxu0 0.0
      %3370 = vmatpush.msra.mxu0 0.0
      %3371 = vmatpush.msra.mxu0 0.0
      %3372 = vmatpush.msra.mxu0 0.0
      %3373 = vmatpush.msra.mxu0 %v3213
      %3374 = vmatmul.f32.gmra.mxu0 %v3215
      %v3375 = vpop.f32.mrf.mxu0
      %v3376 = vadd.f32 0.0, %v3375
      %3377 = vmatmul.f32.gmra.mxu0 %v3218
      %v3378 = vpop.f32.mrf.mxu0
      %v3379 = vadd.f32 0.0, %v3378
      %3380 = vmatmul.f32.gmra.mxu0 %v3221
      %v3381 = vpop.f32.mrf.mxu0
      %v3382 = vadd.f32 0.0, %v3381
      %3383 = vmatmul.f32.gmra.mxu0 %v3224
      %v3384 = vpop.f32.mrf.mxu0
      %v3385 = vadd.f32 0.0, %v3384
      %3386 = vmatmul.f32.gmra.mxu0 %v3227
      %v3387 = vpop.f32.mrf.mxu0
      %v3388 = vadd.f32 0.0, %v3387
      %3389 = vmatmul.f32.gmra.mxu0 %v3230
      %v3390 = vpop.f32.mrf.mxu0
      %v3391 = vadd.f32 0.0, %v3390
      %3392 = vmatmul.f32.gmra.mxu0 %v3233
      %v3393 = vpop.f32.mrf.mxu0
      %v3394 = vadd.f32 0.0, %v3393
      %3395 = vmatmul.f32.gmra.mxu0 %v3236
      %v3396 = vpop.f32.mrf.mxu0
      %v3397 = vadd.f32 0.0, %v3396
      %3398 = vmatmul.f32.gmra.mxu0 %v3239
      %v3399 = vpop.f32.mrf.mxu0
      %v3400 = vadd.f32 0.0, %v3399
      %3401 = vmatmul.f32.gmra.mxu0 %v3242
      %v3402 = vpop.f32.mrf.mxu0
      %v3403 = vadd.f32 0.0, %v3402
      %3404 = vmatmul.f32.gmra.mxu0 %v3245
      %v3405 = vpop.f32.mrf.mxu0
      %v3406 = vadd.f32 0.0, %v3405
      %3407 = vmatmul.f32.gmra.mxu0 %v3248
      %v3408 = vpop.f32.mrf.mxu0
      %v3409 = vadd.f32 0.0, %v3408
      %3410 = vmatmul.f32.gmra.mxu0 %v3251
      %v3411 = vpop.f32.mrf.mxu0
      %v3412 = vadd.f32 0.0, %v3411
      %3413 = vmatmul.f32.gmra.mxu0 %v3254
      %v3414 = vpop.f32.mrf.mxu0
      %v3415 = vadd.f32 0.0, %v3414
      %3416 = vmatmul.f32.gmra.mxu0 %v3257
      %v3417 = vpop.f32.mrf.mxu0
      %v3418 = vadd.f32 0.0, %v3417
      %3419 = vmatmul.f32.gmra.mxu0 %v3260
      %v3420 = vpop.f32.mrf.mxu0
      %v3421 = vadd.f32 0.0, %v3420
      %3422 = vmatmul.f32.gmra.mxu0 %v3263
      %v3423 = vpop.f32.mrf.mxu0
      %v3424 = vadd.f32 0.0, %v3423
      %3425 = vmatmul.f32.gmra.mxu0 %v3266
      %v3426 = vpop.f32.mrf.mxu0
      %v3427 = vadd.f32 0.0, %v3426
      %3428 = vmatmul.f32.gmra.mxu0 %v3269
      %v3429 = vpop.f32.mrf.mxu0
      %v3430 = vadd.f32 0.0, %v3429
      %3431 = vmatmul.f32.gmra.mxu0 %v3272
      %v3432 = vpop.f32.mrf.mxu0
      %v3433 = vadd.f32 0.0, %v3432
      %3434 = vmatmul.f32.gmra.mxu0 %v3275
      %v3435 = vpop.f32.mrf.mxu0
      %v3436 = vadd.f32 0.0, %v3435
      %3437 = vmatmul.f32.gmra.mxu0 %v3278
      %v3438 = vpop.f32.mrf.mxu0
      %v3439 = vadd.f32 0.0, %v3438
      %3440 = vmatmul.f32.gmra.mxu0 %v3281
      %v3441 = vpop.f32.mrf.mxu0
      %v3442 = vadd.f32 0.0, %v3441
      %3443 = vmatmul.f32.gmra.mxu0 %v3284
      %v3444 = vpop.f32.mrf.mxu0
      %v3445 = vadd.f32 0.0, %v3444
      %3446 = vmatmul.f32.gmra.mxu0 %v3287
      %v3447 = vpop.f32.mrf.mxu0
      %v3448 = vadd.f32 0.0, %v3447
      %3449 = vmatmul.f32.gmra.mxu0 %v3290
      %v3450 = vpop.f32.mrf.mxu0
      %v3451 = vadd.f32 0.0, %v3450
      %3452 = vmatmul.f32.gmra.mxu0 %v3293
      %v3453 = vpop.f32.mrf.mxu0
      %v3454 = vadd.f32 0.0, %v3453
      %3455 = vmatmul.f32.gmra.mxu0 %v3296
      %v3456 = vpop.f32.mrf.mxu0
      %v3457 = vadd.f32 0.0, %v3456
      %3458 = vmatmul.f32.gmra.mxu0 %v3299
      %v3459 = vpop.f32.mrf.mxu0
      %v3460 = vadd.f32 0.0, %v3459
      %3461 = vmatmul.f32.gmra.mxu0 %v3302
      %v3462 = vpop.f32.mrf.mxu0
      %v3463 = vadd.f32 0.0, %v3462
      %3464 = vmatmul.f32.gmra.mxu0 %v3305
      %v3465 = vpop.f32.mrf.mxu0
      %v3466 = vadd.f32 0.0, %v3465
      %3467 = vmatmul.f32.gmra.mxu0 %v3308
      %v3468 = vpop.f32.mrf.mxu0
      %v3469 = vadd.f32 0.0, %v3468
      %3470 = vmatmul.f32.gmra.mxu0 %v3311
      %v3471 = vpop.f32.mrf.mxu0
      %v3472 = vadd.f32 0.0, %v3471
      %3473 = vmatmul.f32.gmra.mxu0 %v3314
      %v3474 = vpop.f32.mrf.mxu0
      %v3475 = vadd.f32 0.0, %v3474
      %3476 = vmatmul.f32.gmra.mxu0 %v3317
      %v3477 = vpop.f32.mrf.mxu0
      %v3478 = vadd.f32 0.0, %v3477
      %3479 = vmatmul.f32.gmra.mxu0 %v3320
      %v3480 = vpop.f32.mrf.mxu0
      %v3481 = vadd.f32 0.0, %v3480
      %3482 = vmatmul.f32.gmra.mxu0 %v3323
      %v3483 = vpop.f32.mrf.mxu0
      %v3484 = vadd.f32 0.0, %v3483
      %3485 = vmatmul.f32.gmra.mxu0 %v3326
      %v3486 = vpop.f32.mrf.mxu0
      %v3487 = vadd.f32 0.0, %v3486
      %3488 = vmatmul.f32.gmra.mxu0 %v3329
      %v3489 = vpop.f32.mrf.mxu0
      %v3490 = vadd.f32 0.0, %v3489
      %3491 = vmatmul.f32.gmra.mxu0 %v3332
      %v3492 = vpop.f32.mrf.mxu0
      %v3493 = vadd.f32 0.0, %v3492
      %3494 = vmatmul.f32.gmra.mxu0 %v3335
      %v3495 = vpop.f32.mrf.mxu0
      %v3496 = vadd.f32 0.0, %v3495
      %3497 = vmatmul.f32.gmra.mxu0 %v3338
      %v3498 = vpop.f32.mrf.mxu0
      %v3499 = vadd.f32 0.0, %v3498
      %3500 = vmatmul.f32.gmra.mxu0 %v3341
      %v3501 = vpop.f32.mrf.mxu0
      %v3502 = vadd.f32 0.0, %v3501
      %3503 = vmatmul.f32.gmra.mxu0 %v3344
      %v3504 = vpop.f32.mrf.mxu0
      %v3505 = vadd.f32 0.0, %v3504
      %3506 = vmatmul.f32.gmra.mxu0 %v3347
      %v3507 = vpop.f32.mrf.mxu0
      %v3508 = vadd.f32 0.0, %v3507
      %3509 = vmatmul.f32.gmra.mxu0 %v3350
      %v3510 = vpop.f32.mrf.mxu0
      %v3511 = vadd.f32 0.0, %v3510
      %3512 = vmatmul.f32.gmra.mxu0 %v3353
      %v3513 = vpop.f32.mrf.mxu0
      %v3514 = vadd.f32 0.0, %v3513
      %3515 = vmatmul.f32.gmra.mxu0 %v3356
      %v3516 = vpop.f32.mrf.mxu0
      %v3517 = vadd.f32 0.0, %v3516
      %3518 = vdwg.mxu0
      %v3520 = vsel %vm3044, %v3110, 0
      %v3523 = vsel %vm3044, %v3111, 0
      %v3526 = vsel %vm3044, %v3112, 0
      %v3529 = vsel %vm3044, %v3113, 0
      %v3532 = vsel %vm3044, %v3114, 0
      %v3535 = vsel %vm3044, %v3115, 0
      %v3538 = vsel %vm3044, %v3116, 0
      %v3541 = vsel %vm3044, %v3117, 0
      %v3544 = vsel %vm3044, %v3118, 0
      %v3547 = vsel %vm3044, %v3119, 0
      %v3550 = vsel %vm3044, %v3120, 0
      %v3553 = vsel %vm3044, %v3121, 0
      %v3556 = vsel %vm3044, %v3122, 0
      %v3559 = vsel %vm3044, %v3123, 0
      %v3562 = vsel %vm3044, %v3124, 0
      %v3565 = vsel %vm3044, %v3125, 0
      %v3568 = vsel %vm3044, %v3126, 0
      %v3571 = vsel %vm3044, %v3127, 0
      %v3574 = vsel %vm3044, %v3128, 0
      %v3577 = vsel %vm3044, %v3129, 0
      %v3580 = vsel %vm3044, %v3130, 0
      %v3583 = vsel %vm3044, %v3131, 0
      %v3586 = vsel %vm3044, %v3132, 0
      %v3589 = vsel %vm3044, %v3133, 0
      %v3592 = vsel %vm3044, %v3134, 0
      %v3595 = vsel %vm3044, %v3135, 0
      %v3598 = vsel %vm3044, %v3136, 0
      %v3601 = vsel %vm3044, %v3137, 0
      %v3604 = vsel %vm3044, %v3138, 0
      %v3607 = vsel %vm3044, %v3139, 0
      %v3610 = vsel %vm3044, %v3140, 0
      %v3613 = vsel %vm3044, %v3141, 0
      %v3616 = vsel %vm3044, %v3142, 0
      %v3619 = vsel %vm3044, %v3143, 0
      %v3622 = vsel %vm3044, %v3144, 0
      %v3625 = vsel %vm3044, %v3145, 0
      %v3628 = vsel %vm3044, %v3146, 0
      %v3631 = vsel %vm3044, %v3147, 0
      %v3634 = vsel %vm3044, %v3148, 0
      %v3637 = vsel %vm3044, %v3149, 0
      %v3640 = vsel %vm3044, %v3150, 0
      %v3643 = vsel %vm3044, %v3151, 0
      %v3646 = vsel %vm3044, %v3152, 0
      %v3649 = vsel %vm3044, %v3153, 0
      %v3652 = vsel %vm3044, %v3154, 0
      %v3655 = vsel %vm3044, %v3155, 0
      %v3658 = vsel %vm3044, %v3156, 0
      %v3661 = vsel %vm3044, %v3157, 0
      %3663 = vmatpush.msra.mxu0 0.0
      %3664 = vmatpush.msra.mxu0 0.0
      %3665 = vmatpush.msra.mxu0 0.0
      %3666 = vmatpush.msra.mxu0 0.0
      %3667 = vmatpush.msra.mxu0 0.0
      %3668 = vmatpush.msra.mxu0 0.0
      %3669 = vmatpush.msra.mxu0 0.0
      %3670 = vmatpush.msra.mxu0 0.0
      %3671 = vmatpush.msra.mxu0 0.0
      %3672 = vmatpush.msra.mxu0 0.0
      %3673 = vmatpush.msra.mxu0 0.0
      %3674 = vmatpush.msra.mxu0 0.0
      %3675 = vmatpush.msra.mxu0 0.0
      %3676 = vmatpush.msra.mxu0 0.0
      %3677 = vmatpush.msra.mxu0 0.0
      %3678 = vmatpush.msra.mxu0 %v3158
      %3679 = vmatmul.f32.gmra.mxu0 %v3520
      %v3680 = vpop.f32.mrf.mxu0
      %v3681 = vadd.f32 %v3376, %v3680
      %3682 = vmatmul.f32.gmra.mxu0 %v3523
      %v3683 = vpop.f32.mrf.mxu0
      %v3684 = vadd.f32 %v3379, %v3683
      %3685 = vmatmul.f32.gmra.mxu0 %v3526
      %v3686 = vpop.f32.mrf.mxu0
      %v3687 = vadd.f32 %v3382, %v3686
      %3688 = vmatmul.f32.gmra.mxu0 %v3529
      %v3689 = vpop.f32.mrf.mxu0
      %v3690 = vadd.f32 %v3385, %v3689
      %3691 = vmatmul.f32.gmra.mxu0 %v3532
      %v3692 = vpop.f32.mrf.mxu0
      %v3693 = vadd.f32 %v3388, %v3692
      %3694 = vmatmul.f32.gmra.mxu0 %v3535
      %v3695 = vpop.f32.mrf.mxu0
      %v3696 = vadd.f32 %v3391, %v3695
      %3697 = vmatmul.f32.gmra.mxu0 %v3538
      %v3698 = vpop.f32.mrf.mxu0
      %v3699 = vadd.f32 %v3394, %v3698
      %3700 = vmatmul.f32.gmra.mxu0 %v3541
      %v3701 = vpop.f32.mrf.mxu0
      %v3702 = vadd.f32 %v3397, %v3701
      %3703 = vmatmul.f32.gmra.mxu0 %v3544
      %v3704 = vpop.f32.mrf.mxu0
      %v3705 = vadd.f32 %v3400, %v3704
      %3706 = vmatmul.f32.gmra.mxu0 %v3547
      %v3707 = vpop.f32.mrf.mxu0
      %v3708 = vadd.f32 %v3403, %v3707
      %3709 = vmatmul.f32.gmra.mxu0 %v3550
      %v3710 = vpop.f32.mrf.mxu0
      %v3711 = vadd.f32 %v3406, %v3710
      %3712 = vmatmul.f32.gmra.mxu0 %v3553
      %v3713 = vpop.f32.mrf.mxu0
      %v3714 = vadd.f32 %v3409, %v3713
      %3715 = vmatmul.f32.gmra.mxu0 %v3556
      %v3716 = vpop.f32.mrf.mxu0
      %v3717 = vadd.f32 %v3412, %v3716
      %3718 = vmatmul.f32.gmra.mxu0 %v3559
      %v3719 = vpop.f32.mrf.mxu0
      %v3720 = vadd.f32 %v3415, %v3719
      %3721 = vmatmul.f32.gmra.mxu0 %v3562
      %v3722 = vpop.f32.mrf.mxu0
      %v3723 = vadd.f32 %v3418, %v3722
      %3724 = vmatmul.f32.gmra.mxu0 %v3565
      %v3725 = vpop.f32.mrf.mxu0
      %v3726 = vadd.f32 %v3421, %v3725
      %3727 = vmatmul.f32.gmra.mxu0 %v3568
      %v3728 = vpop.f32.mrf.mxu0
      %v3729 = vadd.f32 %v3424, %v3728
      %3730 = vmatmul.f32.gmra.mxu0 %v3571
      %v3731 = vpop.f32.mrf.mxu0
      %v3732 = vadd.f32 %v3427, %v3731
      %3733 = vmatmul.f32.gmra.mxu0 %v3574
      %v3734 = vpop.f32.mrf.mxu0
      %v3735 = vadd.f32 %v3430, %v3734
      %3736 = vmatmul.f32.gmra.mxu0 %v3577
      %v3737 = vpop.f32.mrf.mxu0
      %v3738 = vadd.f32 %v3433, %v3737
      %3739 = vmatmul.f32.gmra.mxu0 %v3580
      %v3740 = vpop.f32.mrf.mxu0
      %v3741 = vadd.f32 %v3436, %v3740
      %3742 = vmatmul.f32.gmra.mxu0 %v3583
      %v3743 = vpop.f32.mrf.mxu0
      %v3744 = vadd.f32 %v3439, %v3743
      %3745 = vmatmul.f32.gmra.mxu0 %v3586
      %v3746 = vpop.f32.mrf.mxu0
      %v3747 = vadd.f32 %v3442, %v3746
      %3748 = vmatmul.f32.gmra.mxu0 %v3589
      %v3749 = vpop.f32.mrf.mxu0
      %v3750 = vadd.f32 %v3445, %v3749
      %3751 = vmatmul.f32.gmra.mxu0 %v3592
      %v3752 = vpop.f32.mrf.mxu0
      %v3753 = vadd.f32 %v3448, %v3752
      %3754 = vmatmul.f32.gmra.mxu0 %v3595
      %v3755 = vpop.f32.mrf.mxu0
      %v3756 = vadd.f32 %v3451, %v3755
      %3757 = vmatmul.f32.gmra.mxu0 %v3598
      %v3758 = vpop.f32.mrf.mxu0
      %v3759 = vadd.f32 %v3454, %v3758
      %3760 = vmatmul.f32.gmra.mxu0 %v3601
      %v3761 = vpop.f32.mrf.mxu0
      %v3762 = vadd.f32 %v3457, %v3761
      %3763 = vmatmul.f32.gmra.mxu0 %v3604
      %v3764 = vpop.f32.mrf.mxu0
      %v3765 = vadd.f32 %v3460, %v3764
      %3766 = vmatmul.f32.gmra.mxu0 %v3607
      %v3767 = vpop.f32.mrf.mxu0
      %v3768 = vadd.f32 %v3463, %v3767
      %3769 = vmatmul.f32.gmra.mxu0 %v3610
      %v3770 = vpop.f32.mrf.mxu0
      %v3771 = vadd.f32 %v3466, %v3770
      %3772 = vmatmul.f32.gmra.mxu0 %v3613
      %v3773 = vpop.f32.mrf.mxu0
      %v3774 = vadd.f32 %v3469, %v3773
      %3775 = vmatmul.f32.gmra.mxu0 %v3616
      %v3776 = vpop.f32.mrf.mxu0
      %v3777 = vadd.f32 %v3472, %v3776
      %3778 = vmatmul.f32.gmra.mxu0 %v3619
      %v3779 = vpop.f32.mrf.mxu0
      %v3780 = vadd.f32 %v3475, %v3779
      %3781 = vmatmul.f32.gmra.mxu0 %v3622
      %v3782 = vpop.f32.mrf.mxu0
      %v3783 = vadd.f32 %v3478, %v3782
      %3784 = vmatmul.f32.gmra.mxu0 %v3625
      %v3785 = vpop.f32.mrf.mxu0
      %v3786 = vadd.f32 %v3481, %v3785
      %3787 = vmatmul.f32.gmra.mxu0 %v3628
      %v3788 = vpop.f32.mrf.mxu0
      %v3789 = vadd.f32 %v3484, %v3788
      %3790 = vmatmul.f32.gmra.mxu0 %v3631
      %v3791 = vpop.f32.mrf.mxu0
      %v3792 = vadd.f32 %v3487, %v3791
      %3793 = vmatmul.f32.gmra.mxu0 %v3634
      %v3794 = vpop.f32.mrf.mxu0
      %v3795 = vadd.f32 %v3490, %v3794
      %3796 = vmatmul.f32.gmra.mxu0 %v3637
      %v3797 = vpop.f32.mrf.mxu0
      %v3798 = vadd.f32 %v3493, %v3797
      %3799 = vmatmul.f32.gmra.mxu0 %v3640
      %v3800 = vpop.f32.mrf.mxu0
      %v3801 = vadd.f32 %v3496, %v3800
      %3802 = vmatmul.f32.gmra.mxu0 %v3643
      %v3803 = vpop.f32.mrf.mxu0
      %v3804 = vadd.f32 %v3499, %v3803
      %3805 = vmatmul.f32.gmra.mxu0 %v3646
      %v3806 = vpop.f32.mrf.mxu0
      %v3807 = vadd.f32 %v3502, %v3806
      %3808 = vmatmul.f32.gmra.mxu0 %v3649
      %v3809 = vpop.f32.mrf.mxu0
      %v3810 = vadd.f32 %v3505, %v3809
      %3811 = vmatmul.f32.gmra.mxu0 %v3652
      %v3812 = vpop.f32.mrf.mxu0
      %v3813 = vadd.f32 %v3508, %v3812
      %3814 = vmatmul.f32.gmra.mxu0 %v3655
      %v3815 = vpop.f32.mrf.mxu0
      %v3816 = vadd.f32 %v3511, %v3815
      %3817 = vmatmul.f32.gmra.mxu0 %v3658
      %v3818 = vpop.f32.mrf.mxu0
      %v3819 = vadd.f32 %v3514, %v3818
      %3820 = vmatmul.f32.gmra.mxu0 %v3661
      %v3821 = vpop.f32.mrf.mxu0
      %v3822 = vadd.f32 %v3517, %v3821
      %3823 = vdwg.mxu0
      %s3824 = scalar_lea.vmem %s3, 32
      %v3825 = vld [vmem:[%s3824] sm:$0xff]
      %3826 = vmatpush.msra.mxu0 0.0
      %3827 = vmatpush.msra.mxu0 0.0
      %3828 = vmatpush.msra.mxu0 0.0
      %3829 = vmatpush.msra.mxu0 0.0
      %3830 = vmatpush.msra.mxu0 0.0
      %3831 = vmatpush.msra.mxu0 0.0
      %3832 = vmatpush.msra.mxu0 0.0
      %3833 = vmatpush.msra.mxu0 0.0
      %3834 = vmatpush.msra.mxu0 0.0
      %3835 = vmatpush.msra.mxu0 0.0
      %3836 = vmatpush.msra.mxu0 0.0
      %3837 = vmatpush.msra.mxu0 0.0
      %3838 = vmatpush.msra.mxu0 0.0
      %3839 = vmatpush.msra.mxu0 0.0
      %3840 = vmatpush.msra.mxu0 0.0
      %3841 = vmatpush.msra.mxu0 %v3825
      %3842 = vmatmul.f32.gmra.mxu0 %v3215
      %v3843 = vpop.f32.mrf.mxu0
      %v3844 = vadd.f32 0.0, %v3843
      %3845 = vmatmul.f32.gmra.mxu0 %v3218
      %v3846 = vpop.f32.mrf.mxu0
      %v3847 = vadd.f32 0.0, %v3846
      %3848 = vmatmul.f32.gmra.mxu0 %v3221
      %v3849 = vpop.f32.mrf.mxu0
      %3850 = vmatmul.f32.gmra.mxu0 %v3224
      %v3851 = vpop.f32.mrf.mxu0
      %v3852 = vadd.f32 0.0, %v3851
      %3853 = vmatmul.f32.gmra.mxu0 %v3227
      %v3854 = vpop.f32.mrf.mxu0
      %v3855 = vadd.f32 0.0, %v3854
      %3856 = vmatmul.f32.gmra.mxu0 %v3230
      %v3857 = vpop.f32.mrf.mxu0
      %3858 = vmatmul.f32.gmra.mxu0 %v3233
      %v3859 = vpop.f32.mrf.mxu0
      %v3860 = vadd.f32 0.0, %v3859
      %3861 = vmatmul.f32.gmra.mxu0 %v3236
      %v3862 = vpop.f32.mrf.mxu0
      %v3863 = vadd.f32 0.0, %v3862
      %3864 = vmatmul.f32.gmra.mxu0 %v3239
      %v3865 = vpop.f32.mrf.mxu0
      %3866 = vmatmul.f32.gmra.mxu0 %v3242
      %v3867 = vpop.f32.mrf.mxu0
      %v3868 = vadd.f32 0.0, %v3867
      %3869 = vmatmul.f32.gmra.mxu0 %v3245
      %v3870 = vpop.f32.mrf.mxu0
      %v3871 = vadd.f32 0.0, %v3870
      %3872 = vmatmul.f32.gmra.mxu0 %v3248
      %v3873 = vpop.f32.mrf.mxu0
      %3874 = vmatmul.f32.gmra.mxu0 %v3251
      %v3875 = vpop.f32.mrf.mxu0
      %v3876 = vadd.f32 0.0, %v3875
      %3877 = vmatmul.f32.gmra.mxu0 %v3254
      %v3878 = vpop.f32.mrf.mxu0
      %v3879 = vadd.f32 0.0, %v3878
      %3880 = vmatmul.f32.gmra.mxu0 %v3257
      %v3881 = vpop.f32.mrf.mxu0
      %3882 = vmatmul.f32.gmra.mxu0 %v3260
      %v3883 = vpop.f32.mrf.mxu0
      %v3884 = vadd.f32 0.0, %v3883
      %3885 = vmatmul.f32.gmra.mxu0 %v3263
      %v3886 = vpop.f32.mrf.mxu0
      %v3887 = vadd.f32 0.0, %v3886
      %3888 = vmatmul.f32.gmra.mxu0 %v3266
      %v3889 = vpop.f32.mrf.mxu0
      %3890 = vmatmul.f32.gmra.mxu0 %v3269
      %v3891 = vpop.f32.mrf.mxu0
      %v3892 = vadd.f32 0.0, %v3891
      %3893 = vmatmul.f32.gmra.mxu0 %v3272
      %v3894 = vpop.f32.mrf.mxu0
      %v3895 = vadd.f32 0.0, %v3894
      %3896 = vmatmul.f32.gmra.mxu0 %v3275
      %v3897 = vpop.f32.mrf.mxu0
      %3898 = vmatmul.f32.gmra.mxu0 %v3278
      %v3899 = vpop.f32.mrf.mxu0
      %v3900 = vadd.f32 0.0, %v3899
      %3901 = vmatmul.f32.gmra.mxu0 %v3281
      %v3902 = vpop.f32.mrf.mxu0
      %v3903 = vadd.f32 0.0, %v3902
      %3904 = vmatmul.f32.gmra.mxu0 %v3284
      %v3905 = vpop.f32.mrf.mxu0
      %3906 = vmatmul.f32.gmra.mxu0 %v3287
      %v3907 = vpop.f32.mrf.mxu0
      %v3908 = vadd.f32 0.0, %v3907
      %3909 = vmatmul.f32.gmra.mxu0 %v3290
      %v3910 = vpop.f32.mrf.mxu0
      %v3911 = vadd.f32 0.0, %v3910
      %3912 = vmatmul.f32.gmra.mxu0 %v3293
      %v3913 = vpop.f32.mrf.mxu0
      %3914 = vmatmul.f32.gmra.mxu0 %v3296
      %v3915 = vpop.f32.mrf.mxu0
      %v3916 = vadd.f32 0.0, %v3915
      %3917 = vmatmul.f32.gmra.mxu0 %v3299
      %v3918 = vpop.f32.mrf.mxu0
      %v3919 = vadd.f32 0.0, %v3918
      %3920 = vmatmul.f32.gmra.mxu0 %v3302
      %v3921 = vpop.f32.mrf.mxu0
      %3922 = vmatmul.f32.gmra.mxu0 %v3305
      %v3923 = vpop.f32.mrf.mxu0
      %v3924 = vadd.f32 0.0, %v3923
      %3925 = vmatmul.f32.gmra.mxu0 %v3308
      %v3926 = vpop.f32.mrf.mxu0
      %v3927 = vadd.f32 0.0, %v3926
      %3928 = vmatmul.f32.gmra.mxu0 %v3311
      %v3929 = vpop.f32.mrf.mxu0
      %3930 = vmatmul.f32.gmra.mxu0 %v3314
      %v3931 = vpop.f32.mrf.mxu0
      %v3932 = vadd.f32 0.0, %v3931
      %3933 = vmatmul.f32.gmra.mxu0 %v3317
      %v3934 = vpop.f32.mrf.mxu0
      %v3935 = vadd.f32 0.0, %v3934
      %3936 = vmatmul.f32.gmra.mxu0 %v3320
      %v3937 = vpop.f32.mrf.mxu0
      %3938 = vmatmul.f32.gmra.mxu0 %v3323
      %v3939 = vpop.f32.mrf.mxu0
      %v3940 = vadd.f32 0.0, %v3939
      %3941 = vmatmul.f32.gmra.mxu0 %v3326
      %v3942 = vpop.f32.mrf.mxu0
      %v3943 = vadd.f32 0.0, %v3942
      %3944 = vmatmul.f32.gmra.mxu0 %v3329
      %v3945 = vpop.f32.mrf.mxu0
      %3946 = vmatmul.f32.gmra.mxu0 %v3332
      %v3947 = vpop.f32.mrf.mxu0
      %v3948 = vadd.f32 0.0, %v3947
      %3949 = vmatmul.f32.gmra.mxu0 %v3335
      %v3950 = vpop.f32.mrf.mxu0
      %v3951 = vadd.f32 0.0, %v3950
      %3952 = vmatmul.f32.gmra.mxu0 %v3338
      %v3953 = vpop.f32.mrf.mxu0
      %3954 = vmatmul.f32.gmra.mxu0 %v3341
      %v3955 = vpop.f32.mrf.mxu0
      %v3956 = vadd.f32 0.0, %v3955
      %3957 = vmatmul.f32.gmra.mxu0 %v3344
      %v3958 = vpop.f32.mrf.mxu0
      %v3959 = vadd.f32 0.0, %v3958
      %3960 = vmatmul.f32.gmra.mxu0 %v3347
      %v3961 = vpop.f32.mrf.mxu0
      %3962 = vmatmul.f32.gmra.mxu0 %v3350
      %v3963 = vpop.f32.mrf.mxu0
      %v3964 = vadd.f32 0.0, %v3963
      %3965 = vmatmul.f32.gmra.mxu0 %v3353
      %v3966 = vpop.f32.mrf.mxu0
      %v3967 = vadd.f32 0.0, %v3966
      %3968 = vmatmul.f32.gmra.mxu0 %v3356
      %v3969 = vpop.f32.mrf.mxu0
      %3970 = vdwg.mxu0
      %3971 = vmatpush.msra.mxu0 0.0
      %3972 = vmatpush.msra.mxu0 0.0
      %3973 = vmatpush.msra.mxu0 0.0
      %3974 = vmatpush.msra.mxu0 0.0
      %3975 = vmatpush.msra.mxu0 0.0
      %3976 = vmatpush.msra.mxu0 0.0
      %3977 = vmatpush.msra.mxu0 0.0
      %3978 = vmatpush.msra.mxu0 0.0
      %3979 = vmatpush.msra.mxu0 0.0
      %3980 = vmatpush.msra.mxu0 0.0
      %3981 = vmatpush.msra.mxu0 0.0
      %3982 = vmatpush.msra.mxu0 0.0
      %3983 = vmatpush.msra.mxu0 0.0
      %3984 = vmatpush.msra.mxu0 0.0
      %3985 = vmatpush.msra.mxu0 0.0
      %3986 = vmatpush.msra.mxu0 %v3160
      %3987 = vmatmul.f32.gmra.mxu0 %v3520
      %v3988 = vpop.f32.mrf.mxu0
      %v3989 = vadd.f32 %v3844, %v3988
      %3990 = vmatmul.f32.gmra.mxu0 %v3523
      %v3991 = vpop.f32.mrf.mxu0
      %v3992 = vadd.f32 %v3847, %v3991
      %3993 = vmatmul.f32.gmra.mxu0 %v3526
      %v3994 = vpop.f32.mrf.mxu0
      %3995 = vmatmul.f32.gmra.mxu0 %v3529
      %v3996 = vpop.f32.mrf.mxu0
      %v3997 = vadd.f32 %v3852, %v3996
      %3998 = vmatmul.f32.gmra.mxu0 %v3532
      %v3999 = vpop.f32.mrf.mxu0
      %v4000 = vadd.f32 %v3855, %v3999
      %4001 = vmatmul.f32.gmra.mxu0 %v3535
      %v4002 = vpop.f32.mrf.mxu0
      %4003 = vmatmul.f32.gmra.mxu0 %v3538
      %v4004 = vpop.f32.mrf.mxu0
      %v4005 = vadd.f32 %v3860, %v4004
      %4006 = vmatmul.f32.gmra.mxu0 %v3541
      %v4007 = vpop.f32.mrf.mxu0
      %v4008 = vadd.f32 %v3863, %v4007
      %4009 = vmatmul.f32.gmra.mxu0 %v3544
      %v4010 = vpop.f32.mrf.mxu0
      %4011 = vmatmul.f32.gmra.mxu0 %v3547
      %v4012 = vpop.f32.mrf.mxu0
      %v4013 = vadd.f32 %v3868, %v4012
      %4014 = vmatmul.f32.gmra.mxu0 %v3550
      %v4015 = vpop.f32.mrf.mxu0
      %v4016 = vadd.f32 %v3871, %v4015
      %4017 = vmatmul.f32.gmra.mxu0 %v3553
      %v4018 = vpop.f32.mrf.mxu0
      %4019 = vmatmul.f32.gmra.mxu0 %v3556
      %v4020 = vpop.f32.mrf.mxu0
      %v4021 = vadd.f32 %v3876, %v4020
      %4022 = vmatmul.f32.gmra.mxu0 %v3559
      %v4023 = vpop.f32.mrf.mxu0
      %v4024 = vadd.f32 %v3879, %v4023
      %4025 = vmatmul.f32.gmra.mxu0 %v3562
      %v4026 = vpop.f32.mrf.mxu0
      %4027 = vmatmul.f32.gmra.mxu0 %v3565
      %v4028 = vpop.f32.mrf.mxu0
      %v4029 = vadd.f32 %v3884, %v4028
      %4030 = vmatmul.f32.gmra.mxu0 %v3568
      %v4031 = vpop.f32.mrf.mxu0
      %v4032 = vadd.f32 %v3887, %v4031
      %4033 = vmatmul.f32.gmra.mxu0 %v3571
      %v4034 = vpop.f32.mrf.mxu0
      %4035 = vmatmul.f32.gmra.mxu0 %v3574
      %v4036 = vpop.f32.mrf.mxu0
      %v4037 = vadd.f32 %v3892, %v4036
      %4038 = vmatmul.f32.gmra.mxu0 %v3577
      %v4039 = vpop.f32.mrf.mxu0
      %v4040 = vadd.f32 %v3895, %v4039
      %4041 = vmatmul.f32.gmra.mxu0 %v3580
      %v4042 = vpop.f32.mrf.mxu0
      %4043 = vmatmul.f32.gmra.mxu0 %v3583
      %v4044 = vpop.f32.mrf.mxu0
      %v4045 = vadd.f32 %v3900, %v4044
      %4046 = vmatmul.f32.gmra.mxu0 %v3586
      %v4047 = vpop.f32.mrf.mxu0
      %v4048 = vadd.f32 %v3903, %v4047
      %4049 = vmatmul.f32.gmra.mxu0 %v3589
      %v4050 = vpop.f32.mrf.mxu0
      %4051 = vmatmul.f32.gmra.mxu0 %v3592
      %v4052 = vpop.f32.mrf.mxu0
      %v4053 = vadd.f32 %v3908, %v4052
      %4054 = vmatmul.f32.gmra.mxu0 %v3595
      %v4055 = vpop.f32.mrf.mxu0
      %v4056 = vadd.f32 %v3911, %v4055
      %4057 = vmatmul.f32.gmra.mxu0 %v3598
      %v4058 = vpop.f32.mrf.mxu0
      %4059 = vmatmul.f32.gmra.mxu0 %v3601
      %v4060 = vpop.f32.mrf.mxu0
      %v4061 = vadd.f32 %v3916, %v4060
      %4062 = vmatmul.f32.gmra.mxu0 %v3604
      %v4063 = vpop.f32.mrf.mxu0
      %v4064 = vadd.f32 %v3919, %v4063
      %4065 = vmatmul.f32.gmra.mxu0 %v3607
      %v4066 = vpop.f32.mrf.mxu0
      %4067 = vmatmul.f32.gmra.mxu0 %v3610
      %v4068 = vpop.f32.mrf.mxu0
      %v4069 = vadd.f32 %v3924, %v4068
      %4070 = vmatmul.f32.gmra.mxu0 %v3613
      %v4071 = vpop.f32.mrf.mxu0
      %v4072 = vadd.f32 %v3927, %v4071
      %4073 = vmatmul.f32.gmra.mxu0 %v3616
      %v4074 = vpop.f32.mrf.mxu0
      %4075 = vmatmul.f32.gmra.mxu0 %v3619
      %v4076 = vpop.f32.mrf.mxu0
      %v4077 = vadd.f32 %v3932, %v4076
      %4078 = vmatmul.f32.gmra.mxu0 %v3622
      %v4079 = vpop.f32.mrf.mxu0
      %v4080 = vadd.f32 %v3935, %v4079
      %4081 = vmatmul.f32.gmra.mxu0 %v3625
      %v4082 = vpop.f32.mrf.mxu0
      %4083 = vmatmul.f32.gmra.mxu0 %v3628
      %v4084 = vpop.f32.mrf.mxu0
      %v4085 = vadd.f32 %v3940, %v4084
      %4086 = vmatmul.f32.gmra.mxu0 %v3631
      %v4087 = vpop.f32.mrf.mxu0
      %v4088 = vadd.f32 %v3943, %v4087
      %4089 = vmatmul.f32.gmra.mxu0 %v3634
      %v4090 = vpop.f32.mrf.mxu0
      %4091 = vmatmul.f32.gmra.mxu0 %v3637
      %v4092 = vpop.f32.mrf.mxu0
      %v4093 = vadd.f32 %v3948, %v4092
      %4094 = vmatmul.f32.gmra.mxu0 %v3640
      %v4095 = vpop.f32.mrf.mxu0
      %v4096 = vadd.f32 %v3951, %v4095
      %4097 = vmatmul.f32.gmra.mxu0 %v3643
      %v4098 = vpop.f32.mrf.mxu0
      %4099 = vmatmul.f32.gmra.mxu0 %v3646
      %v4100 = vpop.f32.mrf.mxu0
      %v4101 = vadd.f32 %v3956, %v4100
      %4102 = vmatmul.f32.gmra.mxu0 %v3649
      %v4103 = vpop.f32.mrf.mxu0
      %v4104 = vadd.f32 %v3959, %v4103
      %4105 = vmatmul.f32.gmra.mxu0 %v3652
      %v4106 = vpop.f32.mrf.mxu0
      %4107 = vmatmul.f32.gmra.mxu0 %v3655
      %v4108 = vpop.f32.mrf.mxu0
      %v4109 = vadd.f32 %v3964, %v4108
      %4110 = vmatmul.f32.gmra.mxu0 %v3658
      %v4111 = vpop.f32.mrf.mxu0
      %v4112 = vadd.f32 %v3967, %v4111
      %4113 = vmatmul.f32.gmra.mxu0 %v3661
      %v4114 = vpop.f32.mrf.mxu0
      %4115 = vdwg.mxu0
      %s4116 = scalar_lea.vmem %s3, 40
      %v4117 = vld [vmem:[%s4116] sm:$0xff]
      %4118 = vmatpush.msra.mxu0 0.0
      %4119 = vmatpush.msra.mxu0 0.0
      %4120 = vmatpush.msra.mxu0 0.0
      %4121 = vmatpush.msra.mxu0 0.0
      %4122 = vmatpush.msra.mxu0 0.0
      %4123 = vmatpush.msra.mxu0 0.0
      %4124 = vmatpush.msra.mxu0 0.0
      %4125 = vmatpush.msra.mxu0 0.0
      %4126 = vmatpush.msra.mxu0 0.0
      %4127 = vmatpush.msra.mxu0 0.0
      %4128 = vmatpush.msra.mxu0 0.0
      %4129 = vmatpush.msra.mxu0 0.0
      %4130 = vmatpush.msra.mxu0 0.0
      %4131 = vmatpush.msra.mxu0 0.0
      %4132 = vmatpush.msra.mxu0 0.0
      %4133 = vmatpush.msra.mxu0 %v4117
      %4134 = vmatmul.f32.gmra.mxu0 %v3215
      %v4135 = vpop.f32.mrf.mxu0
      %v4136 = vadd.f32 0.0, %v4135
      %4137 = vmatmul.f32.gmra.mxu0 %v3218
      %v4138 = vpop.f32.mrf.mxu0
      %v4139 = vadd.f32 0.0, %v4138
      %4140 = vmatmul.f32.gmra.mxu0 %v3221
      %v4141 = vpop.f32.mrf.mxu0
      %v4142 = vadd.f32 0.0, %v4141
      %4143 = vmatmul.f32.gmra.mxu0 %v3224
      %v4144 = vpop.f32.mrf.mxu0
      %v4145 = vadd.f32 0.0, %v4144
      %4146 = vmatmul.f32.gmra.mxu0 %v3227
      %v4147 = vpop.f32.mrf.mxu0
      %v4148 = vadd.f32 0.0, %v4147
      %4149 = vmatmul.f32.gmra.mxu0 %v3230
      %v4150 = vpop.f32.mrf.mxu0
      %v4151 = vadd.f32 0.0, %v4150
      %4152 = vmatmul.f32.gmra.mxu0 %v3233
      %v4153 = vpop.f32.mrf.mxu0
      %v4154 = vadd.f32 0.0, %v4153
      %4155 = vmatmul.f32.gmra.mxu0 %v3236
      %v4156 = vpop.f32.mrf.mxu0
      %v4157 = vadd.f32 0.0, %v4156
      %4158 = vmatmul.f32.gmra.mxu0 %v3239
      %v4159 = vpop.f32.mrf.mxu0
      %v4160 = vadd.f32 0.0, %v4159
      %4161 = vmatmul.f32.gmra.mxu0 %v3242
      %v4162 = vpop.f32.mrf.mxu0
      %v4163 = vadd.f32 0.0, %v4162
      %4164 = vmatmul.f32.gmra.mxu0 %v3245
      %v4165 = vpop.f32.mrf.mxu0
      %v4166 = vadd.f32 0.0, %v4165
      %4167 = vmatmul.f32.gmra.mxu0 %v3248
      %v4168 = vpop.f32.mrf.mxu0
      %v4169 = vadd.f32 0.0, %v4168
      %4170 = vmatmul.f32.gmra.mxu0 %v3251
      %v4171 = vpop.f32.mrf.mxu0
      %v4172 = vadd.f32 0.0, %v4171
      %4173 = vmatmul.f32.gmra.mxu0 %v3254
      %v4174 = vpop.f32.mrf.mxu0
      %v4175 = vadd.f32 0.0, %v4174
      %4176 = vmatmul.f32.gmra.mxu0 %v3257
      %v4177 = vpop.f32.mrf.mxu0
      %v4178 = vadd.f32 0.0, %v4177
      %4179 = vmatmul.f32.gmra.mxu0 %v3260
      %v4180 = vpop.f32.mrf.mxu0
      %v4181 = vadd.f32 0.0, %v4180
      %4182 = vmatmul.f32.gmra.mxu0 %v3263
      %v4183 = vpop.f32.mrf.mxu0
      %v4184 = vadd.f32 0.0, %v4183
      %4185 = vmatmul.f32.gmra.mxu0 %v3266
      %v4186 = vpop.f32.mrf.mxu0
      %v4187 = vadd.f32 0.0, %v4186
      %4188 = vmatmul.f32.gmra.mxu0 %v3269
      %v4189 = vpop.f32.mrf.mxu0
      %v4190 = vadd.f32 0.0, %v4189
      %4191 = vmatmul.f32.gmra.mxu0 %v3272
      %v4192 = vpop.f32.mrf.mxu0
      %v4193 = vadd.f32 0.0, %v4192
      %4194 = vmatmul.f32.gmra.mxu0 %v3275
      %v4195 = vpop.f32.mrf.mxu0
      %v4196 = vadd.f32 0.0, %v4195
      %4197 = vmatmul.f32.gmra.mxu0 %v3278
      %v4198 = vpop.f32.mrf.mxu0
      %v4199 = vadd.f32 0.0, %v4198
      %4200 = vmatmul.f32.gmra.mxu0 %v3281
      %v4201 = vpop.f32.mrf.mxu0
      %v4202 = vadd.f32 0.0, %v4201
      %4203 = vmatmul.f32.gmra.mxu0 %v3284
      %v4204 = vpop.f32.mrf.mxu0
      %v4205 = vadd.f32 0.0, %v4204
      %4206 = vmatmul.f32.gmra.mxu0 %v3287
      %v4207 = vpop.f32.mrf.mxu0
      %v4208 = vadd.f32 0.0, %v4207
      %4209 = vmatmul.f32.gmra.mxu0 %v3290
      %v4210 = vpop.f32.mrf.mxu0
      %v4211 = vadd.f32 0.0, %v4210
      %4212 = vmatmul.f32.gmra.mxu0 %v3293
      %v4213 = vpop.f32.mrf.mxu0
      %v4214 = vadd.f32 0.0, %v4213
      %4215 = vmatmul.f32.gmra.mxu0 %v3296
      %v4216 = vpop.f32.mrf.mxu0
      %v4217 = vadd.f32 0.0, %v4216
      %4218 = vmatmul.f32.gmra.mxu0 %v3299
      %v4219 = vpop.f32.mrf.mxu0
      %v4220 = vadd.f32 0.0, %v4219
      %4221 = vmatmul.f32.gmra.mxu0 %v3302
      %v4222 = vpop.f32.mrf.mxu0
      %v4223 = vadd.f32 0.0, %v4222
      %4224 = vmatmul.f32.gmra.mxu0 %v3305
      %v4225 = vpop.f32.mrf.mxu0
      %v4226 = vadd.f32 0.0, %v4225
      %4227 = vmatmul.f32.gmra.mxu0 %v3308
      %v4228 = vpop.f32.mrf.mxu0
      %v4229 = vadd.f32 0.0, %v4228
      %4230 = vmatmul.f32.gmra.mxu0 %v3311
      %v4231 = vpop.f32.mrf.mxu0
      %v4232 = vadd.f32 0.0, %v4231
      %4233 = vmatmul.f32.gmra.mxu0 %v3314
      %v4234 = vpop.f32.mrf.mxu0
      %v4235 = vadd.f32 0.0, %v4234
      %4236 = vmatmul.f32.gmra.mxu0 %v3317
      %v4237 = vpop.f32.mrf.mxu0
      %v4238 = vadd.f32 0.0, %v4237
      %4239 = vmatmul.f32.gmra.mxu0 %v3320
      %v4240 = vpop.f32.mrf.mxu0
      %v4241 = vadd.f32 0.0, %v4240
      %4242 = vmatmul.f32.gmra.mxu0 %v3323
      %v4243 = vpop.f32.mrf.mxu0
      %v4244 = vadd.f32 0.0, %v4243
      %4245 = vmatmul.f32.gmra.mxu0 %v3326
      %v4246 = vpop.f32.mrf.mxu0
      %v4247 = vadd.f32 0.0, %v4246
      %4248 = vmatmul.f32.gmra.mxu0 %v3329
      %v4249 = vpop.f32.mrf.mxu0
      %v4250 = vadd.f32 0.0, %v4249
      %4251 = vmatmul.f32.gmra.mxu0 %v3332
      %v4252 = vpop.f32.mrf.mxu0
      %v4253 = vadd.f32 0.0, %v4252
      %4254 = vmatmul.f32.gmra.mxu0 %v3335
      %v4255 = vpop.f32.mrf.mxu0
      %v4256 = vadd.f32 0.0, %v4255
      %4257 = vmatmul.f32.gmra.mxu0 %v3338
      %v4258 = vpop.f32.mrf.mxu0
      %v4259 = vadd.f32 0.0, %v4258
      %4260 = vmatmul.f32.gmra.mxu0 %v3341
      %v4261 = vpop.f32.mrf.mxu0
      %v4262 = vadd.f32 0.0, %v4261
      %4263 = vmatmul.f32.gmra.mxu0 %v3344
      %v4264 = vpop.f32.mrf.mxu0
      %v4265 = vadd.f32 0.0, %v4264
      %4266 = vmatmul.f32.gmra.mxu0 %v3347
      %v4267 = vpop.f32.mrf.mxu0
      %v4268 = vadd.f32 0.0, %v4267
      %4269 = vmatmul.f32.gmra.mxu0 %v3350
      %v4270 = vpop.f32.mrf.mxu0
      %v4271 = vadd.f32 0.0, %v4270
      %4272 = vmatmul.f32.gmra.mxu0 %v3353
      %v4273 = vpop.f32.mrf.mxu0
      %v4274 = vadd.f32 0.0, %v4273
      %4275 = vmatmul.f32.gmra.mxu0 %v3356
      %v4276 = vpop.f32.mrf.mxu0
      %v4277 = vadd.f32 0.0, %v4276
      %4278 = vdwg.mxu0
      %4279 = vmatpush.msra.mxu0 0.0
      %4280 = vmatpush.msra.mxu0 0.0
      %4281 = vmatpush.msra.mxu0 0.0
      %4282 = vmatpush.msra.mxu0 0.0
      %4283 = vmatpush.msra.mxu0 0.0
      %4284 = vmatpush.msra.mxu0 0.0
      %4285 = vmatpush.msra.mxu0 0.0
      %4286 = vmatpush.msra.mxu0 0.0
      %4287 = vmatpush.msra.mxu0 0.0
      %4288 = vmatpush.msra.mxu0 0.0
      %4289 = vmatpush.msra.mxu0 0.0
      %4290 = vmatpush.msra.mxu0 0.0
      %4291 = vmatpush.msra.mxu0 0.0
      %4292 = vmatpush.msra.mxu0 0.0
      %4293 = vmatpush.msra.mxu0 0.0
      %4294 = vmatpush.msra.mxu0 %v3162
      %4295 = vmatmul.f32.gmra.mxu0 %v3520
      %v4296 = vpop.f32.mrf.mxu0
      %v4297 = vadd.f32 %v4136, %v4296
      %4298 = vmatmul.f32.gmra.mxu0 %v3523
      %v4299 = vpop.f32.mrf.mxu0
      %v4300 = vadd.f32 %v4139, %v4299
      %4301 = vmatmul.f32.gmra.mxu0 %v3526
      %v4302 = vpop.f32.mrf.mxu0
      %v4303 = vadd.f32 %v4142, %v4302
      %4304 = vmatmul.f32.gmra.mxu0 %v3529
      %v4305 = vpop.f32.mrf.mxu0
      %v4306 = vadd.f32 %v4145, %v4305
      %4307 = vmatmul.f32.gmra.mxu0 %v3532
      %v4308 = vpop.f32.mrf.mxu0
      %v4309 = vadd.f32 %v4148, %v4308
      %4310 = vmatmul.f32.gmra.mxu0 %v3535
      %v4311 = vpop.f32.mrf.mxu0
      %v4312 = vadd.f32 %v4151, %v4311
      %4313 = vmatmul.f32.gmra.mxu0 %v3538
      %v4314 = vpop.f32.mrf.mxu0
      %v4315 = vadd.f32 %v4154, %v4314
      %4316 = vmatmul.f32.gmra.mxu0 %v3541
      %v4317 = vpop.f32.mrf.mxu0
      %v4318 = vadd.f32 %v4157, %v4317
      %4319 = vmatmul.f32.gmra.mxu0 %v3544
      %v4320 = vpop.f32.mrf.mxu0
      %v4321 = vadd.f32 %v4160, %v4320
      %4322 = vmatmul.f32.gmra.mxu0 %v3547
      %v4323 = vpop.f32.mrf.mxu0
      %v4324 = vadd.f32 %v4163, %v4323
      %4325 = vmatmul.f32.gmra.mxu0 %v3550
      %v4326 = vpop.f32.mrf.mxu0
      %v4327 = vadd.f32 %v4166, %v4326
      %4328 = vmatmul.f32.gmra.mxu0 %v3553
      %v4329 = vpop.f32.mrf.mxu0
      %v4330 = vadd.f32 %v4169, %v4329
      %4331 = vmatmul.f32.gmra.mxu0 %v3556
      %v4332 = vpop.f32.mrf.mxu0
      %v4333 = vadd.f32 %v4172, %v4332
      %4334 = vmatmul.f32.gmra.mxu0 %v3559
      %v4335 = vpop.f32.mrf.mxu0
      %v4336 = vadd.f32 %v4175, %v4335
      %4337 = vmatmul.f32.gmra.mxu0 %v3562
      %v4338 = vpop.f32.mrf.mxu0
      %v4339 = vadd.f32 %v4178, %v4338
      %4340 = vmatmul.f32.gmra.mxu0 %v3565
      %v4341 = vpop.f32.mrf.mxu0
      %v4342 = vadd.f32 %v4181, %v4341
      %4343 = vmatmul.f32.gmra.mxu0 %v3568
      %v4344 = vpop.f32.mrf.mxu0
      %v4345 = vadd.f32 %v4184, %v4344
      %4346 = vmatmul.f32.gmra.mxu0 %v3571
      %v4347 = vpop.f32.mrf.mxu0
      %v4348 = vadd.f32 %v4187, %v4347
      %4349 = vmatmul.f32.gmra.mxu0 %v3574
      %v4350 = vpop.f32.mrf.mxu0
      %v4351 = vadd.f32 %v4190, %v4350
      %4352 = vmatmul.f32.gmra.mxu0 %v3577
      %v4353 = vpop.f32.mrf.mxu0
      %v4354 = vadd.f32 %v4193, %v4353
      %4355 = vmatmul.f32.gmra.mxu0 %v3580
      %v4356 = vpop.f32.mrf.mxu0
      %v4357 = vadd.f32 %v4196, %v4356
      %4358 = vmatmul.f32.gmra.mxu0 %v3583
      %v4359 = vpop.f32.mrf.mxu0
      %v4360 = vadd.f32 %v4199, %v4359
      %4361 = vmatmul.f32.gmra.mxu0 %v3586
      %v4362 = vpop.f32.mrf.mxu0
      %v4363 = vadd.f32 %v4202, %v4362
      %4364 = vmatmul.f32.gmra.mxu0 %v3589
      %v4365 = vpop.f32.mrf.mxu0
      %v4366 = vadd.f32 %v4205, %v4365
      %4367 = vmatmul.f32.gmra.mxu0 %v3592
      %v4368 = vpop.f32.mrf.mxu0
      %v4369 = vadd.f32 %v4208, %v4368
      %4370 = vmatmul.f32.gmra.mxu0 %v3595
      %v4371 = vpop.f32.mrf.mxu0
      %v4372 = vadd.f32 %v4211, %v4371
      %4373 = vmatmul.f32.gmra.mxu0 %v3598
      %v4374 = vpop.f32.mrf.mxu0
      %v4375 = vadd.f32 %v4214, %v4374
      %4376 = vmatmul.f32.gmra.mxu0 %v3601
      %v4377 = vpop.f32.mrf.mxu0
      %v4378 = vadd.f32 %v4217, %v4377
      %4379 = vmatmul.f32.gmra.mxu0 %v3604
      %v4380 = vpop.f32.mrf.mxu0
      %v4381 = vadd.f32 %v4220, %v4380
      %4382 = vmatmul.f32.gmra.mxu0 %v3607
      %v4383 = vpop.f32.mrf.mxu0
      %v4384 = vadd.f32 %v4223, %v4383
      %4385 = vmatmul.f32.gmra.mxu0 %v3610
      %v4386 = vpop.f32.mrf.mxu0
      %v4387 = vadd.f32 %v4226, %v4386
      %4388 = vmatmul.f32.gmra.mxu0 %v3613
      %v4389 = vpop.f32.mrf.mxu0
      %v4390 = vadd.f32 %v4229, %v4389
      %4391 = vmatmul.f32.gmra.mxu0 %v3616
      %v4392 = vpop.f32.mrf.mxu0
      %v4393 = vadd.f32 %v4232, %v4392
      %4394 = vmatmul.f32.gmra.mxu0 %v3619
      %v4395 = vpop.f32.mrf.mxu0
      %v4396 = vadd.f32 %v4235, %v4395
      %4397 = vmatmul.f32.gmra.mxu0 %v3622
      %v4398 = vpop.f32.mrf.mxu0
      %v4399 = vadd.f32 %v4238, %v4398
      %4400 = vmatmul.f32.gmra.mxu0 %v3625
      %v4401 = vpop.f32.mrf.mxu0
      %v4402 = vadd.f32 %v4241, %v4401
      %4403 = vmatmul.f32.gmra.mxu0 %v3628
      %v4404 = vpop.f32.mrf.mxu0
      %v4405 = vadd.f32 %v4244, %v4404
      %4406 = vmatmul.f32.gmra.mxu0 %v3631
      %v4407 = vpop.f32.mrf.mxu0
      %v4408 = vadd.f32 %v4247, %v4407
      %4409 = vmatmul.f32.gmra.mxu0 %v3634
      %v4410 = vpop.f32.mrf.mxu0
      %v4411 = vadd.f32 %v4250, %v4410
      %4412 = vmatmul.f32.gmra.mxu0 %v3637
      %v4413 = vpop.f32.mrf.mxu0
      %v4414 = vadd.f32 %v4253, %v4413
      %4415 = vmatmul.f32.gmra.mxu0 %v3640
      %v4416 = vpop.f32.mrf.mxu0
      %v4417 = vadd.f32 %v4256, %v4416
      %4418 = vmatmul.f32.gmra.mxu0 %v3643
      %v4419 = vpop.f32.mrf.mxu0
      %v4420 = vadd.f32 %v4259, %v4419
      %4421 = vmatmul.f32.gmra.mxu0 %v3646
      %v4422 = vpop.f32.mrf.mxu0
      %v4423 = vadd.f32 %v4262, %v4422
      %4424 = vmatmul.f32.gmra.mxu0 %v3649
      %v4425 = vpop.f32.mrf.mxu0
      %v4426 = vadd.f32 %v4265, %v4425
      %4427 = vmatmul.f32.gmra.mxu0 %v3652
      %v4428 = vpop.f32.mrf.mxu0
      %v4429 = vadd.f32 %v4268, %v4428
      %4430 = vmatmul.f32.gmra.mxu0 %v3655
      %v4431 = vpop.f32.mrf.mxu0
      %v4432 = vadd.f32 %v4271, %v4431
      %4433 = vmatmul.f32.gmra.mxu0 %v3658
      %v4434 = vpop.f32.mrf.mxu0
      %v4435 = vadd.f32 %v4274, %v4434
      %4436 = vmatmul.f32.gmra.mxu0 %v3661
      %v4437 = vpop.f32.mrf.mxu0
      %v4438 = vadd.f32 %v4277, %v4437
      %4439 = vdwg.mxu0
      %s4440 = scalar_lea.vmem [#allocation2], 48
      %v4441 = vld [vmem:[%s4440] sm:$0xff]
      %v4442 = vld [vmem:[%s4440 + $0x8] sm:$0xff]
      %v4443 = vld [vmem:[%s4440 + $0x10] sm:$0xff]
      %v4444 = vld [vmem:[%s4440 + $0x18] sm:$0xff]
      %v4445 = vld [vmem:[%s4440 + $0x20] sm:$0xff]
      %v4446 = vld [vmem:[%s4440 + $0x28] sm:$0xff]
      %v4447 = vld [vmem:[%s4440 + $0x30] sm:$0xff]
      %v4448 = vld [vmem:[%s4440 + $0x38] sm:$0xff]
      %v4449 = vld [vmem:[%s4440 + $0x40] sm:$0xff]
      %v4450 = vld [vmem:[%s4440 + $0x48] sm:$0xff]
      %v4451 = vld [vmem:[%s4440 + $0x50] sm:$0xff]
      %v4452 = vld [vmem:[%s4440 + $0x58] sm:$0xff]
      %v4453 = vld [vmem:[%s4440 + $0x60] sm:$0xff]
      %v4454 = vld [vmem:[%s4440 + $0x68] sm:$0xff]
      %v4455 = vld [vmem:[%s4440 + $0x70] sm:$0xff]
      %v4456 = vld [vmem:[%s4440 + $0x78] sm:$0xff]
      %v4457 = vld [vmem:[%s4440 + $0x80] sm:$0xff]
      %v4458 = vld [vmem:[%s4440 + $0x88] sm:$0xff]
      %v4459 = vld [vmem:[%s4440 + $0x90] sm:$0xff]
      %v4460 = vld [vmem:[%s4440 + $0x98] sm:$0xff]
      %v4461 = vld [vmem:[%s4440 + $0xa0] sm:$0xff]
      %v4462 = vld [vmem:[%s4440 + $0xa8] sm:$0xff]
      %v4463 = vld [vmem:[%s4440 + $0xb0] sm:$0xff]
      %v4464 = vld [vmem:[%s4440 + $0xb8] sm:$0xff]
      %v4465 = vld [vmem:[%s4440 + $0xc0] sm:$0xff]
      %v4466 = vld [vmem:[%s4440 + $0xc8] sm:$0xff]
      %v4467 = vld [vmem:[%s4440 + $0xd0] sm:$0xff]
      %v4468 = vld [vmem:[%s4440 + $0xd8] sm:$0xff]
      %v4469 = vld [vmem:[%s4440 + $0xe0] sm:$0xff]
      %v4470 = vld [vmem:[%s4440 + $0xe8] sm:$0xff]
      %v4471 = vld [vmem:[%s4440 + $0xf0] sm:$0xff]
      %v4472 = vld [vmem:[%s4440 + $0xf8] sm:$0xff]
      %v4473 = vld [vmem:[%s4440 + $0x100] sm:$0xff]
      %v4474 = vld [vmem:[%s4440 + $0x108] sm:$0xff]
      %v4475 = vld [vmem:[%s4440 + $0x110] sm:$0xff]
      %v4476 = vld [vmem:[%s4440 + $0x118] sm:$0xff]
      %v4477 = vld [vmem:[%s4440 + $0x120] sm:$0xff]
      %v4478 = vld [vmem:[%s4440 + $0x128] sm:$0xff]
      %v4479 = vld [vmem:[%s4440 + $0x130] sm:$0xff]
      %v4480 = vld [vmem:[%s4440 + $0x138] sm:$0xff]
      %v4481 = vld [vmem:[%s4440 + $0x140] sm:$0xff]
      %v4482 = vld [vmem:[%s4440 + $0x148] sm:$0xff]
      %v4483 = vld [vmem:[%s4440 + $0x150] sm:$0xff]
      %v4484 = vld [vmem:[%s4440 + $0x158] sm:$0xff]
      %v4485 = vld [vmem:[%s4440 + $0x160] sm:$0xff]
      %v4486 = vld [vmem:[%s4440 + $0x168] sm:$0xff]
      %v4487 = vld [vmem:[%s4440 + $0x170] sm:$0xff]
      %v4488 = vld [vmem:[%s4440 + $0x178] sm:$0xff]
      %s4489 = scalar_lea.vmem %s3, 48
      %v4490 = vld [vmem:[%s4489] sm:$0xff]
      %v4492 = vsel %vm3044, %v4441, 0
      %v4495 = vsel %vm3044, %v4442, 0
      %v4498 = vsel %vm3044, %v4443, 0
      %v4501 = vsel %vm3044, %v4444, 0
      %v4504 = vsel %vm3044, %v4445, 0
      %v4507 = vsel %vm3044, %v4446, 0
      %v4510 = vsel %vm3044, %v4447, 0
      %v4513 = vsel %vm3044, %v4448, 0
      %v4516 = vsel %vm3044, %v4449, 0
      %v4519 = vsel %vm3044, %v4450, 0
      %v4522 = vsel %vm3044, %v4451, 0
      %v4525 = vsel %vm3044, %v4452, 0
      %v4528 = vsel %vm3044, %v4453, 0
      %v4531 = vsel %vm3044, %v4454, 0
      %v4534 = vsel %vm3044, %v4455, 0
      %v4537 = vsel %vm3044, %v4456, 0
      %v4540 = vsel %vm3044, %v4457, 0
      %v4543 = vsel %vm3044, %v4458, 0
      %v4546 = vsel %vm3044, %v4459, 0
      %v4549 = vsel %vm3044, %v4460, 0
      %v4552 = vsel %vm3044, %v4461, 0
      %v4555 = vsel %vm3044, %v4462, 0
      %v4558 = vsel %vm3044, %v4463, 0
      %v4561 = vsel %vm3044, %v4464, 0
      %v4564 = vsel %vm3044, %v4465, 0
      %v4567 = vsel %vm3044, %v4466, 0
      %v4570 = vsel %vm3044, %v4467, 0
      %v4573 = vsel %vm3044, %v4468, 0
      %v4576 = vsel %vm3044, %v4469, 0
      %v4579 = vsel %vm3044, %v4470, 0
      %v4582 = vsel %vm3044, %v4471, 0
      %v4585 = vsel %vm3044, %v4472, 0
      %v4588 = vsel %vm3044, %v4473, 0
      %v4591 = vsel %vm3044, %v4474, 0
      %v4594 = vsel %vm3044, %v4475, 0
      %v4597 = vsel %vm3044, %v4476, 0
      %v4600 = vsel %vm3044, %v4477, 0
      %v4603 = vsel %vm3044, %v4478, 0
      %v4606 = vsel %vm3044, %v4479, 0
      %v4609 = vsel %vm3044, %v4480, 0
      %v4612 = vsel %vm3044, %v4481, 0
      %v4615 = vsel %vm3044, %v4482, 0
      %v4618 = vsel %vm3044, %v4483, 0
      %v4621 = vsel %vm3044, %v4484, 0
      %v4624 = vsel %vm3044, %v4485, 0
      %v4627 = vsel %vm3044, %v4486, 0
      %v4630 = vsel %vm3044, %v4487, 0
      %v4633 = vsel %vm3044, %v4488, 0
      %4635 = vmatpush.msra.mxu0 0.0
      %4636 = vmatpush.msra.mxu0 0.0
      %4637 = vmatpush.msra.mxu0 0.0
      %4638 = vmatpush.msra.mxu0 0.0
      %4639 = vmatpush.msra.mxu0 0.0
      %4640 = vmatpush.msra.mxu0 0.0
      %4641 = vmatpush.msra.mxu0 0.0
      %4642 = vmatpush.msra.mxu0 0.0
      %4643 = vmatpush.msra.mxu0 0.0
      %4644 = vmatpush.msra.mxu0 0.0
      %4645 = vmatpush.msra.mxu0 0.0
      %4646 = vmatpush.msra.mxu0 0.0
      %4647 = vmatpush.msra.mxu0 0.0
      %4648 = vmatpush.msra.mxu0 0.0
      %4649 = vmatpush.msra.mxu0 0.0
      %4650 = vmatpush.msra.mxu0 %v4490
      %4651 = vmatmul.f32.gmra.mxu0 %v4492
      %v4652 = vpop.f32.mrf.mxu0
      %v4653 = vadd.f32 0.0, %v4652
      %4654 = vmatmul.f32.gmra.mxu0 %v4495
      %v4655 = vpop.f32.mrf.mxu0
      %v4656 = vadd.f32 0.0, %v4655
      %4657 = vmatmul.f32.gmra.mxu0 %v4498
      %v4658 = vpop.f32.mrf.mxu0
      %v4659 = vadd.f32 0.0, %v4658
      %4660 = vmatmul.f32.gmra.mxu0 %v4501
      %v4661 = vpop.f32.mrf.mxu0
      %v4662 = vadd.f32 0.0, %v4661
      %4663 = vmatmul.f32.gmra.mxu0 %v4504
      %v4664 = vpop.f32.mrf.mxu0
      %v4665 = vadd.f32 0.0, %v4664
      %4666 = vmatmul.f32.gmra.mxu0 %v4507
      %v4667 = vpop.f32.mrf.mxu0
      %v4668 = vadd.f32 0.0, %v4667
      %4669 = vmatmul.f32.gmra.mxu0 %v4510
      %v4670 = vpop.f32.mrf.mxu0
      %v4671 = vadd.f32 0.0, %v4670
      %4672 = vmatmul.f32.gmra.mxu0 %v4513
      %v4673 = vpop.f32.mrf.mxu0
      %v4674 = vadd.f32 0.0, %v4673
      %4675 = vmatmul.f32.gmra.mxu0 %v4516
      %v4676 = vpop.f32.mrf.mxu0
      %v4677 = vadd.f32 0.0, %v4676
      %4678 = vmatmul.f32.gmra.mxu0 %v4519
      %v4679 = vpop.f32.mrf.mxu0
      %v4680 = vadd.f32 0.0, %v4679
      %4681 = vmatmul.f32.gmra.mxu0 %v4522
      %v4682 = vpop.f32.mrf.mxu0
      %v4683 = vadd.f32 0.0, %v4682
      %4684 = vmatmul.f32.gmra.mxu0 %v4525
      %v4685 = vpop.f32.mrf.mxu0
      %v4686 = vadd.f32 0.0, %v4685
      %4687 = vmatmul.f32.gmra.mxu0 %v4528
      %v4688 = vpop.f32.mrf.mxu0
      %v4689 = vadd.f32 0.0, %v4688
      %4690 = vmatmul.f32.gmra.mxu0 %v4531
      %v4691 = vpop.f32.mrf.mxu0
      %v4692 = vadd.f32 0.0, %v4691
      %4693 = vmatmul.f32.gmra.mxu0 %v4534
      %v4694 = vpop.f32.mrf.mxu0
      %v4695 = vadd.f32 0.0, %v4694
      %4696 = vmatmul.f32.gmra.mxu0 %v4537
      %v4697 = vpop.f32.mrf.mxu0
      %v4698 = vadd.f32 0.0, %v4697
      %4699 = vmatmul.f32.gmra.mxu0 %v4540
      %v4700 = vpop.f32.mrf.mxu0
      %v4701 = vadd.f32 0.0, %v4700
      %4702 = vmatmul.f32.gmra.mxu0 %v4543
      %v4703 = vpop.f32.mrf.mxu0
      %v4704 = vadd.f32 0.0, %v4703
      %4705 = vmatmul.f32.gmra.mxu0 %v4546
      %v4706 = vpop.f32.mrf.mxu0
      %v4707 = vadd.f32 0.0, %v4706
      %4708 = vmatmul.f32.gmra.mxu0 %v4549
      %v4709 = vpop.f32.mrf.mxu0
      %v4710 = vadd.f32 0.0, %v4709
      %4711 = vmatmul.f32.gmra.mxu0 %v4552
      %v4712 = vpop.f32.mrf.mxu0
      %v4713 = vadd.f32 0.0, %v4712
      %4714 = vmatmul.f32.gmra.mxu0 %v4555
      %v4715 = vpop.f32.mrf.mxu0
      %v4716 = vadd.f32 0.0, %v4715
      %4717 = vmatmul.f32.gmra.mxu0 %v4558
      %v4718 = vpop.f32.mrf.mxu0
      %v4719 = vadd.f32 0.0, %v4718
      %4720 = vmatmul.f32.gmra.mxu0 %v4561
      %v4721 = vpop.f32.mrf.mxu0
      %v4722 = vadd.f32 0.0, %v4721
      %4723 = vmatmul.f32.gmra.mxu0 %v4564
      %v4724 = vpop.f32.mrf.mxu0
      %v4725 = vadd.f32 0.0, %v4724
      %4726 = vmatmul.f32.gmra.mxu0 %v4567
      %v4727 = vpop.f32.mrf.mxu0
      %v4728 = vadd.f32 0.0, %v4727
      %4729 = vmatmul.f32.gmra.mxu0 %v4570
      %v4730 = vpop.f32.mrf.mxu0
      %v4731 = vadd.f32 0.0, %v4730
      %4732 = vmatmul.f32.gmra.mxu0 %v4573
      %v4733 = vpop.f32.mrf.mxu0
      %v4734 = vadd.f32 0.0, %v4733
      %4735 = vmatmul.f32.gmra.mxu0 %v4576
      %v4736 = vpop.f32.mrf.mxu0
      %v4737 = vadd.f32 0.0, %v4736
      %4738 = vmatmul.f32.gmra.mxu0 %v4579
      %v4739 = vpop.f32.mrf.mxu0
      %v4740 = vadd.f32 0.0, %v4739
      %4741 = vmatmul.f32.gmra.mxu0 %v4582
      %v4742 = vpop.f32.mrf.mxu0
      %v4743 = vadd.f32 0.0, %v4742
      %4744 = vmatmul.f32.gmra.mxu0 %v4585
      %v4745 = vpop.f32.mrf.mxu0
      %v4746 = vadd.f32 0.0, %v4745
      %4747 = vmatmul.f32.gmra.mxu0 %v4588
      %v4748 = vpop.f32.mrf.mxu0
      %v4749 = vadd.f32 0.0, %v4748
      %4750 = vmatmul.f32.gmra.mxu0 %v4591
      %v4751 = vpop.f32.mrf.mxu0
      %v4752 = vadd.f32 0.0, %v4751
      %4753 = vmatmul.f32.gmra.mxu0 %v4594
      %v4754 = vpop.f32.mrf.mxu0
      %v4755 = vadd.f32 0.0, %v4754
      %4756 = vmatmul.f32.gmra.mxu0 %v4597
      %v4757 = vpop.f32.mrf.mxu0
      %v4758 = vadd.f32 0.0, %v4757
      %4759 = vmatmul.f32.gmra.mxu0 %v4600
      %v4760 = vpop.f32.mrf.mxu0
      %v4761 = vadd.f32 0.0, %v4760
      %4762 = vmatmul.f32.gmra.mxu0 %v4603
      %v4763 = vpop.f32.mrf.mxu0
      %v4764 = vadd.f32 0.0, %v4763
      %4765 = vmatmul.f32.gmra.mxu0 %v4606
      %v4766 = vpop.f32.mrf.mxu0
      %v4767 = vadd.f32 0.0, %v4766
      %4768 = vmatmul.f32.gmra.mxu0 %v4609
      %v4769 = vpop.f32.mrf.mxu0
      %v4770 = vadd.f32 0.0, %v4769
      %4771 = vmatmul.f32.gmra.mxu0 %v4612
      %v4772 = vpop.f32.mrf.mxu0
      %v4773 = vadd.f32 0.0, %v4772
      %4774 = vmatmul.f32.gmra.mxu0 %v4615
      %v4775 = vpop.f32.mrf.mxu0
      %v4776 = vadd.f32 0.0, %v4775
      %4777 = vmatmul.f32.gmra.mxu0 %v4618
      %v4778 = vpop.f32.mrf.mxu0
      %v4779 = vadd.f32 0.0, %v4778
      %4780 = vmatmul.f32.gmra.mxu0 %v4621
      %v4781 = vpop.f32.mrf.mxu0
      %v4782 = vadd.f32 0.0, %v4781
      %4783 = vmatmul.f32.gmra.mxu0 %v4624
      %v4784 = vpop.f32.mrf.mxu0
      %v4785 = vadd.f32 0.0, %v4784
      %4786 = vmatmul.f32.gmra.mxu0 %v4627
      %v4787 = vpop.f32.mrf.mxu0
      %v4788 = vadd.f32 0.0, %v4787
      %4789 = vmatmul.f32.gmra.mxu0 %v4630
      %v4790 = vpop.f32.mrf.mxu0
      %v4791 = vadd.f32 0.0, %v4790
      %4792 = vmatmul.f32.gmra.mxu0 %v4633
      %v4793 = vpop.f32.mrf.mxu0
      %v4794 = vadd.f32 0.0, %v4793
      %4795 = vdwg.mxu0
      %v4796 = vadd.f32 %v3681, %v4653
      %v4797 = vadd.f32 %v3684, %v4656
      %v4798 = vadd.f32 %v3687, %v4659
      %v4799 = vadd.f32 %v3690, %v4662
      %v4800 = vadd.f32 %v3693, %v4665
      %v4801 = vadd.f32 %v3696, %v4668
      %v4802 = vadd.f32 %v3699, %v4671
      %v4803 = vadd.f32 %v3702, %v4674
      %v4804 = vadd.f32 %v3705, %v4677
      %v4805 = vadd.f32 %v3708, %v4680
      %v4806 = vadd.f32 %v3711, %v4683
      %v4807 = vadd.f32 %v3714, %v4686
      %v4808 = vadd.f32 %v3717, %v4689
      %v4809 = vadd.f32 %v3720, %v4692
      %v4810 = vadd.f32 %v3723, %v4695
      %v4811 = vadd.f32 %v3726, %v4698
      %v4812 = vadd.f32 %v3729, %v4701
      %v4813 = vadd.f32 %v3732, %v4704
      %v4814 = vadd.f32 %v3735, %v4707
      %v4815 = vadd.f32 %v3738, %v4710
      %v4816 = vadd.f32 %v3741, %v4713
      %v4817 = vadd.f32 %v3744, %v4716
      %v4818 = vadd.f32 %v3747, %v4719
      %v4819 = vadd.f32 %v3750, %v4722
      %v4820 = vadd.f32 %v3753, %v4725
      %v4821 = vadd.f32 %v3756, %v4728
      %v4822 = vadd.f32 %v3759, %v4731
      %v4823 = vadd.f32 %v3762, %v4734
      %v4824 = vadd.f32 %v3765, %v4737
      %v4825 = vadd.f32 %v3768, %v4740
      %v4826 = vadd.f32 %v3771, %v4743
      %v4827 = vadd.f32 %v3774, %v4746
      %v4828 = vadd.f32 %v3777, %v4749
      %v4829 = vadd.f32 %v3780, %v4752
      %v4830 = vadd.f32 %v3783, %v4755
      %v4831 = vadd.f32 %v3786, %v4758
      %v4832 = vadd.f32 %v3789, %v4761
      %v4833 = vadd.f32 %v3792, %v4764
      %v4834 = vadd.f32 %v3795, %v4767
      %v4835 = vadd.f32 %v3798, %v4770
      %v4836 = vadd.f32 %v3801, %v4773
      %v4837 = vadd.f32 %v3804, %v4776
      %v4838 = vadd.f32 %v3807, %v4779
      %v4839 = vadd.f32 %v3810, %v4782
      %v4840 = vadd.f32 %v3813, %v4785
      %v4841 = vadd.f32 %v3816, %v4788
      %v4842 = vadd.f32 %v3819, %v4791
      %v4843 = vadd.f32 %v3822, %v4794
      %s4844 = scalar_lea.vmem %s3, 56
      %v4845 = vld [vmem:[%s4844] sm:$0xff]
      %4846 = vmatpush.msra.mxu0 0.0
      %4847 = vmatpush.msra.mxu0 0.0
      %4848 = vmatpush.msra.mxu0 0.0
      %4849 = vmatpush.msra.mxu0 0.0
      %4850 = vmatpush.msra.mxu0 0.0
      %4851 = vmatpush.msra.mxu0 0.0
      %4852 = vmatpush.msra.mxu0 0.0
      %4853 = vmatpush.msra.mxu0 0.0
      %4854 = vmatpush.msra.mxu0 0.0
      %4855 = vmatpush.msra.mxu0 0.0
      %4856 = vmatpush.msra.mxu0 0.0
      %4857 = vmatpush.msra.mxu0 0.0
      %4858 = vmatpush.msra.mxu0 0.0
      %4859 = vmatpush.msra.mxu0 0.0
      %4860 = vmatpush.msra.mxu0 0.0
      %4861 = vmatpush.msra.mxu0 %v4845
      %4862 = vmatmul.f32.gmra.mxu0 %v4492
      %v4863 = vpop.f32.mrf.mxu0
      %v4864 = vadd.f32 0.0, %v4863
      %4865 = vmatmul.f32.gmra.mxu0 %v4495
      %v4866 = vpop.f32.mrf.mxu0
      %v4867 = vadd.f32 0.0, %v4866
      %4868 = vmatmul.f32.gmra.mxu0 %v4498
      %v4869 = vpop.f32.mrf.mxu0
      %4870 = vmatmul.f32.gmra.mxu0 %v4501
      %v4871 = vpop.f32.mrf.mxu0
      %v4872 = vadd.f32 0.0, %v4871
      %4873 = vmatmul.f32.gmra.mxu0 %v4504
      %v4874 = vpop.f32.mrf.mxu0
      %v4875 = vadd.f32 0.0, %v4874
      %4876 = vmatmul.f32.gmra.mxu0 %v4507
      %v4877 = vpop.f32.mrf.mxu0
      %4878 = vmatmul.f32.gmra.mxu0 %v4510
      %v4879 = vpop.f32.mrf.mxu0
      %v4880 = vadd.f32 0.0, %v4879
      %4881 = vmatmul.f32.gmra.mxu0 %v4513
      %v4882 = vpop.f32.mrf.mxu0
      %v4883 = vadd.f32 0.0, %v4882
      %4884 = vmatmul.f32.gmra.mxu0 %v4516
      %v4885 = vpop.f32.mrf.mxu0
      %4886 = vmatmul.f32.gmra.mxu0 %v4519
      %v4887 = vpop.f32.mrf.mxu0
      %v4888 = vadd.f32 0.0, %v4887
      %4889 = vmatmul.f32.gmra.mxu0 %v4522
      %v4890 = vpop.f32.mrf.mxu0
      %v4891 = vadd.f32 0.0, %v4890
      %4892 = vmatmul.f32.gmra.mxu0 %v4525
      %v4893 = vpop.f32.mrf.mxu0
      %4894 = vmatmul.f32.gmra.mxu0 %v4528
      %v4895 = vpop.f32.mrf.mxu0
      %v4896 = vadd.f32 0.0, %v4895
      %4897 = vmatmul.f32.gmra.mxu0 %v4531
      %v4898 = vpop.f32.mrf.mxu0
      %v4899 = vadd.f32 0.0, %v4898
      %4900 = vmatmul.f32.gmra.mxu0 %v4534
      %v4901 = vpop.f32.mrf.mxu0
      %4902 = vmatmul.f32.gmra.mxu0 %v4537
      %v4903 = vpop.f32.mrf.mxu0
      %v4904 = vadd.f32 0.0, %v4903
      %4905 = vmatmul.f32.gmra.mxu0 %v4540
      %v4906 = vpop.f32.mrf.mxu0
      %v4907 = vadd.f32 0.0, %v4906
      %4908 = vmatmul.f32.gmra.mxu0 %v4543
      %v4909 = vpop.f32.mrf.mxu0
      %4910 = vmatmul.f32.gmra.mxu0 %v4546
      %v4911 = vpop.f32.mrf.mxu0
      %v4912 = vadd.f32 0.0, %v4911
      %4913 = vmatmul.f32.gmra.mxu0 %v4549
      %v4914 = vpop.f32.mrf.mxu0
      %v4915 = vadd.f32 0.0, %v4914
      %4916 = vmatmul.f32.gmra.mxu0 %v4552
      %v4917 = vpop.f32.mrf.mxu0
      %4918 = vmatmul.f32.gmra.mxu0 %v4555
      %v4919 = vpop.f32.mrf.mxu0
      %v4920 = vadd.f32 0.0, %v4919
      %4921 = vmatmul.f32.gmra.mxu0 %v4558
      %v4922 = vpop.f32.mrf.mxu0
      %v4923 = vadd.f32 0.0, %v4922
      %4924 = vmatmul.f32.gmra.mxu0 %v4561
      %v4925 = vpop.f32.mrf.mxu0
      %4926 = vmatmul.f32.gmra.mxu0 %v4564
      %v4927 = vpop.f32.mrf.mxu0
      %v4928 = vadd.f32 0.0, %v4927
      %4929 = vmatmul.f32.gmra.mxu0 %v4567
      %v4930 = vpop.f32.mrf.mxu0
      %v4931 = vadd.f32 0.0, %v4930
      %4932 = vmatmul.f32.gmra.mxu0 %v4570
      %v4933 = vpop.f32.mrf.mxu0
      %4934 = vmatmul.f32.gmra.mxu0 %v4573
      %v4935 = vpop.f32.mrf.mxu0
      %v4936 = vadd.f32 0.0, %v4935
      %4937 = vmatmul.f32.gmra.mxu0 %v4576
      %v4938 = vpop.f32.mrf.mxu0
      %v4939 = vadd.f32 0.0, %v4938
      %4940 = vmatmul.f32.gmra.mxu0 %v4579
      %v4941 = vpop.f32.mrf.mxu0
      %4942 = vmatmul.f32.gmra.mxu0 %v4582
      %v4943 = vpop.f32.mrf.mxu0
      %v4944 = vadd.f32 0.0, %v4943
      %4945 = vmatmul.f32.gmra.mxu0 %v4585
      %v4946 = vpop.f32.mrf.mxu0
      %v4947 = vadd.f32 0.0, %v4946
      %4948 = vmatmul.f32.gmra.mxu0 %v4588
      %v4949 = vpop.f32.mrf.mxu0
      %4950 = vmatmul.f32.gmra.mxu0 %v4591
      %v4951 = vpop.f32.mrf.mxu0
      %v4952 = vadd.f32 0.0, %v4951
      %4953 = vmatmul.f32.gmra.mxu0 %v4594
      %v4954 = vpop.f32.mrf.mxu0
      %v4955 = vadd.f32 0.0, %v4954
      %4956 = vmatmul.f32.gmra.mxu0 %v4597
      %v4957 = vpop.f32.mrf.mxu0
      %4958 = vmatmul.f32.gmra.mxu0 %v4600
      %v4959 = vpop.f32.mrf.mxu0
      %v4960 = vadd.f32 0.0, %v4959
      %4961 = vmatmul.f32.gmra.mxu0 %v4603
      %v4962 = vpop.f32.mrf.mxu0
      %v4963 = vadd.f32 0.0, %v4962
      %4964 = vmatmul.f32.gmra.mxu0 %v4606
      %v4965 = vpop.f32.mrf.mxu0
      %4966 = vmatmul.f32.gmra.mxu0 %v4609
      %v4967 = vpop.f32.mrf.mxu0
      %v4968 = vadd.f32 0.0, %v4967
      %4969 = vmatmul.f32.gmra.mxu0 %v4612
      %v4970 = vpop.f32.mrf.mxu0
      %v4971 = vadd.f32 0.0, %v4970
      %4972 = vmatmul.f32.gmra.mxu0 %v4615
      %v4973 = vpop.f32.mrf.mxu0
      %4974 = vmatmul.f32.gmra.mxu0 %v4618
      %v4975 = vpop.f32.mrf.mxu0
      %v4976 = vadd.f32 0.0, %v4975
      %4977 = vmatmul.f32.gmra.mxu0 %v4621
      %v4978 = vpop.f32.mrf.mxu0
      %v4979 = vadd.f32 0.0, %v4978
      %4980 = vmatmul.f32.gmra.mxu0 %v4624
      %v4981 = vpop.f32.mrf.mxu0
      %4982 = vmatmul.f32.gmra.mxu0 %v4627
      %v4983 = vpop.f32.mrf.mxu0
      %v4984 = vadd.f32 0.0, %v4983
      %4985 = vmatmul.f32.gmra.mxu0 %v4630
      %v4986 = vpop.f32.mrf.mxu0
      %v4987 = vadd.f32 0.0, %v4986
      %4988 = vmatmul.f32.gmra.mxu0 %v4633
      %v4989 = vpop.f32.mrf.mxu0
      %4990 = vdwg.mxu0
      %v4991 = vadd.f32 %v3989, %v4864
      %v4992 = vadd.f32 %v3992, %v4867
      %v4993 = vadd.f32 %v3997, %v4872
      %v4994 = vadd.f32 %v4000, %v4875
      %v4995 = vadd.f32 %v4005, %v4880
      %v4996 = vadd.f32 %v4008, %v4883
      %v4997 = vadd.f32 %v4013, %v4888
      %v4998 = vadd.f32 %v4016, %v4891
      %v4999 = vadd.f32 %v4021, %v4896
      %v5000 = vadd.f32 %v4024, %v4899
      %v5001 = vadd.f32 %v4029, %v4904
      %v5002 = vadd.f32 %v4032, %v4907
      %v5003 = vadd.f32 %v4037, %v4912
      %v5004 = vadd.f32 %v4040, %v4915
      %v5005 = vadd.f32 %v4045, %v4920
      %v5006 = vadd.f32 %v4048, %v4923
      %v5007 = vadd.f32 %v4053, %v4928
      %v5008 = vadd.f32 %v4056, %v4931
      %v5009 = vadd.f32 %v4061, %v4936
      %v5010 = vadd.f32 %v4064, %v4939
      %v5011 = vadd.f32 %v4069, %v4944
      %v5012 = vadd.f32 %v4072, %v4947
      %v5013 = vadd.f32 %v4077, %v4952
      %v5014 = vadd.f32 %v4080, %v4955
      %v5015 = vadd.f32 %v4085, %v4960
      %v5016 = vadd.f32 %v4088, %v4963
      %v5017 = vadd.f32 %v4093, %v4968
      %v5018 = vadd.f32 %v4096, %v4971
      %v5019 = vadd.f32 %v4101, %v4976
      %v5020 = vadd.f32 %v4104, %v4979
      %v5021 = vadd.f32 %v4109, %v4984
      %v5022 = vadd.f32 %v4112, %v4987
      %s5023 = scalar_lea.vmem %s3, 64
      %v5024 = vld [vmem:[%s5023] sm:$0xff]
      %5025 = vmatpush.msra.mxu0 0.0
      %5026 = vmatpush.msra.mxu0 0.0
      %5027 = vmatpush.msra.mxu0 0.0
      %5028 = vmatpush.msra.mxu0 0.0
      %5029 = vmatpush.msra.mxu0 0.0
      %5030 = vmatpush.msra.mxu0 0.0
      %5031 = vmatpush.msra.mxu0 0.0
      %5032 = vmatpush.msra.mxu0 0.0
      %5033 = vmatpush.msra.mxu0 0.0
      %5034 = vmatpush.msra.mxu0 0.0
      %5035 = vmatpush.msra.mxu0 0.0
      %5036 = vmatpush.msra.mxu0 0.0
      %5037 = vmatpush.msra.mxu0 0.0
      %5038 = vmatpush.msra.mxu0 0.0
      %5039 = vmatpush.msra.mxu0 0.0
      %5040 = vmatpush.msra.mxu0 %v5024
      %5041 = vmatmul.f32.gmra.mxu0 %v4492
      %v5042 = vpop.f32.mrf.mxu0
      %v5043 = vadd.f32 0.0, %v5042
      %5044 = vmatmul.f32.gmra.mxu0 %v4495
      %v5045 = vpop.f32.mrf.mxu0
      %v5046 = vadd.f32 0.0, %v5045
      %5047 = vmatmul.f32.gmra.mxu0 %v4498
      %v5048 = vpop.f32.mrf.mxu0
      %v5049 = vadd.f32 0.0, %v5048
      %5050 = vmatmul.f32.gmra.mxu0 %v4501
      %v5051 = vpop.f32.mrf.mxu0
      %v5052 = vadd.f32 0.0, %v5051
      %5053 = vmatmul.f32.gmra.mxu0 %v4504
      %v5054 = vpop.f32.mrf.mxu0
      %v5055 = vadd.f32 0.0, %v5054
      %5056 = vmatmul.f32.gmra.mxu0 %v4507
      %v5057 = vpop.f32.mrf.mxu0
      %v5058 = vadd.f32 0.0, %v5057
      %5059 = vmatmul.f32.gmra.mxu0 %v4510
      %v5060 = vpop.f32.mrf.mxu0
      %v5061 = vadd.f32 0.0, %v5060
      %5062 = vmatmul.f32.gmra.mxu0 %v4513
      %v5063 = vpop.f32.mrf.mxu0
      %v5064 = vadd.f32 0.0, %v5063
      %5065 = vmatmul.f32.gmra.mxu0 %v4516
      %v5066 = vpop.f32.mrf.mxu0
      %v5067 = vadd.f32 0.0, %v5066
      %5068 = vmatmul.f32.gmra.mxu0 %v4519
      %v5069 = vpop.f32.mrf.mxu0
      %v5070 = vadd.f32 0.0, %v5069
      %5071 = vmatmul.f32.gmra.mxu0 %v4522
      %v5072 = vpop.f32.mrf.mxu0
      %v5073 = vadd.f32 0.0, %v5072
      %5074 = vmatmul.f32.gmra.mxu0 %v4525
      %v5075 = vpop.f32.mrf.mxu0
      %v5076 = vadd.f32 0.0, %v5075
      %5077 = vmatmul.f32.gmra.mxu0 %v4528
      %v5078 = vpop.f32.mrf.mxu0
      %v5079 = vadd.f32 0.0, %v5078
      %5080 = vmatmul.f32.gmra.mxu0 %v4531
      %v5081 = vpop.f32.mrf.mxu0
      %v5082 = vadd.f32 0.0, %v5081
      %5083 = vmatmul.f32.gmra.mxu0 %v4534
      %v5084 = vpop.f32.mrf.mxu0
      %v5085 = vadd.f32 0.0, %v5084
      %5086 = vmatmul.f32.gmra.mxu0 %v4537
      %v5087 = vpop.f32.mrf.mxu0
      %v5088 = vadd.f32 0.0, %v5087
      %5089 = vmatmul.f32.gmra.mxu0 %v4540
      %v5090 = vpop.f32.mrf.mxu0
      %v5091 = vadd.f32 0.0, %v5090
      %5092 = vmatmul.f32.gmra.mxu0 %v4543
      %v5093 = vpop.f32.mrf.mxu0
      %v5094 = vadd.f32 0.0, %v5093
      %5095 = vmatmul.f32.gmra.mxu0 %v4546
      %v5096 = vpop.f32.mrf.mxu0
      %v5097 = vadd.f32 0.0, %v5096
      %5098 = vmatmul.f32.gmra.mxu0 %v4549
      %v5099 = vpop.f32.mrf.mxu0
      %v5100 = vadd.f32 0.0, %v5099
      %5101 = vmatmul.f32.gmra.mxu0 %v4552
      %v5102 = vpop.f32.mrf.mxu0
      %v5103 = vadd.f32 0.0, %v5102
      %5104 = vmatmul.f32.gmra.mxu0 %v4555
      %v5105 = vpop.f32.mrf.mxu0
      %v5106 = vadd.f32 0.0, %v5105
      %5107 = vmatmul.f32.gmra.mxu0 %v4558
      %v5108 = vpop.f32.mrf.mxu0
      %v5109 = vadd.f32 0.0, %v5108
      %5110 = vmatmul.f32.gmra.mxu0 %v4561
      %v5111 = vpop.f32.mrf.mxu0
      %v5112 = vadd.f32 0.0, %v5111
      %5113 = vmatmul.f32.gmra.mxu0 %v4564
      %v5114 = vpop.f32.mrf.mxu0
      %v5115 = vadd.f32 0.0, %v5114
      %5116 = vmatmul.f32.gmra.mxu0 %v4567
      %v5117 = vpop.f32.mrf.mxu0
      %v5118 = vadd.f32 0.0, %v5117
      %5119 = vmatmul.f32.gmra.mxu0 %v4570
      %v5120 = vpop.f32.mrf.mxu0
      %v5121 = vadd.f32 0.0, %v5120
      %5122 = vmatmul.f32.gmra.mxu0 %v4573
      %v5123 = vpop.f32.mrf.mxu0
      %v5124 = vadd.f32 0.0, %v5123
      %5125 = vmatmul.f32.gmra.mxu0 %v4576
      %v5126 = vpop.f32.mrf.mxu0
      %v5127 = vadd.f32 0.0, %v5126
      %5128 = vmatmul.f32.gmra.mxu0 %v4579
      %v5129 = vpop.f32.mrf.mxu0
      %v5130 = vadd.f32 0.0, %v5129
      %5131 = vmatmul.f32.gmra.mxu0 %v4582
      %v5132 = vpop.f32.mrf.mxu0
      %v5133 = vadd.f32 0.0, %v5132
      %5134 = vmatmul.f32.gmra.mxu0 %v4585
      %v5135 = vpop.f32.mrf.mxu0
      %v5136 = vadd.f32 0.0, %v5135
      %5137 = vmatmul.f32.gmra.mxu0 %v4588
      %v5138 = vpop.f32.mrf.mxu0
      %v5139 = vadd.f32 0.0, %v5138
      %5140 = vmatmul.f32.gmra.mxu0 %v4591
      %v5141 = vpop.f32.mrf.mxu0
      %v5142 = vadd.f32 0.0, %v5141
      %5143 = vmatmul.f32.gmra.mxu0 %v4594
      %v5144 = vpop.f32.mrf.mxu0
      %v5145 = vadd.f32 0.0, %v5144
      %5146 = vmatmul.f32.gmra.mxu0 %v4597
      %v5147 = vpop.f32.mrf.mxu0
      %v5148 = vadd.f32 0.0, %v5147
      %5149 = vmatmul.f32.gmra.mxu0 %v4600
      %v5150 = vpop.f32.mrf.mxu0
      %v5151 = vadd.f32 0.0, %v5150
      %5152 = vmatmul.f32.gmra.mxu0 %v4603
      %v5153 = vpop.f32.mrf.mxu0
      %v5154 = vadd.f32 0.0, %v5153
      %5155 = vmatmul.f32.gmra.mxu0 %v4606
      %v5156 = vpop.f32.mrf.mxu0
      %v5157 = vadd.f32 0.0, %v5156
      %5158 = vmatmul.f32.gmra.mxu0 %v4609
      %v5159 = vpop.f32.mrf.mxu0
      %v5160 = vadd.f32 0.0, %v5159
      %5161 = vmatmul.f32.gmra.mxu0 %v4612
      %v5162 = vpop.f32.mrf.mxu0
      %v5163 = vadd.f32 0.0, %v5162
      %5164 = vmatmul.f32.gmra.mxu0 %v4615
      %v5165 = vpop.f32.mrf.mxu0
      %v5166 = vadd.f32 0.0, %v5165
      %5167 = vmatmul.f32.gmra.mxu0 %v4618
      %v5168 = vpop.f32.mrf.mxu0
      %v5169 = vadd.f32 0.0, %v5168
      %5170 = vmatmul.f32.gmra.mxu0 %v4621
      %v5171 = vpop.f32.mrf.mxu0
      %v5172 = vadd.f32 0.0, %v5171
      %5173 = vmatmul.f32.gmra.mxu0 %v4624
      %v5174 = vpop.f32.mrf.mxu0
      %v5175 = vadd.f32 0.0, %v5174
      %5176 = vmatmul.f32.gmra.mxu0 %v4627
      %v5177 = vpop.f32.mrf.mxu0
      %v5178 = vadd.f32 0.0, %v5177
      %5179 = vmatmul.f32.gmra.mxu0 %v4630
      %v5180 = vpop.f32.mrf.mxu0
      %v5181 = vadd.f32 0.0, %v5180
      %5182 = vmatmul.f32.gmra.mxu0 %v4633
      %v5183 = vpop.f32.mrf.mxu0
      %v5184 = vadd.f32 0.0, %v5183
      %5185 = vdwg.mxu0
      %v5186 = vadd.f32 %v4297, %v5043
      %v5187 = vadd.f32 %v4300, %v5046
      %v5188 = vadd.f32 %v4303, %v5049
      %v5189 = vadd.f32 %v4306, %v5052
      %v5190 = vadd.f32 %v4309, %v5055
      %v5191 = vadd.f32 %v4312, %v5058
      %v5192 = vadd.f32 %v4315, %v5061
      %v5193 = vadd.f32 %v4318, %v5064
      %v5194 = vadd.f32 %v4321, %v5067
      %v5195 = vadd.f32 %v4324, %v5070
      %v5196 = vadd.f32 %v4327, %v5073
      %v5197 = vadd.f32 %v4330, %v5076
      %v5198 = vadd.f32 %v4333, %v5079
      %v5199 = vadd.f32 %v4336, %v5082
      %v5200 = vadd.f32 %v4339, %v5085
      %v5201 = vadd.f32 %v4342, %v5088
      %v5202 = vadd.f32 %v4345, %v5091
      %v5203 = vadd.f32 %v4348, %v5094
      %v5204 = vadd.f32 %v4351, %v5097
      %v5205 = vadd.f32 %v4354, %v5100
      %v5206 = vadd.f32 %v4357, %v5103
      %v5207 = vadd.f32 %v4360, %v5106
      %v5208 = vadd.f32 %v4363, %v5109
      %v5209 = vadd.f32 %v4366, %v5112
      %v5210 = vadd.f32 %v4369, %v5115
      %v5211 = vadd.f32 %v4372, %v5118
      %v5212 = vadd.f32 %v4375, %v5121
      %v5213 = vadd.f32 %v4378, %v5124
      %v5214 = vadd.f32 %v4381, %v5127
      %v5215 = vadd.f32 %v4384, %v5130
      %v5216 = vadd.f32 %v4387, %v5133
      %v5217 = vadd.f32 %v4390, %v5136
      %v5218 = vadd.f32 %v4393, %v5139
      %v5219 = vadd.f32 %v4396, %v5142
      %v5220 = vadd.f32 %v4399, %v5145
      %v5221 = vadd.f32 %v4402, %v5148
      %v5222 = vadd.f32 %v4405, %v5151
      %v5223 = vadd.f32 %v4408, %v5154
      %v5224 = vadd.f32 %v4411, %v5157
      %v5225 = vadd.f32 %v4414, %v5160
      %v5226 = vadd.f32 %v4417, %v5163
      %v5227 = vadd.f32 %v4420, %v5166
      %v5228 = vadd.f32 %v4423, %v5169
      %v5229 = vadd.f32 %v4426, %v5172
      %v5230 = vadd.f32 %v4429, %v5175
      %v5231 = vadd.f32 %v4432, %v5178
      %v5232 = vadd.f32 %v4435, %v5181
      %v5233 = vadd.f32 %v4438, %v5184
      %v5234 = vrot.slane %v4796, 7
      %v5235 = vrot.slane %v4797, 7
      %v5236 = vrot.slane %v4798, 7
      %v5237 = vrot.slane %v4799, 7
      %v5238 = vrot.slane %v4800, 7
      %v5239 = vrot.slane %v4801, 7
      %v5240 = vrot.slane %v4802, 7
      %v5241 = vrot.slane %v4803, 7
      %v5242 = vrot.slane %v4804, 7
      %v5243 = vrot.slane %v4805, 7
      %v5244 = vrot.slane %v4806, 7
      %v5245 = vrot.slane %v4807, 7
      %v5246 = vrot.slane %v4808, 7
      %v5247 = vrot.slane %v4809, 7
      %v5248 = vrot.slane %v4810, 7
      %v5249 = vrot.slane %v4811, 7
      %v5250 = vrot.slane %v4812, 7
      %v5251 = vrot.slane %v4813, 7
      %v5252 = vrot.slane %v4814, 7
      %v5253 = vrot.slane %v4815, 7
      %v5254 = vrot.slane %v4816, 7
      %v5255 = vrot.slane %v4817, 7
      %v5256 = vrot.slane %v4818, 7
      %v5257 = vrot.slane %v4819, 7
      %v5258 = vrot.slane %v4820, 7
      %v5259 = vrot.slane %v4821, 7
      %v5260 = vrot.slane %v4822, 7
      %v5261 = vrot.slane %v4823, 7
      %v5262 = vrot.slane %v4824, 7
      %v5263 = vrot.slane %v4825, 7
      %v5264 = vrot.slane %v4826, 7
      %v5265 = vrot.slane %v4827, 7
      %v5266 = vrot.slane %v4828, 7
      %v5267 = vrot.slane %v4829, 7
      %v5268 = vrot.slane %v4830, 7
      %v5269 = vrot.slane %v4831, 7
      %v5270 = vrot.slane %v4832, 7
      %v5271 = vrot.slane %v4833, 7
      %v5272 = vrot.slane %v4834, 7
      %v5273 = vrot.slane %v4835, 7
      %v5274 = vrot.slane %v4836, 7
      %v5275 = vrot.slane %v4837, 7
      %v5276 = vrot.slane %v4838, 7
      %v5277 = vrot.slane %v4839, 7
      %v5278 = vrot.slane %v4840, 7
      %v5279 = vrot.slane %v4841, 7
      %v5280 = vrot.slane %v4842, 7
      %v5281 = vrot.slane %v4843, 7
      %v5282 = vsel %vm2804, %v5279, %v5280
      %v5283 = vsel %vm2804, %v5278, %v5279
      %v5284 = vsel %vm2804, %v5276, %v5277
      %v5285 = vsel %vm2804, %v5275, %v5276
      %v5286 = vsel %vm2804, %v5273, %v5274
      %v5287 = vsel %vm2804, %v5272, %v5273
      %v5288 = vsel %vm2804, %v5270, %v5271
      %v5289 = vsel %vm2804, %v5269, %v5270
      %v5290 = vsel %vm2804, %v5267, %v5268
      %v5291 = vsel %vm2804, %v5266, %v5267
      %v5292 = vsel %vm2804, %v5264, %v5265
      %v5293 = vsel %vm2804, %v5263, %v5264
      %v5294 = vsel %vm2804, %v5261, %v5262
      %v5295 = vsel %vm2804, %v5260, %v5261
      %v5296 = vsel %vm2804, %v5258, %v5259
      %v5297 = vsel %vm2804, %v5257, %v5258
      %v5298 = vsel %vm2804, %v5255, %v5256
      %v5299 = vsel %vm2804, %v5254, %v5255
      %v5300 = vsel %vm2804, %v5252, %v5253
      %v5301 = vsel %vm2804, %v5251, %v5252
      %v5302 = vsel %vm2804, %v5249, %v5250
      %v5303 = vsel %vm2804, %v5248, %v5249
      %v5304 = vsel %vm2804, %v5246, %v5247
      %v5305 = vsel %vm2804, %v5245, %v5246
      %v5306 = vsel %vm2804, %v5243, %v5244
      %v5307 = vsel %vm2804, %v5242, %v5243
      %v5308 = vsel %vm2804, %v5240, %v5241
      %v5309 = vsel %vm2804, %v5239, %v5240
      %v5310 = vsel %vm2804, %v5237, %v5238
      %v5311 = vsel %vm2804, %v5236, %v5237
      %v5312 = vsel %vm2804, %v5234, %v5235
      %v5313 = vsel %vm2804, %v5281, %v5234
      %v5314 = vadd.f32 %v4991, %v5313
      %v5315 = vadd.f32 %v4992, %v5312
      %v5316 = vadd.f32 %v4993, %v5311
      %v5317 = vadd.f32 %v4994, %v5310
      %v5318 = vadd.f32 %v4995, %v5309
      %v5319 = vadd.f32 %v4996, %v5308
      %v5320 = vadd.f32 %v4997, %v5307
      %v5321 = vadd.f32 %v4998, %v5306
      %v5322 = vadd.f32 %v4999, %v5305
      %v5323 = vadd.f32 %v5000, %v5304
      %v5324 = vadd.f32 %v5001, %v5303
      %v5325 = vadd.f32 %v5002, %v5302
      %v5326 = vadd.f32 %v5003, %v5301
      %v5327 = vadd.f32 %v5004, %v5300
      %v5328 = vadd.f32 %v5005, %v5299
      %v5329 = vadd.f32 %v5006, %v5298
      %v5330 = vadd.f32 %v5007, %v5297
      %v5331 = vadd.f32 %v5008, %v5296
      %v5332 = vadd.f32 %v5009, %v5295
      %v5333 = vadd.f32 %v5010, %v5294
      %v5334 = vadd.f32 %v5011, %v5293
      %v5335 = vadd.f32 %v5012, %v5292
      %v5336 = vadd.f32 %v5013, %v5291
      %v5337 = vadd.f32 %v5014, %v5290
      %v5338 = vadd.f32 %v5015, %v5289
      %v5339 = vadd.f32 %v5016, %v5288
      %v5340 = vadd.f32 %v5017, %v5287
      %v5341 = vadd.f32 %v5018, %v5286
      %v5342 = vadd.f32 %v5019, %v5285
      %v5343 = vadd.f32 %v5020, %v5284
      %v5344 = vadd.f32 %v5021, %v5283
      %v5345 = vadd.f32 %v5022, %v5282
      %v5346 = vrot.slane %v5186, 1
      %v5347 = vrot.slane %v5187, 1
      %v5348 = vrot.slane %v5188, 1
      %v5349 = vrot.slane %v5189, 1
      %v5350 = vrot.slane %v5190, 1
      %v5351 = vrot.slane %v5191, 1
      %v5352 = vrot.slane %v5192, 1
      %v5353 = vrot.slane %v5193, 1
      %v5354 = vrot.slane %v5194, 1
      %v5355 = vrot.slane %v5195, 1
      %v5356 = vrot.slane %v5196, 1
      %v5357 = vrot.slane %v5197, 1
      %v5358 = vrot.slane %v5198, 1
      %v5359 = vrot.slane %v5199, 1
      %v5360 = vrot.slane %v5200, 1
      %v5361 = vrot.slane %v5201, 1
      %v5362 = vrot.slane %v5202, 1
      %v5363 = vrot.slane %v5203, 1
      %v5364 = vrot.slane %v5204, 1
      %v5365 = vrot.slane %v5205, 1
      %v5366 = vrot.slane %v5206, 1
      %v5367 = vrot.slane %v5207, 1
      %v5368 = vrot.slane %v5208, 1
      %v5369 = vrot.slane %v5209, 1
      %v5370 = vrot.slane %v5210, 1
      %v5371 = vrot.slane %v5211, 1
      %v5372 = vrot.slane %v5212, 1
      %v5373 = vrot.slane %v5213, 1
      %v5374 = vrot.slane %v5214, 1
      %v5375 = vrot.slane %v5215, 1
      %v5376 = vrot.slane %v5216, 1
      %v5377 = vrot.slane %v5217, 1
      %v5378 = vrot.slane %v5218, 1
      %v5379 = vrot.slane %v5219, 1
      %v5380 = vrot.slane %v5220, 1
      %v5381 = vrot.slane %v5221, 1
      %v5382 = vrot.slane %v5222, 1
      %v5383 = vrot.slane %v5223, 1
      %v5384 = vrot.slane %v5224, 1
      %v5385 = vrot.slane %v5225, 1
      %v5386 = vrot.slane %v5226, 1
      %v5387 = vrot.slane %v5227, 1
      %v5388 = vrot.slane %v5228, 1
      %v5389 = vrot.slane %v5229, 1
      %v5390 = vrot.slane %v5230, 1
      %v5391 = vrot.slane %v5231, 1
      %v5392 = vrot.slane %v5232, 1
      %v5393 = vrot.slane %v5233, 1
      %v5394 = vsel %vm2931, %v5392, %v5393
      %v5395 = vsel %vm2931, %v5391, %v5392
      %v5396 = vsel %vm2931, %v5389, %v5390
      %v5397 = vsel %vm2931, %v5388, %v5389
      %v5398 = vsel %vm2931, %v5386, %v5387
      %v5399 = vsel %vm2931, %v5385, %v5386
      %v5400 = vsel %vm2931, %v5383, %v5384
      %v5401 = vsel %vm2931, %v5382, %v5383
      %v5402 = vsel %vm2931, %v5380, %v5381
      %v5403 = vsel %vm2931, %v5379, %v5380
      %v5404 = vsel %vm2931, %v5377, %v5378
      %v5405 = vsel %vm2931, %v5376, %v5377
      %v5406 = vsel %vm2931, %v5374, %v5375
      %v5407 = vsel %vm2931, %v5373, %v5374
      %v5408 = vsel %vm2931, %v5371, %v5372
      %v5409 = vsel %vm2931, %v5370, %v5371
      %v5410 = vsel %vm2931, %v5368, %v5369
      %v5411 = vsel %vm2931, %v5367, %v5368
      %v5412 = vsel %vm2931, %v5365, %v5366
      %v5413 = vsel %vm2931, %v5364, %v5365
      %v5414 = vsel %vm2931, %v5362, %v5363
      %v5415 = vsel %vm2931, %v5361, %v5362
      %v5416 = vsel %vm2931, %v5359, %v5360
      %v5417 = vsel %vm2931, %v5358, %v5359
      %v5418 = vsel %vm2931, %v5356, %v5357
      %v5419 = vsel %vm2931, %v5355, %v5356
      %v5420 = vsel %vm2931, %v5353, %v5354
      %v5421 = vsel %vm2931, %v5352, %v5353
      %v5422 = vsel %vm2931, %v5350, %v5351
      %v5423 = vsel %vm2931, %v5349, %v5350
      %v5424 = vsel %vm2931, %v5347, %v5348
      %v5425 = vsel %vm2931, %v5346, %v5347
      %v5426 = vadd.f32 %v5314, %v5425
      %v5427 = vadd.f32 %v5315, %v5424
      %v5428 = vadd.f32 %v5316, %v5423
      %v5429 = vadd.f32 %v5317, %v5422
      %v5430 = vadd.f32 %v5318, %v5421
      %v5431 = vadd.f32 %v5319, %v5420
      %v5432 = vadd.f32 %v5320, %v5419
      %v5433 = vadd.f32 %v5321, %v5418
      %v5434 = vadd.f32 %v5322, %v5417
      %v5435 = vadd.f32 %v5323, %v5416
      %v5436 = vadd.f32 %v5324, %v5415
      %v5437 = vadd.f32 %v5325, %v5414
      %v5438 = vadd.f32 %v5326, %v5413
      %v5439 = vadd.f32 %v5327, %v5412
      %v5440 = vadd.f32 %v5328, %v5411
      %v5441 = vadd.f32 %v5329, %v5410
      %v5442 = vadd.f32 %v5330, %v5409
      %v5443 = vadd.f32 %v5331, %v5408
      %v5444 = vadd.f32 %v5332, %v5407
      %v5445 = vadd.f32 %v5333, %v5406
      %v5446 = vadd.f32 %v5334, %v5405
      %v5447 = vadd.f32 %v5335, %v5404
      %v5448 = vadd.f32 %v5336, %v5403
      %v5449 = vadd.f32 %v5337, %v5402
      %v5450 = vadd.f32 %v5338, %v5401
      %v5451 = vadd.f32 %v5339, %v5400
      %v5452 = vadd.f32 %v5340, %v5399
      %v5453 = vadd.f32 %v5341, %v5398
      %v5454 = vadd.f32 %v5342, %v5397
      %v5455 = vadd.f32 %v5343, %v5396
      %v5456 = vadd.f32 %v5344, %v5395
      %v5457 = vadd.f32 %v5345, %v5394
      %v5458 = vld [vmem:[%s4] sm:$0x1]
      %v5460 = vperm.slane %v5458, 0
      %v5462 = vadd.f32 %v5426, %v5460
      %v5463 = vadd.f32 %v5427, %v5460
      %v5464 = vadd.f32 %v5428, %v5460
      %v5465 = vadd.f32 %v5429, %v5460
      %v5466 = vadd.f32 %v5430, %v5460
      %v5467 = vadd.f32 %v5431, %v5460
      %v5468 = vadd.f32 %v5432, %v5460
      %v5469 = vadd.f32 %v5433, %v5460
      %v5470 = vadd.f32 %v5434, %v5460
      %v5471 = vadd.f32 %v5435, %v5460
      %v5472 = vadd.f32 %v5436, %v5460
      %v5473 = vadd.f32 %v5437, %v5460
      %v5474 = vadd.f32 %v5438, %v5460
      %v5475 = vadd.f32 %v5439, %v5460
      %v5476 = vadd.f32 %v5440, %v5460
      %v5477 = vadd.f32 %v5441, %v5460
      %v5478 = vadd.f32 %v5442, %v5460
      %v5479 = vadd.f32 %v5443, %v5460
      %v5480 = vadd.f32 %v5444, %v5460
      %v5481 = vadd.f32 %v5445, %v5460
      %v5482 = vadd.f32 %v5446, %v5460
      %v5483 = vadd.f32 %v5447, %v5460
      %v5484 = vadd.f32 %v5448, %v5460
      %v5485 = vadd.f32 %v5449, %v5460
      %v5486 = vadd.f32 %v5450, %v5460
      %v5487 = vadd.f32 %v5451, %v5460
      %v5488 = vadd.f32 %v5452, %v5460
      %v5489 = vadd.f32 %v5453, %v5460
      %v5490 = vadd.f32 %v5454, %v5460
      %v5491 = vadd.f32 %v5455, %v5460
      %v5492 = vadd.f32 %v5456, %v5460
      %v5493 = vadd.f32 %v5457, %v5460
      %vm5494 = vcmp.gt.f32.partialorder %v5462, 0.0
      %vm5495 = vcmp.gt.f32.partialorder %v5463, 0.0
      %vm5496 = vcmp.gt.f32.partialorder %v5464, 0.0
      %vm5497 = vcmp.gt.f32.partialorder %v5465, 0.0
      %vm5498 = vcmp.gt.f32.partialorder %v5466, 0.0
      %vm5499 = vcmp.gt.f32.partialorder %v5467, 0.0
      %vm5500 = vcmp.gt.f32.partialorder %v5468, 0.0
      %vm5501 = vcmp.gt.f32.partialorder %v5469, 0.0
      %vm5502 = vcmp.gt.f32.partialorder %v5470, 0.0
      %vm5503 = vcmp.gt.f32.partialorder %v5471, 0.0
      %vm5504 = vcmp.gt.f32.partialorder %v5472, 0.0
      %vm5505 = vcmp.gt.f32.partialorder %v5473, 0.0
      %vm5506 = vcmp.gt.f32.partialorder %v5474, 0.0
      %vm5507 = vcmp.gt.f32.partialorder %v5475, 0.0
      %vm5508 = vcmp.gt.f32.partialorder %v5476, 0.0
      %vm5509 = vcmp.gt.f32.partialorder %v5477, 0.0
      %vm5510 = vcmp.gt.f32.partialorder %v5478, 0.0
      %vm5511 = vcmp.gt.f32.partialorder %v5479, 0.0
      %vm5512 = vcmp.gt.f32.partialorder %v5480, 0.0
      %vm5513 = vcmp.gt.f32.partialorder %v5481, 0.0
      %vm5514 = vcmp.gt.f32.partialorder %v5482, 0.0
      %vm5515 = vcmp.gt.f32.partialorder %v5483, 0.0
      %vm5516 = vcmp.gt.f32.partialorder %v5484, 0.0
      %vm5517 = vcmp.gt.f32.partialorder %v5485, 0.0
      %vm5518 = vcmp.gt.f32.partialorder %v5486, 0.0
      %vm5519 = vcmp.gt.f32.partialorder %v5487, 0.0
      %vm5520 = vcmp.gt.f32.partialorder %v5488, 0.0
      %vm5521 = vcmp.gt.f32.partialorder %v5489, 0.0
      %vm5522 = vcmp.gt.f32.partialorder %v5490, 0.0
      %vm5523 = vcmp.gt.f32.partialorder %v5491, 0.0
      %vm5524 = vcmp.gt.f32.partialorder %v5492, 0.0
      %vm5525 = vcmp.gt.f32.partialorder %v5493, 0.0
      %v5526 = vmin.f32 %v5462, 0.0
      %v5527 = vmin.f32 %v5463, 0.0
      %v5528 = vmin.f32 %v5464, 0.0
      %v5529 = vmin.f32 %v5465, 0.0
      %v5530 = vmin.f32 %v5466, 0.0
      %v5531 = vmin.f32 %v5467, 0.0
      %v5532 = vmin.f32 %v5468, 0.0
      %v5533 = vmin.f32 %v5469, 0.0
      %v5534 = vmin.f32 %v5470, 0.0
      %v5535 = vmin.f32 %v5471, 0.0
      %v5536 = vmin.f32 %v5472, 0.0
      %v5537 = vmin.f32 %v5473, 0.0
      %v5538 = vmin.f32 %v5474, 0.0
      %v5539 = vmin.f32 %v5475, 0.0
      %v5540 = vmin.f32 %v5476, 0.0
      %v5541 = vmin.f32 %v5477, 0.0
      %v5542 = vmin.f32 %v5478, 0.0
      %v5543 = vmin.f32 %v5479, 0.0
      %v5544 = vmin.f32 %v5480, 0.0
      %v5545 = vmin.f32 %v5481, 0.0
      %v5546 = vmin.f32 %v5482, 0.0
      %v5547 = vmin.f32 %v5483, 0.0
      %v5548 = vmin.f32 %v5484, 0.0
      %v5549 = vmin.f32 %v5485, 0.0
      %v5550 = vmin.f32 %v5486, 0.0
      %v5551 = vmin.f32 %v5487, 0.0
      %v5552 = vmin.f32 %v5488, 0.0
      %v5553 = vmin.f32 %v5489, 0.0
      %v5554 = vmin.f32 %v5490, 0.0
      %v5555 = vmin.f32 %v5491, 0.0
      %v5556 = vmin.f32 %v5492, 0.0
      %v5557 = vmin.f32 %v5493, 0.0
      %v5558 = vmul.f32 %v5526, 1.442695
      %v5559 = vpow.pop %v5558
      %v5560 = vmul.f32 %v5527, 1.442695
      %v5561 = vpow.pop %v5560
      %v5562 = vmul.f32 %v5528, 1.442695
      %v5563 = vpow.pop %v5562
      %v5564 = vmul.f32 %v5529, 1.442695
      %v5565 = vpow.pop %v5564
      %v5566 = vmul.f32 %v5530, 1.442695
      %v5567 = vpow.pop %v5566
      %v5568 = vmul.f32 %v5531, 1.442695
      %v5569 = vpow.pop %v5568
      %v5570 = vmul.f32 %v5532, 1.442695
      %v5571 = vpow.pop %v5570
      %v5572 = vmul.f32 %v5533, 1.442695
      %v5573 = vpow.pop %v5572
      %v5574 = vmul.f32 %v5534, 1.442695
      %v5575 = vpow.pop %v5574
      %v5576 = vmul.f32 %v5535, 1.442695
      %v5577 = vpow.pop %v5576
      %v5578 = vmul.f32 %v5536, 1.442695
      %v5579 = vpow.pop %v5578
      %v5580 = vmul.f32 %v5537, 1.442695
      %v5581 = vpow.pop %v5580
      %v5582 = vmul.f32 %v5538, 1.442695
      %v5583 = vpow.pop %v5582
      %v5584 = vmul.f32 %v5539, 1.442695
      %v5585 = vpow.pop %v5584
      %v5586 = vmul.f32 %v5540, 1.442695
      %v5587 = vpow.pop %v5586
      %v5588 = vmul.f32 %v5541, 1.442695
      %v5589 = vpow.pop %v5588
      %v5590 = vmul.f32 %v5542, 1.442695
      %v5591 = vpow.pop %v5590
      %v5592 = vmul.f32 %v5543, 1.442695
      %v5593 = vpow.pop %v5592
      %v5594 = vmul.f32 %v5544, 1.442695
      %v5595 = vpow.pop %v5594
      %v5596 = vmul.f32 %v5545, 1.442695
      %v5597 = vpow.pop %v5596
      %v5598 = vmul.f32 %v5546, 1.442695
      %v5599 = vpow.pop %v5598
      %v5600 = vmul.f32 %v5547, 1.442695
      %v5601 = vpow.pop %v5600
      %v5602 = vmul.f32 %v5548, 1.442695
      %v5603 = vpow.pop %v5602
      %v5604 = vmul.f32 %v5549, 1.442695
      %v5605 = vpow.pop %v5604
      %v5606 = vmul.f32 %v5550, 1.442695
      %v5607 = vpow.pop %v5606
      %v5608 = vmul.f32 %v5551, 1.442695
      %v5609 = vpow.pop %v5608
      %v5610 = vmul.f32 %v5552, 1.442695
      %v5611 = vpow.pop %v5610
      %v5612 = vmul.f32 %v5553, 1.442695
      %v5613 = vpow.pop %v5612
      %v5614 = vmul.f32 %v5554, 1.442695
      %v5615 = vpow.pop %v5614
      %v5616 = vmul.f32 %v5555, 1.442695
      %v5617 = vpow.pop %v5616
      %v5618 = vmul.f32 %v5556, 1.442695
      %v5619 = vpow.pop %v5618
      %v5620 = vmul.f32 %v5557, 1.442695
      %v5621 = vpow.pop %v5620
      %v5622 = vsub.f32 %v5559, 1.0
      %v5623 = vsub.f32 %v5561, 1.0
      %v5624 = vsub.f32 %v5563, 1.0
      %v5625 = vsub.f32 %v5565, 1.0
      %v5626 = vsub.f32 %v5567, 1.0
      %v5627 = vsub.f32 %v5569, 1.0
      %v5628 = vsub.f32 %v5571, 1.0
      %v5629 = vsub.f32 %v5573, 1.0
      %v5630 = vsub.f32 %v5575, 1.0
      %v5631 = vsub.f32 %v5577, 1.0
      %v5632 = vsub.f32 %v5579, 1.0
      %v5633 = vsub.f32 %v5581, 1.0
      %v5634 = vsub.f32 %v5583, 1.0
      %v5635 = vsub.f32 %v5585, 1.0
      %v5636 = vsub.f32 %v5587, 1.0
      %v5637 = vsub.f32 %v5589, 1.0
      %v5638 = vsub.f32 %v5591, 1.0
      %v5639 = vsub.f32 %v5593, 1.0
      %v5640 = vsub.f32 %v5595, 1.0
      %v5641 = vsub.f32 %v5597, 1.0
      %v5642 = vsub.f32 %v5599, 1.0
      %v5643 = vsub.f32 %v5601, 1.0
      %v5644 = vsub.f32 %v5603, 1.0
      %v5645 = vsub.f32 %v5605, 1.0
      %v5646 = vsub.f32 %v5607, 1.0
      %v5647 = vsub.f32 %v5609, 1.0
      %v5648 = vsub.f32 %v5611, 1.0
      %v5649 = vsub.f32 %v5613, 1.0
      %v5650 = vsub.f32 %v5615, 1.0
      %v5651 = vsub.f32 %v5617, 1.0
      %v5652 = vsub.f32 %v5619, 1.0
      %v5653 = vsub.f32 %v5621, 1.0
      %v5654 = vmul.f32 %v5622, 1.6732632
      %v5655 = vmul.f32 %v5623, 1.6732632
      %v5656 = vmul.f32 %v5624, 1.6732632
      %v5657 = vmul.f32 %v5625, 1.6732632
      %v5658 = vmul.f32 %v5626, 1.6732632
      %v5659 = vmul.f32 %v5627, 1.6732632
      %v5660 = vmul.f32 %v5628, 1.6732632
      %v5661 = vmul.f32 %v5629, 1.6732632
      %v5662 = vmul.f32 %v5630, 1.6732632
      %v5663 = vmul.f32 %v5631, 1.6732632
      %v5664 = vmul.f32 %v5632, 1.6732632
      %v5665 = vmul.f32 %v5633, 1.6732632
      %v5666 = vmul.f32 %v5634, 1.6732632
      %v5667 = vmul.f32 %v5635, 1.6732632
      %v5668 = vmul.f32 %v5636, 1.6732632
      %v5669 = vmul.f32 %v5637, 1.6732632
      %v5670 = vmul.f32 %v5638, 1.6732632
      %v5671 = vmul.f32 %v5639, 1.6732632
      %v5672 = vmul.f32 %v5640, 1.6732632
      %v5673 = vmul.f32 %v5641, 1.6732632
      %v5674 = vmul.f32 %v5642, 1.6732632
      %v5675 = vmul.f32 %v5643, 1.6732632
      %v5676 = vmul.f32 %v5644, 1.6732632
      %v5677 = vmul.f32 %v5645, 1.6732632
      %v5678 = vmul.f32 %v5646, 1.6732632
      %v5679 = vmul.f32 %v5647, 1.6732632
      %v5680 = vmul.f32 %v5648, 1.6732632
      %v5681 = vmul.f32 %v5649, 1.6732632
      %v5682 = vmul.f32 %v5650, 1.6732632
      %v5683 = vmul.f32 %v5651, 1.6732632
      %v5684 = vmul.f32 %v5652, 1.6732632
      %v5685 = vmul.f32 %v5653, 1.6732632
      %v5686 = vsel %vm5494, %v5462, %v5654
      %v5687 = vsel %vm5495, %v5463, %v5655
      %v5688 = vsel %vm5496, %v5464, %v5656
      %v5689 = vsel %vm5497, %v5465, %v5657
      %v5690 = vsel %vm5498, %v5466, %v5658
      %v5691 = vsel %vm5499, %v5467, %v5659
      %v5692 = vsel %vm5500, %v5468, %v5660
      %v5693 = vsel %vm5501, %v5469, %v5661
      %v5694 = vsel %vm5502, %v5470, %v5662
      %v5695 = vsel %vm5503, %v5471, %v5663
      %v5696 = vsel %vm5504, %v5472, %v5664
      %v5697 = vsel %vm5505, %v5473, %v5665
      %v5698 = vsel %vm5506, %v5474, %v5666
      %v5699 = vsel %vm5507, %v5475, %v5667
      %v5700 = vsel %vm5508, %v5476, %v5668
      %v5701 = vsel %vm5509, %v5477, %v5669
      %v5702 = vsel %vm5510, %v5478, %v5670
      %v5703 = vsel %vm5511, %v5479, %v5671
      %v5704 = vsel %vm5512, %v5480, %v5672
      %v5705 = vsel %vm5513, %v5481, %v5673
      %v5706 = vsel %vm5514, %v5482, %v5674
      %v5707 = vsel %vm5515, %v5483, %v5675
      %v5708 = vsel %vm5516, %v5484, %v5676
      %v5709 = vsel %vm5517, %v5485, %v5677
      %v5710 = vsel %vm5518, %v5486, %v5678
      %v5711 = vsel %vm5519, %v5487, %v5679
      %v5712 = vsel %vm5520, %v5488, %v5680
      %v5713 = vsel %vm5521, %v5489, %v5681
      %v5714 = vsel %vm5522, %v5490, %v5682
      %v5715 = vsel %vm5523, %v5491, %v5683
      %v5716 = vsel %vm5524, %v5492, %v5684
      %v5717 = vsel %vm5525, %v5493, %v5685
      %v5718 = vmul.f32 %v5686, 1.050701
      %v5719 = vmul.f32 %v5687, 1.050701
      %v5720 = vmul.f32 %v5688, 1.050701
      %v5721 = vmul.f32 %v5689, 1.050701
      %v5722 = vmul.f32 %v5690, 1.050701
      %v5723 = vmul.f32 %v5691, 1.050701
      %v5724 = vmul.f32 %v5692, 1.050701
      %v5725 = vmul.f32 %v5693, 1.050701
      %v5726 = vmul.f32 %v5694, 1.050701
      %v5727 = vmul.f32 %v5695, 1.050701
      %v5728 = vmul.f32 %v5696, 1.050701
      %v5729 = vmul.f32 %v5697, 1.050701
      %v5730 = vmul.f32 %v5698, 1.050701
      %v5731 = vmul.f32 %v5699, 1.050701
      %v5732 = vmul.f32 %v5700, 1.050701
      %v5733 = vmul.f32 %v5701, 1.050701
      %v5734 = vmul.f32 %v5702, 1.050701
      %v5735 = vmul.f32 %v5703, 1.050701
      %v5736 = vmul.f32 %v5704, 1.050701
      %v5737 = vmul.f32 %v5705, 1.050701
      %v5738 = vmul.f32 %v5706, 1.050701
      %v5739 = vmul.f32 %v5707, 1.050701
      %v5740 = vmul.f32 %v5708, 1.050701
      %v5741 = vmul.f32 %v5709, 1.050701
      %v5742 = vmul.f32 %v5710, 1.050701
      %v5743 = vmul.f32 %v5711, 1.050701
      %v5744 = vmul.f32 %v5712, 1.050701
      %v5745 = vmul.f32 %v5713, 1.050701
      %v5746 = vmul.f32 %v5714, 1.050701
      %v5747 = vmul.f32 %v5715, 1.050701
      %v5748 = vmul.f32 %v5716, 1.050701
      %v5749 = vmul.f32 %v5717, 1.050701
      %vm5750 = vcmp.gt.f32.partialorder %v5718, 0.0
      %vm5751 = vcmp.gt.f32.partialorder %v5719, 0.0
      %vm5752 = vcmp.gt.f32.partialorder %v5720, 0.0
      %vm5753 = vcmp.gt.f32.partialorder %v5721, 0.0
      %vm5754 = vcmp.gt.f32.partialorder %v5722, 0.0
      %vm5755 = vcmp.gt.f32.partialorder %v5723, 0.0
      %vm5756 = vcmp.gt.f32.partialorder %v5724, 0.0
      %vm5757 = vcmp.gt.f32.partialorder %v5725, 0.0
      %vm5758 = vcmp.gt.f32.partialorder %v5726, 0.0
      %vm5759 = vcmp.gt.f32.partialorder %v5727, 0.0
      %vm5760 = vcmp.gt.f32.partialorder %v5728, 0.0
      %vm5761 = vcmp.gt.f32.partialorder %v5729, 0.0
      %vm5762 = vcmp.gt.f32.partialorder %v5730, 0.0
      %vm5763 = vcmp.gt.f32.partialorder %v5731, 0.0
      %vm5764 = vcmp.gt.f32.partialorder %v5732, 0.0
      %vm5765 = vcmp.gt.f32.partialorder %v5733, 0.0
      %vm5766 = vcmp.gt.f32.partialorder %v5734, 0.0
      %vm5767 = vcmp.gt.f32.partialorder %v5735, 0.0
      %vm5768 = vcmp.gt.f32.partialorder %v5736, 0.0
      %vm5769 = vcmp.gt.f32.partialorder %v5737, 0.0
      %vm5770 = vcmp.gt.f32.partialorder %v5738, 0.0
      %vm5771 = vcmp.gt.f32.partialorder %v5739, 0.0
      %vm5772 = vcmp.gt.f32.partialorder %v5740, 0.0
      %vm5773 = vcmp.gt.f32.partialorder %v5741, 0.0
      %vm5774 = vcmp.gt.f32.partialorder %v5742, 0.0
      %vm5775 = vcmp.gt.f32.partialorder %v5743, 0.0
      %vm5776 = vcmp.gt.f32.partialorder %v5744, 0.0
      %vm5777 = vcmp.gt.f32.partialorder %v5745, 0.0
      %vm5778 = vcmp.gt.f32.partialorder %v5746, 0.0
      %vm5779 = vcmp.gt.f32.partialorder %v5747, 0.0
      %vm5780 = vcmp.gt.f32.partialorder %v5748, 0.0
      %vm5781 = vcmp.gt.f32.partialorder %v5749, 0.0
      %v5782 = vmin.f32 %v5718, 0.0
      %v5783 = vmin.f32 %v5719, 0.0
      %v5784 = vmin.f32 %v5720, 0.0
      %v5785 = vmin.f32 %v5721, 0.0
      %v5786 = vmin.f32 %v5722, 0.0
      %v5787 = vmin.f32 %v5723, 0.0
      %v5788 = vmin.f32 %v5724, 0.0
      %v5789 = vmin.f32 %v5725, 0.0
      %v5790 = vmin.f32 %v5726, 0.0
      %v5791 = vmin.f32 %v5727, 0.0
      %v5792 = vmin.f32 %v5728, 0.0
      %v5793 = vmin.f32 %v5729, 0.0
      %v5794 = vmin.f32 %v5730, 0.0
      %v5795 = vmin.f32 %v5731, 0.0
      %v5796 = vmin.f32 %v5732, 0.0
      %v5797 = vmin.f32 %v5733, 0.0
      %v5798 = vmin.f32 %v5734, 0.0
      %v5799 = vmin.f32 %v5735, 0.0
      %v5800 = vmin.f32 %v5736, 0.0
      %v5801 = vmin.f32 %v5737, 0.0
      %v5802 = vmin.f32 %v5738, 0.0
      %v5803 = vmin.f32 %v5739, 0.0
      %v5804 = vmin.f32 %v5740, 0.0
      %v5805 = vmin.f32 %v5741, 0.0
      %v5806 = vmin.f32 %v5742, 0.0
      %v5807 = vmin.f32 %v5743, 0.0
      %v5808 = vmin.f32 %v5744, 0.0
      %v5809 = vmin.f32 %v5745, 0.0
      %v5810 = vmin.f32 %v5746, 0.0
      %v5811 = vmin.f32 %v5747, 0.0
      %v5812 = vmin.f32 %v5748, 0.0
      %v5813 = vmin.f32 %v5749, 0.0
      %v5814 = vmul.f32 %v5782, 1.442695
      %v5815 = vpow.pop %v5814
      %v5816 = vmul.f32 %v5783, 1.442695
      %v5817 = vpow.pop %v5816
      %v5818 = vmul.f32 %v5784, 1.442695
      %v5819 = vpow.pop %v5818
      %v5820 = vmul.f32 %v5785, 1.442695
      %v5821 = vpow.pop %v5820
      %v5822 = vmul.f32 %v5786, 1.442695
      %v5823 = vpow.pop %v5822
      %v5824 = vmul.f32 %v5787, 1.442695
      %v5825 = vpow.pop %v5824
      %v5826 = vmul.f32 %v5788, 1.442695
      %v5827 = vpow.pop %v5826
      %v5828 = vmul.f32 %v5789, 1.442695
      %v5829 = vpow.pop %v5828
      %v5830 = vmul.f32 %v5790, 1.442695
      %v5831 = vpow.pop %v5830
      %v5832 = vmul.f32 %v5791, 1.442695
      %v5833 = vpow.pop %v5832
      %v5834 = vmul.f32 %v5792, 1.442695
      %v5835 = vpow.pop %v5834
      %v5836 = vmul.f32 %v5793, 1.442695
      %v5837 = vpow.pop %v5836
      %v5838 = vmul.f32 %v5794, 1.442695
      %v5839 = vpow.pop %v5838
      %v5840 = vmul.f32 %v5795, 1.442695
      %v5841 = vpow.pop %v5840
      %v5842 = vmul.f32 %v5796, 1.442695
      %v5843 = vpow.pop %v5842
      %v5844 = vmul.f32 %v5797, 1.442695
      %v5845 = vpow.pop %v5844
      %v5846 = vmul.f32 %v5798, 1.442695
      %v5847 = vpow.pop %v5846
      %v5848 = vmul.f32 %v5799, 1.442695
      %v5849 = vpow.pop %v5848
      %v5850 = vmul.f32 %v5800, 1.442695
      %v5851 = vpow.pop %v5850
      %v5852 = vmul.f32 %v5801, 1.442695
      %v5853 = vpow.pop %v5852
      %v5854 = vmul.f32 %v5802, 1.442695
      %v5855 = vpow.pop %v5854
      %v5856 = vmul.f32 %v5803, 1.442695
      %v5857 = vpow.pop %v5856
      %v5858 = vmul.f32 %v5804, 1.442695
      %v5859 = vpow.pop %v5858
      %v5860 = vmul.f32 %v5805, 1.442695
      %v5861 = vpow.pop %v5860
      %v5862 = vmul.f32 %v5806, 1.442695
      %v5863 = vpow.pop %v5862
      %v5864 = vmul.f32 %v5807, 1.442695
      %v5865 = vpow.pop %v5864
      %v5866 = vmul.f32 %v5808, 1.442695
      %v5867 = vpow.pop %v5866
      %v5868 = vmul.f32 %v5809, 1.442695
      %v5869 = vpow.pop %v5868
      %v5870 = vmul.f32 %v5810, 1.442695
      %v5871 = vpow.pop %v5870
      %v5872 = vmul.f32 %v5811, 1.442695
      %v5873 = vpow.pop %v5872
      %v5874 = vmul.f32 %v5812, 1.442695
      %v5875 = vpow.pop %v5874
      %v5876 = vmul.f32 %v5813, 1.442695
      %v5877 = vpow.pop %v5876
      %v5878 = vsub.f32 %v5815, 1.0
      %v5879 = vsub.f32 %v5817, 1.0
      %v5880 = vsub.f32 %v5819, 1.0
      %v5881 = vsub.f32 %v5821, 1.0
      %v5882 = vsub.f32 %v5823, 1.0
      %v5883 = vsub.f32 %v5825, 1.0
      %v5884 = vsub.f32 %v5827, 1.0
      %v5885 = vsub.f32 %v5829, 1.0
      %v5886 = vsub.f32 %v5831, 1.0
      %v5887 = vsub.f32 %v5833, 1.0
      %v5888 = vsub.f32 %v5835, 1.0
      %v5889 = vsub.f32 %v5837, 1.0
      %v5890 = vsub.f32 %v5839, 1.0
      %v5891 = vsub.f32 %v5841, 1.0
      %v5892 = vsub.f32 %v5843, 1.0
      %v5893 = vsub.f32 %v5845, 1.0
      %v5894 = vsub.f32 %v5847, 1.0
      %v5895 = vsub.f32 %v5849, 1.0
      %v5896 = vsub.f32 %v5851, 1.0
      %v5897 = vsub.f32 %v5853, 1.0
      %v5898 = vsub.f32 %v5855, 1.0
      %v5899 = vsub.f32 %v5857, 1.0
      %v5900 = vsub.f32 %v5859, 1.0
      %v5901 = vsub.f32 %v5861, 1.0
      %v5902 = vsub.f32 %v5863, 1.0
      %v5903 = vsub.f32 %v5865, 1.0
      %v5904 = vsub.f32 %v5867, 1.0
      %v5905 = vsub.f32 %v5869, 1.0
      %v5906 = vsub.f32 %v5871, 1.0
      %v5907 = vsub.f32 %v5873, 1.0
      %v5908 = vsub.f32 %v5875, 1.0
      %v5909 = vsub.f32 %v5877, 1.0
      %v5910 = vmul.f32 %v5878, 1.6732632
      %v5911 = vmul.f32 %v5879, 1.6732632
      %v5912 = vmul.f32 %v5880, 1.6732632
      %v5913 = vmul.f32 %v5881, 1.6732632
      %v5914 = vmul.f32 %v5882, 1.6732632
      %v5915 = vmul.f32 %v5883, 1.6732632
      %v5916 = vmul.f32 %v5884, 1.6732632
      %v5917 = vmul.f32 %v5885, 1.6732632
      %v5918 = vmul.f32 %v5886, 1.6732632
      %v5919 = vmul.f32 %v5887, 1.6732632
      %v5920 = vmul.f32 %v5888, 1.6732632
      %v5921 = vmul.f32 %v5889, 1.6732632
      %v5922 = vmul.f32 %v5890, 1.6732632
      %v5923 = vmul.f32 %v5891, 1.6732632
      %v5924 = vmul.f32 %v5892, 1.6732632
      %v5925 = vmul.f32 %v5893, 1.6732632
      %v5926 = vmul.f32 %v5894, 1.6732632
      %v5927 = vmul.f32 %v5895, 1.6732632
      %v5928 = vmul.f32 %v5896, 1.6732632
      %v5929 = vmul.f32 %v5897, 1.6732632
      %v5930 = vmul.f32 %v5898, 1.6732632
      %v5931 = vmul.f32 %v5899, 1.6732632
      %v5932 = vmul.f32 %v5900, 1.6732632
      %v5933 = vmul.f32 %v5901, 1.6732632
      %v5934 = vmul.f32 %v5902, 1.6732632
      %v5935 = vmul.f32 %v5903, 1.6732632
      %v5936 = vmul.f32 %v5904, 1.6732632
      %v5937 = vmul.f32 %v5905, 1.6732632
      %v5938 = vmul.f32 %v5906, 1.6732632
      %v5939 = vmul.f32 %v5907, 1.6732632
      %v5940 = vmul.f32 %v5908, 1.6732632
      %v5941 = vmul.f32 %v5909, 1.6732632
      %v5942 = vsel %vm5750, %v5718, %v5910
      %v5943 = vsel %vm5751, %v5719, %v5911
      %v5944 = vsel %vm5752, %v5720, %v5912
      %v5945 = vsel %vm5753, %v5721, %v5913
      %v5946 = vsel %vm5754, %v5722, %v5914
      %v5947 = vsel %vm5755, %v5723, %v5915
      %v5948 = vsel %vm5756, %v5724, %v5916
      %v5949 = vsel %vm5757, %v5725, %v5917
      %v5950 = vsel %vm5758, %v5726, %v5918
      %v5951 = vsel %vm5759, %v5727, %v5919
      %v5952 = vsel %vm5760, %v5728, %v5920
      %v5953 = vsel %vm5761, %v5729, %v5921
      %v5954 = vsel %vm5762, %v5730, %v5922
      %v5955 = vsel %vm5763, %v5731, %v5923
      %v5956 = vsel %vm5764, %v5732, %v5924
      %v5957 = vsel %vm5765, %v5733, %v5925
      %v5958 = vsel %vm5766, %v5734, %v5926
      %v5959 = vsel %vm5767, %v5735, %v5927
      %v5960 = vsel %vm5768, %v5736, %v5928
      %v5961 = vsel %vm5769, %v5737, %v5929
      %v5962 = vsel %vm5770, %v5738, %v5930
      %v5963 = vsel %vm5771, %v5739, %v5931
      %v5964 = vsel %vm5772, %v5740, %v5932
      %v5965 = vsel %vm5773, %v5741, %v5933
      %v5966 = vsel %vm5774, %v5742, %v5934
      %v5967 = vsel %vm5775, %v5743, %v5935
      %v5968 = vsel %vm5776, %v5744, %v5936
      %v5969 = vsel %vm5777, %v5745, %v5937
      %v5970 = vsel %vm5778, %v5746, %v5938
      %v5971 = vsel %vm5779, %v5747, %v5939
      %v5972 = vsel %vm5780, %v5748, %v5940
      %v5973 = vsel %vm5781, %v5749, %v5941
      %v5974 = vmul.f32 %v5942, 1.050701
      %v5975 = vmul.f32 %v5943, 1.050701
      %v5976 = vmul.f32 %v5944, 1.050701
      %v5977 = vmul.f32 %v5945, 1.050701
      %v5978 = vmul.f32 %v5946, 1.050701
      %v5979 = vmul.f32 %v5947, 1.050701
      %v5980 = vmul.f32 %v5948, 1.050701
      %v5981 = vmul.f32 %v5949, 1.050701
      %v5982 = vmul.f32 %v5950, 1.050701
      %v5983 = vmul.f32 %v5951, 1.050701
      %v5984 = vmul.f32 %v5952, 1.050701
      %v5985 = vmul.f32 %v5953, 1.050701
      %v5986 = vmul.f32 %v5954, 1.050701
      %v5987 = vmul.f32 %v5955, 1.050701
      %v5988 = vmul.f32 %v5956, 1.050701
      %v5989 = vmul.f32 %v5957, 1.050701
      %v5990 = vmul.f32 %v5958, 1.050701
      %v5991 = vmul.f32 %v5959, 1.050701
      %v5992 = vmul.f32 %v5960, 1.050701
      %v5993 = vmul.f32 %v5961, 1.050701
      %v5994 = vmul.f32 %v5962, 1.050701
      %v5995 = vmul.f32 %v5963, 1.050701
      %v5996 = vmul.f32 %v5964, 1.050701
      %v5997 = vmul.f32 %v5965, 1.050701
      %v5998 = vmul.f32 %v5966, 1.050701
      %v5999 = vmul.f32 %v5967, 1.050701
      %v6000 = vmul.f32 %v5968, 1.050701
      %v6001 = vmul.f32 %v5969, 1.050701
      %v6002 = vmul.f32 %v5970, 1.050701
      %v6003 = vmul.f32 %v5971, 1.050701
      %v6004 = vmul.f32 %v5972, 1.050701
      %v6005 = vmul.f32 %v5973, 1.050701
      %6006 = vst.msk [vmem:[%s337] sm:$0xff] %vm3044, %v5974
      %6007 = vst.msk [vmem:[%s337 + $0x8] sm:$0xff] %vm3044, %v5975
      %6008 = vst.msk [vmem:[%s337 + $0x10] sm:$0xff] %vm3044, %v5976
      %6009 = vst.msk [vmem:[%s337 + $0x18] sm:$0xff] %vm3044, %v5977
      %6010 = vst.msk [vmem:[%s337 + $0x20] sm:$0xff] %vm3044, %v5978
      %6011 = vst.msk [vmem:[%s337 + $0x28] sm:$0xff] %vm3044, %v5979
      %6012 = vst.msk [vmem:[%s337 + $0x30] sm:$0xff] %vm3044, %v5980
      %6013 = vst.msk [vmem:[%s337 + $0x38] sm:$0xff] %vm3044, %v5981
      %6014 = vst.msk [vmem:[%s337 + $0x40] sm:$0xff] %vm3044, %v5982
      %6015 = vst.msk [vmem:[%s337 + $0x48] sm:$0xff] %vm3044, %v5983
      %6016 = vst.msk [vmem:[%s337 + $0x50] sm:$0xff] %vm3044, %v5984
      %6017 = vst.msk [vmem:[%s337 + $0x58] sm:$0xff] %vm3044, %v5985
      %6018 = vst.msk [vmem:[%s337 + $0x60] sm:$0xff] %vm3044, %v5986
      %6019 = vst.msk [vmem:[%s337 + $0x68] sm:$0xff] %vm3044, %v5987
      %6020 = vst.msk [vmem:[%s337 + $0x70] sm:$0xff] %vm3044, %v5988
      %6021 = vst.msk [vmem:[%s337 + $0x78] sm:$0xff] %vm3044, %v5989
      %6022 = vst.msk [vmem:[%s337 + $0x80] sm:$0xff] %vm3044, %v5990
      %6023 = vst.msk [vmem:[%s337 + $0x88] sm:$0xff] %vm3044, %v5991
      %6024 = vst.msk [vmem:[%s337 + $0x90] sm:$0xff] %vm3044, %v5992
      %6025 = vst.msk [vmem:[%s337 + $0x98] sm:$0xff] %vm3044, %v5993
      %6026 = vst.msk [vmem:[%s337 + $0xa0] sm:$0xff] %vm3044, %v5994
      %6027 = vst.msk [vmem:[%s337 + $0xa8] sm:$0xff] %vm3044, %v5995
      %6028 = vst.msk [vmem:[%s337 + $0xb0] sm:$0xff] %vm3044, %v5996
      %6029 = vst.msk [vmem:[%s337 + $0xb8] sm:$0xff] %vm3044, %v5997
      %6030 = vst.msk [vmem:[%s337 + $0xc0] sm:$0xff] %vm3044, %v5998
      %6031 = vst.msk [vmem:[%s337 + $0xc8] sm:$0xff] %vm3044, %v5999
      %6032 = vst.msk [vmem:[%s337 + $0xd0] sm:$0xff] %vm3044, %v6000
      %6033 = vst.msk [vmem:[%s337 + $0xd8] sm:$0xff] %vm3044, %v6001
      %6034 = vst.msk [vmem:[%s337 + $0xe0] sm:$0xff] %vm3044, %v6002
      %6035 = vst.msk [vmem:[%s337 + $0xe8] sm:$0xff] %vm3044, %v6003
      %6036 = vst.msk [vmem:[%s337 + $0xf0] sm:$0xff] %vm3044, %v6004
      %6037 = vst.msk [vmem:[%s337 + $0xf8] sm:$0xff] %vm3044, %v6005
      %v6038 = vsel %vm3044, %v5974, 0.0
      %v6039 = vsel %vm3044, %v5975, 0.0
      %v6040 = vadd.f32 %v6038, %v6039
      %v6041 = vsel %vm3044, %v5976, 0.0
      %v6042 = vadd.f32 %v6040, %v6041
      %v6043 = vsel %vm3044, %v5977, 0.0
      %v6044 = vadd.f32 %v6042, %v6043
      %v6045 = vsel %vm3044, %v5978, 0.0
      %v6046 = vadd.f32 %v6044, %v6045
      %v6047 = vsel %vm3044, %v5979, 0.0
      %v6048 = vadd.f32 %v6046, %v6047
      %v6049 = vsel %vm3044, %v5980, 0.0
      %v6050 = vadd.f32 %v6048, %v6049
      %v6051 = vsel %vm3044, %v5981, 0.0
      %v6052 = vadd.f32 %v6050, %v6051
      %v6053 = vsel %vm3044, %v5982, 0.0
      %v6054 = vadd.f32 %v6052, %v6053
      %v6055 = vsel %vm3044, %v5983, 0.0
      %v6056 = vadd.f32 %v6054, %v6055
      %v6057 = vsel %vm3044, %v5984, 0.0
      %v6058 = vadd.f32 %v6056, %v6057
      %v6059 = vsel %vm3044, %v5985, 0.0
      %v6060 = vadd.f32 %v6058, %v6059
      %v6061 = vsel %vm3044, %v5986, 0.0
      %v6062 = vadd.f32 %v6060, %v6061
      %v6063 = vsel %vm3044, %v5987, 0.0
      %v6064 = vadd.f32 %v6062, %v6063
      %v6065 = vsel %vm3044, %v5988, 0.0
      %v6066 = vadd.f32 %v6064, %v6065
      %v6067 = vsel %vm3044, %v5989, 0.0
      %v6068 = vadd.f32 %v6066, %v6067
      %v6069 = vsel %vm3044, %v5990, 0.0
      %v6070 = vadd.f32 %v6068, %v6069
      %v6071 = vsel %vm3044, %v5991, 0.0
      %v6072 = vadd.f32 %v6070, %v6071
      %v6073 = vsel %vm3044, %v5992, 0.0
      %v6074 = vadd.f32 %v6072, %v6073
      %v6075 = vsel %vm3044, %v5993, 0.0
      %v6076 = vadd.f32 %v6074, %v6075
      %v6077 = vsel %vm3044, %v5994, 0.0
      %v6078 = vadd.f32 %v6076, %v6077
      %v6079 = vsel %vm3044, %v5995, 0.0
      %v6080 = vadd.f32 %v6078, %v6079
      %v6081 = vsel %vm3044, %v5996, 0.0
      %v6082 = vadd.f32 %v6080, %v6081
      %v6083 = vsel %vm3044, %v5997, 0.0
      %v6084 = vadd.f32 %v6082, %v6083
      %v6085 = vsel %vm3044, %v5998, 0.0
      %v6086 = vadd.f32 %v6084, %v6085
      %v6087 = vsel %vm3044, %v5999, 0.0
      %v6088 = vadd.f32 %v6086, %v6087
      %v6089 = vsel %vm3044, %v6000, 0.0
      %v6090 = vadd.f32 %v6088, %v6089
      %v6091 = vsel %vm3044, %v6001, 0.0
      %v6092 = vadd.f32 %v6090, %v6091
      %v6093 = vsel %vm3044, %v6002, 0.0
      %v6094 = vadd.f32 %v6092, %v6093
      %v6095 = vsel %vm3044, %v6003, 0.0
      %v6096 = vadd.f32 %v6094, %v6095
      %v6097 = vsel %vm3044, %v6004, 0.0
      %v6098 = vadd.f32 %v6096, %v6097
      %v6099 = vsel %vm3044, %v6005, 0.0
      %v6100 = vadd.f32 %v6098, %v6099
      %v6101 = vrot.slane %v6100, 4
      %v6102 = vadd.f32 %v6100, %v6101
      %v6103 = vrot.slane %v6102, 2
      %v6104 = vadd.f32 %v6102, %v6103
      %v6105 = vrot.slane %v6104, 1
      %v6106 = vadd.f32 %v6104, %v6105
      %vm6107 = vcmask 57344
      %6108 = vst.msk [vmem:[%s344] sm:$0x1] %vm6107, %v6106
      %v6109 = vmul.f32 %v5974, %v5974
      %v6110 = vmul.f32 %v5975, %v5975
      %v6111 = vmul.f32 %v5976, %v5976
      %v6112 = vmul.f32 %v5977, %v5977
      %v6113 = vmul.f32 %v5978, %v5978
      %v6114 = vmul.f32 %v5979, %v5979
      %v6115 = vmul.f32 %v5980, %v5980
      %v6116 = vmul.f32 %v5981, %v5981
      %v6117 = vmul.f32 %v5982, %v5982
      %v6118 = vmul.f32 %v5983, %v5983
      %v6119 = vmul.f32 %v5984, %v5984
      %v6120 = vmul.f32 %v5985, %v5985
      %v6121 = vmul.f32 %v5986, %v5986
      %v6122 = vmul.f32 %v5987, %v5987
      %v6123 = vmul.f32 %v5988, %v5988
      %v6124 = vmul.f32 %v5989, %v5989
      %v6125 = vmul.f32 %v5990, %v5990
      %v6126 = vmul.f32 %v5991, %v5991
      %v6127 = vmul.f32 %v5992, %v5992
      %v6128 = vmul.f32 %v5993, %v5993
      %v6129 = vmul.f32 %v5994, %v5994
      %v6130 = vmul.f32 %v5995, %v5995
      %v6131 = vmul.f32 %v5996, %v5996
      %v6132 = vmul.f32 %v5997, %v5997
      %v6133 = vmul.f32 %v5998, %v5998
      %v6134 = vmul.f32 %v5999, %v5999
      %v6135 = vmul.f32 %v6000, %v6000
      %v6136 = vmul.f32 %v6001, %v6001
      %v6137 = vmul.f32 %v6002, %v6002
      %v6138 = vmul.f32 %v6003, %v6003
      %v6139 = vmul.f32 %v6004, %v6004
      %v6140 = vmul.f32 %v6005, %v6005
      %v6141 = vsel %vm3044, %v6109, 0.0
      %v6142 = vsel %vm3044, %v6110, 0.0
      %v6143 = vadd.f32 %v6141, %v6142
      %v6144 = vsel %vm3044, %v6111, 0.0
      %v6145 = vadd.f32 %v6143, %v6144
      %v6146 = vsel %vm3044, %v6112, 0.0
      %v6147 = vadd.f32 %v6145, %v6146
      %v6148 = vsel %vm3044, %v6113, 0.0
      %v6149 = vadd.f32 %v6147, %v6148
      %v6150 = vsel %vm3044, %v6114, 0.0
      %v6151 = vadd.f32 %v6149, %v6150
      %v6152 = vsel %vm3044, %v6115, 0.0
      %v6153 = vadd.f32 %v6151, %v6152
      %v6154 = vsel %vm3044, %v6116, 0.0
      %v6155 = vadd.f32 %v6153, %v6154
      %v6156 = vsel %vm3044, %v6117, 0.0
      %v6157 = vadd.f32 %v6155, %v6156
      %v6158 = vsel %vm3044, %v6118, 0.0
      %v6159 = vadd.f32 %v6157, %v6158
      %v6160 = vsel %vm3044, %v6119, 0.0
      %v6161 = vadd.f32 %v6159, %v6160
      %v6162 = vsel %vm3044, %v6120, 0.0
      %v6163 = vadd.f32 %v6161, %v6162
      %v6164 = vsel %vm3044, %v6121, 0.0
      %v6165 = vadd.f32 %v6163, %v6164
      %v6166 = vsel %vm3044, %v6122, 0.0
      %v6167 = vadd.f32 %v6165, %v6166
      %v6168 = vsel %vm3044, %v6123, 0.0
      %v6169 = vadd.f32 %v6167, %v6168
      %v6170 = vsel %vm3044, %v6124, 0.0
      %v6171 = vadd.f32 %v6169, %v6170
      %v6172 = vsel %vm3044, %v6125, 0.0
      %v6173 = vadd.f32 %v6171, %v6172
      %v6174 = vsel %vm3044, %v6126, 0.0
      %v6175 = vadd.f32 %v6173, %v6174
      %v6176 = vsel %vm3044, %v6127, 0.0
      %v6177 = vadd.f32 %v6175, %v6176
      %v6178 = vsel %vm3044, %v6128, 0.0
      %v6179 = vadd.f32 %v6177, %v6178
      %v6180 = vsel %vm3044, %v6129, 0.0
      %v6181 = vadd.f32 %v6179, %v6180
      %v6182 = vsel %vm3044, %v6130, 0.0
      %v6183 = vadd.f32 %v6181, %v6182
      %v6184 = vsel %vm3044, %v6131, 0.0
      %v6185 = vadd.f32 %v6183, %v6184
      %v6186 = vsel %vm3044, %v6132, 0.0
      %v6187 = vadd.f32 %v6185, %v6186
      %v6188 = vsel %vm3044, %v6133, 0.0
      %v6189 = vadd.f32 %v6187, %v6188
      %v6190 = vsel %vm3044, %v6134, 0.0
      %v6191 = vadd.f32 %v6189, %v6190
      %v6192 = vsel %vm3044, %v6135, 0.0
      %v6193 = vadd.f32 %v6191, %v6192
      %v6194 = vsel %vm3044, %v6136, 0.0
      %v6195 = vadd.f32 %v6193, %v6194
      %v6196 = vsel %vm3044, %v6137, 0.0
      %v6197 = vadd.f32 %v6195, %v6196
      %v6198 = vsel %vm3044, %v6138, 0.0
      %v6199 = vadd.f32 %v6197, %v6198
      %v6200 = vsel %vm3044, %v6139, 0.0
      %v6201 = vadd.f32 %v6199, %v6200
      %v6202 = vsel %vm3044, %v6140, 0.0
      %v6203 = vadd.f32 %v6201, %v6202
      %v6204 = vrot.slane %v6203, 4
      %v6205 = vadd.f32 %v6203, %v6204
      %v6206 = vrot.slane %v6205, 2
      %v6207 = vadd.f32 %v6205, %v6206
      %v6208 = vrot.slane %v6207, 1
      %v6209 = vadd.f32 %v6207, %v6208
      %6210 = vst.msk [vmem:[%s350] sm:$0x1] %vm6107, %v6209
      %s6211 = smul.u32 16, %s24
      %p6212 = scmp.lt.s32.totalorder %s23, 1
      %s6213 = scalar_select %p6212, %s23, 1
      %p6214 = scmp.lt.s32.totalorder %s6211, 15
      %s6215 = scalar_select %p6214, %s6211, 15
      %s6216 = smul.addr %s6215, 2
      %s6217 = smul.addr %s6213, 32
      %s6218 = sadd.s32 %s6216, %s6217
      %s6219 = smul.addr %s6218, 8
      %s6220 = scalar_lea.vmem %s5, %s6219
      %p6221 = scmp.lt.s32.totalorder %s23, 1
      %s6222 = scalar_select %p6221, %s23, 1
      %p6223 = scmp.lt.s32.totalorder %s24, 0
      %s6224 = scalar_select %p6223, %s24, 0
      %s6225 = sadd.s32 %s6224, %s6222
      %s6226 = scalar_lea.vmem %s6, %s6225
      %p6227 = scmp.lt.s32.totalorder %s23, 1
      %s6228 = scalar_select %p6227, %s23, 1
      %p6229 = scmp.lt.s32.totalorder %s24, 0
      %s6230 = scalar_select %p6229, %s24, 0
      %s6231 = sadd.s32 %s6230, %s6228
      %s6232 = scalar_lea.vmem %s7, %s6231
      // Predicated region
      $region45: #{conv_block_forward.2} parent=39 // pred_check
        %p6233 = pneg %p163
      $region46: #{conv_block_forward.2} parent=39 // pred_check_branch
        %6235 = sbr.rel (%p6233) target = $region48
      $region47: #{conv_block_forward.2} parent=39 // pred_region
        %s6236 = smul.u32 16, %s24
      $region48: #{conv_block_forward.2} parent=39 // pred_fallthru
        _
      // Predicated region
      $region49: #{conv_block_forward.2} parent=39 // pred_check
        %p6237 = pneg %p191
      $region50: #{conv_block_forward.2} parent=39 // pred_check_branch
        %6239 = sbr.rel (%p6237) target = $region52
      $region51: #{conv_block_forward.2} parent=39 // pred_region
        _
      $region52: #{conv_block_forward.2} parent=39 // pred_fallthru
        _
      // Predicated region
      $region53: #{conv_block_forward.2} parent=39 // pred_check
        %p6240 = pneg %p219
      $region54: #{conv_block_forward.2} parent=39 // pred_check_branch
        %6242 = sbr.rel (%p6240) target = $region56
      $region55: #{conv_block_forward.2} parent=39 // pred_region
        _
      $region56: #{conv_block_forward.2} parent=39 // pred_fallthru
        _
    $region40: #{conv_block_forward.2} parent=5 // pred_fallthru
      _
    %p6243 = scmp.le.s32.totalorder 2, %s14
    // Predicated region
    $region57: #{conv_block_forward.2} parent=5 // pred_check
      %p6244 = pneg %p6243
    $region58: #{conv_block_forward.2} parent=5 // pred_check_branch
      %6246 = sbr.rel (%p6244) target = $region60
    $region59: #{conv_block_forward.2} parent=5 // pred_region
      %s6247 = ssub.s32 %s14, 2
      // Predicated region
      $region61: #{conv_block_forward.2} parent=59 // pred_check
        %p6248 = pneg %p169
      $region62: #{conv_block_forward.2} parent=59 // pred_check_branch
        %6250 = sbr.rel (%p6248) target = $region64
      $region63: #{conv_block_forward.2} parent=59 // pred_region
        %s6251 = smul.u32 16, %s26
        %p6252 = scmp.lt.s32.totalorder %s25, 1
        %s6253 = scalar_select %p6252, %s25, 1
        %p6254 = scmp.lt.s32.totalorder %s6251, 15
        %s6255 = scalar_select %p6254, %s6251, 15
        %s6256 = smul.addr %s6255, 2
        %s6257 = smul.addr %s6253, 32
        %s6258 = sadd.s32 %s6256, %s6257
        %s6259 = smul.addr %s6258, 8
        %s6260 = scalar_lea.vmem %s5, %s6259
      $region64: #{conv_block_forward.2} parent=59 // pred_fallthru
        _
      // Predicated region
      $region65: #{conv_block_forward.2} parent=59 // pred_check
        %p6261 = pneg %p197
      $region66: #{conv_block_forward.2} parent=59 // pred_check_branch
        %6263 = sbr.rel (%p6261) target = $region68
      $region67: #{conv_block_forward.2} parent=59 // pred_region
        %p6264 = scmp.lt.s32.totalorder %s25, 1
        %s6265 = scalar_select %p6264, %s25, 1
        %p6266 = scmp.lt.s32.totalorder %s26, 0
        %s6267 = scalar_select %p6266, %s26, 0
        %s6268 = sadd.s32 %s6267, %s6265
        %s6269 = scalar_lea.vmem %s6, %s6268
      $region68: #{conv_block_forward.2} parent=59 // pred_fallthru
        _
      // Predicated region
      $region69: #{conv_block_forward.2} parent=59 // pred_check
        %p6270 = pneg %p225
      $region70: #{conv_block_forward.2} parent=59 // pred_check_branch
        %6272 = sbr.rel (%p6270) target = $region72
      $region71: #{conv_block_forward.2} parent=59 // pred_region
        %p6273 = scmp.lt.s32.totalorder %s25, 1
        %s6274 = scalar_select %p6273, %s25, 1
        %p6275 = scmp.lt.s32.totalorder %s26, 0
        %s6276 = scalar_select %p6275, %s26, 0
        %s6277 = sadd.s32 %s6276, %s6274
        %s6278 = scalar_lea.vmem %s7, %s6277
      $region72: #{conv_block_forward.2} parent=59 // pred_fallthru
        _
    $region60: #{conv_block_forward.2} parent=5 // pred_fallthru
      _
  $region6: #{conv_block_forward.2} parent=0 // loop_footer
    %s18 = sadd.s32 1, %s14
  $region7: #{conv_block_forward.2} parent=0 // loop_footer_branch
    %13 = sbr.rel target = $region3
  $region8: #{conv_block_forward.2} parent=0 // loop_exit
    _

</llo_original>
